<compile_context>
chip_gen: v5e
topology: v5e:2x2
jax: 0.10.0
libtpu: 0.0.40
codegen_flags: <defaults>
</compile_context>

<pallas_src>
from functools import partial

import jax
import jax.numpy as jnp
from jax.experimental import pallas as pl
from jax.experimental.pallas import tpu as pltpu

EPS = 1e-5  # PyTorch BatchNorm2d default eps.

# MXU operand dtype for the conv taps / staging buffer.  Set to jnp.bfloat16
# in production (bf16-native MXU, ~2-3x throughput on v6e/v7x, half the
# staging bytes); f32 here so the numerics check vs the f32 reference passes.
MXU_DTYPE = jnp.float32


# ------------------------------ fused kernel -------------------------------- #

def _resblock_kernel(x_ref, mask_ref, vec_ref, w_ref, o_ref, work_ref,
                     *, n_rows, pad_rows, wp, inv_count):
    """Fused ResBlock2d forward on one VMEM-resident tile.

    Training-mode BatchNorm (batch statistics), like the PyTorch module in
    train(); eval-mode running statistics are NOT implemented here.

    x_ref    : (n_rows, C)   spatially zero-padded activation, row = (n, yp, xp)
    mask_ref : (n_rows, C)   1.0 on interior (real image) rows, 0.0 on halo rows
    vec_ref  : (8, C)        rows 0..5 = gamma1, beta1, cbias1, gamma2, beta2, cbias2
    w_ref    : (2, 9, C, C)  conv taps, [conv, t, ci, co], t = ky*3 + kx
    o_ref    : (n_rows, C)   output in padded coords (halo rows junk, sliced away)
    work_ref : (n_rows + 2*pad_rows, C)  staging buffer with zero guard rows
    """
    C = x_ref.shape[1]
    x = x_ref[...]
    mask = mask_ref[...]          # loaded once, reused as a value (no per-use
                                  # broadcast_in_dim re-emission)

    # Zero ONLY the guard rows; the interior region is fully overwritten by
    # each conv's staging store below.
    zeros_guard = jnp.zeros((pad_rows, C), work_ref.dtype)
    work_ref[0:pad_rows, :] = zeros_guard
    work_ref[pad_rows + n_rows:pad_rows + n_rows + pad_rows, :] = zeros_guard

    def bn_relu(v, gamma, beta):
        # Batch statistics.  Halo rows of `v` are zero, so plain sums only see
        # the interior; inv_count = 1 / (N*H*W).  Two-pass (centered) variance
        # for numerical robustness after conv + bias.
        mean = jnp.sum(v, axis=0, keepdims=True) * inv_count         # (1, C)
        d = (v - mean) * mask
        var = jnp.sum(d * d, axis=0, keepdims=True) * inv_count      # (1, C)
        scale = gamma * jax.lax.rsqrt(var + EPS)
        shift = beta - mean * scale
        return jnp.maximum(v * scale + shift, 0.0) * mask            # zero halo

    def conv3x3(v, conv_idx, bias, mask_out):
        # Stage into the guarded buffer; tap (dy, dx) is then just the constant
        # row offset dy*Wp + dx of a flattened (row=(n,yp,xp), lane=c) buffer.
        work_ref[pad_rows:pad_rows + n_rows, :] = v.astype(work_ref.dtype)
        acc = jnp.zeros((n_rows, C), jnp.float32)
        t = 0
        for dy in (-1, 0, 1):
            for dx in (-1, 0, 1):
                off = pad_rows + dy * wp + dx
                tap = work_ref[off:off + n_rows, :]                  # (n_rows, C)
                acc = acc + jnp.dot(tap, w_ref[conv_idx, t],
                                    preferred_element_type=jnp.float32)
                t += 1
        out = acc + bias
        if mask_out is not None:
            out = out * mask_out
        return out

    g1, be1, cb1 = vec_ref[0:1, :], vec_ref[1:2, :], vec_ref[2:3, :]
    g2, be2, cb2 = vec_ref[3:4, :], vec_ref[4:5, :], vec_ref[5:6, :]

    h = bn_relu(x, g1, be1)
    h = conv3x3(h, 0, cb1, mask)     # masked: BN2's stats need a zero halo
    h = bn_relu(h, g2, be2)
    h = conv3x3(h, 1, cb2, None)     # halo rows are sliced away by the wrapper
    o_ref[...] = h + x               # residual (x halo is 0)


# --------------------------------- wrapper ---------------------------------- #

def resblock2d_forward(x_nchw, params):
    """ResBlock2d forward; input/output NCHW like the PyTorch module."""
    N, C, H, W = x_nchw.shape
    Hp, Wp = H + 2, W + 2
    n_rows = N * Hp * Wp
    pad_rows = ((Wp + 1 + 7) // 8) * 8          # zero guard rows, sublane-aligned

    # --- one-time glue in XLA: layout, halo pad, constant mask, param packing ---
    x_nhwc = jnp.transpose(x_nchw, (0, 2, 3, 1)).astype(jnp.float32)
    xp2 = jnp.pad(x_nhwc, ((0, 0), (1, 1), (1, 1), (0, 0))).reshape(n_rows, C)

    yy = jnp.arange(Hp)
    xx = jnp.arange(Wp)
    interior = (((yy >= 1) & (yy <= H))[:, None]
                & ((xx >= 1) & (xx <= W))[None, :])                  # (Hp, Wp)
    mask = jnp.broadcast_to(interior[None, :, :, None], (N, Hp, Wp, C))
    mask = mask.reshape(n_rows, C).astype(jnp.float32)   # constant; XLA folds it

    def taps(w_oihw):   # OIHW -> (9, Cin, Cout), tap index t = ky*3 + kx
        return jnp.transpose(w_oihw, (2, 3, 1, 0)).reshape(9, C, C)

    w_all = jnp.stack([taps(params["w1"]), taps(params["w2"])]).astype(MXU_DTYPE)
    vecs = jnp.stack([params["gamma1"], params["beta1"], params["b1"],
                      params["gamma2"], params["beta2"], params["b2"]])
    vecs = jnp.pad(vecs.astype(jnp.float32), ((0, 2), (0, 0)))        # (8, C)

    kernel = partial(_resblock_kernel, n_rows=n_rows, pad_rows=pad_rows,
                     wp=Wp, inv_count=1.0 / float(N * H * W))

    flops = int(2 * 9 * 2 * n_rows * C * C + 40 * n_rows * C)
    bytes_accessed = int(4 * (3 * n_rows * C + 8 * C + 2 * 9 * C * C))

    out = pl.pallas_call(
        kernel,
        out_shape=jax.ShapeDtypeStruct((n_rows, C), jnp.float32),
        grid=(1,),
        in_specs=[
            pl.BlockSpec((n_rows, C), lambda i: (0, 0)),         # padded activation
            pl.BlockSpec((n_rows, C), lambda i: (0, 0)),         # interior mask
            pl.BlockSpec((8, C), lambda i: (0, 0)),              # BN/bias bundle
            pl.BlockSpec((2, 9, C, C), lambda i: (0, 0, 0, 0)),  # conv tap bundle
        ],
        out_specs=pl.BlockSpec((n_rows, C), lambda i: (0, 0)),
        scratch_shapes=[pltpu.VMEM((n_rows + 2 * pad_rows, C), MXU_DTYPE)],
        compiler_params=pltpu.CompilerParams(
            dimension_semantics=("arbitrary",),
            vmem_limit_bytes=32 * 1024 * 1024),
        cost_estimate=pl.CostEstimate(flops=flops, transcendentals=2 * C,
                                      bytes_accessed=bytes_accessed),
    )(xp2, mask, vecs, w_all)

    out = out.reshape(N, Hp, Wp, C)[:, 1:H + 1, 1:W + 1, :]
    return jnp.transpose(out, (0, 3, 1, 2))                # back to NCHW


# ---------------------------- pure-JAX reference ----------------------------- #

def _bn_relu_ref(x_nchw, gamma, beta):
    mean = jnp.mean(x_nchw, axis=(0, 2, 3), keepdims=True)
    var = jnp.mean((x_nchw - mean) ** 2, axis=(0, 2, 3), keepdims=True)
    y = (x_nchw - mean) * jax.lax.rsqrt(var + EPS)
    y = y * gamma[None, :, None, None] + beta[None, :, None, None]
    return jnp.maximum(y, 0.0)


def _conv_ref(x_nchw, w_oihw, b):
    out = jax.lax.conv_general_dilated(
        x_nchw, w_oihw, window_strides=(1, 1), padding=((1, 1), (1, 1)),
        dimension_numbers=("NCHW", "OIHW", "NCHW"))
    return out + b[None, :, None, None]


def resblock2d_ref(x, p):
    h = _conv_ref(_bn_relu_ref(x, p["gamma1"], p["beta1"]), p["w1"], p["b1"])
    h = _conv_ref(_bn_relu_ref(h, p["gamma2"], p["beta2"]), p["w2"], p["b2"])
    return h + x


# ----------------------------------- main ------------------------------------ #

if __name__ == "__main__":
    key = jax.random.PRNGKey(0)
    N, C, H, W = 2, 4, 16, 16
    k = jax.random.split(key, 9)

    x = jax.random.normal(k[0], (N, C, H, W), jnp.float32)
    params = {
        # nn.Conv2d(C, C, 3, padding=1): weight (C, C, 3, 3), bias (C,)
        "w1": jax.random.normal(k[1], (C, C, 3, 3), jnp.float32) * 0.2,
        "b1": jax.random.normal(k[2], (C,), jnp.float32) * 0.1,
        "w2": jax.random.normal(k[3], (C, C, 3, 3), jnp.float32) * 0.2,
        "b2": jax.random.normal(k[4], (C,), jnp.float32) * 0.1,
        # nn.BatchNorm2d(C, affine=True): weight/bias (C,)
        "gamma1": 1.0 + 0.1 * jax.random.normal(k[5], (C,), jnp.float32),
        "beta1": 0.1 * jax.random.normal(k[6], (C,), jnp.float32),
        "gamma2": 1.0 + 0.1 * jax.random.normal(k[7], (C,), jnp.float32),
        "beta2": 0.1 * jax.random.normal(k[8], (C,), jnp.float32),
    }

    out = jax.block_until_ready(resblock2d_forward(x, params))
    ref = jax.block_until_ready(resblock2d_ref(x, params))

    assert out.shape == x.shape and out.dtype == jnp.float32
    max_err = float(jnp.max(jnp.abs(out - ref)))
    assert jnp.allclose(out, ref, atol=2e-4, rtol=2e-4), max_err
    print("KERNEL_OK")
</pallas_src>

<mosaic_0001>
module attributes {stable_mosaic.version = 11 : i64} {
  func.func @_resblock_kernel(%arg0: i32, %arg1: memref<648x4xf32, #tpu.memory_space<vmem>>, %arg2: memref<648x4xf32, #tpu.memory_space<vmem>>, %arg3: memref<8x4xf32, #tpu.memory_space<vmem>>, %arg4: memref<2x9x4x4xf32, #tpu.memory_space<vmem>>, %arg5: memref<648x4xf32, #tpu.memory_space<vmem>>, %arg6: memref<696x4xf32, #tpu.memory_space<vmem>>) attributes {dimension_semantics = [#tpu.dimension_semantics<arbitrary>], iteration_bounds = array<i64: 1>, scalar_prefetch = 0 : i64, scratch_operands = 1 : i64, tpu.core_type = #tpu.core_type<tc>, window_params = [{pipeline_mode = #tpu.pipeline_mode<synchronous>, transform_indices = @transform_0, window_bounds = array<i64: 648, 4>}, {pipeline_mode = #tpu.pipeline_mode<synchronous>, transform_indices = @transform_1, window_bounds = array<i64: 648, 4>}, {pipeline_mode = #tpu.pipeline_mode<synchronous>, transform_indices = @transform_2, window_bounds = array<i64: 8, 4>}, {pipeline_mode = #tpu.pipeline_mode<synchronous>, transform_indices = @transform_3, window_bounds = array<i64: 2, 9, 4, 4>}, {pipeline_mode = #tpu.pipeline_mode<synchronous>, transform_indices = @transform_4, window_bounds = array<i64: 648, 4>}]} {
    %c0 = arith.constant 0 : index
    %c0_0 = arith.constant 0 : index
    %0 = vector.load %arg1[%c0, %c0_0] : memref<648x4xf32, #tpu.memory_space<vmem>>, vector<648x4xf32>
    %c0_1 = arith.constant 0 : index
    %c0_2 = arith.constant 0 : index
    %1 = vector.load %arg2[%c0_1, %c0_2] : memref<648x4xf32, #tpu.memory_space<vmem>>, vector<648x4xf32>
    %cst = arith.constant 0.000000e+00 : f32
    %2 = vector.broadcast %cst : f32 to vector<24x4xf32>
    %c0_3 = arith.constant 0 : index
    %c0_4 = arith.constant 0 : index
    %3 = vector.load %arg6[%c0_3, %c0_4] : memref<696x4xf32, #tpu.memory_space<vmem>>, vector<24x4xf32>
    tpu.vector_store %arg6[%c0_3, %c0_4], %2 {strides = array<i32>} : memref<696x4xf32, #tpu.memory_space<vmem>>, vector<24x4xf32>,
    %c672 = arith.constant 672 : index
    %c0_5 = arith.constant 0 : index
    %4 = vector.load %arg6[%c672, %c0_5] : memref<696x4xf32, #tpu.memory_space<vmem>>, vector<24x4xf32>
    tpu.vector_store %arg6[%c672, %c0_5], %2 {strides = array<i32>} : memref<696x4xf32, #tpu.memory_space<vmem>>, vector<24x4xf32>,
    %c0_6 = arith.constant 0 : index
    %c0_7 = arith.constant 0 : index
    %5 = vector.load %arg3[%c0_6, %c0_7] : memref<8x4xf32, #tpu.memory_space<vmem>>, vector<1x4xf32>
    %c1 = arith.constant 1 : index
    %c0_8 = arith.constant 0 : index
    %6 = vector.load %arg3[%c1, %c0_8] : memref<8x4xf32, #tpu.memory_space<vmem>>, vector<1x4xf32>
    %c2 = arith.constant 2 : index
    %c0_9 = arith.constant 0 : index
    %7 = vector.load %arg3[%c2, %c0_9] : memref<8x4xf32, #tpu.memory_space<vmem>>, vector<1x4xf32>
    %c3 = arith.constant 3 : index
    %c0_10 = arith.constant 0 : index
    %8 = vector.load %arg3[%c3, %c0_10] : memref<8x4xf32, #tpu.memory_space<vmem>>, vector<1x4xf32>
    %c4 = arith.constant 4 : index
    %c0_11 = arith.constant 0 : index
    %9 = vector.load %arg3[%c4, %c0_11] : memref<8x4xf32, #tpu.memory_space<vmem>>, vector<1x4xf32>
    %c5 = arith.constant 5 : index
    %c0_12 = arith.constant 0 : index
    %10 = vector.load %arg3[%c5, %c0_12] : memref<8x4xf32, #tpu.memory_space<vmem>>, vector<1x4xf32>
    %cst_13 = arith.constant dense<0.000000e+00> : vector<4xf32>
    %11 = vector.multi_reduction <add>, %0, %cst_13 [0] : vector<648x4xf32> to vector<4xf32>
    %12 = vector.shape_cast %11 : vector<4xf32> to vector<1x4xf32>
    %cst_14 = arith.constant 0.001953125 : f32
    %13 = vector.broadcast %cst_14 : f32 to vector<1x4xf32>
    %14 = arith.mulf %12, %13 : vector<1x4xf32>
    %15 = vector.broadcast %14 : vector<1x4xf32> to vector<648x4xf32>
    %16 = arith.subf %0, %15 : vector<648x4xf32>
    %17 = arith.mulf %16, %1 : vector<648x4xf32>
    %18 = arith.mulf %17, %17 : vector<648x4xf32>
    %cst_15 = arith.constant dense<0.000000e+00> : vector<4xf32>
    %19 = vector.multi_reduction <add>, %18, %cst_15 [0] : vector<648x4xf32> to vector<4xf32>
    %20 = vector.shape_cast %19 : vector<4xf32> to vector<1x4xf32>
    %cst_16 = arith.constant 0.001953125 : f32
    %21 = vector.broadcast %cst_16 : f32 to vector<1x4xf32>
    %22 = arith.mulf %20, %21 : vector<1x4xf32>
    %cst_17 = arith.constant 9.99999974E-6 : f32
    %23 = vector.broadcast %cst_17 : f32 to vector<1x4xf32>
    %24 = arith.addf %22, %23 : vector<1x4xf32>
    %25 = math.rsqrt %24 : vector<1x4xf32>
    %26 = arith.mulf %5, %25 : vector<1x4xf32>
    %27 = arith.mulf %14, %26 : vector<1x4xf32>
    %28 = arith.subf %6, %27 : vector<1x4xf32>
    %29 = vector.broadcast %26 : vector<1x4xf32> to vector<648x4xf32>
    %30 = arith.mulf %0, %29 : vector<648x4xf32>
    %31 = vector.broadcast %28 : vector<1x4xf32> to vector<648x4xf32>
    %32 = arith.addf %30, %31 : vector<648x4xf32>
    %cst_18 = arith.constant 0.000000e+00 : f32
    %33 = vector.broadcast %cst_18 : f32 to vector<648x4xf32>
    %34 = arith.maximumf %32, %33 : vector<648x4xf32>
    %35 = arith.mulf %34, %1 : vector<648x4xf32>
    %c24 = arith.constant 24 : index
    %c0_19 = arith.constant 0 : index
    %36 = vector.load %arg6[%c24, %c0_19] : memref<696x4xf32, #tpu.memory_space<vmem>>, vector<648x4xf32>
    tpu.vector_store %arg6[%c24, %c0_19], %35 {strides = array<i32>} : memref<696x4xf32, #tpu.memory_space<vmem>>, vector<648x4xf32>,
    %cst_20 = arith.constant 0.000000e+00 : f32
    %37 = vector.broadcast %cst_20 : f32 to vector<648x4xf32>
    %c5_21 = arith.constant 5 : index
    %c0_22 = arith.constant 0 : index
    %38 = vector.load %arg6[%c5_21, %c0_22] : memref<696x4xf32, #tpu.memory_space<vmem>>, vector<648x4xf32>
    %c0_23 = arith.constant 0 : index
    %c0_24 = arith.constant 0 : index
    %c0_25 = arith.constant 0 : index
    %c0_26 = arith.constant 0 : index
    %39 = vector.load %arg4[%c0_23, %c0_24, %c0_25, %c0_26] : memref<2x9x4x4xf32, #tpu.memory_space<vmem>>, vector<1x1x4x4xf32>
    %40 = vector.shape_cast %39 : vector<1x1x4x4xf32> to vector<4x4xf32>
    %cst_27 = arith.constant dense<0.000000e+00> : vector<648x4xf32>
    %41 = tpu.matmul %38, %40, %cst_27 {dimension_numbers = #tpu.dot_dimension_numbers<[1], [0], [0], [1], [0, 0, 1, 1], [], []>} : vector<648x4xf32>, vector<4x4xf32>, vector<648x4xf32> -> vector<648x4xf32>
    %42 = arith.addf %37, %41 : vector<648x4xf32>
    %c6 = arith.constant 6 : index
    %c0_28 = arith.constant 0 : index
    %43 = vector.load %arg6[%c6, %c0_28] : memref<696x4xf32, #tpu.memory_space<vmem>>, vector<648x4xf32>
    %c0_29 = arith.constant 0 : index
    %c1_30 = arith.constant 1 : index
    %c0_31 = arith.constant 0 : index
    %c0_32 = arith.constant 0 : index
    %44 = vector.load %arg4[%c0_29, %c1_30, %c0_31, %c0_32] : memref<2x9x4x4xf32, #tpu.memory_space<vmem>>, vector<1x1x4x4xf32>
    %45 = vector.shape_cast %44 : vector<1x1x4x4xf32> to vector<4x4xf32>
    %cst_33 = arith.constant dense<0.000000e+00> : vector<648x4xf32>
    %46 = tpu.matmul %43, %45, %cst_33 {dimension_numbers = #tpu.dot_dimension_numbers<[1], [0], [0], [1], [0, 0, 1, 1], [], []>} : vector<648x4xf32>, vector<4x4xf32>, vector<648x4xf32> -> vector<648x4xf32>
    %47 = arith.addf %42, %46 : vector<648x4xf32>
    %c7 = arith.constant 7 : index
    %c0_34 = arith.constant 0 : index
    %48 = vector.load %arg6[%c7, %c0_34] : memref<696x4xf32, #tpu.memory_space<vmem>>, vector<648x4xf32>
    %c0_35 = arith.constant 0 : index
    %c2_36 = arith.constant 2 : index
    %c0_37 = arith.constant 0 : index
    %c0_38 = arith.constant 0 : index
    %49 = vector.load %arg4[%c0_35, %c2_36, %c0_37, %c0_38] : memref<2x9x4x4xf32, #tpu.memory_space<vmem>>, vector<1x1x4x4xf32>
    %50 = vector.shape_cast %49 : vector<1x1x4x4xf32> to vector<4x4xf32>
    %cst_39 = arith.constant dense<0.000000e+00> : vector<648x4xf32>
    %51 = tpu.matmul %48, %50, %cst_39 {dimension_numbers = #tpu.dot_dimension_numbers<[1], [0], [0], [1], [0, 0, 1, 1], [], []>} : vector<648x4xf32>, vector<4x4xf32>, vector<648x4xf32> -> vector<648x4xf32>
    %52 = arith.addf %47, %51 : vector<648x4xf32>
    %c23 = arith.constant 23 : index
    %c0_40 = arith.constant 0 : index
    %53 = vector.load %arg6[%c23, %c0_40] : memref<696x4xf32, #tpu.memory_space<vmem>>, vector<648x4xf32>
    %c0_41 = arith.constant 0 : index
    %c3_42 = arith.constant 3 : index
    %c0_43 = arith.constant 0 : index
    %c0_44 = arith.constant 0 : index
    %54 = vector.load %arg4[%c0_41, %c3_42, %c0_43, %c0_44] : memref<2x9x4x4xf32, #tpu.memory_space<vmem>>, vector<1x1x4x4xf32>
    %55 = vector.shape_cast %54 : vector<1x1x4x4xf32> to vector<4x4xf32>
    %cst_45 = arith.constant dense<0.000000e+00> : vector<648x4xf32>
    %56 = tpu.matmul %53, %55, %cst_45 {dimension_numbers = #tpu.dot_dimension_numbers<[1], [0], [0], [1], [0, 0, 1, 1], [], []>} : vector<648x4xf32>, vector<4x4xf32>, vector<648x4xf32> -> vector<648x4xf32>
    %57 = arith.addf %52, %56 : vector<648x4xf32>
    %c24_46 = arith.constant 24 : index
    %c0_47 = arith.constant 0 : index
    %58 = vector.load %arg6[%c24_46, %c0_47] : memref<696x4xf32, #tpu.memory_space<vmem>>, vector<648x4xf32>
    %c0_48 = arith.constant 0 : index
    %c4_49 = arith.constant 4 : index
    %c0_50 = arith.constant 0 : index
    %c0_51 = arith.constant 0 : index
    %59 = vector.load %arg4[%c0_48, %c4_49, %c0_50, %c0_51] : memref<2x9x4x4xf32, #tpu.memory_space<vmem>>, vector<1x1x4x4xf32>
    %60 = vector.shape_cast %59 : vector<1x1x4x4xf32> to vector<4x4xf32>
    %cst_52 = arith.constant dense<0.000000e+00> : vector<648x4xf32>
    %61 = tpu.matmul %58, %60, %cst_52 {dimension_numbers = #tpu.dot_dimension_numbers<[1], [0], [0], [1], [0, 0, 1, 1], [], []>} : vector<648x4xf32>, vector<4x4xf32>, vector<648x4xf32> -> vector<648x4xf32>
    %62 = arith.addf %57, %61 : vector<648x4xf32>
    %c25 = arith.constant 25 : index
    %c0_53 = arith.constant 0 : index
    %63 = vector.load %arg6[%c25, %c0_53] : memref<696x4xf32, #tpu.memory_space<vmem>>, vector<648x4xf32>
    %c0_54 = arith.constant 0 : index
    %c5_55 = arith.constant 5 : index
    %c0_56 = arith.constant 0 : index
    %c0_57 = arith.constant 0 : index
    %64 = vector.load %arg4[%c0_54, %c5_55, %c0_56, %c0_57] : memref<2x9x4x4xf32, #tpu.memory_space<vmem>>, vector<1x1x4x4xf32>
    %65 = vector.shape_cast %64 : vector<1x1x4x4xf32> to vector<4x4xf32>
    %cst_58 = arith.constant dense<0.000000e+00> : vector<648x4xf32>
    %66 = tpu.matmul %63, %65, %cst_58 {dimension_numbers = #tpu.dot_dimension_numbers<[1], [0], [0], [1], [0, 0, 1, 1], [], []>} : vector<648x4xf32>, vector<4x4xf32>, vector<648x4xf32> -> vector<648x4xf32>
    %67 = arith.addf %62, %66 : vector<648x4xf32>
    %c41 = arith.constant 41 : index
    %c0_59 = arith.constant 0 : index
    %68 = vector.load %arg6[%c41, %c0_59] : memref<696x4xf32, #tpu.memory_space<vmem>>, vector<648x4xf32>
    %c0_60 = arith.constant 0 : index
    %c6_61 = arith.constant 6 : index
    %c0_62 = arith.constant 0 : index
    %c0_63 = arith.constant 0 : index
    %69 = vector.load %arg4[%c0_60, %c6_61, %c0_62, %c0_63] : memref<2x9x4x4xf32, #tpu.memory_space<vmem>>, vector<1x1x4x4xf32>
    %70 = vector.shape_cast %69 : vector<1x1x4x4xf32> to vector<4x4xf32>
    %cst_64 = arith.constant dense<0.000000e+00> : vector<648x4xf32>
    %71 = tpu.matmul %68, %70, %cst_64 {dimension_numbers = #tpu.dot_dimension_numbers<[1], [0], [0], [1], [0, 0, 1, 1], [], []>} : vector<648x4xf32>, vector<4x4xf32>, vector<648x4xf32> -> vector<648x4xf32>
    %72 = arith.addf %67, %71 : vector<648x4xf32>
    %c42 = arith.constant 42 : index
    %c0_65 = arith.constant 0 : index
    %73 = vector.load %arg6[%c42, %c0_65] : memref<696x4xf32, #tpu.memory_space<vmem>>, vector<648x4xf32>
    %c0_66 = arith.constant 0 : index
    %c7_67 = arith.constant 7 : index
    %c0_68 = arith.constant 0 : index
    %c0_69 = arith.constant 0 : index
    %74 = vector.load %arg4[%c0_66, %c7_67, %c0_68, %c0_69] : memref<2x9x4x4xf32, #tpu.memory_space<vmem>>, vector<1x1x4x4xf32>
    %75 = vector.shape_cast %74 : vector<1x1x4x4xf32> to vector<4x4xf32>
    %cst_70 = arith.constant dense<0.000000e+00> : vector<648x4xf32>
    %76 = tpu.matmul %73, %75, %cst_70 {dimension_numbers = #tpu.dot_dimension_numbers<[1], [0], [0], [1], [0, 0, 1, 1], [], []>} : vector<648x4xf32>, vector<4x4xf32>, vector<648x4xf32> -> vector<648x4xf32>
    %77 = arith.addf %72, %76 : vector<648x4xf32>
    %c43 = arith.constant 43 : index
    %c0_71 = arith.constant 0 : index
    %78 = vector.load %arg6[%c43, %c0_71] : memref<696x4xf32, #tpu.memory_space<vmem>>, vector<648x4xf32>
    %c0_72 = arith.constant 0 : index
    %c8 = arith.constant 8 : index
    %c0_73 = arith.constant 0 : index
    %c0_74 = arith.constant 0 : index
    %79 = vector.load %arg4[%c0_72, %c8, %c0_73, %c0_74] : memref<2x9x4x4xf32, #tpu.memory_space<vmem>>, vector<1x1x4x4xf32>
    %80 = vector.shape_cast %79 : vector<1x1x4x4xf32> to vector<4x4xf32>
    %cst_75 = arith.constant dense<0.000000e+00> : vector<648x4xf32>
    %81 = tpu.matmul %78, %80, %cst_75 {dimension_numbers = #tpu.dot_dimension_numbers<[1], [0], [0], [1], [0, 0, 1, 1], [], []>} : vector<648x4xf32>, vector<4x4xf32>, vector<648x4xf32> -> vector<648x4xf32>
    %82 = arith.addf %77, %81 : vector<648x4xf32>
    %83 = vector.broadcast %7 : vector<1x4xf32> to vector<648x4xf32>
    %84 = arith.addf %82, %83 : vector<648x4xf32>
    %85 = arith.mulf %84, %1 : vector<648x4xf32>
    %cst_76 = arith.constant dense<0.000000e+00> : vector<4xf32>
    %86 = vector.multi_reduction <add>, %85, %cst_76 [0] : vector<648x4xf32> to vector<4xf32>
    %87 = vector.shape_cast %86 : vector<4xf32> to vector<1x4xf32>
    %cst_77 = arith.constant 0.001953125 : f32
    %88 = vector.broadcast %cst_77 : f32 to vector<1x4xf32>
    %89 = arith.mulf %87, %88 : vector<1x4xf32>
    %90 = vector.broadcast %89 : vector<1x4xf32> to vector<648x4xf32>
    %91 = arith.subf %85, %90 : vector<648x4xf32>
    %92 = arith.mulf %91, %1 : vector<648x4xf32>
    %93 = arith.mulf %92, %92 : vector<648x4xf32>
    %cst_78 = arith.constant dense<0.000000e+00> : vector<4xf32>
    %94 = vector.multi_reduction <add>, %93, %cst_78 [0] : vector<648x4xf32> to vector<4xf32>
    %95 = vector.shape_cast %94 : vector<4xf32> to vector<1x4xf32>
    %cst_79 = arith.constant 0.001953125 : f32
    %96 = vector.broadcast %cst_79 : f32 to vector<1x4xf32>
    %97 = arith.mulf %95, %96 : vector<1x4xf32>
    %cst_80 = arith.constant 9.99999974E-6 : f32
    %98 = vector.broadcast %cst_80 : f32 to vector<1x4xf32>
    %99 = arith.addf %97, %98 : vector<1x4xf32>
    %100 = math.rsqrt %99 : vector<1x4xf32>
    %101 = arith.mulf %8, %100 : vector<1x4xf32>
    %102 = arith.mulf %89, %101 : vector<1x4xf32>
    %103 = arith.subf %9, %102 : vector<1x4xf32>
    %104 = vector.broadcast %101 : vector<1x4xf32> to vector<648x4xf32>
    %105 = arith.mulf %85, %104 : vector<648x4xf32>
    %106 = vector.broadcast %103 : vector<1x4xf32> to vector<648x4xf32>
    %107 = arith.addf %105, %106 : vector<648x4xf32>
    %cst_81 = arith.constant 0.000000e+00 : f32
    %108 = vector.broadcast %cst_81 : f32 to vector<648x4xf32>
    %109 = arith.maximumf %107, %108 : vector<648x4xf32>
    %110 = arith.mulf %109, %1 : vector<648x4xf32>
    %c24_82 = arith.constant 24 : index
    %c0_83 = arith.constant 0 : index
    %111 = vector.load %arg6[%c24_82, %c0_83] : memref<696x4xf32, #tpu.memory_space<vmem>>, vector<648x4xf32>
    tpu.vector_store %arg6[%c24_82, %c0_83], %110 {strides = array<i32>} : memref<696x4xf32, #tpu.memory_space<vmem>>, vector<648x4xf32>,
    %cst_84 = arith.constant 0.000000e+00 : f32
    %112 = vector.broadcast %cst_84 : f32 to vector<648x4xf32>
    %c5_85 = arith.constant 5 : index
    %c0_86 = arith.constant 0 : index
    %113 = vector.load %arg6[%c5_85, %c0_86] : memref<696x4xf32, #tpu.memory_space<vmem>>, vector<648x4xf32>
    %c1_87 = arith.constant 1 : index
    %c0_88 = arith.constant 0 : index
    %c0_89 = arith.constant 0 : index
    %c0_90 = arith.constant 0 : index
    %114 = vector.load %arg4[%c1_87, %c0_88, %c0_89, %c0_90] : memref<2x9x4x4xf32, #tpu.memory_space<vmem>>, vector<1x1x4x4xf32>
    %115 = vector.shape_cast %114 : vector<1x1x4x4xf32> to vector<4x4xf32>
    %cst_91 = arith.constant dense<0.000000e+00> : vector<648x4xf32>
    %116 = tpu.matmul %113, %115, %cst_91 {dimension_numbers = #tpu.dot_dimension_numbers<[1], [0], [0], [1], [0, 0, 1, 1], [], []>} : vector<648x4xf32>, vector<4x4xf32>, vector<648x4xf32> -> vector<648x4xf32>
    %117 = arith.addf %112, %116 : vector<648x4xf32>
    %c6_92 = arith.constant 6 : index
    %c0_93 = arith.constant 0 : index
    %118 = vector.load %arg6[%c6_92, %c0_93] : memref<696x4xf32, #tpu.memory_space<vmem>>, vector<648x4xf32>
    %c1_94 = arith.constant 1 : index
    %c1_95 = arith.constant 1 : index
    %c0_96 = arith.constant 0 : index
    %c0_97 = arith.constant 0 : index
    %119 = vector.load %arg4[%c1_94, %c1_95, %c0_96, %c0_97] : memref<2x9x4x4xf32, #tpu.memory_space<vmem>>, vector<1x1x4x4xf32>
    %120 = vector.shape_cast %119 : vector<1x1x4x4xf32> to vector<4x4xf32>
    %cst_98 = arith.constant dense<0.000000e+00> : vector<648x4xf32>
    %121 = tpu.matmul %118, %120, %cst_98 {dimension_numbers = #tpu.dot_dimension_numbers<[1], [0], [0], [1], [0, 0, 1, 1], [], []>} : vector<648x4xf32>, vector<4x4xf32>, vector<648x4xf32> -> vector<648x4xf32>
    %122 = arith.addf %117, %121 : vector<648x4xf32>
    %c7_99 = arith.constant 7 : index
    %c0_100 = arith.constant 0 : index
    %123 = vector.load %arg6[%c7_99, %c0_100] : memref<696x4xf32, #tpu.memory_space<vmem>>, vector<648x4xf32>
    %c1_101 = arith.constant 1 : index
    %c2_102 = arith.constant 2 : index
    %c0_103 = arith.constant 0 : index
    %c0_104 = arith.constant 0 : index
    %124 = vector.load %arg4[%c1_101, %c2_102, %c0_103, %c0_104] : memref<2x9x4x4xf32, #tpu.memory_space<vmem>>, vector<1x1x4x4xf32>
    %125 = vector.shape_cast %124 : vector<1x1x4x4xf32> to vector<4x4xf32>
    %cst_105 = arith.constant dense<0.000000e+00> : vector<648x4xf32>
    %126 = tpu.matmul %123, %125, %cst_105 {dimension_numbers = #tpu.dot_dimension_numbers<[1], [0], [0], [1], [0, 0, 1, 1], [], []>} : vector<648x4xf32>, vector<4x4xf32>, vector<648x4xf32> -> vector<648x4xf32>
    %127 = arith.addf %122, %126 : vector<648x4xf32>
    %c23_106 = arith.constant 23 : index
    %c0_107 = arith.constant 0 : index
    %128 = vector.load %arg6[%c23_106, %c0_107] : memref<696x4xf32, #tpu.memory_space<vmem>>, vector<648x4xf32>
    %c1_108 = arith.constant 1 : index
    %c3_109 = arith.constant 3 : index
    %c0_110 = arith.constant 0 : index
    %c0_111 = arith.constant 0 : index
    %129 = vector.load %arg4[%c1_108, %c3_109, %c0_110, %c0_111] : memref<2x9x4x4xf32, #tpu.memory_space<vmem>>, vector<1x1x4x4xf32>
    %130 = vector.shape_cast %129 : vector<1x1x4x4xf32> to vector<4x4xf32>
    %cst_112 = arith.constant dense<0.000000e+00> : vector<648x4xf32>
    %131 = tpu.matmul %128, %130, %cst_112 {dimension_numbers = #tpu.dot_dimension_numbers<[1], [0], [0], [1], [0, 0, 1, 1], [], []>} : vector<648x4xf32>, vector<4x4xf32>, vector<648x4xf32> -> vector<648x4xf32>
    %132 = arith.addf %127, %131 : vector<648x4xf32>
    %c24_113 = arith.constant 24 : index
    %c0_114 = arith.constant 0 : index
    %133 = vector.load %arg6[%c24_113, %c0_114] : memref<696x4xf32, #tpu.memory_space<vmem>>, vector<648x4xf32>
    %c1_115 = arith.constant 1 : index
    %c4_116 = arith.constant 4 : index
    %c0_117 = arith.constant 0 : index
    %c0_118 = arith.constant 0 : index
    %134 = vector.load %arg4[%c1_115, %c4_116, %c0_117, %c0_118] : memref<2x9x4x4xf32, #tpu.memory_space<vmem>>, vector<1x1x4x4xf32>
    %135 = vector.shape_cast %134 : vector<1x1x4x4xf32> to vector<4x4xf32>
    %cst_119 = arith.constant dense<0.000000e+00> : vector<648x4xf32>
    %136 = tpu.matmul %133, %135, %cst_119 {dimension_numbers = #tpu.dot_dimension_numbers<[1], [0], [0], [1], [0, 0, 1, 1], [], []>} : vector<648x4xf32>, vector<4x4xf32>, vector<648x4xf32> -> vector<648x4xf32>
    %137 = arith.addf %132, %136 : vector<648x4xf32>
    %c25_120 = arith.constant 25 : index
    %c0_121 = arith.constant 0 : index
    %138 = vector.load %arg6[%c25_120, %c0_121] : memref<696x4xf32, #tpu.memory_space<vmem>>, vector<648x4xf32>
    %c1_122 = arith.constant 1 : index
    %c5_123 = arith.constant 5 : index
    %c0_124 = arith.constant 0 : index
    %c0_125 = arith.constant 0 : index
    %139 = vector.load %arg4[%c1_122, %c5_123, %c0_124, %c0_125] : memref<2x9x4x4xf32, #tpu.memory_space<vmem>>, vector<1x1x4x4xf32>
    %140 = vector.shape_cast %139 : vector<1x1x4x4xf32> to vector<4x4xf32>
    %cst_126 = arith.constant dense<0.000000e+00> : vector<648x4xf32>
    %141 = tpu.matmul %138, %140, %cst_126 {dimension_numbers = #tpu.dot_dimension_numbers<[1], [0], [0], [1], [0, 0, 1, 1], [], []>} : vector<648x4xf32>, vector<4x4xf32>, vector<648x4xf32> -> vector<648x4xf32>
    %142 = arith.addf %137, %141 : vector<648x4xf32>
    %c41_127 = arith.constant 41 : index
    %c0_128 = arith.constant 0 : index
    %143 = vector.load %arg6[%c41_127, %c0_128] : memref<696x4xf32, #tpu.memory_space<vmem>>, vector<648x4xf32>
    %c1_129 = arith.constant 1 : index
    %c6_130 = arith.constant 6 : index
    %c0_131 = arith.constant 0 : index
    %c0_132 = arith.constant 0 : index
    %144 = vector.load %arg4[%c1_129, %c6_130, %c0_131, %c0_132] : memref<2x9x4x4xf32, #tpu.memory_space<vmem>>, vector<1x1x4x4xf32>
    %145 = vector.shape_cast %144 : vector<1x1x4x4xf32> to vector<4x4xf32>
    %cst_133 = arith.constant dense<0.000000e+00> : vector<648x4xf32>
    %146 = tpu.matmul %143, %145, %cst_133 {dimension_numbers = #tpu.dot_dimension_numbers<[1], [0], [0], [1], [0, 0, 1, 1], [], []>} : vector<648x4xf32>, vector<4x4xf32>, vector<648x4xf32> -> vector<648x4xf32>
    %147 = arith.addf %142, %146 : vector<648x4xf32>
    %c42_134 = arith.constant 42 : index
    %c0_135 = arith.constant 0 : index
    %148 = vector.load %arg6[%c42_134, %c0_135] : memref<696x4xf32, #tpu.memory_space<vmem>>, vector<648x4xf32>
    %c1_136 = arith.constant 1 : index
    %c7_137 = arith.constant 7 : index
    %c0_138 = arith.constant 0 : index
    %c0_139 = arith.constant 0 : index
    %149 = vector.load %arg4[%c1_136, %c7_137, %c0_138, %c0_139] : memref<2x9x4x4xf32, #tpu.memory_space<vmem>>, vector<1x1x4x4xf32>
    %150 = vector.shape_cast %149 : vector<1x1x4x4xf32> to vector<4x4xf32>
    %cst_140 = arith.constant dense<0.000000e+00> : vector<648x4xf32>
    %151 = tpu.matmul %148, %150, %cst_140 {dimension_numbers = #tpu.dot_dimension_numbers<[1], [0], [0], [1], [0, 0, 1, 1], [], []>} : vector<648x4xf32>, vector<4x4xf32>, vector<648x4xf32> -> vector<648x4xf32>
    %152 = arith.addf %147, %151 : vector<648x4xf32>
    %c43_141 = arith.constant 43 : index
    %c0_142 = arith.constant 0 : index
    %153 = vector.load %arg6[%c43_141, %c0_142] : memref<696x4xf32, #tpu.memory_space<vmem>>, vector<648x4xf32>
    %c1_143 = arith.constant 1 : index
    %c8_144 = arith.constant 8 : index
    %c0_145 = arith.constant 0 : index
    %c0_146 = arith.constant 0 : index
    %154 = vector.load %arg4[%c1_143, %c8_144, %c0_145, %c0_146] : memref<2x9x4x4xf32, #tpu.memory_space<vmem>>, vector<1x1x4x4xf32>
    %155 = vector.shape_cast %154 : vector<1x1x4x4xf32> to vector<4x4xf32>
    %cst_147 = arith.constant dense<0.000000e+00> : vector<648x4xf32>
    %156 = tpu.matmul %153, %155, %cst_147 {dimension_numbers = #tpu.dot_dimension_numbers<[1], [0], [0], [1], [0, 0, 1, 1], [], []>} : vector<648x4xf32>, vector<4x4xf32>, vector<648x4xf32> -> vector<648x4xf32>
    %157 = arith.addf %152, %156 : vector<648x4xf32>
    %158 = vector.broadcast %10 : vector<1x4xf32> to vector<648x4xf32>
    %159 = arith.addf %157, %158 : vector<648x4xf32>
    %160 = arith.addf %159, %0 : vector<648x4xf32>
    %c0_148 = arith.constant 0 : index
    %c0_149 = arith.constant 0 : index
    %161 = vector.load %arg5[%c0_148, %c0_149] : memref<648x4xf32, #tpu.memory_space<vmem>>, vector<648x4xf32>
    tpu.vector_store %arg5[%c0_148, %c0_149], %160 {strides = array<i32>} : memref<648x4xf32, #tpu.memory_space<vmem>>, vector<648x4xf32>,
    return
  }
  func.func @transform_0(%arg0: i32) -> (i32, i32) {
    %c0_i32 = arith.constant 0 : i32
    %c0_i32_0 = arith.constant 0 : i32
    %c0_i32_1 = arith.constant 0 : i32
    return %c0_i32, %c0_i32_0 : i32, i32
  }
  func.func @transform_1(%arg0: i32) -> (i32, i32) {
    %c0_i32 = arith.constant 0 : i32
    %c0_i32_0 = arith.constant 0 : i32
    %c0_i32_1 = arith.constant 0 : i32
    return %c0_i32, %c0_i32_0 : i32, i32
  }
  func.func @transform_2(%arg0: i32) -> (i32, i32) {
    %c0_i32 = arith.constant 0 : i32
    %c0_i32_0 = arith.constant 0 : i32
    %c0_i32_1 = arith.constant 0 : i32
    return %c0_i32, %c0_i32_0 : i32, i32
  }
  func.func @transform_3(%arg0: i32) -> (i32, i32, i32, i32) {
    %c0_i32 = arith.constant 0 : i32
    %c0_i32_0 = arith.constant 0 : i32
    %c0_i32_1 = arith.constant 0 : i32
    %c0_i32_2 = arith.constant 0 : i32
    %c0_i32_3 = arith.constant 0 : i32
    return %c0_i32, %c0_i32_0, %c0_i32_1, %c0_i32_2 : i32, i32, i32, i32
  }
  func.func @transform_4(%arg0: i32) -> (i32, i32) {
    %c0_i32 = arith.constant 0 : i32
    %c0_i32_0 = arith.constant 0 : i32
    %c0_i32_1 = arith.constant 0 : i32
    return %c0_i32, %c0_i32_0 : i32, i32
  }
}

</mosaic_0001>

<llo_original>
// kernel: tpu_custom_call.1
$region0: #{tpu_custom_call.1}
  #allocation0 [shape = 'u32[]', space=smem, size = 0x4, offset = 0x4, fixed_abs, tag = 'smem constant byte address 0x4 - core index']
  #allocation1 [shape = 'u32[72,128]{1,0:T(1,128)}', space=vmem, size = 0x9000, scoped, tag = 'internal scratch']
  #allocation2 [shape = 'f32[696,4]{1,0:T(8,128)}', space=vmem, size = 0x57000, scoped, tag = 'scratch operand']
  %s0 = inlined_call_operand.vmem [shape: f32[648,4], index: 0, kind: input, shape index: {}]
  %s1 = inlined_call_operand.vmem [shape: f32[648,4], index: 1, kind: input, shape index: {}]
  %s2 = inlined_call_operand.vmem [shape: f32[8,4], index: 2, kind: input, shape index: {}]
  %s3 = inlined_call_operand.vmem [shape: f32[2,9,4,4], index: 3, kind: input, shape index: {}]
  %s4 = inlined_call_operand.vmem [shape: f32[648,4], index: 4, kind: output, shape index: {}]
  %s5 = sld [smem:[#allocation0]]
  $region26: #{tpu_custom_call.1} parent=0
    _
  %s7 = ssub.s32 1, %s5
  %s8 = scalar_select 0, %s7, %s5
  // Predicated region
  $region2: #{tpu_custom_call.1} parent=0 // pred_check
    _
  $region3: #{tpu_custom_call.1} parent=0 // pred_check_branch
    %10 = sbr.rel (0) target = $region5
  $region4: #{tpu_custom_call.1} parent=0 // pred_region
    _
  $region5: #{tpu_custom_call.1} parent=0 // pred_fallthru
    _
  // Predicated region
  $region6: #{tpu_custom_call.1} parent=0 // pred_check
    _
  $region7: #{tpu_custom_call.1} parent=0 // pred_check_branch
    %12 = sbr.rel (0) target = $region9
  $region8: #{tpu_custom_call.1} parent=0 // pred_region
    _
  $region9: #{tpu_custom_call.1} parent=0 // pred_fallthru
    _
  // Predicated region
  $region10: #{tpu_custom_call.1} parent=0 // pred_check
    _
  $region11: #{tpu_custom_call.1} parent=0 // pred_check_branch
    %14 = sbr.rel (0) target = $region13
  $region12: #{tpu_custom_call.1} parent=0 // pred_region
    _
  $region13: #{tpu_custom_call.1} parent=0 // pred_fallthru
    _
  // Predicated region
  $region14: #{tpu_custom_call.1} parent=0 // pred_check
    _
  $region15: #{tpu_custom_call.1} parent=0 // pred_check_branch
    %16 = sbr.rel (0) target = $region17
  $region16: #{tpu_custom_call.1} parent=0 // pred_region
    _
  $region17: #{tpu_custom_call.1} parent=0 // pred_fallthru
    _
  %v17 = vld [vmem:[%s0] sm:$0xff]
  %v18 = vld [vmem:[%s0 + $0x8] sm:$0xff]
  %v19 = vld [vmem:[%s0 + $0x10] sm:$0xff]
  %v20 = vld [vmem:[%s0 + $0x18] sm:$0xff]
  %v21 = vld [vmem:[%s0 + $0x20] sm:$0xff]
  %v22 = vld [vmem:[%s0 + $0x28] sm:$0xff]
  %v23 = vld [vmem:[%s0 + $0x30] sm:$0xff]
  %v24 = vld [vmem:[%s0 + $0x38] sm:$0xff]
  %v25 = vld [vmem:[%s0 + $0x40] sm:$0xff]
  %v26 = vld [vmem:[%s0 + $0x48] sm:$0xff]
  %v27 = vld [vmem:[%s0 + $0x50] sm:$0xff]
  %v28 = vld [vmem:[%s0 + $0x58] sm:$0xff]
  %v29 = vld [vmem:[%s0 + $0x60] sm:$0xff]
  %v30 = vld [vmem:[%s0 + $0x68] sm:$0xff]
  %v31 = vld [vmem:[%s0 + $0x70] sm:$0xff]
  %v32 = vld [vmem:[%s0 + $0x78] sm:$0xff]
  %v33 = vld [vmem:[%s0 + $0x80] sm:$0xff]
  %v34 = vld [vmem:[%s0 + $0x88] sm:$0xff]
  %v35 = vld [vmem:[%s0 + $0x90] sm:$0xff]
  %v36 = vld [vmem:[%s0 + $0x98] sm:$0xff]
  %v37 = vld [vmem:[%s0 + $0xa0] sm:$0xff]
  %v38 = vld [vmem:[%s0 + $0xa8] sm:$0xff]
  %v39 = vld [vmem:[%s0 + $0xb0] sm:$0xff]
  %v40 = vld [vmem:[%s0 + $0xb8] sm:$0xff]
  %v41 = vld [vmem:[%s0 + $0xc0] sm:$0xff]
  %v42 = vld [vmem:[%s0 + $0xc8] sm:$0xff]
  %v43 = vld [vmem:[%s0 + $0xd0] sm:$0xff]
  %v44 = vld [vmem:[%s0 + $0xd8] sm:$0xff]
  %v45 = vld [vmem:[%s0 + $0xe0] sm:$0xff]
  %v46 = vld [vmem:[%s0 + $0xe8] sm:$0xff]
  %v47 = vld [vmem:[%s0 + $0xf0] sm:$0xff]
  %v48 = vld [vmem:[%s0 + $0xf8] sm:$0xff]
  %v49 = vld [vmem:[%s0 + $0x100] sm:$0xff]
  %v50 = vld [vmem:[%s0 + $0x108] sm:$0xff]
  %v51 = vld [vmem:[%s0 + $0x110] sm:$0xff]
  %v52 = vld [vmem:[%s0 + $0x118] sm:$0xff]
  %v53 = vld [vmem:[%s0 + $0x120] sm:$0xff]
  %v54 = vld [vmem:[%s0 + $0x128] sm:$0xff]
  %v55 = vld [vmem:[%s0 + $0x130] sm:$0xff]
  %v56 = vld [vmem:[%s0 + $0x138] sm:$0xff]
  %v57 = vld [vmem:[%s0 + $0x140] sm:$0xff]
  %v58 = vld [vmem:[%s0 + $0x148] sm:$0xff]
  %v59 = vld [vmem:[%s0 + $0x150] sm:$0xff]
  %v60 = vld [vmem:[%s0 + $0x158] sm:$0xff]
  %v61 = vld [vmem:[%s0 + $0x160] sm:$0xff]
  %v62 = vld [vmem:[%s0 + $0x168] sm:$0xff]
  %v63 = vld [vmem:[%s0 + $0x170] sm:$0xff]
  %v64 = vld [vmem:[%s0 + $0x178] sm:$0xff]
  %v65 = vld [vmem:[%s0 + $0x180] sm:$0xff]
  %v66 = vld [vmem:[%s0 + $0x188] sm:$0xff]
  %v67 = vld [vmem:[%s0 + $0x190] sm:$0xff]
  %v68 = vld [vmem:[%s0 + $0x198] sm:$0xff]
  %v69 = vld [vmem:[%s0 + $0x1a0] sm:$0xff]
  %v70 = vld [vmem:[%s0 + $0x1a8] sm:$0xff]
  %v71 = vld [vmem:[%s0 + $0x1b0] sm:$0xff]
  %v72 = vld [vmem:[%s0 + $0x1b8] sm:$0xff]
  %v73 = vld [vmem:[%s0 + $0x1c0] sm:$0xff]
  %v74 = vld [vmem:[%s0 + $0x1c8] sm:$0xff]
  %v75 = vld [vmem:[%s0 + $0x1d0] sm:$0xff]
  %v76 = vld [vmem:[%s0 + $0x1d8] sm:$0xff]
  %v77 = vld [vmem:[%s0 + $0x1e0] sm:$0xff]
  %v78 = vld [vmem:[%s0 + $0x1e8] sm:$0xff]
  %v79 = vld [vmem:[%s0 + $0x1f0] sm:$0xff]
  %v80 = vld [vmem:[%s0 + $0x1f8] sm:$0xff]
  %v81 = vld [vmem:[%s0 + $0x200] sm:$0xff]
  %v82 = vld [vmem:[%s0 + $0x208] sm:$0xff]
  %v83 = vld [vmem:[%s0 + $0x210] sm:$0xff]
  %v84 = vld [vmem:[%s0 + $0x218] sm:$0xff]
  %v85 = vld [vmem:[%s0 + $0x220] sm:$0xff]
  %v86 = vld [vmem:[%s0 + $0x228] sm:$0xff]
  %v87 = vld [vmem:[%s0 + $0x230] sm:$0xff]
  %v88 = vld [vmem:[%s0 + $0x238] sm:$0xff]
  %v89 = vld [vmem:[%s0 + $0x240] sm:$0xff]
  %v90 = vld [vmem:[%s0 + $0x248] sm:$0xff]
  %v91 = vld [vmem:[%s0 + $0x250] sm:$0xff]
  %v92 = vld [vmem:[%s0 + $0x258] sm:$0xff]
  %v93 = vld [vmem:[%s0 + $0x260] sm:$0xff]
  %v94 = vld [vmem:[%s0 + $0x268] sm:$0xff]
  %v95 = vld [vmem:[%s0 + $0x270] sm:$0xff]
  %v96 = vld [vmem:[%s0 + $0x278] sm:$0xff]
  %v97 = vld [vmem:[%s0 + $0x280] sm:$0xff]
  %v98 = vld [vmem:[%s1] sm:$0xff]
  %v99 = vld [vmem:[%s1 + $0x8] sm:$0xff]
  %v100 = vld [vmem:[%s1 + $0x10] sm:$0xff]
  %v101 = vld [vmem:[%s1 + $0x18] sm:$0xff]
  %v102 = vld [vmem:[%s1 + $0x20] sm:$0xff]
  %v103 = vld [vmem:[%s1 + $0x28] sm:$0xff]
  %v104 = vld [vmem:[%s1 + $0x30] sm:$0xff]
  %v105 = vld [vmem:[%s1 + $0x38] sm:$0xff]
  %v106 = vld [vmem:[%s1 + $0x40] sm:$0xff]
  %v107 = vld [vmem:[%s1 + $0x48] sm:$0xff]
  %v108 = vld [vmem:[%s1 + $0x50] sm:$0xff]
  %v109 = vld [vmem:[%s1 + $0x58] sm:$0xff]
  %v110 = vld [vmem:[%s1 + $0x60] sm:$0xff]
  %v111 = vld [vmem:[%s1 + $0x68] sm:$0xff]
  %v112 = vld [vmem:[%s1 + $0x70] sm:$0xff]
  %v113 = vld [vmem:[%s1 + $0x78] sm:$0xff]
  %v114 = vld [vmem:[%s1 + $0x80] sm:$0xff]
  %v115 = vld [vmem:[%s1 + $0x88] sm:$0xff]
  %v116 = vld [vmem:[%s1 + $0x90] sm:$0xff]
  %v117 = vld [vmem:[%s1 + $0x98] sm:$0xff]
  %v118 = vld [vmem:[%s1 + $0xa0] sm:$0xff]
  %v119 = vld [vmem:[%s1 + $0xa8] sm:$0xff]
  %v120 = vld [vmem:[%s1 + $0xb0] sm:$0xff]
  %v121 = vld [vmem:[%s1 + $0xb8] sm:$0xff]
  %v122 = vld [vmem:[%s1 + $0xc0] sm:$0xff]
  %v123 = vld [vmem:[%s1 + $0xc8] sm:$0xff]
  %v124 = vld [vmem:[%s1 + $0xd0] sm:$0xff]
  %v125 = vld [vmem:[%s1 + $0xd8] sm:$0xff]
  %v126 = vld [vmem:[%s1 + $0xe0] sm:$0xff]
  %v127 = vld [vmem:[%s1 + $0xe8] sm:$0xff]
  %v128 = vld [vmem:[%s1 + $0xf0] sm:$0xff]
  %v129 = vld [vmem:[%s1 + $0xf8] sm:$0xff]
  %v130 = vld [vmem:[%s1 + $0x100] sm:$0xff]
  %v131 = vld [vmem:[%s1 + $0x108] sm:$0xff]
  %v132 = vld [vmem:[%s1 + $0x110] sm:$0xff]
  %v133 = vld [vmem:[%s1 + $0x118] sm:$0xff]
  %v134 = vld [vmem:[%s1 + $0x120] sm:$0xff]
  %v135 = vld [vmem:[%s1 + $0x128] sm:$0xff]
  %v136 = vld [vmem:[%s1 + $0x130] sm:$0xff]
  %v137 = vld [vmem:[%s1 + $0x138] sm:$0xff]
  %v138 = vld [vmem:[%s1 + $0x140] sm:$0xff]
  %v139 = vld [vmem:[%s1 + $0x148] sm:$0xff]
  %v140 = vld [vmem:[%s1 + $0x150] sm:$0xff]
  %v141 = vld [vmem:[%s1 + $0x158] sm:$0xff]
  %v142 = vld [vmem:[%s1 + $0x160] sm:$0xff]
  %v143 = vld [vmem:[%s1 + $0x168] sm:$0xff]
  %v144 = vld [vmem:[%s1 + $0x170] sm:$0xff]
  %v145 = vld [vmem:[%s1 + $0x178] sm:$0xff]
  %v146 = vld [vmem:[%s1 + $0x180] sm:$0xff]
  %v147 = vld [vmem:[%s1 + $0x188] sm:$0xff]
  %v148 = vld [vmem:[%s1 + $0x190] sm:$0xff]
  %v149 = vld [vmem:[%s1 + $0x198] sm:$0xff]
  %v150 = vld [vmem:[%s1 + $0x1a0] sm:$0xff]
  %v151 = vld [vmem:[%s1 + $0x1a8] sm:$0xff]
  %v152 = vld [vmem:[%s1 + $0x1b0] sm:$0xff]
  %v153 = vld [vmem:[%s1 + $0x1b8] sm:$0xff]
  %v154 = vld [vmem:[%s1 + $0x1c0] sm:$0xff]
  %v155 = vld [vmem:[%s1 + $0x1c8] sm:$0xff]
  %v156 = vld [vmem:[%s1 + $0x1d0] sm:$0xff]
  %v157 = vld [vmem:[%s1 + $0x1d8] sm:$0xff]
  %v158 = vld [vmem:[%s1 + $0x1e0] sm:$0xff]
  %v159 = vld [vmem:[%s1 + $0x1e8] sm:$0xff]
  %v160 = vld [vmem:[%s1 + $0x1f0] sm:$0xff]
  %v161 = vld [vmem:[%s1 + $0x1f8] sm:$0xff]
  %v162 = vld [vmem:[%s1 + $0x200] sm:$0xff]
  %v163 = vld [vmem:[%s1 + $0x208] sm:$0xff]
  %v164 = vld [vmem:[%s1 + $0x210] sm:$0xff]
  %v165 = vld [vmem:[%s1 + $0x218] sm:$0xff]
  %v166 = vld [vmem:[%s1 + $0x220] sm:$0xff]
  %v167 = vld [vmem:[%s1 + $0x228] sm:$0xff]
  %v168 = vld [vmem:[%s1 + $0x230] sm:$0xff]
  %v169 = vld [vmem:[%s1 + $0x238] sm:$0xff]
  %v170 = vld [vmem:[%s1 + $0x240] sm:$0xff]
  %v171 = vld [vmem:[%s1 + $0x248] sm:$0xff]
  %v172 = vld [vmem:[%s1 + $0x250] sm:$0xff]
  %v173 = vld [vmem:[%s1 + $0x258] sm:$0xff]
  %v174 = vld [vmem:[%s1 + $0x260] sm:$0xff]
  %v175 = vld [vmem:[%s1 + $0x268] sm:$0xff]
  %v176 = vld [vmem:[%s1 + $0x270] sm:$0xff]
  %v177 = vld [vmem:[%s1 + $0x278] sm:$0xff]
  %v178 = vld [vmem:[%s1 + $0x280] sm:$0xff]
  %vm179 = vcmask 31744
  %180 = vst.msk [vmem:[#allocation2] sm:$0xff] %vm179, 0.0
  %181 = vst.msk [vmem:[#allocation2 + $0x8] sm:$0xff] %vm179, 0.0
  %182 = vst.msk [vmem:[#allocation2 + $0x10] sm:$0xff] %vm179, 0.0
  %183 = vst.msk [vmem:[#allocation2 + $0x2a0] sm:$0xff] %vm179, 0.0
  %184 = vst.msk [vmem:[#allocation2 + $0x2a8] sm:$0xff] %vm179, 0.0
  %185 = vst.msk [vmem:[#allocation2 + $0x2b0] sm:$0xff] %vm179, 0.0
  %v186 = vld [vmem:[%s2] sm:$0x1]
  %v187 = vld [vmem:[%s2 + $0x1] sm:$0x1]
  %v188 = vld [vmem:[%s2 + $0x2] sm:$0x1]
  %v189 = vld [vmem:[%s2 + $0x3] sm:$0x1]
  %v190 = vld [vmem:[%s2 + $0x4] sm:$0x1]
  %v191 = vld [vmem:[%s2 + $0x5] sm:$0x1]
  %v192 = vsel %vm179, %v17, 0.0
  %v193 = vsel %vm179, %v18, 0.0
  %v194 = vadd.f32 %v192, %v193
  %v195 = vsel %vm179, %v19, 0.0
  %v196 = vadd.f32 %v194, %v195
  %v197 = vsel %vm179, %v20, 0.0
  %v198 = vadd.f32 %v196, %v197
  %v199 = vsel %vm179, %v21, 0.0
  %v200 = vadd.f32 %v198, %v199
  %v201 = vsel %vm179, %v22, 0.0
  %v202 = vadd.f32 %v200, %v201
  %v203 = vsel %vm179, %v23, 0.0
  %v204 = vadd.f32 %v202, %v203
  %v205 = vsel %vm179, %v24, 0.0
  %v206 = vadd.f32 %v204, %v205
  %v207 = vsel %vm179, %v25, 0.0
  %v208 = vadd.f32 %v206, %v207
  %v209 = vsel %vm179, %v26, 0.0
  %v210 = vadd.f32 %v208, %v209
  %v211 = vsel %vm179, %v27, 0.0
  %v212 = vadd.f32 %v210, %v211
  %v213 = vsel %vm179, %v28, 0.0
  %v214 = vadd.f32 %v212, %v213
  %v215 = vsel %vm179, %v29, 0.0
  %v216 = vadd.f32 %v214, %v215
  %v217 = vsel %vm179, %v30, 0.0
  %v218 = vadd.f32 %v216, %v217
  %v219 = vsel %vm179, %v31, 0.0
  %v220 = vadd.f32 %v218, %v219
  %v221 = vsel %vm179, %v32, 0.0
  %v222 = vadd.f32 %v220, %v221
  %v223 = vsel %vm179, %v33, 0.0
  %v224 = vadd.f32 %v222, %v223
  %v225 = vsel %vm179, %v34, 0.0
  %v226 = vadd.f32 %v224, %v225
  %v227 = vsel %vm179, %v35, 0.0
  %v228 = vadd.f32 %v226, %v227
  %v229 = vsel %vm179, %v36, 0.0
  %v230 = vadd.f32 %v228, %v229
  %v231 = vsel %vm179, %v37, 0.0
  %v232 = vadd.f32 %v230, %v231
  %v233 = vsel %vm179, %v38, 0.0
  %v234 = vadd.f32 %v232, %v233
  %v235 = vsel %vm179, %v39, 0.0
  %v236 = vadd.f32 %v234, %v235
  %v237 = vsel %vm179, %v40, 0.0
  %v238 = vadd.f32 %v236, %v237
  %v239 = vsel %vm179, %v41, 0.0
  %v240 = vadd.f32 %v238, %v239
  %v241 = vsel %vm179, %v42, 0.0
  %v242 = vadd.f32 %v240, %v241
  %v243 = vsel %vm179, %v43, 0.0
  %v244 = vadd.f32 %v242, %v243
  %v245 = vsel %vm179, %v44, 0.0
  %v246 = vadd.f32 %v244, %v245
  %v247 = vsel %vm179, %v45, 0.0
  %v248 = vadd.f32 %v246, %v247
  %v249 = vsel %vm179, %v46, 0.0
  %v250 = vadd.f32 %v248, %v249
  %v251 = vsel %vm179, %v47, 0.0
  %v252 = vadd.f32 %v250, %v251
  %v253 = vsel %vm179, %v48, 0.0
  %v254 = vadd.f32 %v252, %v253
  %v255 = vsel %vm179, %v49, 0.0
  %v256 = vadd.f32 %v254, %v255
  %v257 = vsel %vm179, %v50, 0.0
  %v258 = vadd.f32 %v256, %v257
  %v259 = vsel %vm179, %v51, 0.0
  %v260 = vadd.f32 %v258, %v259
  %v261 = vsel %vm179, %v52, 0.0
  %v262 = vadd.f32 %v260, %v261
  %v263 = vsel %vm179, %v53, 0.0
  %v264 = vadd.f32 %v262, %v263
  %v265 = vsel %vm179, %v54, 0.0
  %v266 = vadd.f32 %v264, %v265
  %v267 = vsel %vm179, %v55, 0.0
  %v268 = vadd.f32 %v266, %v267
  %v269 = vsel %vm179, %v56, 0.0
  %v270 = vadd.f32 %v268, %v269
  %v271 = vsel %vm179, %v57, 0.0
  %v272 = vadd.f32 %v270, %v271
  %v273 = vsel %vm179, %v58, 0.0
  %v274 = vadd.f32 %v272, %v273
  %v275 = vsel %vm179, %v59, 0.0
  %v276 = vadd.f32 %v274, %v275
  %v277 = vsel %vm179, %v60, 0.0
  %v278 = vadd.f32 %v276, %v277
  %v279 = vsel %vm179, %v61, 0.0
  %v280 = vadd.f32 %v278, %v279
  %v281 = vsel %vm179, %v62, 0.0
  %v282 = vadd.f32 %v280, %v281
  %v283 = vsel %vm179, %v63, 0.0
  %v284 = vadd.f32 %v282, %v283
  %v285 = vsel %vm179, %v64, 0.0
  %v286 = vadd.f32 %v284, %v285
  %v287 = vsel %vm179, %v65, 0.0
  %v288 = vadd.f32 %v286, %v287
  %v289 = vsel %vm179, %v66, 0.0
  %v290 = vadd.f32 %v288, %v289
  %v291 = vsel %vm179, %v67, 0.0
  %v292 = vadd.f32 %v290, %v291
  %v293 = vsel %vm179, %v68, 0.0
  %v294 = vadd.f32 %v292, %v293
  %v295 = vsel %vm179, %v69, 0.0
  %v296 = vadd.f32 %v294, %v295
  %v297 = vsel %vm179, %v70, 0.0
  %v298 = vadd.f32 %v296, %v297
  %v299 = vsel %vm179, %v71, 0.0
  %v300 = vadd.f32 %v298, %v299
  %v301 = vsel %vm179, %v72, 0.0
  %v302 = vadd.f32 %v300, %v301
  %v303 = vsel %vm179, %v73, 0.0
  %v304 = vadd.f32 %v302, %v303
  %v305 = vsel %vm179, %v74, 0.0
  %v306 = vadd.f32 %v304, %v305
  %v307 = vsel %vm179, %v75, 0.0
  %v308 = vadd.f32 %v306, %v307
  %v309 = vsel %vm179, %v76, 0.0
  %v310 = vadd.f32 %v308, %v309
  %v311 = vsel %vm179, %v77, 0.0
  %v312 = vadd.f32 %v310, %v311
  %v313 = vsel %vm179, %v78, 0.0
  %v314 = vadd.f32 %v312, %v313
  %v315 = vsel %vm179, %v79, 0.0
  %v316 = vadd.f32 %v314, %v315
  %v317 = vsel %vm179, %v80, 0.0
  %v318 = vadd.f32 %v316, %v317
  %v319 = vsel %vm179, %v81, 0.0
  %v320 = vadd.f32 %v318, %v319
  %v321 = vsel %vm179, %v82, 0.0
  %v322 = vadd.f32 %v320, %v321
  %v323 = vsel %vm179, %v83, 0.0
  %v324 = vadd.f32 %v322, %v323
  %v325 = vsel %vm179, %v84, 0.0
  %v326 = vadd.f32 %v324, %v325
  %v327 = vsel %vm179, %v85, 0.0
  %v328 = vadd.f32 %v326, %v327
  %v329 = vsel %vm179, %v86, 0.0
  %v330 = vadd.f32 %v328, %v329
  %v331 = vsel %vm179, %v87, 0.0
  %v332 = vadd.f32 %v330, %v331
  %v333 = vsel %vm179, %v88, 0.0
  %v334 = vadd.f32 %v332, %v333
  %v335 = vsel %vm179, %v89, 0.0
  %v336 = vadd.f32 %v334, %v335
  %v337 = vsel %vm179, %v90, 0.0
  %v338 = vadd.f32 %v336, %v337
  %v339 = vsel %vm179, %v91, 0.0
  %v340 = vadd.f32 %v338, %v339
  %v341 = vsel %vm179, %v92, 0.0
  %v342 = vadd.f32 %v340, %v341
  %v343 = vsel %vm179, %v93, 0.0
  %v344 = vadd.f32 %v342, %v343
  %v345 = vsel %vm179, %v94, 0.0
  %v346 = vadd.f32 %v344, %v345
  %v347 = vsel %vm179, %v95, 0.0
  %v348 = vadd.f32 %v346, %v347
  %v349 = vsel %vm179, %v96, 0.0
  %v350 = vadd.f32 %v348, %v349
  %v351 = vsel %vm179, %v97, 0.0
  %v352 = vadd.f32 %v350, %v351
  %v353 = vrot.slane %v352, 4
  %v354 = vadd.f32 %v352, %v353
  %v355 = vrot.slane %v354, 2
  %v356 = vadd.f32 %v354, %v355
  %v357 = vrot.slane %v356, 1
  %v358 = vadd.f32 %v356, %v357
  %v359 = vmul.f32 %v358, 0.001953125
  %v360 = vsub.f32 %v17, %v359
  %v361 = vsub.f32 %v18, %v359
  %v362 = vsub.f32 %v19, %v359
  %v363 = vsub.f32 %v20, %v359
  %v364 = vsub.f32 %v21, %v359
  %v365 = vsub.f32 %v22, %v359
  %v366 = vsub.f32 %v23, %v359
  %v367 = vsub.f32 %v24, %v359
  %v368 = vsub.f32 %v25, %v359
  %v369 = vsub.f32 %v26, %v359
  %v370 = vsub.f32 %v27, %v359
  %v371 = vsub.f32 %v28, %v359
  %v372 = vsub.f32 %v29, %v359
  %v373 = vsub.f32 %v30, %v359
  %v374 = vsub.f32 %v31, %v359
  %v375 = vsub.f32 %v32, %v359
  %v376 = vsub.f32 %v33, %v359
  %v377 = vsub.f32 %v34, %v359
  %v378 = vsub.f32 %v35, %v359
  %v379 = vsub.f32 %v36, %v359
  %v380 = vsub.f32 %v37, %v359
  %v381 = vsub.f32 %v38, %v359
  %v382 = vsub.f32 %v39, %v359
  %v383 = vsub.f32 %v40, %v359
  %v384 = vsub.f32 %v41, %v359
  %v385 = vsub.f32 %v42, %v359
  %v386 = vsub.f32 %v43, %v359
  %v387 = vsub.f32 %v44, %v359
  %v388 = vsub.f32 %v45, %v359
  %v389 = vsub.f32 %v46, %v359
  %v390 = vsub.f32 %v47, %v359
  %v391 = vsub.f32 %v48, %v359
  %v392 = vsub.f32 %v49, %v359
  %v393 = vsub.f32 %v50, %v359
  %v394 = vsub.f32 %v51, %v359
  %v395 = vsub.f32 %v52, %v359
  %v396 = vsub.f32 %v53, %v359
  %v397 = vsub.f32 %v54, %v359
  %v398 = vsub.f32 %v55, %v359
  %v399 = vsub.f32 %v56, %v359
  %v400 = vsub.f32 %v57, %v359
  %v401 = vsub.f32 %v58, %v359
  %v402 = vsub.f32 %v59, %v359
  %v403 = vsub.f32 %v60, %v359
  %v404 = vsub.f32 %v61, %v359
  %v405 = vsub.f32 %v62, %v359
  %v406 = vsub.f32 %v63, %v359
  %v407 = vsub.f32 %v64, %v359
  %v408 = vsub.f32 %v65, %v359
  %v409 = vsub.f32 %v66, %v359
  %v410 = vsub.f32 %v67, %v359
  %v411 = vsub.f32 %v68, %v359
  %v412 = vsub.f32 %v69, %v359
  %v413 = vsub.f32 %v70, %v359
  %v414 = vsub.f32 %v71, %v359
  %v415 = vsub.f32 %v72, %v359
  %v416 = vsub.f32 %v73, %v359
  %v417 = vsub.f32 %v74, %v359
  %v418 = vsub.f32 %v75, %v359
  %v419 = vsub.f32 %v76, %v359
  %v420 = vsub.f32 %v77, %v359
  %v421 = vsub.f32 %v78, %v359
  %v422 = vsub.f32 %v79, %v359
  %v423 = vsub.f32 %v80, %v359
  %v424 = vsub.f32 %v81, %v359
  %v425 = vsub.f32 %v82, %v359
  %v426 = vsub.f32 %v83, %v359
  %v427 = vsub.f32 %v84, %v359
  %v428 = vsub.f32 %v85, %v359
  %v429 = vsub.f32 %v86, %v359
  %v430 = vsub.f32 %v87, %v359
  %v431 = vsub.f32 %v88, %v359
  %v432 = vsub.f32 %v89, %v359
  %v433 = vsub.f32 %v90, %v359
  %v434 = vsub.f32 %v91, %v359
  %v435 = vsub.f32 %v92, %v359
  %v436 = vsub.f32 %v93, %v359
  %v437 = vsub.f32 %v94, %v359
  %v438 = vsub.f32 %v95, %v359
  %v439 = vsub.f32 %v96, %v359
  %v440 = vsub.f32 %v97, %v359
  %v441 = vmul.f32 %v360, %v98
  %v442 = vmul.f32 %v361, %v99
  %v443 = vmul.f32 %v362, %v100
  %v444 = vmul.f32 %v363, %v101
  %v445 = vmul.f32 %v364, %v102
  %v446 = vmul.f32 %v365, %v103
  %v447 = vmul.f32 %v366, %v104
  %v448 = vmul.f32 %v367, %v105
  %v449 = vmul.f32 %v368, %v106
  %v450 = vmul.f32 %v369, %v107
  %v451 = vmul.f32 %v370, %v108
  %v452 = vmul.f32 %v371, %v109
  %v453 = vmul.f32 %v372, %v110
  %v454 = vmul.f32 %v373, %v111
  %v455 = vmul.f32 %v374, %v112
  %v456 = vmul.f32 %v375, %v113
  %v457 = vmul.f32 %v376, %v114
  %v458 = vmul.f32 %v377, %v115
  %v459 = vmul.f32 %v378, %v116
  %v460 = vmul.f32 %v379, %v117
  %v461 = vmul.f32 %v380, %v118
  %v462 = vmul.f32 %v381, %v119
  %v463 = vmul.f32 %v382, %v120
  %v464 = vmul.f32 %v383, %v121
  %v465 = vmul.f32 %v384, %v122
  %v466 = vmul.f32 %v385, %v123
  %v467 = vmul.f32 %v386, %v124
  %v468 = vmul.f32 %v387, %v125
  %v469 = vmul.f32 %v388, %v126
  %v470 = vmul.f32 %v389, %v127
  %v471 = vmul.f32 %v390, %v128
  %v472 = vmul.f32 %v391, %v129
  %v473 = vmul.f32 %v392, %v130
  %v474 = vmul.f32 %v393, %v131
  %v475 = vmul.f32 %v394, %v132
  %v476 = vmul.f32 %v395, %v133
  %v477 = vmul.f32 %v396, %v134
  %v478 = vmul.f32 %v397, %v135
  %v479 = vmul.f32 %v398, %v136
  %v480 = vmul.f32 %v399, %v137
  %v481 = vmul.f32 %v400, %v138
  %v482 = vmul.f32 %v401, %v139
  %v483 = vmul.f32 %v402, %v140
  %v484 = vmul.f32 %v403, %v141
  %v485 = vmul.f32 %v404, %v142
  %v486 = vmul.f32 %v405, %v143
  %v487 = vmul.f32 %v406, %v144
  %v488 = vmul.f32 %v407, %v145
  %v489 = vmul.f32 %v408, %v146
  %v490 = vmul.f32 %v409, %v147
  %v491 = vmul.f32 %v410, %v148
  %v492 = vmul.f32 %v411, %v149
  %v493 = vmul.f32 %v412, %v150
  %v494 = vmul.f32 %v413, %v151
  %v495 = vmul.f32 %v414, %v152
  %v496 = vmul.f32 %v415, %v153
  %v497 = vmul.f32 %v416, %v154
  %v498 = vmul.f32 %v417, %v155
  %v499 = vmul.f32 %v418, %v156
  %v500 = vmul.f32 %v419, %v157
  %v501 = vmul.f32 %v420, %v158
  %v502 = vmul.f32 %v421, %v159
  %v503 = vmul.f32 %v422, %v160
  %v504 = vmul.f32 %v423, %v161
  %v505 = vmul.f32 %v424, %v162
  %v506 = vmul.f32 %v425, %v163
  %v507 = vmul.f32 %v426, %v164
  %v508 = vmul.f32 %v427, %v165
  %v509 = vmul.f32 %v428, %v166
  %v510 = vmul.f32 %v429, %v167
  %v511 = vmul.f32 %v430, %v168
  %v512 = vmul.f32 %v431, %v169
  %v513 = vmul.f32 %v432, %v170
  %v514 = vmul.f32 %v433, %v171
  %v515 = vmul.f32 %v434, %v172
  %v516 = vmul.f32 %v435, %v173
  %v517 = vmul.f32 %v436, %v174
  %v518 = vmul.f32 %v437, %v175
  %v519 = vmul.f32 %v438, %v176
  %v520 = vmul.f32 %v439, %v177
  %v521 = vmul.f32 %v440, %v178
  %v522 = vmul.f32 %v441, %v441
  %v523 = vmul.f32 %v442, %v442
  %v524 = vmul.f32 %v443, %v443
  %v525 = vmul.f32 %v444, %v444
  %v526 = vmul.f32 %v445, %v445
  %v527 = vmul.f32 %v446, %v446
  %v528 = vmul.f32 %v447, %v447
  %v529 = vmul.f32 %v448, %v448
  %v530 = vmul.f32 %v449, %v449
  %v531 = vmul.f32 %v450, %v450
  %v532 = vmul.f32 %v451, %v451
  %v533 = vmul.f32 %v452, %v452
  %v534 = vmul.f32 %v453, %v453
  %v535 = vmul.f32 %v454, %v454
  %v536 = vmul.f32 %v455, %v455
  %v537 = vmul.f32 %v456, %v456
  %v538 = vmul.f32 %v457, %v457
  %v539 = vmul.f32 %v458, %v458
  %v540 = vmul.f32 %v459, %v459
  %v541 = vmul.f32 %v460, %v460
  %v542 = vmul.f32 %v461, %v461
  %v543 = vmul.f32 %v462, %v462
  %v544 = vmul.f32 %v463, %v463
  %v545 = vmul.f32 %v464, %v464
  %v546 = vmul.f32 %v465, %v465
  %v547 = vmul.f32 %v466, %v466
  %v548 = vmul.f32 %v467, %v467
  %v549 = vmul.f32 %v468, %v468
  %v550 = vmul.f32 %v469, %v469
  %v551 = vmul.f32 %v470, %v470
  %v552 = vmul.f32 %v471, %v471
  %v553 = vmul.f32 %v472, %v472
  %v554 = vmul.f32 %v473, %v473
  %v555 = vmul.f32 %v474, %v474
  %v556 = vmul.f32 %v475, %v475
  %v557 = vmul.f32 %v476, %v476
  %v558 = vmul.f32 %v477, %v477
  %v559 = vmul.f32 %v478, %v478
  %v560 = vmul.f32 %v479, %v479
  %v561 = vmul.f32 %v480, %v480
  %v562 = vmul.f32 %v481, %v481
  %v563 = vmul.f32 %v482, %v482
  %v564 = vmul.f32 %v483, %v483
  %v565 = vmul.f32 %v484, %v484
  %v566 = vmul.f32 %v485, %v485
  %v567 = vmul.f32 %v486, %v486
  %v568 = vmul.f32 %v487, %v487
  %v569 = vmul.f32 %v488, %v488
  %v570 = vmul.f32 %v489, %v489
  %v571 = vmul.f32 %v490, %v490
  %v572 = vmul.f32 %v491, %v491
  %v573 = vmul.f32 %v492, %v492
  %v574 = vmul.f32 %v493, %v493
  %v575 = vmul.f32 %v494, %v494
  %v576 = vmul.f32 %v495, %v495
  %v577 = vmul.f32 %v496, %v496
  %v578 = vmul.f32 %v497, %v497
  %v579 = vmul.f32 %v498, %v498
  %v580 = vmul.f32 %v499, %v499
  %v581 = vmul.f32 %v500, %v500
  %v582 = vmul.f32 %v501, %v501
  %v583 = vmul.f32 %v502, %v502
  %v584 = vmul.f32 %v503, %v503
  %v585 = vmul.f32 %v504, %v504
  %v586 = vmul.f32 %v505, %v505
  %v587 = vmul.f32 %v506, %v506
  %v588 = vmul.f32 %v507, %v507
  %v589 = vmul.f32 %v508, %v508
  %v590 = vmul.f32 %v509, %v509
  %v591 = vmul.f32 %v510, %v510
  %v592 = vmul.f32 %v511, %v511
  %v593 = vmul.f32 %v512, %v512
  %v594 = vmul.f32 %v513, %v513
  %v595 = vmul.f32 %v514, %v514
  %v596 = vmul.f32 %v515, %v515
  %v597 = vmul.f32 %v516, %v516
  %v598 = vmul.f32 %v517, %v517
  %v599 = vmul.f32 %v518, %v518
  %v600 = vmul.f32 %v519, %v519
  %v601 = vmul.f32 %v520, %v520
  %v602 = vmul.f32 %v521, %v521
  %v603 = vsel %vm179, %v522, 0.0
  %v604 = vsel %vm179, %v523, 0.0
  %v605 = vadd.f32 %v603, %v604
  %v606 = vsel %vm179, %v524, 0.0
  %v607 = vadd.f32 %v605, %v606
  %v608 = vsel %vm179, %v525, 0.0
  %v609 = vadd.f32 %v607, %v608
  %v610 = vsel %vm179, %v526, 0.0
  %v611 = vadd.f32 %v609, %v610
  %v612 = vsel %vm179, %v527, 0.0
  %v613 = vadd.f32 %v611, %v612
  %v614 = vsel %vm179, %v528, 0.0
  %v615 = vadd.f32 %v613, %v614
  %v616 = vsel %vm179, %v529, 0.0
  %v617 = vadd.f32 %v615, %v616
  %v618 = vsel %vm179, %v530, 0.0
  %v619 = vadd.f32 %v617, %v618
  %v620 = vsel %vm179, %v531, 0.0
  %v621 = vadd.f32 %v619, %v620
  %v622 = vsel %vm179, %v532, 0.0
  %v623 = vadd.f32 %v621, %v622
  %v624 = vsel %vm179, %v533, 0.0
  %v625 = vadd.f32 %v623, %v624
  %v626 = vsel %vm179, %v534, 0.0
  %v627 = vadd.f32 %v625, %v626
  %v628 = vsel %vm179, %v535, 0.0
  %v629 = vadd.f32 %v627, %v628
  %v630 = vsel %vm179, %v536, 0.0
  %v631 = vadd.f32 %v629, %v630
  %v632 = vsel %vm179, %v537, 0.0
  %v633 = vadd.f32 %v631, %v632
  %v634 = vsel %vm179, %v538, 0.0
  %v635 = vadd.f32 %v633, %v634
  %v636 = vsel %vm179, %v539, 0.0
  %v637 = vadd.f32 %v635, %v636
  %v638 = vsel %vm179, %v540, 0.0
  %v639 = vadd.f32 %v637, %v638
  %v640 = vsel %vm179, %v541, 0.0
  %v641 = vadd.f32 %v639, %v640
  %v642 = vsel %vm179, %v542, 0.0
  %v643 = vadd.f32 %v641, %v642
  %v644 = vsel %vm179, %v543, 0.0
  %v645 = vadd.f32 %v643, %v644
  %v646 = vsel %vm179, %v544, 0.0
  %v647 = vadd.f32 %v645, %v646
  %v648 = vsel %vm179, %v545, 0.0
  %v649 = vadd.f32 %v647, %v648
  %v650 = vsel %vm179, %v546, 0.0
  %v651 = vadd.f32 %v649, %v650
  %v652 = vsel %vm179, %v547, 0.0
  %v653 = vadd.f32 %v651, %v652
  %v654 = vsel %vm179, %v548, 0.0
  %v655 = vadd.f32 %v653, %v654
  %v656 = vsel %vm179, %v549, 0.0
  %v657 = vadd.f32 %v655, %v656
  %v658 = vsel %vm179, %v550, 0.0
  %v659 = vadd.f32 %v657, %v658
  %v660 = vsel %vm179, %v551, 0.0
  %v661 = vadd.f32 %v659, %v660
  %v662 = vsel %vm179, %v552, 0.0
  %v663 = vadd.f32 %v661, %v662
  %v664 = vsel %vm179, %v553, 0.0
  %v665 = vadd.f32 %v663, %v664
  %v666 = vsel %vm179, %v554, 0.0
  %v667 = vadd.f32 %v665, %v666
  %v668 = vsel %vm179, %v555, 0.0
  %v669 = vadd.f32 %v667, %v668
  %v670 = vsel %vm179, %v556, 0.0
  %v671 = vadd.f32 %v669, %v670
  %v672 = vsel %vm179, %v557, 0.0
  %v673 = vadd.f32 %v671, %v672
  %v674 = vsel %vm179, %v558, 0.0
  %v675 = vadd.f32 %v673, %v674
  %v676 = vsel %vm179, %v559, 0.0
  %v677 = vadd.f32 %v675, %v676
  %v678 = vsel %vm179, %v560, 0.0
  %v679 = vadd.f32 %v677, %v678
  %v680 = vsel %vm179, %v561, 0.0
  %v681 = vadd.f32 %v679, %v680
  %v682 = vsel %vm179, %v562, 0.0
  %v683 = vadd.f32 %v681, %v682
  %v684 = vsel %vm179, %v563, 0.0
  %v685 = vadd.f32 %v683, %v684
  %v686 = vsel %vm179, %v564, 0.0
  %v687 = vadd.f32 %v685, %v686
  %v688 = vsel %vm179, %v565, 0.0
  %v689 = vadd.f32 %v687, %v688
  %v690 = vsel %vm179, %v566, 0.0
  %v691 = vadd.f32 %v689, %v690
  %v692 = vsel %vm179, %v567, 0.0
  %v693 = vadd.f32 %v691, %v692
  %v694 = vsel %vm179, %v568, 0.0
  %v695 = vadd.f32 %v693, %v694
  %v696 = vsel %vm179, %v569, 0.0
  %v697 = vadd.f32 %v695, %v696
  %v698 = vsel %vm179, %v570, 0.0
  %v699 = vadd.f32 %v697, %v698
  %v700 = vsel %vm179, %v571, 0.0
  %v701 = vadd.f32 %v699, %v700
  %v702 = vsel %vm179, %v572, 0.0
  %v703 = vadd.f32 %v701, %v702
  %v704 = vsel %vm179, %v573, 0.0
  %v705 = vadd.f32 %v703, %v704
  %v706 = vsel %vm179, %v574, 0.0
  %v707 = vadd.f32 %v705, %v706
  %v708 = vsel %vm179, %v575, 0.0
  %v709 = vadd.f32 %v707, %v708
  %v710 = vsel %vm179, %v576, 0.0
  %v711 = vadd.f32 %v709, %v710
  %v712 = vsel %vm179, %v577, 0.0
  %v713 = vadd.f32 %v711, %v712
  %v714 = vsel %vm179, %v578, 0.0
  %v715 = vadd.f32 %v713, %v714
  %v716 = vsel %vm179, %v579, 0.0
  %v717 = vadd.f32 %v715, %v716
  %v718 = vsel %vm179, %v580, 0.0
  %v719 = vadd.f32 %v717, %v718
  %v720 = vsel %vm179, %v581, 0.0
  %v721 = vadd.f32 %v719, %v720
  %v722 = vsel %vm179, %v582, 0.0
  %v723 = vadd.f32 %v721, %v722
  %v724 = vsel %vm179, %v583, 0.0
  %v725 = vadd.f32 %v723, %v724
  %v726 = vsel %vm179, %v584, 0.0
  %v727 = vadd.f32 %v725, %v726
  %v728 = vsel %vm179, %v585, 0.0
  %v729 = vadd.f32 %v727, %v728
  %v730 = vsel %vm179, %v586, 0.0
  %v731 = vadd.f32 %v729, %v730
  %v732 = vsel %vm179, %v587, 0.0
  %v733 = vadd.f32 %v731, %v732
  %v734 = vsel %vm179, %v588, 0.0
  %v735 = vadd.f32 %v733, %v734
  %v736 = vsel %vm179, %v589, 0.0
  %v737 = vadd.f32 %v735, %v736
  %v738 = vsel %vm179, %v590, 0.0
  %v739 = vadd.f32 %v737, %v738
  %v740 = vsel %vm179, %v591, 0.0
  %v741 = vadd.f32 %v739, %v740
  %v742 = vsel %vm179, %v592, 0.0
  %v743 = vadd.f32 %v741, %v742
  %v744 = vsel %vm179, %v593, 0.0
  %v745 = vadd.f32 %v743, %v744
  %v746 = vsel %vm179, %v594, 0.0
  %v747 = vadd.f32 %v745, %v746
  %v748 = vsel %vm179, %v595, 0.0
  %v749 = vadd.f32 %v747, %v748
  %v750 = vsel %vm179, %v596, 0.0
  %v751 = vadd.f32 %v749, %v750
  %v752 = vsel %vm179, %v597, 0.0
  %v753 = vadd.f32 %v751, %v752
  %v754 = vsel %vm179, %v598, 0.0
  %v755 = vadd.f32 %v753, %v754
  %v756 = vsel %vm179, %v599, 0.0
  %v757 = vadd.f32 %v755, %v756
  %v758 = vsel %vm179, %v600, 0.0
  %v759 = vadd.f32 %v757, %v758
  %v760 = vsel %vm179, %v601, 0.0
  %v761 = vadd.f32 %v759, %v760
  %v762 = vsel %vm179, %v602, 0.0
  %v763 = vadd.f32 %v761, %v762
  %v764 = vrot.slane %v763, 4
  %v765 = vadd.f32 %v763, %v764
  %v766 = vrot.slane %v765, 2
  %v767 = vadd.f32 %v765, %v766
  %v768 = vrot.slane %v767, 1
  %v769 = vadd.f32 %v767, %v768
  %v770 = vmul.f32 %v769, 0.001953125
  %v771 = vadd.f32 %v770, 1e-05
  %v772 = vrsqrt.pop %v771
  %v773 = vmul.f32 %v772, %v771
  %v774 = vmul.f32 %v773, %v772
  %v775 = vmul.f32 0.5, %v774
  %v776 = vsub.f32 1.5, %v775
  %v777 = vmul.f32 %v772, %v776
  %vm778 = vweird.f32 %v771
  %vm779 = vweird.f32 %v772
  %vm780 = vmor %vm778, %vm779
  %v781 = vsel %vm780, %v772, %v777
  %v782 = vmul.f32 %v186, %v781
  %v783 = vmul.f32 %v359, %v782
  %v784 = vsub.f32 %v187, %v783
  %v785 = vperm.slane %v782, 0
  %v786 = vmul.f32 %v17, %v785
  %v787 = vmul.f32 %v18, %v785
  %v788 = vmul.f32 %v19, %v785
  %v789 = vmul.f32 %v20, %v785
  %v790 = vmul.f32 %v21, %v785
  %v791 = vmul.f32 %v22, %v785
  %v792 = vmul.f32 %v23, %v785
  %v793 = vmul.f32 %v24, %v785
  %v794 = vmul.f32 %v25, %v785
  %v795 = vmul.f32 %v26, %v785
  %v796 = vmul.f32 %v27, %v785
  %v797 = vmul.f32 %v28, %v785
  %v798 = vmul.f32 %v29, %v785
  %v799 = vmul.f32 %v30, %v785
  %v800 = vmul.f32 %v31, %v785
  %v801 = vmul.f32 %v32, %v785
  %v802 = vmul.f32 %v33, %v785
  %v803 = vmul.f32 %v34, %v785
  %v804 = vmul.f32 %v35, %v785
  %v805 = vmul.f32 %v36, %v785
  %v806 = vmul.f32 %v37, %v785
  %v807 = vmul.f32 %v38, %v785
  %v808 = vmul.f32 %v39, %v785
  %v809 = vmul.f32 %v40, %v785
  %v810 = vmul.f32 %v41, %v785
  %v811 = vmul.f32 %v42, %v785
  %v812 = vmul.f32 %v43, %v785
  %v813 = vmul.f32 %v44, %v785
  %v814 = vmul.f32 %v45, %v785
  %v815 = vmul.f32 %v46, %v785
  %v816 = vmul.f32 %v47, %v785
  %v817 = vmul.f32 %v48, %v785
  %v818 = vmul.f32 %v49, %v785
  %v819 = vmul.f32 %v50, %v785
  %v820 = vmul.f32 %v51, %v785
  %v821 = vmul.f32 %v52, %v785
  %v822 = vmul.f32 %v53, %v785
  %v823 = vmul.f32 %v54, %v785
  %v824 = vmul.f32 %v55, %v785
  %v825 = vmul.f32 %v56, %v785
  %v826 = vmul.f32 %v57, %v785
  %v827 = vmul.f32 %v58, %v785
  %v828 = vmul.f32 %v59, %v785
  %v829 = vmul.f32 %v60, %v785
  %v830 = vmul.f32 %v61, %v785
  %v831 = vmul.f32 %v62, %v785
  %v832 = vmul.f32 %v63, %v785
  %v833 = vmul.f32 %v64, %v785
  %v834 = vmul.f32 %v65, %v785
  %v835 = vmul.f32 %v66, %v785
  %v836 = vmul.f32 %v67, %v785
  %v837 = vmul.f32 %v68, %v785
  %v838 = vmul.f32 %v69, %v785
  %v839 = vmul.f32 %v70, %v785
  %v840 = vmul.f32 %v71, %v785
  %v841 = vmul.f32 %v72, %v785
  %v842 = vmul.f32 %v73, %v785
  %v843 = vmul.f32 %v74, %v785
  %v844 = vmul.f32 %v75, %v785
  %v845 = vmul.f32 %v76, %v785
  %v846 = vmul.f32 %v77, %v785
  %v847 = vmul.f32 %v78, %v785
  %v848 = vmul.f32 %v79, %v785
  %v849 = vmul.f32 %v80, %v785
  %v850 = vmul.f32 %v81, %v785
  %v851 = vmul.f32 %v82, %v785
  %v852 = vmul.f32 %v83, %v785
  %v853 = vmul.f32 %v84, %v785
  %v854 = vmul.f32 %v85, %v785
  %v855 = vmul.f32 %v86, %v785
  %v856 = vmul.f32 %v87, %v785
  %v857 = vmul.f32 %v88, %v785
  %v858 = vmul.f32 %v89, %v785
  %v859 = vmul.f32 %v90, %v785
  %v860 = vmul.f32 %v91, %v785
  %v861 = vmul.f32 %v92, %v785
  %v862 = vmul.f32 %v93, %v785
  %v863 = vmul.f32 %v94, %v785
  %v864 = vmul.f32 %v95, %v785
  %v865 = vmul.f32 %v96, %v785
  %v866 = vmul.f32 %v97, %v785
  %v867 = vperm.slane %v784, 0
  %v868 = vadd.f32 %v786, %v867
  %v869 = vadd.f32 %v787, %v867
  %v870 = vadd.f32 %v788, %v867
  %v871 = vadd.f32 %v789, %v867
  %v872 = vadd.f32 %v790, %v867
  %v873 = vadd.f32 %v791, %v867
  %v874 = vadd.f32 %v792, %v867
  %v875 = vadd.f32 %v793, %v867
  %v876 = vadd.f32 %v794, %v867
  %v877 = vadd.f32 %v795, %v867
  %v878 = vadd.f32 %v796, %v867
  %v879 = vadd.f32 %v797, %v867
  %v880 = vadd.f32 %v798, %v867
  %v881 = vadd.f32 %v799, %v867
  %v882 = vadd.f32 %v800, %v867
  %v883 = vadd.f32 %v801, %v867
  %v884 = vadd.f32 %v802, %v867
  %v885 = vadd.f32 %v803, %v867
  %v886 = vadd.f32 %v804, %v867
  %v887 = vadd.f32 %v805, %v867
  %v888 = vadd.f32 %v806, %v867
  %v889 = vadd.f32 %v807, %v867
  %v890 = vadd.f32 %v808, %v867
  %v891 = vadd.f32 %v809, %v867
  %v892 = vadd.f32 %v810, %v867
  %v893 = vadd.f32 %v811, %v867
  %v894 = vadd.f32 %v812, %v867
  %v895 = vadd.f32 %v813, %v867
  %v896 = vadd.f32 %v814, %v867
  %v897 = vadd.f32 %v815, %v867
  %v898 = vadd.f32 %v816, %v867
  %v899 = vadd.f32 %v817, %v867
  %v900 = vadd.f32 %v818, %v867
  %v901 = vadd.f32 %v819, %v867
  %v902 = vadd.f32 %v820, %v867
  %v903 = vadd.f32 %v821, %v867
  %v904 = vadd.f32 %v822, %v867
  %v905 = vadd.f32 %v823, %v867
  %v906 = vadd.f32 %v824, %v867
  %v907 = vadd.f32 %v825, %v867
  %v908 = vadd.f32 %v826, %v867
  %v909 = vadd.f32 %v827, %v867
  %v910 = vadd.f32 %v828, %v867
  %v911 = vadd.f32 %v829, %v867
  %v912 = vadd.f32 %v830, %v867
  %v913 = vadd.f32 %v831, %v867
  %v914 = vadd.f32 %v832, %v867
  %v915 = vadd.f32 %v833, %v867
  %v916 = vadd.f32 %v834, %v867
  %v917 = vadd.f32 %v835, %v867
  %v918 = vadd.f32 %v836, %v867
  %v919 = vadd.f32 %v837, %v867
  %v920 = vadd.f32 %v838, %v867
  %v921 = vadd.f32 %v839, %v867
  %v922 = vadd.f32 %v840, %v867
  %v923 = vadd.f32 %v841, %v867
  %v924 = vadd.f32 %v842, %v867
  %v925 = vadd.f32 %v843, %v867
  %v926 = vadd.f32 %v844, %v867
  %v927 = vadd.f32 %v845, %v867
  %v928 = vadd.f32 %v846, %v867
  %v929 = vadd.f32 %v847, %v867
  %v930 = vadd.f32 %v848, %v867
  %v931 = vadd.f32 %v849, %v867
  %v932 = vadd.f32 %v850, %v867
  %v933 = vadd.f32 %v851, %v867
  %v934 = vadd.f32 %v852, %v867
  %v935 = vadd.f32 %v853, %v867
  %v936 = vadd.f32 %v854, %v867
  %v937 = vadd.f32 %v855, %v867
  %v938 = vadd.f32 %v856, %v867
  %v939 = vadd.f32 %v857, %v867
  %v940 = vadd.f32 %v858, %v867
  %v941 = vadd.f32 %v859, %v867
  %v942 = vadd.f32 %v860, %v867
  %v943 = vadd.f32 %v861, %v867
  %v944 = vadd.f32 %v862, %v867
  %v945 = vadd.f32 %v863, %v867
  %v946 = vadd.f32 %v864, %v867
  %v947 = vadd.f32 %v865, %v867
  %v948 = vadd.f32 %v866, %v867
  %v949 = vmax.f32 %v868, 0.0
  %v950 = vmax.f32 %v869, 0.0
  %v951 = vmax.f32 %v870, 0.0
  %v952 = vmax.f32 %v871, 0.0
  %v953 = vmax.f32 %v872, 0.0
  %v954 = vmax.f32 %v873, 0.0
  %v955 = vmax.f32 %v874, 0.0
  %v956 = vmax.f32 %v875, 0.0
  %v957 = vmax.f32 %v876, 0.0
  %v958 = vmax.f32 %v877, 0.0
  %v959 = vmax.f32 %v878, 0.0
  %v960 = vmax.f32 %v879, 0.0
  %v961 = vmax.f32 %v880, 0.0
  %v962 = vmax.f32 %v881, 0.0
  %v963 = vmax.f32 %v882, 0.0
  %v964 = vmax.f32 %v883, 0.0
  %v965 = vmax.f32 %v884, 0.0
  %v966 = vmax.f32 %v885, 0.0
  %v967 = vmax.f32 %v886, 0.0
  %v968 = vmax.f32 %v887, 0.0
  %v969 = vmax.f32 %v888, 0.0
  %v970 = vmax.f32 %v889, 0.0
  %v971 = vmax.f32 %v890, 0.0
  %v972 = vmax.f32 %v891, 0.0
  %v973 = vmax.f32 %v892, 0.0
  %v974 = vmax.f32 %v893, 0.0
  %v975 = vmax.f32 %v894, 0.0
  %v976 = vmax.f32 %v895, 0.0
  %v977 = vmax.f32 %v896, 0.0
  %v978 = vmax.f32 %v897, 0.0
  %v979 = vmax.f32 %v898, 0.0
  %v980 = vmax.f32 %v899, 0.0
  %v981 = vmax.f32 %v900, 0.0
  %v982 = vmax.f32 %v901, 0.0
  %v983 = vmax.f32 %v902, 0.0
  %v984 = vmax.f32 %v903, 0.0
  %v985 = vmax.f32 %v904, 0.0
  %v986 = vmax.f32 %v905, 0.0
  %v987 = vmax.f32 %v906, 0.0
  %v988 = vmax.f32 %v907, 0.0
  %v989 = vmax.f32 %v908, 0.0
  %v990 = vmax.f32 %v909, 0.0
  %v991 = vmax.f32 %v910, 0.0
  %v992 = vmax.f32 %v911, 0.0
  %v993 = vmax.f32 %v912, 0.0
  %v994 = vmax.f32 %v913, 0.0
  %v995 = vmax.f32 %v914, 0.0
  %v996 = vmax.f32 %v915, 0.0
  %v997 = vmax.f32 %v916, 0.0
  %v998 = vmax.f32 %v917, 0.0
  %v999 = vmax.f32 %v918, 0.0
  %v1000 = vmax.f32 %v919, 0.0
  %v1001 = vmax.f32 %v920, 0.0
  %v1002 = vmax.f32 %v921, 0.0
  %v1003 = vmax.f32 %v922, 0.0
  %v1004 = vmax.f32 %v923, 0.0
  %v1005 = vmax.f32 %v924, 0.0
  %v1006 = vmax.f32 %v925, 0.0
  %v1007 = vmax.f32 %v926, 0.0
  %v1008 = vmax.f32 %v927, 0.0
  %v1009 = vmax.f32 %v928, 0.0
  %v1010 = vmax.f32 %v929, 0.0
  %v1011 = vmax.f32 %v930, 0.0
  %v1012 = vmax.f32 %v931, 0.0
  %v1013 = vmax.f32 %v932, 0.0
  %v1014 = vmax.f32 %v933, 0.0
  %v1015 = vmax.f32 %v934, 0.0
  %v1016 = vmax.f32 %v935, 0.0
  %v1017 = vmax.f32 %v936, 0.0
  %v1018 = vmax.f32 %v937, 0.0
  %v1019 = vmax.f32 %v938, 0.0
  %v1020 = vmax.f32 %v939, 0.0
  %v1021 = vmax.f32 %v940, 0.0
  %v1022 = vmax.f32 %v941, 0.0
  %v1023 = vmax.f32 %v942, 0.0
  %v1024 = vmax.f32 %v943, 0.0
  %v1025 = vmax.f32 %v944, 0.0
  %v1026 = vmax.f32 %v945, 0.0
  %v1027 = vmax.f32 %v946, 0.0
  %v1028 = vmax.f32 %v947, 0.0
  %v1029 = vmax.f32 %v948, 0.0
  %v1030 = vmul.f32 %v949, %v98
  %v1031 = vmul.f32 %v950, %v99
  %v1032 = vmul.f32 %v951, %v100
  %v1033 = vmul.f32 %v952, %v101
  %v1034 = vmul.f32 %v953, %v102
  %v1035 = vmul.f32 %v954, %v103
  %v1036 = vmul.f32 %v955, %v104
  %v1037 = vmul.f32 %v956, %v105
  %v1038 = vmul.f32 %v957, %v106
  %v1039 = vmul.f32 %v958, %v107
  %v1040 = vmul.f32 %v959, %v108
  %v1041 = vmul.f32 %v960, %v109
  %v1042 = vmul.f32 %v961, %v110
  %v1043 = vmul.f32 %v962, %v111
  %v1044 = vmul.f32 %v963, %v112
  %v1045 = vmul.f32 %v964, %v113
  %v1046 = vmul.f32 %v965, %v114
  %v1047 = vmul.f32 %v966, %v115
  %v1048 = vmul.f32 %v967, %v116
  %v1049 = vmul.f32 %v968, %v117
  %v1050 = vmul.f32 %v969, %v118
  %v1051 = vmul.f32 %v970, %v119
  %v1052 = vmul.f32 %v971, %v120
  %v1053 = vmul.f32 %v972, %v121
  %v1054 = vmul.f32 %v973, %v122
  %v1055 = vmul.f32 %v974, %v123
  %v1056 = vmul.f32 %v975, %v124
  %v1057 = vmul.f32 %v976, %v125
  %v1058 = vmul.f32 %v977, %v126
  %v1059 = vmul.f32 %v978, %v127
  %v1060 = vmul.f32 %v979, %v128
  %v1061 = vmul.f32 %v980, %v129
  %v1062 = vmul.f32 %v981, %v130
  %v1063 = vmul.f32 %v982, %v131
  %v1064 = vmul.f32 %v983, %v132
  %v1065 = vmul.f32 %v984, %v133
  %v1066 = vmul.f32 %v985, %v134
  %v1067 = vmul.f32 %v986, %v135
  %v1068 = vmul.f32 %v987, %v136
  %v1069 = vmul.f32 %v988, %v137
  %v1070 = vmul.f32 %v989, %v138
  %v1071 = vmul.f32 %v990, %v139
  %v1072 = vmul.f32 %v991, %v140
  %v1073 = vmul.f32 %v992, %v141
  %v1074 = vmul.f32 %v993, %v142
  %v1075 = vmul.f32 %v994, %v143
  %v1076 = vmul.f32 %v995, %v144
  %v1077 = vmul.f32 %v996, %v145
  %v1078 = vmul.f32 %v997, %v146
  %v1079 = vmul.f32 %v998, %v147
  %v1080 = vmul.f32 %v999, %v148
  %v1081 = vmul.f32 %v1000, %v149
  %v1082 = vmul.f32 %v1001, %v150
  %v1083 = vmul.f32 %v1002, %v151
  %v1084 = vmul.f32 %v1003, %v152
  %v1085 = vmul.f32 %v1004, %v153
  %v1086 = vmul.f32 %v1005, %v154
  %v1087 = vmul.f32 %v1006, %v155
  %v1088 = vmul.f32 %v1007, %v156
  %v1089 = vmul.f32 %v1008, %v157
  %v1090 = vmul.f32 %v1009, %v158
  %v1091 = vmul.f32 %v1010, %v159
  %v1092 = vmul.f32 %v1011, %v160
  %v1093 = vmul.f32 %v1012, %v161
  %v1094 = vmul.f32 %v1013, %v162
  %v1095 = vmul.f32 %v1014, %v163
  %v1096 = vmul.f32 %v1015, %v164
  %v1097 = vmul.f32 %v1016, %v165
  %v1098 = vmul.f32 %v1017, %v166
  %v1099 = vmul.f32 %v1018, %v167
  %v1100 = vmul.f32 %v1019, %v168
  %v1101 = vmul.f32 %v1020, %v169
  %v1102 = vmul.f32 %v1021, %v170
  %v1103 = vmul.f32 %v1022, %v171
  %v1104 = vmul.f32 %v1023, %v172
  %v1105 = vmul.f32 %v1024, %v173
  %v1106 = vmul.f32 %v1025, %v174
  %v1107 = vmul.f32 %v1026, %v175
  %v1108 = vmul.f32 %v1027, %v176
  %v1109 = vmul.f32 %v1028, %v177
  %v1110 = vmul.f32 %v1029, %v178
  %1111 = vst.msk [vmem:[#allocation2 + $0x18] sm:$0xff] %vm179, %v1030
  %1112 = vst.msk [vmem:[#allocation2 + $0x20] sm:$0xff] %vm179, %v1031
  %1113 = vst.msk [vmem:[#allocation2 + $0x28] sm:$0xff] %vm179, %v1032
  %1114 = vst.msk [vmem:[#allocation2 + $0x30] sm:$0xff] %vm179, %v1033
  %1115 = vst.msk [vmem:[#allocation2 + $0x38] sm:$0xff] %vm179, %v1034
  %1116 = vst.msk [vmem:[#allocation2 + $0x40] sm:$0xff] %vm179, %v1035
  %1117 = vst.msk [vmem:[#allocation2 + $0x48] sm:$0xff] %vm179, %v1036
  %1118 = vst.msk [vmem:[#allocation2 + $0x50] sm:$0xff] %vm179, %v1037
  %1119 = vst.msk [vmem:[#allocation2 + $0x58] sm:$0xff] %vm179, %v1038
  %1120 = vst.msk [vmem:[#allocation2 + $0x60] sm:$0xff] %vm179, %v1039
  %1121 = vst.msk [vmem:[#allocation2 + $0x68] sm:$0xff] %vm179, %v1040
  %1122 = vst.msk [vmem:[#allocation2 + $0x70] sm:$0xff] %vm179, %v1041
  %1123 = vst.msk [vmem:[#allocation2 + $0x78] sm:$0xff] %vm179, %v1042
  %1124 = vst.msk [vmem:[#allocation2 + $0x80] sm:$0xff] %vm179, %v1043
  %1125 = vst.msk [vmem:[#allocation2 + $0x88] sm:$0xff] %vm179, %v1044
  %1126 = vst.msk [vmem:[#allocation2 + $0x90] sm:$0xff] %vm179, %v1045
  %1127 = vst.msk [vmem:[#allocation2 + $0x98] sm:$0xff] %vm179, %v1046
  %1128 = vst.msk [vmem:[#allocation2 + $0xa0] sm:$0xff] %vm179, %v1047
  %1129 = vst.msk [vmem:[#allocation2 + $0xa8] sm:$0xff] %vm179, %v1048
  %1130 = vst.msk [vmem:[#allocation2 + $0xb0] sm:$0xff] %vm179, %v1049
  %1131 = vst.msk [vmem:[#allocation2 + $0xb8] sm:$0xff] %vm179, %v1050
  %1132 = vst.msk [vmem:[#allocation2 + $0xc0] sm:$0xff] %vm179, %v1051
  %1133 = vst.msk [vmem:[#allocation2 + $0xc8] sm:$0xff] %vm179, %v1052
  %1134 = vst.msk [vmem:[#allocation2 + $0xd0] sm:$0xff] %vm179, %v1053
  %1135 = vst.msk [vmem:[#allocation2 + $0xd8] sm:$0xff] %vm179, %v1054
  %1136 = vst.msk [vmem:[#allocation2 + $0xe0] sm:$0xff] %vm179, %v1055
  %1137 = vst.msk [vmem:[#allocation2 + $0xe8] sm:$0xff] %vm179, %v1056
  %1138 = vst.msk [vmem:[#allocation2 + $0xf0] sm:$0xff] %vm179, %v1057
  %1139 = vst.msk [vmem:[#allocation2 + $0xf8] sm:$0xff] %vm179, %v1058
  %1140 = vst.msk [vmem:[#allocation2 + $0x100] sm:$0xff] %vm179, %v1059
  %1141 = vst.msk [vmem:[#allocation2 + $0x108] sm:$0xff] %vm179, %v1060
  %1142 = vst.msk [vmem:[#allocation2 + $0x110] sm:$0xff] %vm179, %v1061
  %1143 = vst.msk [vmem:[#allocation2 + $0x118] sm:$0xff] %vm179, %v1062
  %1144 = vst.msk [vmem:[#allocation2 + $0x120] sm:$0xff] %vm179, %v1063
  %1145 = vst.msk [vmem:[#allocation2 + $0x128] sm:$0xff] %vm179, %v1064
  %1146 = vst.msk [vmem:[#allocation2 + $0x130] sm:$0xff] %vm179, %v1065
  %1147 = vst.msk [vmem:[#allocation2 + $0x138] sm:$0xff] %vm179, %v1066
  %1148 = vst.msk [vmem:[#allocation2 + $0x140] sm:$0xff] %vm179, %v1067
  %1149 = vst.msk [vmem:[#allocation2 + $0x148] sm:$0xff] %vm179, %v1068
  %1150 = vst.msk [vmem:[#allocation2 + $0x150] sm:$0xff] %vm179, %v1069
  %1151 = vst.msk [vmem:[#allocation2 + $0x158] sm:$0xff] %vm179, %v1070
  %1152 = vst.msk [vmem:[#allocation2 + $0x160] sm:$0xff] %vm179, %v1071
  %1153 = vst.msk [vmem:[#allocation2 + $0x168] sm:$0xff] %vm179, %v1072
  %1154 = vst.msk [vmem:[#allocation2 + $0x170] sm:$0xff] %vm179, %v1073
  %1155 = vst.msk [vmem:[#allocation2 + $0x178] sm:$0xff] %vm179, %v1074
  %1156 = vst.msk [vmem:[#allocation2 + $0x180] sm:$0xff] %vm179, %v1075
  %1157 = vst.msk [vmem:[#allocation2 + $0x188] sm:$0xff] %vm179, %v1076
  %1158 = vst.msk [vmem:[#allocation2 + $0x190] sm:$0xff] %vm179, %v1077
  %1159 = vst.msk [vmem:[#allocation2 + $0x198] sm:$0xff] %vm179, %v1078
  %1160 = vst.msk [vmem:[#allocation2 + $0x1a0] sm:$0xff] %vm179, %v1079
  %1161 = vst.msk [vmem:[#allocation2 + $0x1a8] sm:$0xff] %vm179, %v1080
  %1162 = vst.msk [vmem:[#allocation2 + $0x1b0] sm:$0xff] %vm179, %v1081
  %1163 = vst.msk [vmem:[#allocation2 + $0x1b8] sm:$0xff] %vm179, %v1082
  %1164 = vst.msk [vmem:[#allocation2 + $0x1c0] sm:$0xff] %vm179, %v1083
  %1165 = vst.msk [vmem:[#allocation2 + $0x1c8] sm:$0xff] %vm179, %v1084
  %1166 = vst.msk [vmem:[#allocation2 + $0x1d0] sm:$0xff] %vm179, %v1085
  %1167 = vst.msk [vmem:[#allocation2 + $0x1d8] sm:$0xff] %vm179, %v1086
  %1168 = vst.msk [vmem:[#allocation2 + $0x1e0] sm:$0xff] %vm179, %v1087
  %1169 = vst.msk [vmem:[#allocation2 + $0x1e8] sm:$0xff] %vm179, %v1088
  %1170 = vst.msk [vmem:[#allocation2 + $0x1f0] sm:$0xff] %vm179, %v1089
  %1171 = vst.msk [vmem:[#allocation2 + $0x1f8] sm:$0xff] %vm179, %v1090
  %1172 = vst.msk [vmem:[#allocation2 + $0x200] sm:$0xff] %vm179, %v1091
  %1173 = vst.msk [vmem:[#allocation2 + $0x208] sm:$0xff] %vm179, %v1092
  %1174 = vst.msk [vmem:[#allocation2 + $0x210] sm:$0xff] %vm179, %v1093
  %1175 = vst.msk [vmem:[#allocation2 + $0x218] sm:$0xff] %vm179, %v1094
  %1176 = vst.msk [vmem:[#allocation2 + $0x220] sm:$0xff] %vm179, %v1095
  %1177 = vst.msk [vmem:[#allocation2 + $0x228] sm:$0xff] %vm179, %v1096
  %1178 = vst.msk [vmem:[#allocation2 + $0x230] sm:$0xff] %vm179, %v1097
  %1179 = vst.msk [vmem:[#allocation2 + $0x238] sm:$0xff] %vm179, %v1098
  %1180 = vst.msk [vmem:[#allocation2 + $0x240] sm:$0xff] %vm179, %v1099
  %1181 = vst.msk [vmem:[#allocation2 + $0x248] sm:$0xff] %vm179, %v1100
  %1182 = vst.msk [vmem:[#allocation2 + $0x250] sm:$0xff] %vm179, %v1101
  %1183 = vst.msk [vmem:[#allocation2 + $0x258] sm:$0xff] %vm179, %v1102
  %1184 = vst.msk [vmem:[#allocation2 + $0x260] sm:$0xff] %vm179, %v1103
  %1185 = vst.msk [vmem:[#allocation2 + $0x268] sm:$0xff] %vm179, %v1104
  %1186 = vst.msk [vmem:[#allocation2 + $0x270] sm:$0xff] %vm179, %v1105
  %1187 = vst.msk [vmem:[#allocation2 + $0x278] sm:$0xff] %vm179, %v1106
  %1188 = vst.msk [vmem:[#allocation2 + $0x280] sm:$0xff] %vm179, %v1107
  %1189 = vst.msk [vmem:[#allocation2 + $0x288] sm:$0xff] %vm179, %v1108
  %1190 = vst.msk [vmem:[#allocation2 + $0x290] sm:$0xff] %vm179, %v1109
  %1191 = vst.msk [vmem:[#allocation2 + $0x298] sm:$0xff] %vm179, %v1110
  %v1192 = vld [vmem:[#allocation2 + $0x5] sm:$0xff]
  %v1193 = vld [vmem:[#allocation2 + $0xd] sm:$0xff]
  %v1194 = vld [vmem:[#allocation2 + $0x15] sm:$0xff]
  %v1195 = vld [vmem:[#allocation2 + $0x1d] sm:$0xff]
  %v1196 = vld [vmem:[#allocation2 + $0x25] sm:$0xff]
  %v1197 = vld [vmem:[#allocation2 + $0x2d] sm:$0xff]
  %v1198 = vld [vmem:[#allocation2 + $0x35] sm:$0xff]
  %v1199 = vld [vmem:[#allocation2 + $0x3d] sm:$0xff]
  %v1200 = vld [vmem:[#allocation2 + $0x45] sm:$0xff]
  %v1201 = vld [vmem:[#allocation2 + $0x4d] sm:$0xff]
  %v1202 = vld [vmem:[#allocation2 + $0x55] sm:$0xff]
  %v1203 = vld [vmem:[#allocation2 + $0x5d] sm:$0xff]
  %v1204 = vld [vmem:[#allocation2 + $0x65] sm:$0xff]
  %v1205 = vld [vmem:[#allocation2 + $0x6d] sm:$0xff]
  %v1206 = vld [vmem:[#allocation2 + $0x75] sm:$0xff]
  %v1207 = vld [vmem:[#allocation2 + $0x7d] sm:$0xff]
  %v1208 = vld [vmem:[#allocation2 + $0x85] sm:$0xff]
  %v1209 = vld [vmem:[#allocation2 + $0x8d] sm:$0xff]
  %v1210 = vld [vmem:[#allocation2 + $0x95] sm:$0xff]
  %v1211 = vld [vmem:[#allocation2 + $0x9d] sm:$0xff]
  %v1212 = vld [vmem:[#allocation2 + $0xa5] sm:$0xff]
  %v1213 = vld [vmem:[#allocation2 + $0xad] sm:$0xff]
  %v1214 = vld [vmem:[#allocation2 + $0xb5] sm:$0xff]
  %v1215 = vld [vmem:[#allocation2 + $0xbd] sm:$0xff]
  %v1216 = vld [vmem:[#allocation2 + $0xc5] sm:$0xff]
  %v1217 = vld [vmem:[#allocation2 + $0xcd] sm:$0xff]
  %v1218 = vld [vmem:[#allocation2 + $0xd5] sm:$0xff]
  %v1219 = vld [vmem:[#allocation2 + $0xdd] sm:$0xff]
  %v1220 = vld [vmem:[#allocation2 + $0xe5] sm:$0xff]
  %v1221 = vld [vmem:[#allocation2 + $0xed] sm:$0xff]
  %v1222 = vld [vmem:[#allocation2 + $0xf5] sm:$0xff]
  %v1223 = vld [vmem:[#allocation2 + $0xfd] sm:$0xff]
  %v1224 = vld [vmem:[#allocation2 + $0x105] sm:$0xff]
  %v1225 = vld [vmem:[#allocation2 + $0x10d] sm:$0xff]
  %v1226 = vld [vmem:[#allocation2 + $0x115] sm:$0xff]
  %v1227 = vld [vmem:[#allocation2 + $0x11d] sm:$0xff]
  %v1228 = vld [vmem:[#allocation2 + $0x125] sm:$0xff]
  %v1229 = vld [vmem:[#allocation2 + $0x12d] sm:$0xff]
  %v1230 = vld [vmem:[#allocation2 + $0x135] sm:$0xff]
  %v1231 = vld [vmem:[#allocation2 + $0x13d] sm:$0xff]
  %v1232 = vld [vmem:[#allocation2 + $0x145] sm:$0xff]
  %v1233 = vld [vmem:[#allocation2 + $0x14d] sm:$0xff]
  %v1234 = vld [vmem:[#allocation2 + $0x155] sm:$0xff]
  %v1235 = vld [vmem:[#allocation2 + $0x15d] sm:$0xff]
  %v1236 = vld [vmem:[#allocation2 + $0x165] sm:$0xff]
  %v1237 = vld [vmem:[#allocation2 + $0x16d] sm:$0xff]
  %v1238 = vld [vmem:[#allocation2 + $0x175] sm:$0xff]
  %v1239 = vld [vmem:[#allocation2 + $0x17d] sm:$0xff]
  %v1240 = vld [vmem:[#allocation2 + $0x185] sm:$0xff]
  %v1241 = vld [vmem:[#allocation2 + $0x18d] sm:$0xff]
  %v1242 = vld [vmem:[#allocation2 + $0x195] sm:$0xff]
  %v1243 = vld [vmem:[#allocation2 + $0x19d] sm:$0xff]
  %v1244 = vld [vmem:[#allocation2 + $0x1a5] sm:$0xff]
  %v1245 = vld [vmem:[#allocation2 + $0x1ad] sm:$0xff]
  %v1246 = vld [vmem:[#allocation2 + $0x1b5] sm:$0xff]
  %v1247 = vld [vmem:[#allocation2 + $0x1bd] sm:$0xff]
  %v1248 = vld [vmem:[#allocation2 + $0x1c5] sm:$0xff]
  %v1249 = vld [vmem:[#allocation2 + $0x1cd] sm:$0xff]
  %v1250 = vld [vmem:[#allocation2 + $0x1d5] sm:$0xff]
  %v1251 = vld [vmem:[#allocation2 + $0x1dd] sm:$0xff]
  %v1252 = vld [vmem:[#allocation2 + $0x1e5] sm:$0xff]
  %v1253 = vld [vmem:[#allocation2 + $0x1ed] sm:$0xff]
  %v1254 = vld [vmem:[#allocation2 + $0x1f5] sm:$0xff]
  %v1255 = vld [vmem:[#allocation2 + $0x1fd] sm:$0xff]
  %v1256 = vld [vmem:[#allocation2 + $0x205] sm:$0xff]
  %v1257 = vld [vmem:[#allocation2 + $0x20d] sm:$0xff]
  %v1258 = vld [vmem:[#allocation2 + $0x215] sm:$0xff]
  %v1259 = vld [vmem:[#allocation2 + $0x21d] sm:$0xff]
  %v1260 = vld [vmem:[#allocation2 + $0x225] sm:$0xff]
  %v1261 = vld [vmem:[#allocation2 + $0x22d] sm:$0xff]
  %v1262 = vld [vmem:[#allocation2 + $0x235] sm:$0xff]
  %v1263 = vld [vmem:[#allocation2 + $0x23d] sm:$0xff]
  %v1264 = vld [vmem:[#allocation2 + $0x245] sm:$0xff]
  %v1265 = vld [vmem:[#allocation2 + $0x24d] sm:$0xff]
  %v1266 = vld [vmem:[#allocation2 + $0x255] sm:$0xff]
  %v1267 = vld [vmem:[#allocation2 + $0x25d] sm:$0xff]
  %v1268 = vld [vmem:[#allocation2 + $0x265] sm:$0xff]
  %v1269 = vld [vmem:[#allocation2 + $0x26d] sm:$0xff]
  %v1270 = vld [vmem:[#allocation2 + $0x275] sm:$0xff]
  %v1271 = vld [vmem:[#allocation2 + $0x27d] sm:$0xff]
  %v1272 = vld [vmem:[#allocation2 + $0x285] sm:$0xff]
  %v1273 = vld [vmem:[%s3] sm:$0xf]
  %v1274 = vld [vmem:[#allocation2 + $0x6] sm:$0xff]
  %v1275 = vld [vmem:[#allocation2 + $0xe] sm:$0xff]
  %v1276 = vld [vmem:[#allocation2 + $0x16] sm:$0xff]
  %v1277 = vld [vmem:[#allocation2 + $0x1e] sm:$0xff]
  %v1278 = vld [vmem:[#allocation2 + $0x26] sm:$0xff]
  %v1279 = vld [vmem:[#allocation2 + $0x2e] sm:$0xff]
  %v1280 = vld [vmem:[#allocation2 + $0x36] sm:$0xff]
  %v1281 = vld [vmem:[#allocation2 + $0x3e] sm:$0xff]
  %v1282 = vld [vmem:[#allocation2 + $0x46] sm:$0xff]
  %v1283 = vld [vmem:[#allocation2 + $0x4e] sm:$0xff]
  %v1284 = vld [vmem:[#allocation2 + $0x56] sm:$0xff]
  %v1285 = vld [vmem:[#allocation2 + $0x5e] sm:$0xff]
  %v1286 = vld [vmem:[#allocation2 + $0x66] sm:$0xff]
  %v1287 = vld [vmem:[#allocation2 + $0x6e] sm:$0xff]
  %v1288 = vld [vmem:[#allocation2 + $0x76] sm:$0xff]
  %v1289 = vld [vmem:[#allocation2 + $0x7e] sm:$0xff]
  %v1290 = vld [vmem:[#allocation2 + $0x86] sm:$0xff]
  %v1291 = vld [vmem:[#allocation2 + $0x8e] sm:$0xff]
  %v1292 = vld [vmem:[#allocation2 + $0x96] sm:$0xff]
  %v1293 = vld [vmem:[#allocation2 + $0x9e] sm:$0xff]
  %v1294 = vld [vmem:[#allocation2 + $0xa6] sm:$0xff]
  %v1295 = vld [vmem:[#allocation2 + $0xae] sm:$0xff]
  %v1296 = vld [vmem:[#allocation2 + $0xb6] sm:$0xff]
  %v1297 = vld [vmem:[#allocation2 + $0xbe] sm:$0xff]
  %v1298 = vld [vmem:[#allocation2 + $0xc6] sm:$0xff]
  %v1299 = vld [vmem:[#allocation2 + $0xce] sm:$0xff]
  %v1300 = vld [vmem:[#allocation2 + $0xd6] sm:$0xff]
  %v1301 = vld [vmem:[#allocation2 + $0xde] sm:$0xff]
  %v1302 = vld [vmem:[#allocation2 + $0xe6] sm:$0xff]
  %v1303 = vld [vmem:[#allocation2 + $0xee] sm:$0xff]
  %v1304 = vld [vmem:[#allocation2 + $0xf6] sm:$0xff]
  %v1305 = vld [vmem:[#allocation2 + $0xfe] sm:$0xff]
  %v1306 = vld [vmem:[#allocation2 + $0x106] sm:$0xff]
  %v1307 = vld [vmem:[#allocation2 + $0x10e] sm:$0xff]
  %v1308 = vld [vmem:[#allocation2 + $0x116] sm:$0xff]
  %v1309 = vld [vmem:[#allocation2 + $0x11e] sm:$0xff]
  %v1310 = vld [vmem:[#allocation2 + $0x126] sm:$0xff]
  %v1311 = vld [vmem:[#allocation2 + $0x12e] sm:$0xff]
  %v1312 = vld [vmem:[#allocation2 + $0x136] sm:$0xff]
  %v1313 = vld [vmem:[#allocation2 + $0x13e] sm:$0xff]
  %v1314 = vld [vmem:[#allocation2 + $0x146] sm:$0xff]
  %v1315 = vld [vmem:[#allocation2 + $0x14e] sm:$0xff]
  %v1316 = vld [vmem:[#allocation2 + $0x156] sm:$0xff]
  %v1317 = vld [vmem:[#allocation2 + $0x15e] sm:$0xff]
  %v1318 = vld [vmem:[#allocation2 + $0x166] sm:$0xff]
  %v1319 = vld [vmem:[#allocation2 + $0x16e] sm:$0xff]
  %v1320 = vld [vmem:[#allocation2 + $0x176] sm:$0xff]
  %v1321 = vld [vmem:[#allocation2 + $0x17e] sm:$0xff]
  %v1322 = vld [vmem:[#allocation2 + $0x186] sm:$0xff]
  %v1323 = vld [vmem:[#allocation2 + $0x18e] sm:$0xff]
  %v1324 = vld [vmem:[#allocation2 + $0x196] sm:$0xff]
  %v1325 = vld [vmem:[#allocation2 + $0x19e] sm:$0xff]
  %v1326 = vld [vmem:[#allocation2 + $0x1a6] sm:$0xff]
  %v1327 = vld [vmem:[#allocation2 + $0x1ae] sm:$0xff]
  %v1328 = vld [vmem:[#allocation2 + $0x1b6] sm:$0xff]
  %v1329 = vld [vmem:[#allocation2 + $0x1be] sm:$0xff]
  %v1330 = vld [vmem:[#allocation2 + $0x1c6] sm:$0xff]
  %v1331 = vld [vmem:[#allocation2 + $0x1ce] sm:$0xff]
  %v1332 = vld [vmem:[#allocation2 + $0x1d6] sm:$0xff]
  %v1333 = vld [vmem:[#allocation2 + $0x1de] sm:$0xff]
  %v1334 = vld [vmem:[#allocation2 + $0x1e6] sm:$0xff]
  %v1335 = vld [vmem:[#allocation2 + $0x1ee] sm:$0xff]
  %v1336 = vld [vmem:[#allocation2 + $0x1f6] sm:$0xff]
  %v1337 = vld [vmem:[#allocation2 + $0x1fe] sm:$0xff]
  %v1338 = vld [vmem:[#allocation2 + $0x206] sm:$0xff]
  %v1339 = vld [vmem:[#allocation2 + $0x20e] sm:$0xff]
  %v1340 = vld [vmem:[#allocation2 + $0x216] sm:$0xff]
  %v1341 = vld [vmem:[#allocation2 + $0x21e] sm:$0xff]
  %v1342 = vld [vmem:[#allocation2 + $0x226] sm:$0xff]
  %v1343 = vld [vmem:[#allocation2 + $0x22e] sm:$0xff]
  %v1344 = vld [vmem:[#allocation2 + $0x236] sm:$0xff]
  %v1345 = vld [vmem:[#allocation2 + $0x23e] sm:$0xff]
  %v1346 = vld [vmem:[#allocation2 + $0x246] sm:$0xff]
  %v1347 = vld [vmem:[#allocation2 + $0x24e] sm:$0xff]
  %v1348 = vld [vmem:[#allocation2 + $0x256] sm:$0xff]
  %v1349 = vld [vmem:[#allocation2 + $0x25e] sm:$0xff]
  %v1350 = vld [vmem:[#allocation2 + $0x266] sm:$0xff]
  %v1351 = vld [vmem:[#allocation2 + $0x26e] sm:$0xff]
  %v1352 = vld [vmem:[#allocation2 + $0x276] sm:$0xff]
  %v1353 = vld [vmem:[#allocation2 + $0x27e] sm:$0xff]
  %v1354 = vld [vmem:[#allocation2 + $0x286] sm:$0xff]
  %s1355 = scalar_lea.vmem %s3, 4
  %v1356 = vld [vmem:[%s1355] sm:$0xf]
  %v1358 = vsel %vm179, %v1274, 0
  %v1361 = vsel %vm179, %v1275, 0
  %v1364 = vsel %vm179, %v1276, 0
  %v1367 = vsel %vm179, %v1277, 0
  %v1370 = vsel %vm179, %v1278, 0
  %v1373 = vsel %vm179, %v1279, 0
  %v1376 = vsel %vm179, %v1280, 0
  %v1379 = vsel %vm179, %v1281, 0
  %v1382 = vsel %vm179, %v1282, 0
  %v1385 = vsel %vm179, %v1283, 0
  %v1388 = vsel %vm179, %v1284, 0
  %v1391 = vsel %vm179, %v1285, 0
  %v1394 = vsel %vm179, %v1286, 0
  %v1397 = vsel %vm179, %v1287, 0
  %v1400 = vsel %vm179, %v1288, 0
  %v1403 = vsel %vm179, %v1289, 0
  %v1406 = vsel %vm179, %v1290, 0
  %v1409 = vsel %vm179, %v1291, 0
  %v1412 = vsel %vm179, %v1292, 0
  %v1415 = vsel %vm179, %v1293, 0
  %v1418 = vsel %vm179, %v1294, 0
  %v1421 = vsel %vm179, %v1295, 0
  %v1424 = vsel %vm179, %v1296, 0
  %v1427 = vsel %vm179, %v1297, 0
  %v1430 = vsel %vm179, %v1298, 0
  %v1433 = vsel %vm179, %v1299, 0
  %v1436 = vsel %vm179, %v1300, 0
  %v1439 = vsel %vm179, %v1301, 0
  %v1442 = vsel %vm179, %v1302, 0
  %v1445 = vsel %vm179, %v1303, 0
  %v1448 = vsel %vm179, %v1304, 0
  %v1451 = vsel %vm179, %v1305, 0
  %v1454 = vsel %vm179, %v1306, 0
  %v1457 = vsel %vm179, %v1307, 0
  %v1460 = vsel %vm179, %v1308, 0
  %v1463 = vsel %vm179, %v1309, 0
  %v1466 = vsel %vm179, %v1310, 0
  %v1469 = vsel %vm179, %v1311, 0
  %v1472 = vsel %vm179, %v1312, 0
  %v1475 = vsel %vm179, %v1313, 0
  %v1478 = vsel %vm179, %v1314, 0
  %v1481 = vsel %vm179, %v1315, 0
  %v1484 = vsel %vm179, %v1316, 0
  %v1487 = vsel %vm179, %v1317, 0
  %v1490 = vsel %vm179, %v1318, 0
  %v1493 = vsel %vm179, %v1319, 0
  %v1496 = vsel %vm179, %v1320, 0
  %v1499 = vsel %vm179, %v1321, 0
  %v1502 = vsel %vm179, %v1322, 0
  %v1505 = vsel %vm179, %v1323, 0
  %v1508 = vsel %vm179, %v1324, 0
  %v1511 = vsel %vm179, %v1325, 0
  %v1514 = vsel %vm179, %v1326, 0
  %v1517 = vsel %vm179, %v1327, 0
  %v1520 = vsel %vm179, %v1328, 0
  %v1523 = vsel %vm179, %v1329, 0
  %v1526 = vsel %vm179, %v1330, 0
  %v1529 = vsel %vm179, %v1331, 0
  %v1532 = vsel %vm179, %v1332, 0
  %v1535 = vsel %vm179, %v1333, 0
  %v1538 = vsel %vm179, %v1334, 0
  %v1541 = vsel %vm179, %v1335, 0
  %v1544 = vsel %vm179, %v1336, 0
  %v1547 = vsel %vm179, %v1337, 0
  %v1550 = vsel %vm179, %v1338, 0
  %v1553 = vsel %vm179, %v1339, 0
  %v1556 = vsel %vm179, %v1340, 0
  %v1559 = vsel %vm179, %v1341, 0
  %v1562 = vsel %vm179, %v1342, 0
  %v1565 = vsel %vm179, %v1343, 0
  %v1568 = vsel %vm179, %v1344, 0
  %v1571 = vsel %vm179, %v1345, 0
  %v1574 = vsel %vm179, %v1346, 0
  %v1577 = vsel %vm179, %v1347, 0
  %v1580 = vsel %vm179, %v1348, 0
  %v1583 = vsel %vm179, %v1349, 0
  %v1586 = vsel %vm179, %v1350, 0
  %v1589 = vsel %vm179, %v1351, 0
  %v1592 = vsel %vm179, %v1352, 0
  %v1595 = vsel %vm179, %v1353, 0
  %v1598 = vsel %vm179, %v1354, 0
  %vm1600 = vcmask 1043456
  %v1602 = vsel %vm1600, %v1356, 0
  %1604 = vmatpush.msra.mxu0 0.0
  %1605 = vmatpush.msra.mxu0 0.0
  %1606 = vmatpush.msra.mxu0 0.0
  %1607 = vmatpush.msra.mxu0 0.0
  %1608 = vmatpush.msra.mxu0 0.0
  %1609 = vmatpush.msra.mxu0 0.0
  %1610 = vmatpush.msra.mxu0 0.0
  %1611 = vmatpush.msra.mxu0 0.0
  %1612 = vmatpush.msra.mxu0 0.0
  %1613 = vmatpush.msra.mxu0 0.0
  %1614 = vmatpush.msra.mxu0 0.0
  %1615 = vmatpush.msra.mxu0 0.0
  %1616 = vmatpush.msra.mxu0 0.0
  %1617 = vmatpush.msra.mxu0 0.0
  %1618 = vmatpush.msra.mxu0 0.0
  %1619 = vmatpush.msra.mxu0 %v1602
  %1620 = vmatmul.f32.gmra.mxu0 %v1358
  %v1621 = vpop.f32.mrf.mxu0
  %v1622 = vadd.f32 0.0, %v1621
  %1623 = vmatmul.f32.gmra.mxu0 %v1361
  %v1624 = vpop.f32.mrf.mxu0
  %v1625 = vadd.f32 0.0, %v1624
  %1626 = vmatmul.f32.gmra.mxu0 %v1364
  %v1627 = vpop.f32.mrf.mxu0
  %v1628 = vadd.f32 0.0, %v1627
  %1629 = vmatmul.f32.gmra.mxu0 %v1367
  %v1630 = vpop.f32.mrf.mxu0
  %v1631 = vadd.f32 0.0, %v1630
  %1632 = vmatmul.f32.gmra.mxu0 %v1370
  %v1633 = vpop.f32.mrf.mxu0
  %v1634 = vadd.f32 0.0, %v1633
  %1635 = vmatmul.f32.gmra.mxu0 %v1373
  %v1636 = vpop.f32.mrf.mxu0
  %v1637 = vadd.f32 0.0, %v1636
  %1638 = vmatmul.f32.gmra.mxu0 %v1376
  %v1639 = vpop.f32.mrf.mxu0
  %v1640 = vadd.f32 0.0, %v1639
  %1641 = vmatmul.f32.gmra.mxu0 %v1379
  %v1642 = vpop.f32.mrf.mxu0
  %v1643 = vadd.f32 0.0, %v1642
  %1644 = vmatmul.f32.gmra.mxu0 %v1382
  %v1645 = vpop.f32.mrf.mxu0
  %v1646 = vadd.f32 0.0, %v1645
  %1647 = vmatmul.f32.gmra.mxu0 %v1385
  %v1648 = vpop.f32.mrf.mxu0
  %v1649 = vadd.f32 0.0, %v1648
  %1650 = vmatmul.f32.gmra.mxu0 %v1388
  %v1651 = vpop.f32.mrf.mxu0
  %v1652 = vadd.f32 0.0, %v1651
  %1653 = vmatmul.f32.gmra.mxu0 %v1391
  %v1654 = vpop.f32.mrf.mxu0
  %v1655 = vadd.f32 0.0, %v1654
  %1656 = vmatmul.f32.gmra.mxu0 %v1394
  %v1657 = vpop.f32.mrf.mxu0
  %v1658 = vadd.f32 0.0, %v1657
  %1659 = vmatmul.f32.gmra.mxu0 %v1397
  %v1660 = vpop.f32.mrf.mxu0
  %v1661 = vadd.f32 0.0, %v1660
  %1662 = vmatmul.f32.gmra.mxu0 %v1400
  %v1663 = vpop.f32.mrf.mxu0
  %v1664 = vadd.f32 0.0, %v1663
  %1665 = vmatmul.f32.gmra.mxu0 %v1403
  %v1666 = vpop.f32.mrf.mxu0
  %v1667 = vadd.f32 0.0, %v1666
  %1668 = vmatmul.f32.gmra.mxu0 %v1406
  %v1669 = vpop.f32.mrf.mxu0
  %v1670 = vadd.f32 0.0, %v1669
  %1671 = vmatmul.f32.gmra.mxu0 %v1409
  %v1672 = vpop.f32.mrf.mxu0
  %v1673 = vadd.f32 0.0, %v1672
  %1674 = vmatmul.f32.gmra.mxu0 %v1412
  %v1675 = vpop.f32.mrf.mxu0
  %v1676 = vadd.f32 0.0, %v1675
  %1677 = vmatmul.f32.gmra.mxu0 %v1415
  %v1678 = vpop.f32.mrf.mxu0
  %v1679 = vadd.f32 0.0, %v1678
  %1680 = vmatmul.f32.gmra.mxu0 %v1418
  %v1681 = vpop.f32.mrf.mxu0
  %v1682 = vadd.f32 0.0, %v1681
  %1683 = vmatmul.f32.gmra.mxu0 %v1421
  %v1684 = vpop.f32.mrf.mxu0
  %v1685 = vadd.f32 0.0, %v1684
  %1686 = vmatmul.f32.gmra.mxu0 %v1424
  %v1687 = vpop.f32.mrf.mxu0
  %v1688 = vadd.f32 0.0, %v1687
  %1689 = vmatmul.f32.gmra.mxu0 %v1427
  %v1690 = vpop.f32.mrf.mxu0
  %v1691 = vadd.f32 0.0, %v1690
  %1692 = vmatmul.f32.gmra.mxu0 %v1430
  %v1693 = vpop.f32.mrf.mxu0
  %v1694 = vadd.f32 0.0, %v1693
  %1695 = vmatmul.f32.gmra.mxu0 %v1433
  %v1696 = vpop.f32.mrf.mxu0
  %v1697 = vadd.f32 0.0, %v1696
  %1698 = vmatmul.f32.gmra.mxu0 %v1436
  %v1699 = vpop.f32.mrf.mxu0
  %v1700 = vadd.f32 0.0, %v1699
  %1701 = vmatmul.f32.gmra.mxu0 %v1439
  %v1702 = vpop.f32.mrf.mxu0
  %v1703 = vadd.f32 0.0, %v1702
  %1704 = vmatmul.f32.gmra.mxu0 %v1442
  %v1705 = vpop.f32.mrf.mxu0
  %v1706 = vadd.f32 0.0, %v1705
  %1707 = vmatmul.f32.gmra.mxu0 %v1445
  %v1708 = vpop.f32.mrf.mxu0
  %v1709 = vadd.f32 0.0, %v1708
  %1710 = vmatmul.f32.gmra.mxu0 %v1448
  %v1711 = vpop.f32.mrf.mxu0
  %v1712 = vadd.f32 0.0, %v1711
  %1713 = vmatmul.f32.gmra.mxu0 %v1451
  %v1714 = vpop.f32.mrf.mxu0
  %v1715 = vadd.f32 0.0, %v1714
  %1716 = vmatmul.f32.gmra.mxu0 %v1454
  %v1717 = vpop.f32.mrf.mxu0
  %v1718 = vadd.f32 0.0, %v1717
  %1719 = vmatmul.f32.gmra.mxu0 %v1457
  %v1720 = vpop.f32.mrf.mxu0
  %v1721 = vadd.f32 0.0, %v1720
  %1722 = vmatmul.f32.gmra.mxu0 %v1460
  %v1723 = vpop.f32.mrf.mxu0
  %v1724 = vadd.f32 0.0, %v1723
  %1725 = vmatmul.f32.gmra.mxu0 %v1463
  %v1726 = vpop.f32.mrf.mxu0
  %v1727 = vadd.f32 0.0, %v1726
  %1728 = vmatmul.f32.gmra.mxu0 %v1466
  %v1729 = vpop.f32.mrf.mxu0
  %v1730 = vadd.f32 0.0, %v1729
  %1731 = vmatmul.f32.gmra.mxu0 %v1469
  %v1732 = vpop.f32.mrf.mxu0
  %v1733 = vadd.f32 0.0, %v1732
  %1734 = vmatmul.f32.gmra.mxu0 %v1472
  %v1735 = vpop.f32.mrf.mxu0
  %v1736 = vadd.f32 0.0, %v1735
  %1737 = vmatmul.f32.gmra.mxu0 %v1475
  %v1738 = vpop.f32.mrf.mxu0
  %v1739 = vadd.f32 0.0, %v1738
  %1740 = vmatmul.f32.gmra.mxu0 %v1478
  %v1741 = vpop.f32.mrf.mxu0
  %v1742 = vadd.f32 0.0, %v1741
  %1743 = vmatmul.f32.gmra.mxu0 %v1481
  %v1744 = vpop.f32.mrf.mxu0
  %v1745 = vadd.f32 0.0, %v1744
  %1746 = vmatmul.f32.gmra.mxu0 %v1484
  %v1747 = vpop.f32.mrf.mxu0
  %v1748 = vadd.f32 0.0, %v1747
  %1749 = vmatmul.f32.gmra.mxu0 %v1487
  %v1750 = vpop.f32.mrf.mxu0
  %v1751 = vadd.f32 0.0, %v1750
  %1752 = vmatmul.f32.gmra.mxu0 %v1490
  %v1753 = vpop.f32.mrf.mxu0
  %v1754 = vadd.f32 0.0, %v1753
  %1755 = vmatmul.f32.gmra.mxu0 %v1493
  %v1756 = vpop.f32.mrf.mxu0
  %v1757 = vadd.f32 0.0, %v1756
  %1758 = vmatmul.f32.gmra.mxu0 %v1496
  %v1759 = vpop.f32.mrf.mxu0
  %v1760 = vadd.f32 0.0, %v1759
  %1761 = vmatmul.f32.gmra.mxu0 %v1499
  %v1762 = vpop.f32.mrf.mxu0
  %v1763 = vadd.f32 0.0, %v1762
  %1764 = vmatmul.f32.gmra.mxu0 %v1502
  %v1765 = vpop.f32.mrf.mxu0
  %v1766 = vadd.f32 0.0, %v1765
  %1767 = vmatmul.f32.gmra.mxu0 %v1505
  %v1768 = vpop.f32.mrf.mxu0
  %v1769 = vadd.f32 0.0, %v1768
  %1770 = vmatmul.f32.gmra.mxu0 %v1508
  %v1771 = vpop.f32.mrf.mxu0
  %v1772 = vadd.f32 0.0, %v1771
  %1773 = vmatmul.f32.gmra.mxu0 %v1511
  %v1774 = vpop.f32.mrf.mxu0
  %v1775 = vadd.f32 0.0, %v1774
  %1776 = vmatmul.f32.gmra.mxu0 %v1514
  %v1777 = vpop.f32.mrf.mxu0
  %v1778 = vadd.f32 0.0, %v1777
  %1779 = vmatmul.f32.gmra.mxu0 %v1517
  %v1780 = vpop.f32.mrf.mxu0
  %v1781 = vadd.f32 0.0, %v1780
  %1782 = vmatmul.f32.gmra.mxu0 %v1520
  %v1783 = vpop.f32.mrf.mxu0
  %v1784 = vadd.f32 0.0, %v1783
  %1785 = vmatmul.f32.gmra.mxu0 %v1523
  %v1786 = vpop.f32.mrf.mxu0
  %v1787 = vadd.f32 0.0, %v1786
  %1788 = vmatmul.f32.gmra.mxu0 %v1526
  %v1789 = vpop.f32.mrf.mxu0
  %v1790 = vadd.f32 0.0, %v1789
  %1791 = vmatmul.f32.gmra.mxu0 %v1529
  %v1792 = vpop.f32.mrf.mxu0
  %v1793 = vadd.f32 0.0, %v1792
  %1794 = vmatmul.f32.gmra.mxu0 %v1532
  %v1795 = vpop.f32.mrf.mxu0
  %v1796 = vadd.f32 0.0, %v1795
  %1797 = vmatmul.f32.gmra.mxu0 %v1535
  %v1798 = vpop.f32.mrf.mxu0
  %v1799 = vadd.f32 0.0, %v1798
  %1800 = vmatmul.f32.gmra.mxu0 %v1538
  %v1801 = vpop.f32.mrf.mxu0
  %v1802 = vadd.f32 0.0, %v1801
  %1803 = vmatmul.f32.gmra.mxu0 %v1541
  %v1804 = vpop.f32.mrf.mxu0
  %v1805 = vadd.f32 0.0, %v1804
  %1806 = vmatmul.f32.gmra.mxu0 %v1544
  %v1807 = vpop.f32.mrf.mxu0
  %v1808 = vadd.f32 0.0, %v1807
  %1809 = vmatmul.f32.gmra.mxu0 %v1547
  %v1810 = vpop.f32.mrf.mxu0
  %v1811 = vadd.f32 0.0, %v1810
  %1812 = vmatmul.f32.gmra.mxu0 %v1550
  %v1813 = vpop.f32.mrf.mxu0
  %v1814 = vadd.f32 0.0, %v1813
  %1815 = vmatmul.f32.gmra.mxu0 %v1553
  %v1816 = vpop.f32.mrf.mxu0
  %v1817 = vadd.f32 0.0, %v1816
  %1818 = vmatmul.f32.gmra.mxu0 %v1556
  %v1819 = vpop.f32.mrf.mxu0
  %v1820 = vadd.f32 0.0, %v1819
  %1821 = vmatmul.f32.gmra.mxu0 %v1559
  %v1822 = vpop.f32.mrf.mxu0
  %v1823 = vadd.f32 0.0, %v1822
  %1824 = vmatmul.f32.gmra.mxu0 %v1562
  %v1825 = vpop.f32.mrf.mxu0
  %v1826 = vadd.f32 0.0, %v1825
  %1827 = vmatmul.f32.gmra.mxu0 %v1565
  %v1828 = vpop.f32.mrf.mxu0
  %v1829 = vadd.f32 0.0, %v1828
  %1830 = vmatmul.f32.gmra.mxu0 %v1568
  %v1831 = vpop.f32.mrf.mxu0
  %v1832 = vadd.f32 0.0, %v1831
  %1833 = vmatmul.f32.gmra.mxu0 %v1571
  %v1834 = vpop.f32.mrf.mxu0
  %v1835 = vadd.f32 0.0, %v1834
  %1836 = vmatmul.f32.gmra.mxu0 %v1574
  %v1837 = vpop.f32.mrf.mxu0
  %v1838 = vadd.f32 0.0, %v1837
  %1839 = vmatmul.f32.gmra.mxu0 %v1577
  %v1840 = vpop.f32.mrf.mxu0
  %v1841 = vadd.f32 0.0, %v1840
  %1842 = vmatmul.f32.gmra.mxu0 %v1580
  %v1843 = vpop.f32.mrf.mxu0
  %v1844 = vadd.f32 0.0, %v1843
  %1845 = vmatmul.f32.gmra.mxu0 %v1583
  %v1846 = vpop.f32.mrf.mxu0
  %v1847 = vadd.f32 0.0, %v1846
  %1848 = vmatmul.f32.gmra.mxu0 %v1586
  %v1849 = vpop.f32.mrf.mxu0
  %v1850 = vadd.f32 0.0, %v1849
  %1851 = vmatmul.f32.gmra.mxu0 %v1589
  %v1852 = vpop.f32.mrf.mxu0
  %v1853 = vadd.f32 0.0, %v1852
  %1854 = vmatmul.f32.gmra.mxu0 %v1592
  %v1855 = vpop.f32.mrf.mxu0
  %v1856 = vadd.f32 0.0, %v1855
  %1857 = vmatmul.f32.gmra.mxu0 %v1595
  %v1858 = vpop.f32.mrf.mxu0
  %v1859 = vadd.f32 0.0, %v1858
  %1860 = vmatmul.f32.gmra.mxu0 %v1598
  %v1861 = vpop.f32.mrf.mxu0
  %v1862 = vadd.f32 0.0, %v1861
  %1863 = vdwg.mxu0
  %v1865 = vsel %vm179, %v1192, 0
  %v1868 = vsel %vm179, %v1193, 0
  %v1871 = vsel %vm179, %v1194, 0
  %v1874 = vsel %vm179, %v1195, 0
  %v1877 = vsel %vm179, %v1196, 0
  %v1880 = vsel %vm179, %v1197, 0
  %v1883 = vsel %vm179, %v1198, 0
  %v1886 = vsel %vm179, %v1199, 0
  %v1889 = vsel %vm179, %v1200, 0
  %v1892 = vsel %vm179, %v1201, 0
  %v1895 = vsel %vm179, %v1202, 0
  %v1898 = vsel %vm179, %v1203, 0
  %v1901 = vsel %vm179, %v1204, 0
  %v1904 = vsel %vm179, %v1205, 0
  %v1907 = vsel %vm179, %v1206, 0
  %v1910 = vsel %vm179, %v1207, 0
  %v1913 = vsel %vm179, %v1208, 0
  %v1916 = vsel %vm179, %v1209, 0
  %v1919 = vsel %vm179, %v1210, 0
  %v1922 = vsel %vm179, %v1211, 0
  %v1925 = vsel %vm179, %v1212, 0
  %v1928 = vsel %vm179, %v1213, 0
  %v1931 = vsel %vm179, %v1214, 0
  %v1934 = vsel %vm179, %v1215, 0
  %v1937 = vsel %vm179, %v1216, 0
  %v1940 = vsel %vm179, %v1217, 0
  %v1943 = vsel %vm179, %v1218, 0
  %v1946 = vsel %vm179, %v1219, 0
  %v1949 = vsel %vm179, %v1220, 0
  %v1952 = vsel %vm179, %v1221, 0
  %v1955 = vsel %vm179, %v1222, 0
  %v1958 = vsel %vm179, %v1223, 0
  %v1961 = vsel %vm179, %v1224, 0
  %v1964 = vsel %vm179, %v1225, 0
  %v1967 = vsel %vm179, %v1226, 0
  %v1970 = vsel %vm179, %v1227, 0
  %v1973 = vsel %vm179, %v1228, 0
  %v1976 = vsel %vm179, %v1229, 0
  %v1979 = vsel %vm179, %v1230, 0
  %v1982 = vsel %vm179, %v1231, 0
  %v1985 = vsel %vm179, %v1232, 0
  %v1988 = vsel %vm179, %v1233, 0
  %v1991 = vsel %vm179, %v1234, 0
  %v1994 = vsel %vm179, %v1235, 0
  %v1997 = vsel %vm179, %v1236, 0
  %v2000 = vsel %vm179, %v1237, 0
  %v2003 = vsel %vm179, %v1238, 0
  %v2006 = vsel %vm179, %v1239, 0
  %v2009 = vsel %vm179, %v1240, 0
  %v2012 = vsel %vm179, %v1241, 0
  %v2015 = vsel %vm179, %v1242, 0
  %v2018 = vsel %vm179, %v1243, 0
  %v2021 = vsel %vm179, %v1244, 0
  %v2024 = vsel %vm179, %v1245, 0
  %v2027 = vsel %vm179, %v1246, 0
  %v2030 = vsel %vm179, %v1247, 0
  %v2033 = vsel %vm179, %v1248, 0
  %v2036 = vsel %vm179, %v1249, 0
  %v2039 = vsel %vm179, %v1250, 0
  %v2042 = vsel %vm179, %v1251, 0
  %v2045 = vsel %vm179, %v1252, 0
  %v2048 = vsel %vm179, %v1253, 0
  %v2051 = vsel %vm179, %v1254, 0
  %v2054 = vsel %vm179, %v1255, 0
  %v2057 = vsel %vm179, %v1256, 0
  %v2060 = vsel %vm179, %v1257, 0
  %v2063 = vsel %vm179, %v1258, 0
  %v2066 = vsel %vm179, %v1259, 0
  %v2069 = vsel %vm179, %v1260, 0
  %v2072 = vsel %vm179, %v1261, 0
  %v2075 = vsel %vm179, %v1262, 0
  %v2078 = vsel %vm179, %v1263, 0
  %v2081 = vsel %vm179, %v1264, 0
  %v2084 = vsel %vm179, %v1265, 0
  %v2087 = vsel %vm179, %v1266, 0
  %v2090 = vsel %vm179, %v1267, 0
  %v2093 = vsel %vm179, %v1268, 0
  %v2096 = vsel %vm179, %v1269, 0
  %v2099 = vsel %vm179, %v1270, 0
  %v2102 = vsel %vm179, %v1271, 0
  %v2105 = vsel %vm179, %v1272, 0
  %v2108 = vsel %vm1600, %v1273, 0
  %2110 = vmatpush.msra.mxu0 0.0
  %2111 = vmatpush.msra.mxu0 0.0
  %2112 = vmatpush.msra.mxu0 0.0
  %2113 = vmatpush.msra.mxu0 0.0
  %2114 = vmatpush.msra.mxu0 0.0
  %2115 = vmatpush.msra.mxu0 0.0
  %2116 = vmatpush.msra.mxu0 0.0
  %2117 = vmatpush.msra.mxu0 0.0
  %2118 = vmatpush.msra.mxu0 0.0
  %2119 = vmatpush.msra.mxu0 0.0
  %2120 = vmatpush.msra.mxu0 0.0
  %2121 = vmatpush.msra.mxu0 0.0
  %2122 = vmatpush.msra.mxu0 0.0
  %2123 = vmatpush.msra.mxu0 0.0
  %2124 = vmatpush.msra.mxu0 0.0
  %2125 = vmatpush.msra.mxu0 %v2108
  %2126 = vmatmul.f32.gmra.mxu0 %v1865
  %v2127 = vpop.f32.mrf.mxu0
  %v2128 = vadd.f32 %v1622, %v2127
  %2129 = vmatmul.f32.gmra.mxu0 %v1868
  %v2130 = vpop.f32.mrf.mxu0
  %v2131 = vadd.f32 %v1625, %v2130
  %2132 = vmatmul.f32.gmra.mxu0 %v1871
  %v2133 = vpop.f32.mrf.mxu0
  %v2134 = vadd.f32 %v1628, %v2133
  %2135 = vmatmul.f32.gmra.mxu0 %v1874
  %v2136 = vpop.f32.mrf.mxu0
  %v2137 = vadd.f32 %v1631, %v2136
  %2138 = vmatmul.f32.gmra.mxu0 %v1877
  %v2139 = vpop.f32.mrf.mxu0
  %v2140 = vadd.f32 %v1634, %v2139
  %2141 = vmatmul.f32.gmra.mxu0 %v1880
  %v2142 = vpop.f32.mrf.mxu0
  %v2143 = vadd.f32 %v1637, %v2142
  %2144 = vmatmul.f32.gmra.mxu0 %v1883
  %v2145 = vpop.f32.mrf.mxu0
  %v2146 = vadd.f32 %v1640, %v2145
  %2147 = vmatmul.f32.gmra.mxu0 %v1886
  %v2148 = vpop.f32.mrf.mxu0
  %v2149 = vadd.f32 %v1643, %v2148
  %2150 = vmatmul.f32.gmra.mxu0 %v1889
  %v2151 = vpop.f32.mrf.mxu0
  %v2152 = vadd.f32 %v1646, %v2151
  %2153 = vmatmul.f32.gmra.mxu0 %v1892
  %v2154 = vpop.f32.mrf.mxu0
  %v2155 = vadd.f32 %v1649, %v2154
  %2156 = vmatmul.f32.gmra.mxu0 %v1895
  %v2157 = vpop.f32.mrf.mxu0
  %v2158 = vadd.f32 %v1652, %v2157
  %2159 = vmatmul.f32.gmra.mxu0 %v1898
  %v2160 = vpop.f32.mrf.mxu0
  %v2161 = vadd.f32 %v1655, %v2160
  %2162 = vmatmul.f32.gmra.mxu0 %v1901
  %v2163 = vpop.f32.mrf.mxu0
  %v2164 = vadd.f32 %v1658, %v2163
  %2165 = vmatmul.f32.gmra.mxu0 %v1904
  %v2166 = vpop.f32.mrf.mxu0
  %v2167 = vadd.f32 %v1661, %v2166
  %2168 = vmatmul.f32.gmra.mxu0 %v1907
  %v2169 = vpop.f32.mrf.mxu0
  %v2170 = vadd.f32 %v1664, %v2169
  %2171 = vmatmul.f32.gmra.mxu0 %v1910
  %v2172 = vpop.f32.mrf.mxu0
  %v2173 = vadd.f32 %v1667, %v2172
  %2174 = vmatmul.f32.gmra.mxu0 %v1913
  %v2175 = vpop.f32.mrf.mxu0
  %v2176 = vadd.f32 %v1670, %v2175
  %2177 = vmatmul.f32.gmra.mxu0 %v1916
  %v2178 = vpop.f32.mrf.mxu0
  %v2179 = vadd.f32 %v1673, %v2178
  %2180 = vmatmul.f32.gmra.mxu0 %v1919
  %v2181 = vpop.f32.mrf.mxu0
  %v2182 = vadd.f32 %v1676, %v2181
  %2183 = vmatmul.f32.gmra.mxu0 %v1922
  %v2184 = vpop.f32.mrf.mxu0
  %v2185 = vadd.f32 %v1679, %v2184
  %2186 = vmatmul.f32.gmra.mxu0 %v1925
  %v2187 = vpop.f32.mrf.mxu0
  %v2188 = vadd.f32 %v1682, %v2187
  %2189 = vmatmul.f32.gmra.mxu0 %v1928
  %v2190 = vpop.f32.mrf.mxu0
  %v2191 = vadd.f32 %v1685, %v2190
  %2192 = vmatmul.f32.gmra.mxu0 %v1931
  %v2193 = vpop.f32.mrf.mxu0
  %v2194 = vadd.f32 %v1688, %v2193
  %2195 = vmatmul.f32.gmra.mxu0 %v1934
  %v2196 = vpop.f32.mrf.mxu0
  %v2197 = vadd.f32 %v1691, %v2196
  %2198 = vmatmul.f32.gmra.mxu0 %v1937
  %v2199 = vpop.f32.mrf.mxu0
  %v2200 = vadd.f32 %v1694, %v2199
  %2201 = vmatmul.f32.gmra.mxu0 %v1940
  %v2202 = vpop.f32.mrf.mxu0
  %v2203 = vadd.f32 %v1697, %v2202
  %2204 = vmatmul.f32.gmra.mxu0 %v1943
  %v2205 = vpop.f32.mrf.mxu0
  %v2206 = vadd.f32 %v1700, %v2205
  %2207 = vmatmul.f32.gmra.mxu0 %v1946
  %v2208 = vpop.f32.mrf.mxu0
  %v2209 = vadd.f32 %v1703, %v2208
  %2210 = vmatmul.f32.gmra.mxu0 %v1949
  %v2211 = vpop.f32.mrf.mxu0
  %v2212 = vadd.f32 %v1706, %v2211
  %2213 = vmatmul.f32.gmra.mxu0 %v1952
  %v2214 = vpop.f32.mrf.mxu0
  %v2215 = vadd.f32 %v1709, %v2214
  %2216 = vmatmul.f32.gmra.mxu0 %v1955
  %v2217 = vpop.f32.mrf.mxu0
  %v2218 = vadd.f32 %v1712, %v2217
  %2219 = vmatmul.f32.gmra.mxu0 %v1958
  %v2220 = vpop.f32.mrf.mxu0
  %v2221 = vadd.f32 %v1715, %v2220
  %2222 = vmatmul.f32.gmra.mxu0 %v1961
  %v2223 = vpop.f32.mrf.mxu0
  %v2224 = vadd.f32 %v1718, %v2223
  %2225 = vmatmul.f32.gmra.mxu0 %v1964
  %v2226 = vpop.f32.mrf.mxu0
  %v2227 = vadd.f32 %v1721, %v2226
  %2228 = vmatmul.f32.gmra.mxu0 %v1967
  %v2229 = vpop.f32.mrf.mxu0
  %v2230 = vadd.f32 %v1724, %v2229
  %2231 = vmatmul.f32.gmra.mxu0 %v1970
  %v2232 = vpop.f32.mrf.mxu0
  %v2233 = vadd.f32 %v1727, %v2232
  %2234 = vmatmul.f32.gmra.mxu0 %v1973
  %v2235 = vpop.f32.mrf.mxu0
  %v2236 = vadd.f32 %v1730, %v2235
  %2237 = vmatmul.f32.gmra.mxu0 %v1976
  %v2238 = vpop.f32.mrf.mxu0
  %v2239 = vadd.f32 %v1733, %v2238
  %2240 = vmatmul.f32.gmra.mxu0 %v1979
  %v2241 = vpop.f32.mrf.mxu0
  %v2242 = vadd.f32 %v1736, %v2241
  %2243 = vmatmul.f32.gmra.mxu0 %v1982
  %v2244 = vpop.f32.mrf.mxu0
  %v2245 = vadd.f32 %v1739, %v2244
  %2246 = vmatmul.f32.gmra.mxu0 %v1985
  %v2247 = vpop.f32.mrf.mxu0
  %v2248 = vadd.f32 %v1742, %v2247
  %2249 = vmatmul.f32.gmra.mxu0 %v1988
  %v2250 = vpop.f32.mrf.mxu0
  %v2251 = vadd.f32 %v1745, %v2250
  %2252 = vmatmul.f32.gmra.mxu0 %v1991
  %v2253 = vpop.f32.mrf.mxu0
  %v2254 = vadd.f32 %v1748, %v2253
  %2255 = vmatmul.f32.gmra.mxu0 %v1994
  %v2256 = vpop.f32.mrf.mxu0
  %v2257 = vadd.f32 %v1751, %v2256
  %2258 = vmatmul.f32.gmra.mxu0 %v1997
  %v2259 = vpop.f32.mrf.mxu0
  %v2260 = vadd.f32 %v1754, %v2259
  %2261 = vmatmul.f32.gmra.mxu0 %v2000
  %v2262 = vpop.f32.mrf.mxu0
  %v2263 = vadd.f32 %v1757, %v2262
  %2264 = vmatmul.f32.gmra.mxu0 %v2003
  %v2265 = vpop.f32.mrf.mxu0
  %v2266 = vadd.f32 %v1760, %v2265
  %2267 = vmatmul.f32.gmra.mxu0 %v2006
  %v2268 = vpop.f32.mrf.mxu0
  %v2269 = vadd.f32 %v1763, %v2268
  %2270 = vmatmul.f32.gmra.mxu0 %v2009
  %v2271 = vpop.f32.mrf.mxu0
  %v2272 = vadd.f32 %v1766, %v2271
  %2273 = vmatmul.f32.gmra.mxu0 %v2012
  %v2274 = vpop.f32.mrf.mxu0
  %v2275 = vadd.f32 %v1769, %v2274
  %2276 = vmatmul.f32.gmra.mxu0 %v2015
  %v2277 = vpop.f32.mrf.mxu0
  %v2278 = vadd.f32 %v1772, %v2277
  %2279 = vmatmul.f32.gmra.mxu0 %v2018
  %v2280 = vpop.f32.mrf.mxu0
  %v2281 = vadd.f32 %v1775, %v2280
  %2282 = vmatmul.f32.gmra.mxu0 %v2021
  %v2283 = vpop.f32.mrf.mxu0
  %v2284 = vadd.f32 %v1778, %v2283
  %2285 = vmatmul.f32.gmra.mxu0 %v2024
  %v2286 = vpop.f32.mrf.mxu0
  %v2287 = vadd.f32 %v1781, %v2286
  %2288 = vmatmul.f32.gmra.mxu0 %v2027
  %v2289 = vpop.f32.mrf.mxu0
  %v2290 = vadd.f32 %v1784, %v2289
  %2291 = vmatmul.f32.gmra.mxu0 %v2030
  %v2292 = vpop.f32.mrf.mxu0
  %v2293 = vadd.f32 %v1787, %v2292
  %2294 = vmatmul.f32.gmra.mxu0 %v2033
  %v2295 = vpop.f32.mrf.mxu0
  %v2296 = vadd.f32 %v1790, %v2295
  %2297 = vmatmul.f32.gmra.mxu0 %v2036
  %v2298 = vpop.f32.mrf.mxu0
  %v2299 = vadd.f32 %v1793, %v2298
  %2300 = vmatmul.f32.gmra.mxu0 %v2039
  %v2301 = vpop.f32.mrf.mxu0
  %v2302 = vadd.f32 %v1796, %v2301
  %2303 = vmatmul.f32.gmra.mxu0 %v2042
  %v2304 = vpop.f32.mrf.mxu0
  %v2305 = vadd.f32 %v1799, %v2304
  %2306 = vmatmul.f32.gmra.mxu0 %v2045
  %v2307 = vpop.f32.mrf.mxu0
  %v2308 = vadd.f32 %v1802, %v2307
  %2309 = vmatmul.f32.gmra.mxu0 %v2048
  %v2310 = vpop.f32.mrf.mxu0
  %v2311 = vadd.f32 %v1805, %v2310
  %2312 = vmatmul.f32.gmra.mxu0 %v2051
  %v2313 = vpop.f32.mrf.mxu0
  %v2314 = vadd.f32 %v1808, %v2313
  %2315 = vmatmul.f32.gmra.mxu0 %v2054
  %v2316 = vpop.f32.mrf.mxu0
  %v2317 = vadd.f32 %v1811, %v2316
  %2318 = vmatmul.f32.gmra.mxu0 %v2057
  %v2319 = vpop.f32.mrf.mxu0
  %v2320 = vadd.f32 %v1814, %v2319
  %2321 = vmatmul.f32.gmra.mxu0 %v2060
  %v2322 = vpop.f32.mrf.mxu0
  %v2323 = vadd.f32 %v1817, %v2322
  %2324 = vmatmul.f32.gmra.mxu0 %v2063
  %v2325 = vpop.f32.mrf.mxu0
  %v2326 = vadd.f32 %v1820, %v2325
  %2327 = vmatmul.f32.gmra.mxu0 %v2066
  %v2328 = vpop.f32.mrf.mxu0
  %v2329 = vadd.f32 %v1823, %v2328
  %2330 = vmatmul.f32.gmra.mxu0 %v2069
  %v2331 = vpop.f32.mrf.mxu0
  %v2332 = vadd.f32 %v1826, %v2331
  %2333 = vmatmul.f32.gmra.mxu0 %v2072
  %v2334 = vpop.f32.mrf.mxu0
  %v2335 = vadd.f32 %v1829, %v2334
  %2336 = vmatmul.f32.gmra.mxu0 %v2075
  %v2337 = vpop.f32.mrf.mxu0
  %v2338 = vadd.f32 %v1832, %v2337
  %2339 = vmatmul.f32.gmra.mxu0 %v2078
  %v2340 = vpop.f32.mrf.mxu0
  %v2341 = vadd.f32 %v1835, %v2340
  %2342 = vmatmul.f32.gmra.mxu0 %v2081
  %v2343 = vpop.f32.mrf.mxu0
  %v2344 = vadd.f32 %v1838, %v2343
  %2345 = vmatmul.f32.gmra.mxu0 %v2084
  %v2346 = vpop.f32.mrf.mxu0
  %v2347 = vadd.f32 %v1841, %v2346
  %2348 = vmatmul.f32.gmra.mxu0 %v2087
  %v2349 = vpop.f32.mrf.mxu0
  %v2350 = vadd.f32 %v1844, %v2349
  %2351 = vmatmul.f32.gmra.mxu0 %v2090
  %v2352 = vpop.f32.mrf.mxu0
  %v2353 = vadd.f32 %v1847, %v2352
  %2354 = vmatmul.f32.gmra.mxu0 %v2093
  %v2355 = vpop.f32.mrf.mxu0
  %v2356 = vadd.f32 %v1850, %v2355
  %2357 = vmatmul.f32.gmra.mxu0 %v2096
  %v2358 = vpop.f32.mrf.mxu0
  %v2359 = vadd.f32 %v1853, %v2358
  %2360 = vmatmul.f32.gmra.mxu0 %v2099
  %v2361 = vpop.f32.mrf.mxu0
  %v2362 = vadd.f32 %v1856, %v2361
  %2363 = vmatmul.f32.gmra.mxu0 %v2102
  %v2364 = vpop.f32.mrf.mxu0
  %v2365 = vadd.f32 %v1859, %v2364
  %2366 = vmatmul.f32.gmra.mxu0 %v2105
  %v2367 = vpop.f32.mrf.mxu0
  %v2368 = vadd.f32 %v1862, %v2367
  %2369 = vdwg.mxu0
  %v2370 = vld [vmem:[#allocation2 + $0x7] sm:$0xff]
  %v2371 = vld [vmem:[#allocation2 + $0xf] sm:$0xff]
  %v2372 = vld [vmem:[#allocation2 + $0x17] sm:$0xff]
  %v2373 = vld [vmem:[#allocation2 + $0x1f] sm:$0xff]
  %v2374 = vld [vmem:[#allocation2 + $0x27] sm:$0xff]
  %v2375 = vld [vmem:[#allocation2 + $0x2f] sm:$0xff]
  %v2376 = vld [vmem:[#allocation2 + $0x37] sm:$0xff]
  %v2377 = vld [vmem:[#allocation2 + $0x3f] sm:$0xff]
  %v2378 = vld [vmem:[#allocation2 + $0x47] sm:$0xff]
  %v2379 = vld [vmem:[#allocation2 + $0x4f] sm:$0xff]
  %v2380 = vld [vmem:[#allocation2 + $0x57] sm:$0xff]
  %v2381 = vld [vmem:[#allocation2 + $0x5f] sm:$0xff]
  %v2382 = vld [vmem:[#allocation2 + $0x67] sm:$0xff]
  %v2383 = vld [vmem:[#allocation2 + $0x6f] sm:$0xff]
  %v2384 = vld [vmem:[#allocation2 + $0x77] sm:$0xff]
  %v2385 = vld [vmem:[#allocation2 + $0x7f] sm:$0xff]
  %v2386 = vld [vmem:[#allocation2 + $0x87] sm:$0xff]
  %v2387 = vld [vmem:[#allocation2 + $0x8f] sm:$0xff]
  %v2388 = vld [vmem:[#allocation2 + $0x97] sm:$0xff]
  %v2389 = vld [vmem:[#allocation2 + $0x9f] sm:$0xff]
  %v2390 = vld [vmem:[#allocation2 + $0xa7] sm:$0xff]
  %v2391 = vld [vmem:[#allocation2 + $0xaf] sm:$0xff]
  %v2392 = vld [vmem:[#allocation2 + $0xb7] sm:$0xff]
  %v2393 = vld [vmem:[#allocation2 + $0xbf] sm:$0xff]
  %v2394 = vld [vmem:[#allocation2 + $0xc7] sm:$0xff]
  %v2395 = vld [vmem:[#allocation2 + $0xcf] sm:$0xff]
  %v2396 = vld [vmem:[#allocation2 + $0xd7] sm:$0xff]
  %v2397 = vld [vmem:[#allocation2 + $0xdf] sm:$0xff]
  %v2398 = vld [vmem:[#allocation2 + $0xe7] sm:$0xff]
  %v2399 = vld [vmem:[#allocation2 + $0xef] sm:$0xff]
  %v2400 = vld [vmem:[#allocation2 + $0xf7] sm:$0xff]
  %v2401 = vld [vmem:[#allocation2 + $0xff] sm:$0xff]
  %v2402 = vld [vmem:[#allocation2 + $0x107] sm:$0xff]
  %v2403 = vld [vmem:[#allocation2 + $0x10f] sm:$0xff]
  %v2404 = vld [vmem:[#allocation2 + $0x117] sm:$0xff]
  %v2405 = vld [vmem:[#allocation2 + $0x11f] sm:$0xff]
  %v2406 = vld [vmem:[#allocation2 + $0x127] sm:$0xff]
  %v2407 = vld [vmem:[#allocation2 + $0x12f] sm:$0xff]
  %v2408 = vld [vmem:[#allocation2 + $0x137] sm:$0xff]
  %v2409 = vld [vmem:[#allocation2 + $0x13f] sm:$0xff]
  %v2410 = vld [vmem:[#allocation2 + $0x147] sm:$0xff]
  %v2411 = vld [vmem:[#allocation2 + $0x14f] sm:$0xff]
  %v2412 = vld [vmem:[#allocation2 + $0x157] sm:$0xff]
  %v2413 = vld [vmem:[#allocation2 + $0x15f] sm:$0xff]
  %v2414 = vld [vmem:[#allocation2 + $0x167] sm:$0xff]
  %v2415 = vld [vmem:[#allocation2 + $0x16f] sm:$0xff]
  %v2416 = vld [vmem:[#allocation2 + $0x177] sm:$0xff]
  %v2417 = vld [vmem:[#allocation2 + $0x17f] sm:$0xff]
  %v2418 = vld [vmem:[#allocation2 + $0x187] sm:$0xff]
  %v2419 = vld [vmem:[#allocation2 + $0x18f] sm:$0xff]
  %v2420 = vld [vmem:[#allocation2 + $0x197] sm:$0xff]
  %v2421 = vld [vmem:[#allocation2 + $0x19f] sm:$0xff]
  %v2422 = vld [vmem:[#allocation2 + $0x1a7] sm:$0xff]
  %v2423 = vld [vmem:[#allocation2 + $0x1af] sm:$0xff]
  %v2424 = vld [vmem:[#allocation2 + $0x1b7] sm:$0xff]
  %v2425 = vld [vmem:[#allocation2 + $0x1bf] sm:$0xff]
  %v2426 = vld [vmem:[#allocation2 + $0x1c7] sm:$0xff]
  %v2427 = vld [vmem:[#allocation2 + $0x1cf] sm:$0xff]
  %v2428 = vld [vmem:[#allocation2 + $0x1d7] sm:$0xff]
  %v2429 = vld [vmem:[#allocation2 + $0x1df] sm:$0xff]
  %v2430 = vld [vmem:[#allocation2 + $0x1e7] sm:$0xff]
  %v2431 = vld [vmem:[#allocation2 + $0x1ef] sm:$0xff]
  %v2432 = vld [vmem:[#allocation2 + $0x1f7] sm:$0xff]
  %v2433 = vld [vmem:[#allocation2 + $0x1ff] sm:$0xff]
  %v2434 = vld [vmem:[#allocation2 + $0x207] sm:$0xff]
  %v2435 = vld [vmem:[#allocation2 + $0x20f] sm:$0xff]
  %v2436 = vld [vmem:[#allocation2 + $0x217] sm:$0xff]
  %v2437 = vld [vmem:[#allocation2 + $0x21f] sm:$0xff]
  %v2438 = vld [vmem:[#allocation2 + $0x227] sm:$0xff]
  %v2439 = vld [vmem:[#allocation2 + $0x22f] sm:$0xff]
  %v2440 = vld [vmem:[#allocation2 + $0x237] sm:$0xff]
  %v2441 = vld [vmem:[#allocation2 + $0x23f] sm:$0xff]
  %v2442 = vld [vmem:[#allocation2 + $0x247] sm:$0xff]
  %v2443 = vld [vmem:[#allocation2 + $0x24f] sm:$0xff]
  %v2444 = vld [vmem:[#allocation2 + $0x257] sm:$0xff]
  %v2445 = vld [vmem:[#allocation2 + $0x25f] sm:$0xff]
  %v2446 = vld [vmem:[#allocation2 + $0x267] sm:$0xff]
  %v2447 = vld [vmem:[#allocation2 + $0x26f] sm:$0xff]
  %v2448 = vld [vmem:[#allocation2 + $0x277] sm:$0xff]
  %v2449 = vld [vmem:[#allocation2 + $0x27f] sm:$0xff]
  %v2450 = vld [vmem:[#allocation2 + $0x287] sm:$0xff]
  %s2451 = scalar_lea.vmem %s3, 8
  %v2452 = vld [vmem:[%s2451] sm:$0xf]
  %v2454 = vsel %vm179, %v2370, 0
  %v2457 = vsel %vm179, %v2371, 0
  %v2460 = vsel %vm179, %v2372, 0
  %v2463 = vsel %vm179, %v2373, 0
  %v2466 = vsel %vm179, %v2374, 0
  %v2469 = vsel %vm179, %v2375, 0
  %v2472 = vsel %vm179, %v2376, 0
  %v2475 = vsel %vm179, %v2377, 0
  %v2478 = vsel %vm179, %v2378, 0
  %v2481 = vsel %vm179, %v2379, 0
  %v2484 = vsel %vm179, %v2380, 0
  %v2487 = vsel %vm179, %v2381, 0
  %v2490 = vsel %vm179, %v2382, 0
  %v2493 = vsel %vm179, %v2383, 0
  %v2496 = vsel %vm179, %v2384, 0
  %v2499 = vsel %vm179, %v2385, 0
  %v2502 = vsel %vm179, %v2386, 0
  %v2505 = vsel %vm179, %v2387, 0
  %v2508 = vsel %vm179, %v2388, 0
  %v2511 = vsel %vm179, %v2389, 0
  %v2514 = vsel %vm179, %v2390, 0
  %v2517 = vsel %vm179, %v2391, 0
  %v2520 = vsel %vm179, %v2392, 0
  %v2523 = vsel %vm179, %v2393, 0
  %v2526 = vsel %vm179, %v2394, 0
  %v2529 = vsel %vm179, %v2395, 0
  %v2532 = vsel %vm179, %v2396, 0
  %v2535 = vsel %vm179, %v2397, 0
  %v2538 = vsel %vm179, %v2398, 0
  %v2541 = vsel %vm179, %v2399, 0
  %v2544 = vsel %vm179, %v2400, 0
  %v2547 = vsel %vm179, %v2401, 0
  %v2550 = vsel %vm179, %v2402, 0
  %v2553 = vsel %vm179, %v2403, 0
  %v2556 = vsel %vm179, %v2404, 0
  %v2559 = vsel %vm179, %v2405, 0
  %v2562 = vsel %vm179, %v2406, 0
  %v2565 = vsel %vm179, %v2407, 0
  %v2568 = vsel %vm179, %v2408, 0
  %v2571 = vsel %vm179, %v2409, 0
  %v2574 = vsel %vm179, %v2410, 0
  %v2577 = vsel %vm179, %v2411, 0
  %v2580 = vsel %vm179, %v2412, 0
  %v2583 = vsel %vm179, %v2413, 0
  %v2586 = vsel %vm179, %v2414, 0
  %v2589 = vsel %vm179, %v2415, 0
  %v2592 = vsel %vm179, %v2416, 0
  %v2595 = vsel %vm179, %v2417, 0
  %v2598 = vsel %vm179, %v2418, 0
  %v2601 = vsel %vm179, %v2419, 0
  %v2604 = vsel %vm179, %v2420, 0
  %v2607 = vsel %vm179, %v2421, 0
  %v2610 = vsel %vm179, %v2422, 0
  %v2613 = vsel %vm179, %v2423, 0
  %v2616 = vsel %vm179, %v2424, 0
  %v2619 = vsel %vm179, %v2425, 0
  %v2622 = vsel %vm179, %v2426, 0
  %v2625 = vsel %vm179, %v2427, 0
  %v2628 = vsel %vm179, %v2428, 0
  %v2631 = vsel %vm179, %v2429, 0
  %v2634 = vsel %vm179, %v2430, 0
  %v2637 = vsel %vm179, %v2431, 0
  %v2640 = vsel %vm179, %v2432, 0
  %v2643 = vsel %vm179, %v2433, 0
  %v2646 = vsel %vm179, %v2434, 0
  %v2649 = vsel %vm179, %v2435, 0
  %v2652 = vsel %vm179, %v2436, 0
  %v2655 = vsel %vm179, %v2437, 0
  %v2658 = vsel %vm179, %v2438, 0
  %v2661 = vsel %vm179, %v2439, 0
  %v2664 = vsel %vm179, %v2440, 0
  %v2667 = vsel %vm179, %v2441, 0
  %v2670 = vsel %vm179, %v2442, 0
  %v2673 = vsel %vm179, %v2443, 0
  %v2676 = vsel %vm179, %v2444, 0
  %v2679 = vsel %vm179, %v2445, 0
  %v2682 = vsel %vm179, %v2446, 0
  %v2685 = vsel %vm179, %v2447, 0
  %v2688 = vsel %vm179, %v2448, 0
  %v2691 = vsel %vm179, %v2449, 0
  %v2694 = vsel %vm179, %v2450, 0
  %v2697 = vsel %vm1600, %v2452, 0
  %2699 = vmatpush.msra.mxu0 0.0
  %2700 = vmatpush.msra.mxu0 0.0
  %2701 = vmatpush.msra.mxu0 0.0
  %2702 = vmatpush.msra.mxu0 0.0
  %2703 = vmatpush.msra.mxu0 0.0
  %2704 = vmatpush.msra.mxu0 0.0
  %2705 = vmatpush.msra.mxu0 0.0
  %2706 = vmatpush.msra.mxu0 0.0
  %2707 = vmatpush.msra.mxu0 0.0
  %2708 = vmatpush.msra.mxu0 0.0
  %2709 = vmatpush.msra.mxu0 0.0
  %2710 = vmatpush.msra.mxu0 0.0
  %2711 = vmatpush.msra.mxu0 0.0
  %2712 = vmatpush.msra.mxu0 0.0
  %2713 = vmatpush.msra.mxu0 0.0
  %2714 = vmatpush.msra.mxu0 %v2697
  %2715 = vmatmul.f32.gmra.mxu0 %v2454
  %v2716 = vpop.f32.mrf.mxu0
  %v2717 = vadd.f32 0.0, %v2716
  %2718 = vmatmul.f32.gmra.mxu0 %v2457
  %v2719 = vpop.f32.mrf.mxu0
  %v2720 = vadd.f32 0.0, %v2719
  %2721 = vmatmul.f32.gmra.mxu0 %v2460
  %v2722 = vpop.f32.mrf.mxu0
  %v2723 = vadd.f32 0.0, %v2722
  %2724 = vmatmul.f32.gmra.mxu0 %v2463
  %v2725 = vpop.f32.mrf.mxu0
  %v2726 = vadd.f32 0.0, %v2725
  %2727 = vmatmul.f32.gmra.mxu0 %v2466
  %v2728 = vpop.f32.mrf.mxu0
  %v2729 = vadd.f32 0.0, %v2728
  %2730 = vmatmul.f32.gmra.mxu0 %v2469
  %v2731 = vpop.f32.mrf.mxu0
  %v2732 = vadd.f32 0.0, %v2731
  %2733 = vmatmul.f32.gmra.mxu0 %v2472
  %v2734 = vpop.f32.mrf.mxu0
  %v2735 = vadd.f32 0.0, %v2734
  %2736 = vmatmul.f32.gmra.mxu0 %v2475
  %v2737 = vpop.f32.mrf.mxu0
  %v2738 = vadd.f32 0.0, %v2737
  %2739 = vmatmul.f32.gmra.mxu0 %v2478
  %v2740 = vpop.f32.mrf.mxu0
  %v2741 = vadd.f32 0.0, %v2740
  %2742 = vmatmul.f32.gmra.mxu0 %v2481
  %v2743 = vpop.f32.mrf.mxu0
  %v2744 = vadd.f32 0.0, %v2743
  %2745 = vmatmul.f32.gmra.mxu0 %v2484
  %v2746 = vpop.f32.mrf.mxu0
  %v2747 = vadd.f32 0.0, %v2746
  %2748 = vmatmul.f32.gmra.mxu0 %v2487
  %v2749 = vpop.f32.mrf.mxu0
  %v2750 = vadd.f32 0.0, %v2749
  %2751 = vmatmul.f32.gmra.mxu0 %v2490
  %v2752 = vpop.f32.mrf.mxu0
  %v2753 = vadd.f32 0.0, %v2752
  %2754 = vmatmul.f32.gmra.mxu0 %v2493
  %v2755 = vpop.f32.mrf.mxu0
  %v2756 = vadd.f32 0.0, %v2755
  %2757 = vmatmul.f32.gmra.mxu0 %v2496
  %v2758 = vpop.f32.mrf.mxu0
  %v2759 = vadd.f32 0.0, %v2758
  %2760 = vmatmul.f32.gmra.mxu0 %v2499
  %v2761 = vpop.f32.mrf.mxu0
  %v2762 = vadd.f32 0.0, %v2761
  %2763 = vmatmul.f32.gmra.mxu0 %v2502
  %v2764 = vpop.f32.mrf.mxu0
  %v2765 = vadd.f32 0.0, %v2764
  %2766 = vmatmul.f32.gmra.mxu0 %v2505
  %v2767 = vpop.f32.mrf.mxu0
  %v2768 = vadd.f32 0.0, %v2767
  %2769 = vmatmul.f32.gmra.mxu0 %v2508
  %v2770 = vpop.f32.mrf.mxu0
  %v2771 = vadd.f32 0.0, %v2770
  %2772 = vmatmul.f32.gmra.mxu0 %v2511
  %v2773 = vpop.f32.mrf.mxu0
  %v2774 = vadd.f32 0.0, %v2773
  %2775 = vmatmul.f32.gmra.mxu0 %v2514
  %v2776 = vpop.f32.mrf.mxu0
  %v2777 = vadd.f32 0.0, %v2776
  %2778 = vmatmul.f32.gmra.mxu0 %v2517
  %v2779 = vpop.f32.mrf.mxu0
  %v2780 = vadd.f32 0.0, %v2779
  %2781 = vmatmul.f32.gmra.mxu0 %v2520
  %v2782 = vpop.f32.mrf.mxu0
  %v2783 = vadd.f32 0.0, %v2782
  %2784 = vmatmul.f32.gmra.mxu0 %v2523
  %v2785 = vpop.f32.mrf.mxu0
  %v2786 = vadd.f32 0.0, %v2785
  %2787 = vmatmul.f32.gmra.mxu0 %v2526
  %v2788 = vpop.f32.mrf.mxu0
  %v2789 = vadd.f32 0.0, %v2788
  %2790 = vmatmul.f32.gmra.mxu0 %v2529
  %v2791 = vpop.f32.mrf.mxu0
  %v2792 = vadd.f32 0.0, %v2791
  %2793 = vmatmul.f32.gmra.mxu0 %v2532
  %v2794 = vpop.f32.mrf.mxu0
  %v2795 = vadd.f32 0.0, %v2794
  %2796 = vmatmul.f32.gmra.mxu0 %v2535
  %v2797 = vpop.f32.mrf.mxu0
  %v2798 = vadd.f32 0.0, %v2797
  %2799 = vmatmul.f32.gmra.mxu0 %v2538
  %v2800 = vpop.f32.mrf.mxu0
  %v2801 = vadd.f32 0.0, %v2800
  %2802 = vmatmul.f32.gmra.mxu0 %v2541
  %v2803 = vpop.f32.mrf.mxu0
  %v2804 = vadd.f32 0.0, %v2803
  %2805 = vmatmul.f32.gmra.mxu0 %v2544
  %v2806 = vpop.f32.mrf.mxu0
  %v2807 = vadd.f32 0.0, %v2806
  %2808 = vmatmul.f32.gmra.mxu0 %v2547
  %v2809 = vpop.f32.mrf.mxu0
  %v2810 = vadd.f32 0.0, %v2809
  %2811 = vmatmul.f32.gmra.mxu0 %v2550
  %v2812 = vpop.f32.mrf.mxu0
  %v2813 = vadd.f32 0.0, %v2812
  %2814 = vmatmul.f32.gmra.mxu0 %v2553
  %v2815 = vpop.f32.mrf.mxu0
  %v2816 = vadd.f32 0.0, %v2815
  %2817 = vmatmul.f32.gmra.mxu0 %v2556
  %v2818 = vpop.f32.mrf.mxu0
  %v2819 = vadd.f32 0.0, %v2818
  %2820 = vmatmul.f32.gmra.mxu0 %v2559
  %v2821 = vpop.f32.mrf.mxu0
  %v2822 = vadd.f32 0.0, %v2821
  %2823 = vmatmul.f32.gmra.mxu0 %v2562
  %v2824 = vpop.f32.mrf.mxu0
  %v2825 = vadd.f32 0.0, %v2824
  %2826 = vmatmul.f32.gmra.mxu0 %v2565
  %v2827 = vpop.f32.mrf.mxu0
  %v2828 = vadd.f32 0.0, %v2827
  %2829 = vmatmul.f32.gmra.mxu0 %v2568
  %v2830 = vpop.f32.mrf.mxu0
  %v2831 = vadd.f32 0.0, %v2830
  %2832 = vmatmul.f32.gmra.mxu0 %v2571
  %v2833 = vpop.f32.mrf.mxu0
  %v2834 = vadd.f32 0.0, %v2833
  %2835 = vmatmul.f32.gmra.mxu0 %v2574
  %v2836 = vpop.f32.mrf.mxu0
  %v2837 = vadd.f32 0.0, %v2836
  %2838 = vmatmul.f32.gmra.mxu0 %v2577
  %v2839 = vpop.f32.mrf.mxu0
  %v2840 = vadd.f32 0.0, %v2839
  %2841 = vmatmul.f32.gmra.mxu0 %v2580
  %v2842 = vpop.f32.mrf.mxu0
  %v2843 = vadd.f32 0.0, %v2842
  %2844 = vmatmul.f32.gmra.mxu0 %v2583
  %v2845 = vpop.f32.mrf.mxu0
  %v2846 = vadd.f32 0.0, %v2845
  %2847 = vmatmul.f32.gmra.mxu0 %v2586
  %v2848 = vpop.f32.mrf.mxu0
  %v2849 = vadd.f32 0.0, %v2848
  %2850 = vmatmul.f32.gmra.mxu0 %v2589
  %v2851 = vpop.f32.mrf.mxu0
  %v2852 = vadd.f32 0.0, %v2851
  %2853 = vmatmul.f32.gmra.mxu0 %v2592
  %v2854 = vpop.f32.mrf.mxu0
  %v2855 = vadd.f32 0.0, %v2854
  %2856 = vmatmul.f32.gmra.mxu0 %v2595
  %v2857 = vpop.f32.mrf.mxu0
  %v2858 = vadd.f32 0.0, %v2857
  %2859 = vmatmul.f32.gmra.mxu0 %v2598
  %v2860 = vpop.f32.mrf.mxu0
  %v2861 = vadd.f32 0.0, %v2860
  %2862 = vmatmul.f32.gmra.mxu0 %v2601
  %v2863 = vpop.f32.mrf.mxu0
  %v2864 = vadd.f32 0.0, %v2863
  %2865 = vmatmul.f32.gmra.mxu0 %v2604
  %v2866 = vpop.f32.mrf.mxu0
  %v2867 = vadd.f32 0.0, %v2866
  %2868 = vmatmul.f32.gmra.mxu0 %v2607
  %v2869 = vpop.f32.mrf.mxu0
  %v2870 = vadd.f32 0.0, %v2869
  %2871 = vmatmul.f32.gmra.mxu0 %v2610
  %v2872 = vpop.f32.mrf.mxu0
  %v2873 = vadd.f32 0.0, %v2872
  %2874 = vmatmul.f32.gmra.mxu0 %v2613
  %v2875 = vpop.f32.mrf.mxu0
  %v2876 = vadd.f32 0.0, %v2875
  %2877 = vmatmul.f32.gmra.mxu0 %v2616
  %v2878 = vpop.f32.mrf.mxu0
  %v2879 = vadd.f32 0.0, %v2878
  %2880 = vmatmul.f32.gmra.mxu0 %v2619
  %v2881 = vpop.f32.mrf.mxu0
  %v2882 = vadd.f32 0.0, %v2881
  %2883 = vmatmul.f32.gmra.mxu0 %v2622
  %v2884 = vpop.f32.mrf.mxu0
  %v2885 = vadd.f32 0.0, %v2884
  %2886 = vmatmul.f32.gmra.mxu0 %v2625
  %v2887 = vpop.f32.mrf.mxu0
  %v2888 = vadd.f32 0.0, %v2887
  %2889 = vmatmul.f32.gmra.mxu0 %v2628
  %v2890 = vpop.f32.mrf.mxu0
  %v2891 = vadd.f32 0.0, %v2890
  %2892 = vmatmul.f32.gmra.mxu0 %v2631
  %v2893 = vpop.f32.mrf.mxu0
  %v2894 = vadd.f32 0.0, %v2893
  %2895 = vmatmul.f32.gmra.mxu0 %v2634
  %v2896 = vpop.f32.mrf.mxu0
  %v2897 = vadd.f32 0.0, %v2896
  %2898 = vmatmul.f32.gmra.mxu0 %v2637
  %v2899 = vpop.f32.mrf.mxu0
  %v2900 = vadd.f32 0.0, %v2899
  %2901 = vmatmul.f32.gmra.mxu0 %v2640
  %v2902 = vpop.f32.mrf.mxu0
  %v2903 = vadd.f32 0.0, %v2902
  %2904 = vmatmul.f32.gmra.mxu0 %v2643
  %v2905 = vpop.f32.mrf.mxu0
  %v2906 = vadd.f32 0.0, %v2905
  %2907 = vmatmul.f32.gmra.mxu0 %v2646
  %v2908 = vpop.f32.mrf.mxu0
  %v2909 = vadd.f32 0.0, %v2908
  %2910 = vmatmul.f32.gmra.mxu0 %v2649
  %v2911 = vpop.f32.mrf.mxu0
  %v2912 = vadd.f32 0.0, %v2911
  %2913 = vmatmul.f32.gmra.mxu0 %v2652
  %v2914 = vpop.f32.mrf.mxu0
  %v2915 = vadd.f32 0.0, %v2914
  %2916 = vmatmul.f32.gmra.mxu0 %v2655
  %v2917 = vpop.f32.mrf.mxu0
  %v2918 = vadd.f32 0.0, %v2917
  %2919 = vmatmul.f32.gmra.mxu0 %v2658
  %v2920 = vpop.f32.mrf.mxu0
  %v2921 = vadd.f32 0.0, %v2920
  %2922 = vmatmul.f32.gmra.mxu0 %v2661
  %v2923 = vpop.f32.mrf.mxu0
  %v2924 = vadd.f32 0.0, %v2923
  %2925 = vmatmul.f32.gmra.mxu0 %v2664
  %v2926 = vpop.f32.mrf.mxu0
  %v2927 = vadd.f32 0.0, %v2926
  %2928 = vmatmul.f32.gmra.mxu0 %v2667
  %v2929 = vpop.f32.mrf.mxu0
  %v2930 = vadd.f32 0.0, %v2929
  %2931 = vmatmul.f32.gmra.mxu0 %v2670
  %v2932 = vpop.f32.mrf.mxu0
  %v2933 = vadd.f32 0.0, %v2932
  %2934 = vmatmul.f32.gmra.mxu0 %v2673
  %v2935 = vpop.f32.mrf.mxu0
  %v2936 = vadd.f32 0.0, %v2935
  %2937 = vmatmul.f32.gmra.mxu0 %v2676
  %v2938 = vpop.f32.mrf.mxu0
  %v2939 = vadd.f32 0.0, %v2938
  %2940 = vmatmul.f32.gmra.mxu0 %v2679
  %v2941 = vpop.f32.mrf.mxu0
  %v2942 = vadd.f32 0.0, %v2941
  %2943 = vmatmul.f32.gmra.mxu0 %v2682
  %v2944 = vpop.f32.mrf.mxu0
  %v2945 = vadd.f32 0.0, %v2944
  %2946 = vmatmul.f32.gmra.mxu0 %v2685
  %v2947 = vpop.f32.mrf.mxu0
  %v2948 = vadd.f32 0.0, %v2947
  %2949 = vmatmul.f32.gmra.mxu0 %v2688
  %v2950 = vpop.f32.mrf.mxu0
  %v2951 = vadd.f32 0.0, %v2950
  %2952 = vmatmul.f32.gmra.mxu0 %v2691
  %v2953 = vpop.f32.mrf.mxu0
  %v2954 = vadd.f32 0.0, %v2953
  %2955 = vmatmul.f32.gmra.mxu0 %v2694
  %v2956 = vpop.f32.mrf.mxu0
  %v2957 = vadd.f32 0.0, %v2956
  %2958 = vdwg.mxu0
  %v2959 = vadd.f32 %v2128, %v2717
  %v2960 = vadd.f32 %v2131, %v2720
  %v2961 = vadd.f32 %v2134, %v2723
  %v2962 = vadd.f32 %v2137, %v2726
  %v2963 = vadd.f32 %v2140, %v2729
  %v2964 = vadd.f32 %v2143, %v2732
  %v2965 = vadd.f32 %v2146, %v2735
  %v2966 = vadd.f32 %v2149, %v2738
  %v2967 = vadd.f32 %v2152, %v2741
  %v2968 = vadd.f32 %v2155, %v2744
  %v2969 = vadd.f32 %v2158, %v2747
  %v2970 = vadd.f32 %v2161, %v2750
  %v2971 = vadd.f32 %v2164, %v2753
  %v2972 = vadd.f32 %v2167, %v2756
  %v2973 = vadd.f32 %v2170, %v2759
  %v2974 = vadd.f32 %v2173, %v2762
  %v2975 = vadd.f32 %v2176, %v2765
  %v2976 = vadd.f32 %v2179, %v2768
  %v2977 = vadd.f32 %v2182, %v2771
  %v2978 = vadd.f32 %v2185, %v2774
  %v2979 = vadd.f32 %v2188, %v2777
  %v2980 = vadd.f32 %v2191, %v2780
  %v2981 = vadd.f32 %v2194, %v2783
  %v2982 = vadd.f32 %v2197, %v2786
  %v2983 = vadd.f32 %v2200, %v2789
  %v2984 = vadd.f32 %v2203, %v2792
  %v2985 = vadd.f32 %v2206, %v2795
  %v2986 = vadd.f32 %v2209, %v2798
  %v2987 = vadd.f32 %v2212, %v2801
  %v2988 = vadd.f32 %v2215, %v2804
  %v2989 = vadd.f32 %v2218, %v2807
  %v2990 = vadd.f32 %v2221, %v2810
  %v2991 = vadd.f32 %v2224, %v2813
  %v2992 = vadd.f32 %v2227, %v2816
  %v2993 = vadd.f32 %v2230, %v2819
  %v2994 = vadd.f32 %v2233, %v2822
  %v2995 = vadd.f32 %v2236, %v2825
  %v2996 = vadd.f32 %v2239, %v2828
  %v2997 = vadd.f32 %v2242, %v2831
  %v2998 = vadd.f32 %v2245, %v2834
  %v2999 = vadd.f32 %v2248, %v2837
  %v3000 = vadd.f32 %v2251, %v2840
  %v3001 = vadd.f32 %v2254, %v2843
  %v3002 = vadd.f32 %v2257, %v2846
  %v3003 = vadd.f32 %v2260, %v2849
  %v3004 = vadd.f32 %v2263, %v2852
  %v3005 = vadd.f32 %v2266, %v2855
  %v3006 = vadd.f32 %v2269, %v2858
  %v3007 = vadd.f32 %v2272, %v2861
  %v3008 = vadd.f32 %v2275, %v2864
  %v3009 = vadd.f32 %v2278, %v2867
  %v3010 = vadd.f32 %v2281, %v2870
  %v3011 = vadd.f32 %v2284, %v2873
  %v3012 = vadd.f32 %v2287, %v2876
  %v3013 = vadd.f32 %v2290, %v2879
  %v3014 = vadd.f32 %v2293, %v2882
  %v3015 = vadd.f32 %v2296, %v2885
  %v3016 = vadd.f32 %v2299, %v2888
  %v3017 = vadd.f32 %v2302, %v2891
  %v3018 = vadd.f32 %v2305, %v2894
  %v3019 = vadd.f32 %v2308, %v2897
  %v3020 = vadd.f32 %v2311, %v2900
  %v3021 = vadd.f32 %v2314, %v2903
  %v3022 = vadd.f32 %v2317, %v2906
  %v3023 = vadd.f32 %v2320, %v2909
  %v3024 = vadd.f32 %v2323, %v2912
  %v3025 = vadd.f32 %v2326, %v2915
  %v3026 = vadd.f32 %v2329, %v2918
  %v3027 = vadd.f32 %v2332, %v2921
  %v3028 = vadd.f32 %v2335, %v2924
  %v3029 = vadd.f32 %v2338, %v2927
  %v3030 = vadd.f32 %v2341, %v2930
  %v3031 = vadd.f32 %v2344, %v2933
  %v3032 = vadd.f32 %v2347, %v2936
  %v3033 = vadd.f32 %v2350, %v2939
  %v3034 = vadd.f32 %v2353, %v2942
  %v3035 = vadd.f32 %v2356, %v2945
  %v3036 = vadd.f32 %v2359, %v2948
  %v3037 = vadd.f32 %v2362, %v2951
  %v3038 = vadd.f32 %v2365, %v2954
  %v3039 = vadd.f32 %v2368, %v2957
  %v3040 = vld [vmem:[#allocation2 + $0x17] sm:$0xff]
  %v3041 = vld [vmem:[#allocation2 + $0x1f] sm:$0xff]
  %v3042 = vld [vmem:[#allocation2 + $0x27] sm:$0xff]
  %v3043 = vld [vmem:[#allocation2 + $0x2f] sm:$0xff]
  %v3044 = vld [vmem:[#allocation2 + $0x37] sm:$0xff]
  %v3045 = vld [vmem:[#allocation2 + $0x3f] sm:$0xff]
  %v3046 = vld [vmem:[#allocation2 + $0x47] sm:$0xff]
  %v3047 = vld [vmem:[#allocation2 + $0x4f] sm:$0xff]
  %v3048 = vld [vmem:[#allocation2 + $0x57] sm:$0xff]
  %v3049 = vld [vmem:[#allocation2 + $0x5f] sm:$0xff]
  %v3050 = vld [vmem:[#allocation2 + $0x67] sm:$0xff]
  %v3051 = vld [vmem:[#allocation2 + $0x6f] sm:$0xff]
  %v3052 = vld [vmem:[#allocation2 + $0x77] sm:$0xff]
  %v3053 = vld [vmem:[#allocation2 + $0x7f] sm:$0xff]
  %v3054 = vld [vmem:[#allocation2 + $0x87] sm:$0xff]
  %v3055 = vld [vmem:[#allocation2 + $0x8f] sm:$0xff]
  %v3056 = vld [vmem:[#allocation2 + $0x97] sm:$0xff]
  %v3057 = vld [vmem:[#allocation2 + $0x9f] sm:$0xff]
  %v3058 = vld [vmem:[#allocation2 + $0xa7] sm:$0xff]
  %v3059 = vld [vmem:[#allocation2 + $0xaf] sm:$0xff]
  %v3060 = vld [vmem:[#allocation2 + $0xb7] sm:$0xff]
  %v3061 = vld [vmem:[#allocation2 + $0xbf] sm:$0xff]
  %v3062 = vld [vmem:[#allocation2 + $0xc7] sm:$0xff]
  %v3063 = vld [vmem:[#allocation2 + $0xcf] sm:$0xff]
  %v3064 = vld [vmem:[#allocation2 + $0xd7] sm:$0xff]
  %v3065 = vld [vmem:[#allocation2 + $0xdf] sm:$0xff]
  %v3066 = vld [vmem:[#allocation2 + $0xe7] sm:$0xff]
  %v3067 = vld [vmem:[#allocation2 + $0xef] sm:$0xff]
  %v3068 = vld [vmem:[#allocation2 + $0xf7] sm:$0xff]
  %v3069 = vld [vmem:[#allocation2 + $0xff] sm:$0xff]
  %v3070 = vld [vmem:[#allocation2 + $0x107] sm:$0xff]
  %v3071 = vld [vmem:[#allocation2 + $0x10f] sm:$0xff]
  %v3072 = vld [vmem:[#allocation2 + $0x117] sm:$0xff]
  %v3073 = vld [vmem:[#allocation2 + $0x11f] sm:$0xff]
  %v3074 = vld [vmem:[#allocation2 + $0x127] sm:$0xff]
  %v3075 = vld [vmem:[#allocation2 + $0x12f] sm:$0xff]
  %v3076 = vld [vmem:[#allocation2 + $0x137] sm:$0xff]
  %v3077 = vld [vmem:[#allocation2 + $0x13f] sm:$0xff]
  %v3078 = vld [vmem:[#allocation2 + $0x147] sm:$0xff]
  %v3079 = vld [vmem:[#allocation2 + $0x14f] sm:$0xff]
  %v3080 = vld [vmem:[#allocation2 + $0x157] sm:$0xff]
  %v3081 = vld [vmem:[#allocation2 + $0x15f] sm:$0xff]
  %v3082 = vld [vmem:[#allocation2 + $0x167] sm:$0xff]
  %v3083 = vld [vmem:[#allocation2 + $0x16f] sm:$0xff]
  %v3084 = vld [vmem:[#allocation2 + $0x177] sm:$0xff]
  %v3085 = vld [vmem:[#allocation2 + $0x17f] sm:$0xff]
  %v3086 = vld [vmem:[#allocation2 + $0x187] sm:$0xff]
  %v3087 = vld [vmem:[#allocation2 + $0x18f] sm:$0xff]
  %v3088 = vld [vmem:[#allocation2 + $0x197] sm:$0xff]
  %v3089 = vld [vmem:[#allocation2 + $0x19f] sm:$0xff]
  %v3090 = vld [vmem:[#allocation2 + $0x1a7] sm:$0xff]
  %v3091 = vld [vmem:[#allocation2 + $0x1af] sm:$0xff]
  %v3092 = vld [vmem:[#allocation2 + $0x1b7] sm:$0xff]
  %v3093 = vld [vmem:[#allocation2 + $0x1bf] sm:$0xff]
  %v3094 = vld [vmem:[#allocation2 + $0x1c7] sm:$0xff]
  %v3095 = vld [vmem:[#allocation2 + $0x1cf] sm:$0xff]
  %v3096 = vld [vmem:[#allocation2 + $0x1d7] sm:$0xff]
  %v3097 = vld [vmem:[#allocation2 + $0x1df] sm:$0xff]
  %v3098 = vld [vmem:[#allocation2 + $0x1e7] sm:$0xff]
  %v3099 = vld [vmem:[#allocation2 + $0x1ef] sm:$0xff]
  %v3100 = vld [vmem:[#allocation2 + $0x1f7] sm:$0xff]
  %v3101 = vld [vmem:[#allocation2 + $0x1ff] sm:$0xff]
  %v3102 = vld [vmem:[#allocation2 + $0x207] sm:$0xff]
  %v3103 = vld [vmem:[#allocation2 + $0x20f] sm:$0xff]
  %v3104 = vld [vmem:[#allocation2 + $0x217] sm:$0xff]
  %v3105 = vld [vmem:[#allocation2 + $0x21f] sm:$0xff]
  %v3106 = vld [vmem:[#allocation2 + $0x227] sm:$0xff]
  %v3107 = vld [vmem:[#allocation2 + $0x22f] sm:$0xff]
  %v3108 = vld [vmem:[#allocation2 + $0x237] sm:$0xff]
  %v3109 = vld [vmem:[#allocation2 + $0x23f] sm:$0xff]
  %v3110 = vld [vmem:[#allocation2 + $0x247] sm:$0xff]
  %v3111 = vld [vmem:[#allocation2 + $0x24f] sm:$0xff]
  %v3112 = vld [vmem:[#allocation2 + $0x257] sm:$0xff]
  %v3113 = vld [vmem:[#allocation2 + $0x25f] sm:$0xff]
  %v3114 = vld [vmem:[#allocation2 + $0x267] sm:$0xff]
  %v3115 = vld [vmem:[#allocation2 + $0x26f] sm:$0xff]
  %v3116 = vld [vmem:[#allocation2 + $0x277] sm:$0xff]
  %v3117 = vld [vmem:[#allocation2 + $0x27f] sm:$0xff]
  %v3118 = vld [vmem:[#allocation2 + $0x287] sm:$0xff]
  %v3119 = vld [vmem:[#allocation2 + $0x28f] sm:$0xff]
  %v3120 = vld [vmem:[#allocation2 + $0x297] sm:$0xff]
  %s3121 = scalar_lea.vmem %s3, 12
  %v3122 = vld [vmem:[%s3121] sm:$0xf]
  %v3124 = vsel %vm179, %v3040, 0
  %v3127 = vsel %vm179, %v3041, 0
  %v3130 = vsel %vm179, %v3042, 0
  %v3133 = vsel %vm179, %v3043, 0
  %v3136 = vsel %vm179, %v3044, 0
  %v3139 = vsel %vm179, %v3045, 0
  %v3142 = vsel %vm179, %v3046, 0
  %v3145 = vsel %vm179, %v3047, 0
  %v3148 = vsel %vm179, %v3048, 0
  %v3151 = vsel %vm179, %v3049, 0
  %v3154 = vsel %vm179, %v3050, 0
  %v3157 = vsel %vm179, %v3051, 0
  %v3160 = vsel %vm179, %v3052, 0
  %v3163 = vsel %vm179, %v3053, 0
  %v3166 = vsel %vm179, %v3054, 0
  %v3169 = vsel %vm179, %v3055, 0
  %v3172 = vsel %vm179, %v3056, 0
  %v3175 = vsel %vm179, %v3057, 0
  %v3178 = vsel %vm179, %v3058, 0
  %v3181 = vsel %vm179, %v3059, 0
  %v3184 = vsel %vm179, %v3060, 0
  %v3187 = vsel %vm179, %v3061, 0
  %v3190 = vsel %vm179, %v3062, 0
  %v3193 = vsel %vm179, %v3063, 0
  %v3196 = vsel %vm179, %v3064, 0
  %v3199 = vsel %vm179, %v3065, 0
  %v3202 = vsel %vm179, %v3066, 0
  %v3205 = vsel %vm179, %v3067, 0
  %v3208 = vsel %vm179, %v3068, 0
  %v3211 = vsel %vm179, %v3069, 0
  %v3214 = vsel %vm179, %v3070, 0
  %v3217 = vsel %vm179, %v3071, 0
  %v3220 = vsel %vm179, %v3072, 0
  %v3223 = vsel %vm179, %v3073, 0
  %v3226 = vsel %vm179, %v3074, 0
  %v3229 = vsel %vm179, %v3075, 0
  %v3232 = vsel %vm179, %v3076, 0
  %v3235 = vsel %vm179, %v3077, 0
  %v3238 = vsel %vm179, %v3078, 0
  %v3241 = vsel %vm179, %v3079, 0
  %v3244 = vsel %vm179, %v3080, 0
  %v3247 = vsel %vm179, %v3081, 0
  %v3250 = vsel %vm179, %v3082, 0
  %v3253 = vsel %vm179, %v3083, 0
  %v3256 = vsel %vm179, %v3084, 0
  %v3259 = vsel %vm179, %v3085, 0
  %v3262 = vsel %vm179, %v3086, 0
  %v3265 = vsel %vm179, %v3087, 0
  %v3268 = vsel %vm179, %v3088, 0
  %v3271 = vsel %vm179, %v3089, 0
  %v3274 = vsel %vm179, %v3090, 0
  %v3277 = vsel %vm179, %v3091, 0
  %v3280 = vsel %vm179, %v3092, 0
  %v3283 = vsel %vm179, %v3093, 0
  %v3286 = vsel %vm179, %v3094, 0
  %v3289 = vsel %vm179, %v3095, 0
  %v3292 = vsel %vm179, %v3096, 0
  %v3295 = vsel %vm179, %v3097, 0
  %v3298 = vsel %vm179, %v3098, 0
  %v3301 = vsel %vm179, %v3099, 0
  %v3304 = vsel %vm179, %v3100, 0
  %v3307 = vsel %vm179, %v3101, 0
  %v3310 = vsel %vm179, %v3102, 0
  %v3313 = vsel %vm179, %v3103, 0
  %v3316 = vsel %vm179, %v3104, 0
  %v3319 = vsel %vm179, %v3105, 0
  %v3322 = vsel %vm179, %v3106, 0
  %v3325 = vsel %vm179, %v3107, 0
  %v3328 = vsel %vm179, %v3108, 0
  %v3331 = vsel %vm179, %v3109, 0
  %v3334 = vsel %vm179, %v3110, 0
  %v3337 = vsel %vm179, %v3111, 0
  %v3340 = vsel %vm179, %v3112, 0
  %v3343 = vsel %vm179, %v3113, 0
  %v3346 = vsel %vm179, %v3114, 0
  %v3349 = vsel %vm179, %v3115, 0
  %v3352 = vsel %vm179, %v3116, 0
  %v3355 = vsel %vm179, %v3117, 0
  %v3358 = vsel %vm179, %v3118, 0
  %v3361 = vsel %vm179, %v3119, 0
  %v3364 = vsel %vm179, %v3120, 0
  %v3367 = vsel %vm1600, %v3122, 0
  %3369 = vmatpush.msra.mxu0 0.0
  %3370 = vmatpush.msra.mxu0 0.0
  %3371 = vmatpush.msra.mxu0 0.0
  %3372 = vmatpush.msra.mxu0 0.0
  %3373 = vmatpush.msra.mxu0 0.0
  %3374 = vmatpush.msra.mxu0 0.0
  %3375 = vmatpush.msra.mxu0 0.0
  %3376 = vmatpush.msra.mxu0 0.0
  %3377 = vmatpush.msra.mxu0 0.0
  %3378 = vmatpush.msra.mxu0 0.0
  %3379 = vmatpush.msra.mxu0 0.0
  %3380 = vmatpush.msra.mxu0 0.0
  %3381 = vmatpush.msra.mxu0 0.0
  %3382 = vmatpush.msra.mxu0 0.0
  %3383 = vmatpush.msra.mxu0 0.0
  %3384 = vmatpush.msra.mxu0 %v3367
  %3385 = vmatmul.f32.gmra.mxu0 %v3124
  %v3386 = vpop.f32.mrf.mxu0
  %v3387 = vadd.f32 0.0, %v3386
  %3388 = vmatmul.f32.gmra.mxu0 %v3127
  %v3389 = vpop.f32.mrf.mxu0
  %v3390 = vadd.f32 0.0, %v3389
  %3391 = vmatmul.f32.gmra.mxu0 %v3130
  %v3392 = vpop.f32.mrf.mxu0
  %v3393 = vadd.f32 0.0, %v3392
  %3394 = vmatmul.f32.gmra.mxu0 %v3133
  %v3395 = vpop.f32.mrf.mxu0
  %v3396 = vadd.f32 0.0, %v3395
  %3397 = vmatmul.f32.gmra.mxu0 %v3136
  %v3398 = vpop.f32.mrf.mxu0
  %v3399 = vadd.f32 0.0, %v3398
  %3400 = vmatmul.f32.gmra.mxu0 %v3139
  %v3401 = vpop.f32.mrf.mxu0
  %v3402 = vadd.f32 0.0, %v3401
  %3403 = vmatmul.f32.gmra.mxu0 %v3142
  %v3404 = vpop.f32.mrf.mxu0
  %v3405 = vadd.f32 0.0, %v3404
  %3406 = vmatmul.f32.gmra.mxu0 %v3145
  %v3407 = vpop.f32.mrf.mxu0
  %v3408 = vadd.f32 0.0, %v3407
  %3409 = vmatmul.f32.gmra.mxu0 %v3148
  %v3410 = vpop.f32.mrf.mxu0
  %v3411 = vadd.f32 0.0, %v3410
  %3412 = vmatmul.f32.gmra.mxu0 %v3151
  %v3413 = vpop.f32.mrf.mxu0
  %v3414 = vadd.f32 0.0, %v3413
  %3415 = vmatmul.f32.gmra.mxu0 %v3154
  %v3416 = vpop.f32.mrf.mxu0
  %v3417 = vadd.f32 0.0, %v3416
  %3418 = vmatmul.f32.gmra.mxu0 %v3157
  %v3419 = vpop.f32.mrf.mxu0
  %v3420 = vadd.f32 0.0, %v3419
  %3421 = vmatmul.f32.gmra.mxu0 %v3160
  %v3422 = vpop.f32.mrf.mxu0
  %v3423 = vadd.f32 0.0, %v3422
  %3424 = vmatmul.f32.gmra.mxu0 %v3163
  %v3425 = vpop.f32.mrf.mxu0
  %v3426 = vadd.f32 0.0, %v3425
  %3427 = vmatmul.f32.gmra.mxu0 %v3166
  %v3428 = vpop.f32.mrf.mxu0
  %v3429 = vadd.f32 0.0, %v3428
  %3430 = vmatmul.f32.gmra.mxu0 %v3169
  %v3431 = vpop.f32.mrf.mxu0
  %v3432 = vadd.f32 0.0, %v3431
  %3433 = vmatmul.f32.gmra.mxu0 %v3172
  %v3434 = vpop.f32.mrf.mxu0
  %v3435 = vadd.f32 0.0, %v3434
  %3436 = vmatmul.f32.gmra.mxu0 %v3175
  %v3437 = vpop.f32.mrf.mxu0
  %v3438 = vadd.f32 0.0, %v3437
  %3439 = vmatmul.f32.gmra.mxu0 %v3178
  %v3440 = vpop.f32.mrf.mxu0
  %v3441 = vadd.f32 0.0, %v3440
  %3442 = vmatmul.f32.gmra.mxu0 %v3181
  %v3443 = vpop.f32.mrf.mxu0
  %v3444 = vadd.f32 0.0, %v3443
  %3445 = vmatmul.f32.gmra.mxu0 %v3184
  %v3446 = vpop.f32.mrf.mxu0
  %v3447 = vadd.f32 0.0, %v3446
  %3448 = vmatmul.f32.gmra.mxu0 %v3187
  %v3449 = vpop.f32.mrf.mxu0
  %v3450 = vadd.f32 0.0, %v3449
  %3451 = vmatmul.f32.gmra.mxu0 %v3190
  %v3452 = vpop.f32.mrf.mxu0
  %v3453 = vadd.f32 0.0, %v3452
  %3454 = vmatmul.f32.gmra.mxu0 %v3193
  %v3455 = vpop.f32.mrf.mxu0
  %v3456 = vadd.f32 0.0, %v3455
  %3457 = vmatmul.f32.gmra.mxu0 %v3196
  %v3458 = vpop.f32.mrf.mxu0
  %v3459 = vadd.f32 0.0, %v3458
  %3460 = vmatmul.f32.gmra.mxu0 %v3199
  %v3461 = vpop.f32.mrf.mxu0
  %v3462 = vadd.f32 0.0, %v3461
  %3463 = vmatmul.f32.gmra.mxu0 %v3202
  %v3464 = vpop.f32.mrf.mxu0
  %v3465 = vadd.f32 0.0, %v3464
  %3466 = vmatmul.f32.gmra.mxu0 %v3205
  %v3467 = vpop.f32.mrf.mxu0
  %v3468 = vadd.f32 0.0, %v3467
  %3469 = vmatmul.f32.gmra.mxu0 %v3208
  %v3470 = vpop.f32.mrf.mxu0
  %v3471 = vadd.f32 0.0, %v3470
  %3472 = vmatmul.f32.gmra.mxu0 %v3211
  %v3473 = vpop.f32.mrf.mxu0
  %v3474 = vadd.f32 0.0, %v3473
  %3475 = vmatmul.f32.gmra.mxu0 %v3214
  %v3476 = vpop.f32.mrf.mxu0
  %v3477 = vadd.f32 0.0, %v3476
  %3478 = vmatmul.f32.gmra.mxu0 %v3217
  %v3479 = vpop.f32.mrf.mxu0
  %v3480 = vadd.f32 0.0, %v3479
  %3481 = vmatmul.f32.gmra.mxu0 %v3220
  %v3482 = vpop.f32.mrf.mxu0
  %v3483 = vadd.f32 0.0, %v3482
  %3484 = vmatmul.f32.gmra.mxu0 %v3223
  %v3485 = vpop.f32.mrf.mxu0
  %v3486 = vadd.f32 0.0, %v3485
  %3487 = vmatmul.f32.gmra.mxu0 %v3226
  %v3488 = vpop.f32.mrf.mxu0
  %v3489 = vadd.f32 0.0, %v3488
  %3490 = vmatmul.f32.gmra.mxu0 %v3229
  %v3491 = vpop.f32.mrf.mxu0
  %v3492 = vadd.f32 0.0, %v3491
  %3493 = vmatmul.f32.gmra.mxu0 %v3232
  %v3494 = vpop.f32.mrf.mxu0
  %v3495 = vadd.f32 0.0, %v3494
  %3496 = vmatmul.f32.gmra.mxu0 %v3235
  %v3497 = vpop.f32.mrf.mxu0
  %v3498 = vadd.f32 0.0, %v3497
  %3499 = vmatmul.f32.gmra.mxu0 %v3238
  %v3500 = vpop.f32.mrf.mxu0
  %v3501 = vadd.f32 0.0, %v3500
  %3502 = vmatmul.f32.gmra.mxu0 %v3241
  %v3503 = vpop.f32.mrf.mxu0
  %v3504 = vadd.f32 0.0, %v3503
  %3505 = vmatmul.f32.gmra.mxu0 %v3244
  %v3506 = vpop.f32.mrf.mxu0
  %v3507 = vadd.f32 0.0, %v3506
  %3508 = vmatmul.f32.gmra.mxu0 %v3247
  %v3509 = vpop.f32.mrf.mxu0
  %v3510 = vadd.f32 0.0, %v3509
  %3511 = vmatmul.f32.gmra.mxu0 %v3250
  %v3512 = vpop.f32.mrf.mxu0
  %v3513 = vadd.f32 0.0, %v3512
  %3514 = vmatmul.f32.gmra.mxu0 %v3253
  %v3515 = vpop.f32.mrf.mxu0
  %v3516 = vadd.f32 0.0, %v3515
  %3517 = vmatmul.f32.gmra.mxu0 %v3256
  %v3518 = vpop.f32.mrf.mxu0
  %v3519 = vadd.f32 0.0, %v3518
  %3520 = vmatmul.f32.gmra.mxu0 %v3259
  %v3521 = vpop.f32.mrf.mxu0
  %v3522 = vadd.f32 0.0, %v3521
  %3523 = vmatmul.f32.gmra.mxu0 %v3262
  %v3524 = vpop.f32.mrf.mxu0
  %v3525 = vadd.f32 0.0, %v3524
  %3526 = vmatmul.f32.gmra.mxu0 %v3265
  %v3527 = vpop.f32.mrf.mxu0
  %v3528 = vadd.f32 0.0, %v3527
  %3529 = vmatmul.f32.gmra.mxu0 %v3268
  %v3530 = vpop.f32.mrf.mxu0
  %v3531 = vadd.f32 0.0, %v3530
  %3532 = vmatmul.f32.gmra.mxu0 %v3271
  %v3533 = vpop.f32.mrf.mxu0
  %v3534 = vadd.f32 0.0, %v3533
  %3535 = vmatmul.f32.gmra.mxu0 %v3274
  %v3536 = vpop.f32.mrf.mxu0
  %v3537 = vadd.f32 0.0, %v3536
  %3538 = vmatmul.f32.gmra.mxu0 %v3277
  %v3539 = vpop.f32.mrf.mxu0
  %v3540 = vadd.f32 0.0, %v3539
  %3541 = vmatmul.f32.gmra.mxu0 %v3280
  %v3542 = vpop.f32.mrf.mxu0
  %v3543 = vadd.f32 0.0, %v3542
  %3544 = vmatmul.f32.gmra.mxu0 %v3283
  %v3545 = vpop.f32.mrf.mxu0
  %v3546 = vadd.f32 0.0, %v3545
  %3547 = vmatmul.f32.gmra.mxu0 %v3286
  %v3548 = vpop.f32.mrf.mxu0
  %v3549 = vadd.f32 0.0, %v3548
  %3550 = vmatmul.f32.gmra.mxu0 %v3289
  %v3551 = vpop.f32.mrf.mxu0
  %v3552 = vadd.f32 0.0, %v3551
  %3553 = vmatmul.f32.gmra.mxu0 %v3292
  %v3554 = vpop.f32.mrf.mxu0
  %v3555 = vadd.f32 0.0, %v3554
  %3556 = vmatmul.f32.gmra.mxu0 %v3295
  %v3557 = vpop.f32.mrf.mxu0
  %v3558 = vadd.f32 0.0, %v3557
  %3559 = vmatmul.f32.gmra.mxu0 %v3298
  %v3560 = vpop.f32.mrf.mxu0
  %v3561 = vadd.f32 0.0, %v3560
  %3562 = vmatmul.f32.gmra.mxu0 %v3301
  %v3563 = vpop.f32.mrf.mxu0
  %v3564 = vadd.f32 0.0, %v3563
  %3565 = vmatmul.f32.gmra.mxu0 %v3304
  %v3566 = vpop.f32.mrf.mxu0
  %v3567 = vadd.f32 0.0, %v3566
  %3568 = vmatmul.f32.gmra.mxu0 %v3307
  %v3569 = vpop.f32.mrf.mxu0
  %v3570 = vadd.f32 0.0, %v3569
  %3571 = vmatmul.f32.gmra.mxu0 %v3310
  %v3572 = vpop.f32.mrf.mxu0
  %v3573 = vadd.f32 0.0, %v3572
  %3574 = vmatmul.f32.gmra.mxu0 %v3313
  %v3575 = vpop.f32.mrf.mxu0
  %v3576 = vadd.f32 0.0, %v3575
  %3577 = vmatmul.f32.gmra.mxu0 %v3316
  %v3578 = vpop.f32.mrf.mxu0
  %v3579 = vadd.f32 0.0, %v3578
  %3580 = vmatmul.f32.gmra.mxu0 %v3319
  %v3581 = vpop.f32.mrf.mxu0
  %v3582 = vadd.f32 0.0, %v3581
  %3583 = vmatmul.f32.gmra.mxu0 %v3322
  %v3584 = vpop.f32.mrf.mxu0
  %v3585 = vadd.f32 0.0, %v3584
  %3586 = vmatmul.f32.gmra.mxu0 %v3325
  %v3587 = vpop.f32.mrf.mxu0
  %v3588 = vadd.f32 0.0, %v3587
  %3589 = vmatmul.f32.gmra.mxu0 %v3328
  %v3590 = vpop.f32.mrf.mxu0
  %v3591 = vadd.f32 0.0, %v3590
  %3592 = vmatmul.f32.gmra.mxu0 %v3331
  %v3593 = vpop.f32.mrf.mxu0
  %v3594 = vadd.f32 0.0, %v3593
  %3595 = vmatmul.f32.gmra.mxu0 %v3334
  %v3596 = vpop.f32.mrf.mxu0
  %v3597 = vadd.f32 0.0, %v3596
  %3598 = vmatmul.f32.gmra.mxu0 %v3337
  %v3599 = vpop.f32.mrf.mxu0
  %v3600 = vadd.f32 0.0, %v3599
  %3601 = vmatmul.f32.gmra.mxu0 %v3340
  %v3602 = vpop.f32.mrf.mxu0
  %v3603 = vadd.f32 0.0, %v3602
  %3604 = vmatmul.f32.gmra.mxu0 %v3343
  %v3605 = vpop.f32.mrf.mxu0
  %v3606 = vadd.f32 0.0, %v3605
  %3607 = vmatmul.f32.gmra.mxu0 %v3346
  %v3608 = vpop.f32.mrf.mxu0
  %v3609 = vadd.f32 0.0, %v3608
  %3610 = vmatmul.f32.gmra.mxu0 %v3349
  %v3611 = vpop.f32.mrf.mxu0
  %v3612 = vadd.f32 0.0, %v3611
  %3613 = vmatmul.f32.gmra.mxu0 %v3352
  %v3614 = vpop.f32.mrf.mxu0
  %v3615 = vadd.f32 0.0, %v3614
  %3616 = vmatmul.f32.gmra.mxu0 %v3355
  %v3617 = vpop.f32.mrf.mxu0
  %v3618 = vadd.f32 0.0, %v3617
  %3619 = vmatmul.f32.gmra.mxu0 %v3358
  %v3620 = vpop.f32.mrf.mxu0
  %v3621 = vadd.f32 0.0, %v3620
  %3622 = vmatmul.f32.gmra.mxu0 %v3361
  %v3623 = vpop.f32.mrf.mxu0
  %v3624 = vadd.f32 0.0, %v3623
  %3625 = vmatmul.f32.gmra.mxu0 %v3364
  %v3626 = vpop.f32.mrf.mxu0
  %v3627 = vadd.f32 0.0, %v3626
  %3628 = vdwg.mxu0
  %v3629 = vadd.f32 %v2959, %v3387
  %v3630 = vadd.f32 %v2960, %v3390
  %v3631 = vadd.f32 %v2961, %v3393
  %v3632 = vadd.f32 %v2962, %v3396
  %v3633 = vadd.f32 %v2963, %v3399
  %v3634 = vadd.f32 %v2964, %v3402
  %v3635 = vadd.f32 %v2965, %v3405
  %v3636 = vadd.f32 %v2966, %v3408
  %v3637 = vadd.f32 %v2967, %v3411
  %v3638 = vadd.f32 %v2968, %v3414
  %v3639 = vadd.f32 %v2969, %v3417
  %v3640 = vadd.f32 %v2970, %v3420
  %v3641 = vadd.f32 %v2971, %v3423
  %v3642 = vadd.f32 %v2972, %v3426
  %v3643 = vadd.f32 %v2973, %v3429
  %v3644 = vadd.f32 %v2974, %v3432
  %v3645 = vadd.f32 %v2975, %v3435
  %v3646 = vadd.f32 %v2976, %v3438
  %v3647 = vadd.f32 %v2977, %v3441
  %v3648 = vadd.f32 %v2978, %v3444
  %v3649 = vadd.f32 %v2979, %v3447
  %v3650 = vadd.f32 %v2980, %v3450
  %v3651 = vadd.f32 %v2981, %v3453
  %v3652 = vadd.f32 %v2982, %v3456
  %v3653 = vadd.f32 %v2983, %v3459
  %v3654 = vadd.f32 %v2984, %v3462
  %v3655 = vadd.f32 %v2985, %v3465
  %v3656 = vadd.f32 %v2986, %v3468
  %v3657 = vadd.f32 %v2987, %v3471
  %v3658 = vadd.f32 %v2988, %v3474
  %v3659 = vadd.f32 %v2989, %v3477
  %v3660 = vadd.f32 %v2990, %v3480
  %v3661 = vadd.f32 %v2991, %v3483
  %v3662 = vadd.f32 %v2992, %v3486
  %v3663 = vadd.f32 %v2993, %v3489
  %v3664 = vadd.f32 %v2994, %v3492
  %v3665 = vadd.f32 %v2995, %v3495
  %v3666 = vadd.f32 %v2996, %v3498
  %v3667 = vadd.f32 %v2997, %v3501
  %v3668 = vadd.f32 %v2998, %v3504
  %v3669 = vadd.f32 %v2999, %v3507
  %v3670 = vadd.f32 %v3000, %v3510
  %v3671 = vadd.f32 %v3001, %v3513
  %v3672 = vadd.f32 %v3002, %v3516
  %v3673 = vadd.f32 %v3003, %v3519
  %v3674 = vadd.f32 %v3004, %v3522
  %v3675 = vadd.f32 %v3005, %v3525
  %v3676 = vadd.f32 %v3006, %v3528
  %v3677 = vadd.f32 %v3007, %v3531
  %v3678 = vadd.f32 %v3008, %v3534
  %v3679 = vadd.f32 %v3009, %v3537
  %v3680 = vadd.f32 %v3010, %v3540
  %v3681 = vadd.f32 %v3011, %v3543
  %v3682 = vadd.f32 %v3012, %v3546
  %v3683 = vadd.f32 %v3013, %v3549
  %v3684 = vadd.f32 %v3014, %v3552
  %v3685 = vadd.f32 %v3015, %v3555
  %v3686 = vadd.f32 %v3016, %v3558
  %v3687 = vadd.f32 %v3017, %v3561
  %v3688 = vadd.f32 %v3018, %v3564
  %v3689 = vadd.f32 %v3019, %v3567
  %v3690 = vadd.f32 %v3020, %v3570
  %v3691 = vadd.f32 %v3021, %v3573
  %v3692 = vadd.f32 %v3022, %v3576
  %v3693 = vadd.f32 %v3023, %v3579
  %v3694 = vadd.f32 %v3024, %v3582
  %v3695 = vadd.f32 %v3025, %v3585
  %v3696 = vadd.f32 %v3026, %v3588
  %v3697 = vadd.f32 %v3027, %v3591
  %v3698 = vadd.f32 %v3028, %v3594
  %v3699 = vadd.f32 %v3029, %v3597
  %v3700 = vadd.f32 %v3030, %v3600
  %v3701 = vadd.f32 %v3031, %v3603
  %v3702 = vadd.f32 %v3032, %v3606
  %v3703 = vadd.f32 %v3033, %v3609
  %v3704 = vadd.f32 %v3034, %v3612
  %v3705 = vadd.f32 %v3035, %v3615
  %v3706 = vadd.f32 %v3036, %v3618
  %v3707 = vadd.f32 %v3037, %v3621
  %v3708 = vadd.f32 %v3038, %v3624
  %v3709 = vadd.f32 %v3039, %v3627
  %v3710 = vld [vmem:[#allocation2 + $0x18] sm:$0xff]
  %v3711 = vld [vmem:[#allocation2 + $0x20] sm:$0xff]
  %v3712 = vld [vmem:[#allocation2 + $0x28] sm:$0xff]
  %v3713 = vld [vmem:[#allocation2 + $0x30] sm:$0xff]
  %v3714 = vld [vmem:[#allocation2 + $0x38] sm:$0xff]
  %v3715 = vld [vmem:[#allocation2 + $0x40] sm:$0xff]
  %v3716 = vld [vmem:[#allocation2 + $0x48] sm:$0xff]
  %v3717 = vld [vmem:[#allocation2 + $0x50] sm:$0xff]
  %v3718 = vld [vmem:[#allocation2 + $0x58] sm:$0xff]
  %v3719 = vld [vmem:[#allocation2 + $0x60] sm:$0xff]
  %v3720 = vld [vmem:[#allocation2 + $0x68] sm:$0xff]
  %v3721 = vld [vmem:[#allocation2 + $0x70] sm:$0xff]
  %v3722 = vld [vmem:[#allocation2 + $0x78] sm:$0xff]
  %v3723 = vld [vmem:[#allocation2 + $0x80] sm:$0xff]
  %v3724 = vld [vmem:[#allocation2 + $0x88] sm:$0xff]
  %v3725 = vld [vmem:[#allocation2 + $0x90] sm:$0xff]
  %v3726 = vld [vmem:[#allocation2 + $0x98] sm:$0xff]
  %v3727 = vld [vmem:[#allocation2 + $0xa0] sm:$0xff]
  %v3728 = vld [vmem:[#allocation2 + $0xa8] sm:$0xff]
  %v3729 = vld [vmem:[#allocation2 + $0xb0] sm:$0xff]
  %v3730 = vld [vmem:[#allocation2 + $0xb8] sm:$0xff]
  %v3731 = vld [vmem:[#allocation2 + $0xc0] sm:$0xff]
  %v3732 = vld [vmem:[#allocation2 + $0xc8] sm:$0xff]
  %v3733 = vld [vmem:[#allocation2 + $0xd0] sm:$0xff]
  %v3734 = vld [vmem:[#allocation2 + $0xd8] sm:$0xff]
  %v3735 = vld [vmem:[#allocation2 + $0xe0] sm:$0xff]
  %v3736 = vld [vmem:[#allocation2 + $0xe8] sm:$0xff]
  %v3737 = vld [vmem:[#allocation2 + $0xf0] sm:$0xff]
  %v3738 = vld [vmem:[#allocation2 + $0xf8] sm:$0xff]
  %v3739 = vld [vmem:[#allocation2 + $0x100] sm:$0xff]
  %v3740 = vld [vmem:[#allocation2 + $0x108] sm:$0xff]
  %v3741 = vld [vmem:[#allocation2 + $0x110] sm:$0xff]
  %v3742 = vld [vmem:[#allocation2 + $0x118] sm:$0xff]
  %v3743 = vld [vmem:[#allocation2 + $0x120] sm:$0xff]
  %v3744 = vld [vmem:[#allocation2 + $0x128] sm:$0xff]
  %v3745 = vld [vmem:[#allocation2 + $0x130] sm:$0xff]
  %v3746 = vld [vmem:[#allocation2 + $0x138] sm:$0xff]
  %v3747 = vld [vmem:[#allocation2 + $0x140] sm:$0xff]
  %v3748 = vld [vmem:[#allocation2 + $0x148] sm:$0xff]
  %v3749 = vld [vmem:[#allocation2 + $0x150] sm:$0xff]
  %v3750 = vld [vmem:[#allocation2 + $0x158] sm:$0xff]
  %v3751 = vld [vmem:[#allocation2 + $0x160] sm:$0xff]
  %v3752 = vld [vmem:[#allocation2 + $0x168] sm:$0xff]
  %v3753 = vld [vmem:[#allocation2 + $0x170] sm:$0xff]
  %v3754 = vld [vmem:[#allocation2 + $0x178] sm:$0xff]
  %v3755 = vld [vmem:[#allocation2 + $0x180] sm:$0xff]
  %v3756 = vld [vmem:[#allocation2 + $0x188] sm:$0xff]
  %v3757 = vld [vmem:[#allocation2 + $0x190] sm:$0xff]
  %v3758 = vld [vmem:[#allocation2 + $0x198] sm:$0xff]
  %v3759 = vld [vmem:[#allocation2 + $0x1a0] sm:$0xff]
  %v3760 = vld [vmem:[#allocation2 + $0x1a8] sm:$0xff]
  %v3761 = vld [vmem:[#allocation2 + $0x1b0] sm:$0xff]
  %v3762 = vld [vmem:[#allocation2 + $0x1b8] sm:$0xff]
  %v3763 = vld [vmem:[#allocation2 + $0x1c0] sm:$0xff]
  %v3764 = vld [vmem:[#allocation2 + $0x1c8] sm:$0xff]
  %v3765 = vld [vmem:[#allocation2 + $0x1d0] sm:$0xff]
  %v3766 = vld [vmem:[#allocation2 + $0x1d8] sm:$0xff]
  %v3767 = vld [vmem:[#allocation2 + $0x1e0] sm:$0xff]
  %v3768 = vld [vmem:[#allocation2 + $0x1e8] sm:$0xff]
  %v3769 = vld [vmem:[#allocation2 + $0x1f0] sm:$0xff]
  %v3770 = vld [vmem:[#allocation2 + $0x1f8] sm:$0xff]
  %v3771 = vld [vmem:[#allocation2 + $0x200] sm:$0xff]
  %v3772 = vld [vmem:[#allocation2 + $0x208] sm:$0xff]
  %v3773 = vld [vmem:[#allocation2 + $0x210] sm:$0xff]
  %v3774 = vld [vmem:[#allocation2 + $0x218] sm:$0xff]
  %v3775 = vld [vmem:[#allocation2 + $0x220] sm:$0xff]
  %v3776 = vld [vmem:[#allocation2 + $0x228] sm:$0xff]
  %v3777 = vld [vmem:[#allocation2 + $0x230] sm:$0xff]
  %v3778 = vld [vmem:[#allocation2 + $0x238] sm:$0xff]
  %v3779 = vld [vmem:[#allocation2 + $0x240] sm:$0xff]
  %v3780 = vld [vmem:[#allocation2 + $0x248] sm:$0xff]
  %v3781 = vld [vmem:[#allocation2 + $0x250] sm:$0xff]
  %v3782 = vld [vmem:[#allocation2 + $0x258] sm:$0xff]
  %v3783 = vld [vmem:[#allocation2 + $0x260] sm:$0xff]
  %v3784 = vld [vmem:[#allocation2 + $0x268] sm:$0xff]
  %v3785 = vld [vmem:[#allocation2 + $0x270] sm:$0xff]
  %v3786 = vld [vmem:[#allocation2 + $0x278] sm:$0xff]
  %v3787 = vld [vmem:[#allocation2 + $0x280] sm:$0xff]
  %v3788 = vld [vmem:[#allocation2 + $0x288] sm:$0xff]
  %v3789 = vld [vmem:[#allocation2 + $0x290] sm:$0xff]
  %v3790 = vld [vmem:[#allocation2 + $0x298] sm:$0xff]
  %s3791 = scalar_lea.vmem %s3, 16
  %v3792 = vld [vmem:[%s3791] sm:$0xf]
  %v3794 = vsel %vm179, %v3710, 0
  %v3797 = vsel %vm179, %v3711, 0
  %v3800 = vsel %vm179, %v3712, 0
  %v3803 = vsel %vm179, %v3713, 0
  %v3806 = vsel %vm179, %v3714, 0
  %v3809 = vsel %vm179, %v3715, 0
  %v3812 = vsel %vm179, %v3716, 0
  %v3815 = vsel %vm179, %v3717, 0
  %v3818 = vsel %vm179, %v3718, 0
  %v3821 = vsel %vm179, %v3719, 0
  %v3824 = vsel %vm179, %v3720, 0
  %v3827 = vsel %vm179, %v3721, 0
  %v3830 = vsel %vm179, %v3722, 0
  %v3833 = vsel %vm179, %v3723, 0
  %v3836 = vsel %vm179, %v3724, 0
  %v3839 = vsel %vm179, %v3725, 0
  %v3842 = vsel %vm179, %v3726, 0
  %v3845 = vsel %vm179, %v3727, 0
  %v3848 = vsel %vm179, %v3728, 0
  %v3851 = vsel %vm179, %v3729, 0
  %v3854 = vsel %vm179, %v3730, 0
  %v3857 = vsel %vm179, %v3731, 0
  %v3860 = vsel %vm179, %v3732, 0
  %v3863 = vsel %vm179, %v3733, 0
  %v3866 = vsel %vm179, %v3734, 0
  %v3869 = vsel %vm179, %v3735, 0
  %v3872 = vsel %vm179, %v3736, 0
  %v3875 = vsel %vm179, %v3737, 0
  %v3878 = vsel %vm179, %v3738, 0
  %v3881 = vsel %vm179, %v3739, 0
  %v3884 = vsel %vm179, %v3740, 0
  %v3887 = vsel %vm179, %v3741, 0
  %v3890 = vsel %vm179, %v3742, 0
  %v3893 = vsel %vm179, %v3743, 0
  %v3896 = vsel %vm179, %v3744, 0
  %v3899 = vsel %vm179, %v3745, 0
  %v3902 = vsel %vm179, %v3746, 0
  %v3905 = vsel %vm179, %v3747, 0
  %v3908 = vsel %vm179, %v3748, 0
  %v3911 = vsel %vm179, %v3749, 0
  %v3914 = vsel %vm179, %v3750, 0
  %v3917 = vsel %vm179, %v3751, 0
  %v3920 = vsel %vm179, %v3752, 0
  %v3923 = vsel %vm179, %v3753, 0
  %v3926 = vsel %vm179, %v3754, 0
  %v3929 = vsel %vm179, %v3755, 0
  %v3932 = vsel %vm179, %v3756, 0
  %v3935 = vsel %vm179, %v3757, 0
  %v3938 = vsel %vm179, %v3758, 0
  %v3941 = vsel %vm179, %v3759, 0
  %v3944 = vsel %vm179, %v3760, 0
  %v3947 = vsel %vm179, %v3761, 0
  %v3950 = vsel %vm179, %v3762, 0
  %v3953 = vsel %vm179, %v3763, 0
  %v3956 = vsel %vm179, %v3764, 0
  %v3959 = vsel %vm179, %v3765, 0
  %v3962 = vsel %vm179, %v3766, 0
  %v3965 = vsel %vm179, %v3767, 0
  %v3968 = vsel %vm179, %v3768, 0
  %v3971 = vsel %vm179, %v3769, 0
  %v3974 = vsel %vm179, %v3770, 0
  %v3977 = vsel %vm179, %v3771, 0
  %v3980 = vsel %vm179, %v3772, 0
  %v3983 = vsel %vm179, %v3773, 0
  %v3986 = vsel %vm179, %v3774, 0
  %v3989 = vsel %vm179, %v3775, 0
  %v3992 = vsel %vm179, %v3776, 0
  %v3995 = vsel %vm179, %v3777, 0
  %v3998 = vsel %vm179, %v3778, 0
  %v4001 = vsel %vm179, %v3779, 0
  %v4004 = vsel %vm179, %v3780, 0
  %v4007 = vsel %vm179, %v3781, 0
  %v4010 = vsel %vm179, %v3782, 0
  %v4013 = vsel %vm179, %v3783, 0
  %v4016 = vsel %vm179, %v3784, 0
  %v4019 = vsel %vm179, %v3785, 0
  %v4022 = vsel %vm179, %v3786, 0
  %v4025 = vsel %vm179, %v3787, 0
  %v4028 = vsel %vm179, %v3788, 0
  %v4031 = vsel %vm179, %v3789, 0
  %v4034 = vsel %vm179, %v3790, 0
  %v4037 = vsel %vm1600, %v3792, 0
  %4039 = vmatpush.msra.mxu0 0.0
  %4040 = vmatpush.msra.mxu0 0.0
  %4041 = vmatpush.msra.mxu0 0.0
  %4042 = vmatpush.msra.mxu0 0.0
  %4043 = vmatpush.msra.mxu0 0.0
  %4044 = vmatpush.msra.mxu0 0.0
  %4045 = vmatpush.msra.mxu0 0.0
  %4046 = vmatpush.msra.mxu0 0.0
  %4047 = vmatpush.msra.mxu0 0.0
  %4048 = vmatpush.msra.mxu0 0.0
  %4049 = vmatpush.msra.mxu0 0.0
  %4050 = vmatpush.msra.mxu0 0.0
  %4051 = vmatpush.msra.mxu0 0.0
  %4052 = vmatpush.msra.mxu0 0.0
  %4053 = vmatpush.msra.mxu0 0.0
  %4054 = vmatpush.msra.mxu0 %v4037
  %4055 = vmatmul.f32.gmra.mxu0 %v3794
  %v4056 = vpop.f32.mrf.mxu0
  %v4057 = vadd.f32 0.0, %v4056
  %4058 = vmatmul.f32.gmra.mxu0 %v3797
  %v4059 = vpop.f32.mrf.mxu0
  %v4060 = vadd.f32 0.0, %v4059
  %4061 = vmatmul.f32.gmra.mxu0 %v3800
  %v4062 = vpop.f32.mrf.mxu0
  %v4063 = vadd.f32 0.0, %v4062
  %4064 = vmatmul.f32.gmra.mxu0 %v3803
  %v4065 = vpop.f32.mrf.mxu0
  %v4066 = vadd.f32 0.0, %v4065
  %4067 = vmatmul.f32.gmra.mxu0 %v3806
  %v4068 = vpop.f32.mrf.mxu0
  %v4069 = vadd.f32 0.0, %v4068
  %4070 = vmatmul.f32.gmra.mxu0 %v3809
  %v4071 = vpop.f32.mrf.mxu0
  %v4072 = vadd.f32 0.0, %v4071
  %4073 = vmatmul.f32.gmra.mxu0 %v3812
  %v4074 = vpop.f32.mrf.mxu0
  %v4075 = vadd.f32 0.0, %v4074
  %4076 = vmatmul.f32.gmra.mxu0 %v3815
  %v4077 = vpop.f32.mrf.mxu0
  %v4078 = vadd.f32 0.0, %v4077
  %4079 = vmatmul.f32.gmra.mxu0 %v3818
  %v4080 = vpop.f32.mrf.mxu0
  %v4081 = vadd.f32 0.0, %v4080
  %4082 = vmatmul.f32.gmra.mxu0 %v3821
  %v4083 = vpop.f32.mrf.mxu0
  %v4084 = vadd.f32 0.0, %v4083
  %4085 = vmatmul.f32.gmra.mxu0 %v3824
  %v4086 = vpop.f32.mrf.mxu0
  %v4087 = vadd.f32 0.0, %v4086
  %4088 = vmatmul.f32.gmra.mxu0 %v3827
  %v4089 = vpop.f32.mrf.mxu0
  %v4090 = vadd.f32 0.0, %v4089
  %4091 = vmatmul.f32.gmra.mxu0 %v3830
  %v4092 = vpop.f32.mrf.mxu0
  %v4093 = vadd.f32 0.0, %v4092
  %4094 = vmatmul.f32.gmra.mxu0 %v3833
  %v4095 = vpop.f32.mrf.mxu0
  %v4096 = vadd.f32 0.0, %v4095
  %4097 = vmatmul.f32.gmra.mxu0 %v3836
  %v4098 = vpop.f32.mrf.mxu0
  %v4099 = vadd.f32 0.0, %v4098
  %4100 = vmatmul.f32.gmra.mxu0 %v3839
  %v4101 = vpop.f32.mrf.mxu0
  %v4102 = vadd.f32 0.0, %v4101
  %4103 = vmatmul.f32.gmra.mxu0 %v3842
  %v4104 = vpop.f32.mrf.mxu0
  %v4105 = vadd.f32 0.0, %v4104
  %4106 = vmatmul.f32.gmra.mxu0 %v3845
  %v4107 = vpop.f32.mrf.mxu0
  %v4108 = vadd.f32 0.0, %v4107
  %4109 = vmatmul.f32.gmra.mxu0 %v3848
  %v4110 = vpop.f32.mrf.mxu0
  %v4111 = vadd.f32 0.0, %v4110
  %4112 = vmatmul.f32.gmra.mxu0 %v3851
  %v4113 = vpop.f32.mrf.mxu0
  %v4114 = vadd.f32 0.0, %v4113
  %4115 = vmatmul.f32.gmra.mxu0 %v3854
  %v4116 = vpop.f32.mrf.mxu0
  %v4117 = vadd.f32 0.0, %v4116
  %4118 = vmatmul.f32.gmra.mxu0 %v3857
  %v4119 = vpop.f32.mrf.mxu0
  %v4120 = vadd.f32 0.0, %v4119
  %4121 = vmatmul.f32.gmra.mxu0 %v3860
  %v4122 = vpop.f32.mrf.mxu0
  %v4123 = vadd.f32 0.0, %v4122
  %4124 = vmatmul.f32.gmra.mxu0 %v3863
  %v4125 = vpop.f32.mrf.mxu0
  %v4126 = vadd.f32 0.0, %v4125
  %4127 = vmatmul.f32.gmra.mxu0 %v3866
  %v4128 = vpop.f32.mrf.mxu0
  %v4129 = vadd.f32 0.0, %v4128
  %4130 = vmatmul.f32.gmra.mxu0 %v3869
  %v4131 = vpop.f32.mrf.mxu0
  %v4132 = vadd.f32 0.0, %v4131
  %4133 = vmatmul.f32.gmra.mxu0 %v3872
  %v4134 = vpop.f32.mrf.mxu0
  %v4135 = vadd.f32 0.0, %v4134
  %4136 = vmatmul.f32.gmra.mxu0 %v3875
  %v4137 = vpop.f32.mrf.mxu0
  %v4138 = vadd.f32 0.0, %v4137
  %4139 = vmatmul.f32.gmra.mxu0 %v3878
  %v4140 = vpop.f32.mrf.mxu0
  %v4141 = vadd.f32 0.0, %v4140
  %4142 = vmatmul.f32.gmra.mxu0 %v3881
  %v4143 = vpop.f32.mrf.mxu0
  %v4144 = vadd.f32 0.0, %v4143
  %4145 = vmatmul.f32.gmra.mxu0 %v3884
  %v4146 = vpop.f32.mrf.mxu0
  %v4147 = vadd.f32 0.0, %v4146
  %4148 = vmatmul.f32.gmra.mxu0 %v3887
  %v4149 = vpop.f32.mrf.mxu0
  %v4150 = vadd.f32 0.0, %v4149
  %4151 = vmatmul.f32.gmra.mxu0 %v3890
  %v4152 = vpop.f32.mrf.mxu0
  %v4153 = vadd.f32 0.0, %v4152
  %4154 = vmatmul.f32.gmra.mxu0 %v3893
  %v4155 = vpop.f32.mrf.mxu0
  %v4156 = vadd.f32 0.0, %v4155
  %4157 = vmatmul.f32.gmra.mxu0 %v3896
  %v4158 = vpop.f32.mrf.mxu0
  %v4159 = vadd.f32 0.0, %v4158
  %4160 = vmatmul.f32.gmra.mxu0 %v3899
  %v4161 = vpop.f32.mrf.mxu0
  %v4162 = vadd.f32 0.0, %v4161
  %4163 = vmatmul.f32.gmra.mxu0 %v3902
  %v4164 = vpop.f32.mrf.mxu0
  %v4165 = vadd.f32 0.0, %v4164
  %4166 = vmatmul.f32.gmra.mxu0 %v3905
  %v4167 = vpop.f32.mrf.mxu0
  %v4168 = vadd.f32 0.0, %v4167
  %4169 = vmatmul.f32.gmra.mxu0 %v3908
  %v4170 = vpop.f32.mrf.mxu0
  %v4171 = vadd.f32 0.0, %v4170
  %4172 = vmatmul.f32.gmra.mxu0 %v3911
  %v4173 = vpop.f32.mrf.mxu0
  %v4174 = vadd.f32 0.0, %v4173
  %4175 = vmatmul.f32.gmra.mxu0 %v3914
  %v4176 = vpop.f32.mrf.mxu0
  %v4177 = vadd.f32 0.0, %v4176
  %4178 = vmatmul.f32.gmra.mxu0 %v3917
  %v4179 = vpop.f32.mrf.mxu0
  %v4180 = vadd.f32 0.0, %v4179
  %4181 = vmatmul.f32.gmra.mxu0 %v3920
  %v4182 = vpop.f32.mrf.mxu0
  %v4183 = vadd.f32 0.0, %v4182
  %4184 = vmatmul.f32.gmra.mxu0 %v3923
  %v4185 = vpop.f32.mrf.mxu0
  %v4186 = vadd.f32 0.0, %v4185
  %4187 = vmatmul.f32.gmra.mxu0 %v3926
  %v4188 = vpop.f32.mrf.mxu0
  %v4189 = vadd.f32 0.0, %v4188
  %4190 = vmatmul.f32.gmra.mxu0 %v3929
  %v4191 = vpop.f32.mrf.mxu0
  %v4192 = vadd.f32 0.0, %v4191
  %4193 = vmatmul.f32.gmra.mxu0 %v3932
  %v4194 = vpop.f32.mrf.mxu0
  %v4195 = vadd.f32 0.0, %v4194
  %4196 = vmatmul.f32.gmra.mxu0 %v3935
  %v4197 = vpop.f32.mrf.mxu0
  %v4198 = vadd.f32 0.0, %v4197
  %4199 = vmatmul.f32.gmra.mxu0 %v3938
  %v4200 = vpop.f32.mrf.mxu0
  %v4201 = vadd.f32 0.0, %v4200
  %4202 = vmatmul.f32.gmra.mxu0 %v3941
  %v4203 = vpop.f32.mrf.mxu0
  %v4204 = vadd.f32 0.0, %v4203
  %4205 = vmatmul.f32.gmra.mxu0 %v3944
  %v4206 = vpop.f32.mrf.mxu0
  %v4207 = vadd.f32 0.0, %v4206
  %4208 = vmatmul.f32.gmra.mxu0 %v3947
  %v4209 = vpop.f32.mrf.mxu0
  %v4210 = vadd.f32 0.0, %v4209
  %4211 = vmatmul.f32.gmra.mxu0 %v3950
  %v4212 = vpop.f32.mrf.mxu0
  %v4213 = vadd.f32 0.0, %v4212
  %4214 = vmatmul.f32.gmra.mxu0 %v3953
  %v4215 = vpop.f32.mrf.mxu0
  %v4216 = vadd.f32 0.0, %v4215
  %4217 = vmatmul.f32.gmra.mxu0 %v3956
  %v4218 = vpop.f32.mrf.mxu0
  %v4219 = vadd.f32 0.0, %v4218
  %4220 = vmatmul.f32.gmra.mxu0 %v3959
  %v4221 = vpop.f32.mrf.mxu0
  %v4222 = vadd.f32 0.0, %v4221
  %4223 = vmatmul.f32.gmra.mxu0 %v3962
  %v4224 = vpop.f32.mrf.mxu0
  %v4225 = vadd.f32 0.0, %v4224
  %4226 = vmatmul.f32.gmra.mxu0 %v3965
  %v4227 = vpop.f32.mrf.mxu0
  %v4228 = vadd.f32 0.0, %v4227
  %4229 = vmatmul.f32.gmra.mxu0 %v3968
  %v4230 = vpop.f32.mrf.mxu0
  %v4231 = vadd.f32 0.0, %v4230
  %4232 = vmatmul.f32.gmra.mxu0 %v3971
  %v4233 = vpop.f32.mrf.mxu0
  %v4234 = vadd.f32 0.0, %v4233
  %4235 = vmatmul.f32.gmra.mxu0 %v3974
  %v4236 = vpop.f32.mrf.mxu0
  %v4237 = vadd.f32 0.0, %v4236
  %4238 = vmatmul.f32.gmra.mxu0 %v3977
  %v4239 = vpop.f32.mrf.mxu0
  %v4240 = vadd.f32 0.0, %v4239
  %4241 = vmatmul.f32.gmra.mxu0 %v3980
  %v4242 = vpop.f32.mrf.mxu0
  %v4243 = vadd.f32 0.0, %v4242
  %4244 = vmatmul.f32.gmra.mxu0 %v3983
  %v4245 = vpop.f32.mrf.mxu0
  %v4246 = vadd.f32 0.0, %v4245
  %4247 = vmatmul.f32.gmra.mxu0 %v3986
  %v4248 = vpop.f32.mrf.mxu0
  %v4249 = vadd.f32 0.0, %v4248
  %4250 = vmatmul.f32.gmra.mxu0 %v3989
  %v4251 = vpop.f32.mrf.mxu0
  %v4252 = vadd.f32 0.0, %v4251
  %4253 = vmatmul.f32.gmra.mxu0 %v3992
  %v4254 = vpop.f32.mrf.mxu0
  %v4255 = vadd.f32 0.0, %v4254
  %4256 = vmatmul.f32.gmra.mxu0 %v3995
  %v4257 = vpop.f32.mrf.mxu0
  %v4258 = vadd.f32 0.0, %v4257
  %4259 = vmatmul.f32.gmra.mxu0 %v3998
  %v4260 = vpop.f32.mrf.mxu0
  %v4261 = vadd.f32 0.0, %v4260
  %4262 = vmatmul.f32.gmra.mxu0 %v4001
  %v4263 = vpop.f32.mrf.mxu0
  %v4264 = vadd.f32 0.0, %v4263
  %4265 = vmatmul.f32.gmra.mxu0 %v4004
  %v4266 = vpop.f32.mrf.mxu0
  %v4267 = vadd.f32 0.0, %v4266
  %4268 = vmatmul.f32.gmra.mxu0 %v4007
  %v4269 = vpop.f32.mrf.mxu0
  %v4270 = vadd.f32 0.0, %v4269
  %4271 = vmatmul.f32.gmra.mxu0 %v4010
  %v4272 = vpop.f32.mrf.mxu0
  %v4273 = vadd.f32 0.0, %v4272
  %4274 = vmatmul.f32.gmra.mxu0 %v4013
  %v4275 = vpop.f32.mrf.mxu0
  %v4276 = vadd.f32 0.0, %v4275
  %4277 = vmatmul.f32.gmra.mxu0 %v4016
  %v4278 = vpop.f32.mrf.mxu0
  %v4279 = vadd.f32 0.0, %v4278
  %4280 = vmatmul.f32.gmra.mxu0 %v4019
  %v4281 = vpop.f32.mrf.mxu0
  %v4282 = vadd.f32 0.0, %v4281
  %4283 = vmatmul.f32.gmra.mxu0 %v4022
  %v4284 = vpop.f32.mrf.mxu0
  %v4285 = vadd.f32 0.0, %v4284
  %4286 = vmatmul.f32.gmra.mxu0 %v4025
  %v4287 = vpop.f32.mrf.mxu0
  %v4288 = vadd.f32 0.0, %v4287
  %4289 = vmatmul.f32.gmra.mxu0 %v4028
  %v4290 = vpop.f32.mrf.mxu0
  %v4291 = vadd.f32 0.0, %v4290
  %4292 = vmatmul.f32.gmra.mxu0 %v4031
  %v4293 = vpop.f32.mrf.mxu0
  %v4294 = vadd.f32 0.0, %v4293
  %4295 = vmatmul.f32.gmra.mxu0 %v4034
  %v4296 = vpop.f32.mrf.mxu0
  %v4297 = vadd.f32 0.0, %v4296
  %4298 = vdwg.mxu0
  %v4299 = vadd.f32 %v3629, %v4057
  %v4300 = vadd.f32 %v3630, %v4060
  %v4301 = vadd.f32 %v3631, %v4063
  %v4302 = vadd.f32 %v3632, %v4066
  %v4303 = vadd.f32 %v3633, %v4069
  %v4304 = vadd.f32 %v3634, %v4072
  %v4305 = vadd.f32 %v3635, %v4075
  %v4306 = vadd.f32 %v3636, %v4078
  %v4307 = vadd.f32 %v3637, %v4081
  %v4308 = vadd.f32 %v3638, %v4084
  %v4309 = vadd.f32 %v3639, %v4087
  %v4310 = vadd.f32 %v3640, %v4090
  %v4311 = vadd.f32 %v3641, %v4093
  %v4312 = vadd.f32 %v3642, %v4096
  %v4313 = vadd.f32 %v3643, %v4099
  %v4314 = vadd.f32 %v3644, %v4102
  %v4315 = vadd.f32 %v3645, %v4105
  %v4316 = vadd.f32 %v3646, %v4108
  %v4317 = vadd.f32 %v3647, %v4111
  %v4318 = vadd.f32 %v3648, %v4114
  %v4319 = vadd.f32 %v3649, %v4117
  %v4320 = vadd.f32 %v3650, %v4120
  %v4321 = vadd.f32 %v3651, %v4123
  %v4322 = vadd.f32 %v3652, %v4126
  %v4323 = vadd.f32 %v3653, %v4129
  %v4324 = vadd.f32 %v3654, %v4132
  %v4325 = vadd.f32 %v3655, %v4135
  %v4326 = vadd.f32 %v3656, %v4138
  %v4327 = vadd.f32 %v3657, %v4141
  %v4328 = vadd.f32 %v3658, %v4144
  %v4329 = vadd.f32 %v3659, %v4147
  %v4330 = vadd.f32 %v3660, %v4150
  %v4331 = vadd.f32 %v3661, %v4153
  %v4332 = vadd.f32 %v3662, %v4156
  %v4333 = vadd.f32 %v3663, %v4159
  %v4334 = vadd.f32 %v3664, %v4162
  %v4335 = vadd.f32 %v3665, %v4165
  %v4336 = vadd.f32 %v3666, %v4168
  %v4337 = vadd.f32 %v3667, %v4171
  %v4338 = vadd.f32 %v3668, %v4174
  %v4339 = vadd.f32 %v3669, %v4177
  %v4340 = vadd.f32 %v3670, %v4180
  %v4341 = vadd.f32 %v3671, %v4183
  %v4342 = vadd.f32 %v3672, %v4186
  %v4343 = vadd.f32 %v3673, %v4189
  %v4344 = vadd.f32 %v3674, %v4192
  %v4345 = vadd.f32 %v3675, %v4195
  %v4346 = vadd.f32 %v3676, %v4198
  %v4347 = vadd.f32 %v3677, %v4201
  %v4348 = vadd.f32 %v3678, %v4204
  %v4349 = vadd.f32 %v3679, %v4207
  %v4350 = vadd.f32 %v3680, %v4210
  %v4351 = vadd.f32 %v3681, %v4213
  %v4352 = vadd.f32 %v3682, %v4216
  %v4353 = vadd.f32 %v3683, %v4219
  %v4354 = vadd.f32 %v3684, %v4222
  %v4355 = vadd.f32 %v3685, %v4225
  %v4356 = vadd.f32 %v3686, %v4228
  %v4357 = vadd.f32 %v3687, %v4231
  %v4358 = vadd.f32 %v3688, %v4234
  %v4359 = vadd.f32 %v3689, %v4237
  %v4360 = vadd.f32 %v3690, %v4240
  %v4361 = vadd.f32 %v3691, %v4243
  %v4362 = vadd.f32 %v3692, %v4246
  %v4363 = vadd.f32 %v3693, %v4249
  %v4364 = vadd.f32 %v3694, %v4252
  %v4365 = vadd.f32 %v3695, %v4255
  %v4366 = vadd.f32 %v3696, %v4258
  %v4367 = vadd.f32 %v3697, %v4261
  %v4368 = vadd.f32 %v3698, %v4264
  %v4369 = vadd.f32 %v3699, %v4267
  %v4370 = vadd.f32 %v3700, %v4270
  %v4371 = vadd.f32 %v3701, %v4273
  %v4372 = vadd.f32 %v3702, %v4276
  %v4373 = vadd.f32 %v3703, %v4279
  %v4374 = vadd.f32 %v3704, %v4282
  %v4375 = vadd.f32 %v3705, %v4285
  %v4376 = vadd.f32 %v3706, %v4288
  %v4377 = vadd.f32 %v3707, %v4291
  %v4378 = vadd.f32 %v3708, %v4294
  %v4379 = vadd.f32 %v3709, %v4297
  %v4380 = vld [vmem:[#allocation2 + $0x19] sm:$0xff]
  %v4381 = vld [vmem:[#allocation2 + $0x21] sm:$0xff]
  %v4382 = vld [vmem:[#allocation2 + $0x29] sm:$0xff]
  %v4383 = vld [vmem:[#allocation2 + $0x31] sm:$0xff]
  %v4384 = vld [vmem:[#allocation2 + $0x39] sm:$0xff]
  %v4385 = vld [vmem:[#allocation2 + $0x41] sm:$0xff]
  %v4386 = vld [vmem:[#allocation2 + $0x49] sm:$0xff]
  %v4387 = vld [vmem:[#allocation2 + $0x51] sm:$0xff]
  %v4388 = vld [vmem:[#allocation2 + $0x59] sm:$0xff]
  %v4389 = vld [vmem:[#allocation2 + $0x61] sm:$0xff]
  %v4390 = vld [vmem:[#allocation2 + $0x69] sm:$0xff]
  %v4391 = vld [vmem:[#allocation2 + $0x71] sm:$0xff]
  %v4392 = vld [vmem:[#allocation2 + $0x79] sm:$0xff]
  %v4393 = vld [vmem:[#allocation2 + $0x81] sm:$0xff]
  %v4394 = vld [vmem:[#allocation2 + $0x89] sm:$0xff]
  %v4395 = vld [vmem:[#allocation2 + $0x91] sm:$0xff]
  %v4396 = vld [vmem:[#allocation2 + $0x99] sm:$0xff]
  %v4397 = vld [vmem:[#allocation2 + $0xa1] sm:$0xff]
  %v4398 = vld [vmem:[#allocation2 + $0xa9] sm:$0xff]
  %v4399 = vld [vmem:[#allocation2 + $0xb1] sm:$0xff]
  %v4400 = vld [vmem:[#allocation2 + $0xb9] sm:$0xff]
  %v4401 = vld [vmem:[#allocation2 + $0xc1] sm:$0xff]
  %v4402 = vld [vmem:[#allocation2 + $0xc9] sm:$0xff]
  %v4403 = vld [vmem:[#allocation2 + $0xd1] sm:$0xff]
  %v4404 = vld [vmem:[#allocation2 + $0xd9] sm:$0xff]
  %v4405 = vld [vmem:[#allocation2 + $0xe1] sm:$0xff]
  %v4406 = vld [vmem:[#allocation2 + $0xe9] sm:$0xff]
  %v4407 = vld [vmem:[#allocation2 + $0xf1] sm:$0xff]
  %v4408 = vld [vmem:[#allocation2 + $0xf9] sm:$0xff]
  %v4409 = vld [vmem:[#allocation2 + $0x101] sm:$0xff]
  %v4410 = vld [vmem:[#allocation2 + $0x109] sm:$0xff]
  %v4411 = vld [vmem:[#allocation2 + $0x111] sm:$0xff]
  %v4412 = vld [vmem:[#allocation2 + $0x119] sm:$0xff]
  %v4413 = vld [vmem:[#allocation2 + $0x121] sm:$0xff]
  %v4414 = vld [vmem:[#allocation2 + $0x129] sm:$0xff]
  %v4415 = vld [vmem:[#allocation2 + $0x131] sm:$0xff]
  %v4416 = vld [vmem:[#allocation2 + $0x139] sm:$0xff]
  %v4417 = vld [vmem:[#allocation2 + $0x141] sm:$0xff]
  %v4418 = vld [vmem:[#allocation2 + $0x149] sm:$0xff]
  %v4419 = vld [vmem:[#allocation2 + $0x151] sm:$0xff]
  %v4420 = vld [vmem:[#allocation2 + $0x159] sm:$0xff]
  %v4421 = vld [vmem:[#allocation2 + $0x161] sm:$0xff]
  %v4422 = vld [vmem:[#allocation2 + $0x169] sm:$0xff]
  %v4423 = vld [vmem:[#allocation2 + $0x171] sm:$0xff]
  %v4424 = vld [vmem:[#allocation2 + $0x179] sm:$0xff]
  %v4425 = vld [vmem:[#allocation2 + $0x181] sm:$0xff]
  %v4426 = vld [vmem:[#allocation2 + $0x189] sm:$0xff]
  %v4427 = vld [vmem:[#allocation2 + $0x191] sm:$0xff]
  %v4428 = vld [vmem:[#allocation2 + $0x199] sm:$0xff]
  %v4429 = vld [vmem:[#allocation2 + $0x1a1] sm:$0xff]
  %v4430 = vld [vmem:[#allocation2 + $0x1a9] sm:$0xff]
  %v4431 = vld [vmem:[#allocation2 + $0x1b1] sm:$0xff]
  %v4432 = vld [vmem:[#allocation2 + $0x1b9] sm:$0xff]
  %v4433 = vld [vmem:[#allocation2 + $0x1c1] sm:$0xff]
  %v4434 = vld [vmem:[#allocation2 + $0x1c9] sm:$0xff]
  %v4435 = vld [vmem:[#allocation2 + $0x1d1] sm:$0xff]
  %v4436 = vld [vmem:[#allocation2 + $0x1d9] sm:$0xff]
  %v4437 = vld [vmem:[#allocation2 + $0x1e1] sm:$0xff]
  %v4438 = vld [vmem:[#allocation2 + $0x1e9] sm:$0xff]
  %v4439 = vld [vmem:[#allocation2 + $0x1f1] sm:$0xff]
  %v4440 = vld [vmem:[#allocation2 + $0x1f9] sm:$0xff]
  %v4441 = vld [vmem:[#allocation2 + $0x201] sm:$0xff]
  %v4442 = vld [vmem:[#allocation2 + $0x209] sm:$0xff]
  %v4443 = vld [vmem:[#allocation2 + $0x211] sm:$0xff]
  %v4444 = vld [vmem:[#allocation2 + $0x219] sm:$0xff]
  %v4445 = vld [vmem:[#allocation2 + $0x221] sm:$0xff]
  %v4446 = vld [vmem:[#allocation2 + $0x229] sm:$0xff]
  %v4447 = vld [vmem:[#allocation2 + $0x231] sm:$0xff]
  %v4448 = vld [vmem:[#allocation2 + $0x239] sm:$0xff]
  %v4449 = vld [vmem:[#allocation2 + $0x241] sm:$0xff]
  %v4450 = vld [vmem:[#allocation2 + $0x249] sm:$0xff]
  %v4451 = vld [vmem:[#allocation2 + $0x251] sm:$0xff]
  %v4452 = vld [vmem:[#allocation2 + $0x259] sm:$0xff]
  %v4453 = vld [vmem:[#allocation2 + $0x261] sm:$0xff]
  %v4454 = vld [vmem:[#allocation2 + $0x269] sm:$0xff]
  %v4455 = vld [vmem:[#allocation2 + $0x271] sm:$0xff]
  %v4456 = vld [vmem:[#allocation2 + $0x279] sm:$0xff]
  %v4457 = vld [vmem:[#allocation2 + $0x281] sm:$0xff]
  %v4458 = vld [vmem:[#allocation2 + $0x289] sm:$0xff]
  %v4459 = vld [vmem:[#allocation2 + $0x291] sm:$0xff]
  %v4460 = vld [vmem:[#allocation2 + $0x299] sm:$0xff]
  %s4461 = scalar_lea.vmem %s3, 20
  %v4462 = vld [vmem:[%s4461] sm:$0xf]
  %v4464 = vsel %vm179, %v4380, 0
  %v4467 = vsel %vm179, %v4381, 0
  %v4470 = vsel %vm179, %v4382, 0
  %v4473 = vsel %vm179, %v4383, 0
  %v4476 = vsel %vm179, %v4384, 0
  %v4479 = vsel %vm179, %v4385, 0
  %v4482 = vsel %vm179, %v4386, 0
  %v4485 = vsel %vm179, %v4387, 0
  %v4488 = vsel %vm179, %v4388, 0
  %v4491 = vsel %vm179, %v4389, 0
  %v4494 = vsel %vm179, %v4390, 0
  %v4497 = vsel %vm179, %v4391, 0
  %v4500 = vsel %vm179, %v4392, 0
  %v4503 = vsel %vm179, %v4393, 0
  %v4506 = vsel %vm179, %v4394, 0
  %v4509 = vsel %vm179, %v4395, 0
  %v4512 = vsel %vm179, %v4396, 0
  %v4515 = vsel %vm179, %v4397, 0
  %v4518 = vsel %vm179, %v4398, 0
  %v4521 = vsel %vm179, %v4399, 0
  %v4524 = vsel %vm179, %v4400, 0
  %v4527 = vsel %vm179, %v4401, 0
  %v4530 = vsel %vm179, %v4402, 0
  %v4533 = vsel %vm179, %v4403, 0
  %v4536 = vsel %vm179, %v4404, 0
  %v4539 = vsel %vm179, %v4405, 0
  %v4542 = vsel %vm179, %v4406, 0
  %v4545 = vsel %vm179, %v4407, 0
  %v4548 = vsel %vm179, %v4408, 0
  %v4551 = vsel %vm179, %v4409, 0
  %v4554 = vsel %vm179, %v4410, 0
  %v4557 = vsel %vm179, %v4411, 0
  %v4560 = vsel %vm179, %v4412, 0
  %v4563 = vsel %vm179, %v4413, 0
  %v4566 = vsel %vm179, %v4414, 0
  %v4569 = vsel %vm179, %v4415, 0
  %v4572 = vsel %vm179, %v4416, 0
  %v4575 = vsel %vm179, %v4417, 0
  %v4578 = vsel %vm179, %v4418, 0
  %v4581 = vsel %vm179, %v4419, 0
  %v4584 = vsel %vm179, %v4420, 0
  %v4587 = vsel %vm179, %v4421, 0
  %v4590 = vsel %vm179, %v4422, 0
  %v4593 = vsel %vm179, %v4423, 0
  %v4596 = vsel %vm179, %v4424, 0
  %v4599 = vsel %vm179, %v4425, 0
  %v4602 = vsel %vm179, %v4426, 0
  %v4605 = vsel %vm179, %v4427, 0
  %v4608 = vsel %vm179, %v4428, 0
  %v4611 = vsel %vm179, %v4429, 0
  %v4614 = vsel %vm179, %v4430, 0
  %v4617 = vsel %vm179, %v4431, 0
  %v4620 = vsel %vm179, %v4432, 0
  %v4623 = vsel %vm179, %v4433, 0
  %v4626 = vsel %vm179, %v4434, 0
  %v4629 = vsel %vm179, %v4435, 0
  %v4632 = vsel %vm179, %v4436, 0
  %v4635 = vsel %vm179, %v4437, 0
  %v4638 = vsel %vm179, %v4438, 0
  %v4641 = vsel %vm179, %v4439, 0
  %v4644 = vsel %vm179, %v4440, 0
  %v4647 = vsel %vm179, %v4441, 0
  %v4650 = vsel %vm179, %v4442, 0
  %v4653 = vsel %vm179, %v4443, 0
  %v4656 = vsel %vm179, %v4444, 0
  %v4659 = vsel %vm179, %v4445, 0
  %v4662 = vsel %vm179, %v4446, 0
  %v4665 = vsel %vm179, %v4447, 0
  %v4668 = vsel %vm179, %v4448, 0
  %v4671 = vsel %vm179, %v4449, 0
  %v4674 = vsel %vm179, %v4450, 0
  %v4677 = vsel %vm179, %v4451, 0
  %v4680 = vsel %vm179, %v4452, 0
  %v4683 = vsel %vm179, %v4453, 0
  %v4686 = vsel %vm179, %v4454, 0
  %v4689 = vsel %vm179, %v4455, 0
  %v4692 = vsel %vm179, %v4456, 0
  %v4695 = vsel %vm179, %v4457, 0
  %v4698 = vsel %vm179, %v4458, 0
  %v4701 = vsel %vm179, %v4459, 0
  %v4704 = vsel %vm179, %v4460, 0
  %v4707 = vsel %vm1600, %v4462, 0
  %4709 = vmatpush.msra.mxu0 0.0
  %4710 = vmatpush.msra.mxu0 0.0
  %4711 = vmatpush.msra.mxu0 0.0
  %4712 = vmatpush.msra.mxu0 0.0
  %4713 = vmatpush.msra.mxu0 0.0
  %4714 = vmatpush.msra.mxu0 0.0
  %4715 = vmatpush.msra.mxu0 0.0
  %4716 = vmatpush.msra.mxu0 0.0
  %4717 = vmatpush.msra.mxu0 0.0
  %4718 = vmatpush.msra.mxu0 0.0
  %4719 = vmatpush.msra.mxu0 0.0
  %4720 = vmatpush.msra.mxu0 0.0
  %4721 = vmatpush.msra.mxu0 0.0
  %4722 = vmatpush.msra.mxu0 0.0
  %4723 = vmatpush.msra.mxu0 0.0
  %4724 = vmatpush.msra.mxu0 %v4707
  %4725 = vmatmul.f32.gmra.mxu0 %v4464
  %v4726 = vpop.f32.mrf.mxu0
  %v4727 = vadd.f32 0.0, %v4726
  %4728 = vmatmul.f32.gmra.mxu0 %v4467
  %v4729 = vpop.f32.mrf.mxu0
  %v4730 = vadd.f32 0.0, %v4729
  %4731 = vmatmul.f32.gmra.mxu0 %v4470
  %v4732 = vpop.f32.mrf.mxu0
  %v4733 = vadd.f32 0.0, %v4732
  %4734 = vmatmul.f32.gmra.mxu0 %v4473
  %v4735 = vpop.f32.mrf.mxu0
  %v4736 = vadd.f32 0.0, %v4735
  %4737 = vmatmul.f32.gmra.mxu0 %v4476
  %v4738 = vpop.f32.mrf.mxu0
  %v4739 = vadd.f32 0.0, %v4738
  %4740 = vmatmul.f32.gmra.mxu0 %v4479
  %v4741 = vpop.f32.mrf.mxu0
  %v4742 = vadd.f32 0.0, %v4741
  %4743 = vmatmul.f32.gmra.mxu0 %v4482
  %v4744 = vpop.f32.mrf.mxu0
  %v4745 = vadd.f32 0.0, %v4744
  %4746 = vmatmul.f32.gmra.mxu0 %v4485
  %v4747 = vpop.f32.mrf.mxu0
  %v4748 = vadd.f32 0.0, %v4747
  %4749 = vmatmul.f32.gmra.mxu0 %v4488
  %v4750 = vpop.f32.mrf.mxu0
  %v4751 = vadd.f32 0.0, %v4750
  %4752 = vmatmul.f32.gmra.mxu0 %v4491
  %v4753 = vpop.f32.mrf.mxu0
  %v4754 = vadd.f32 0.0, %v4753
  %4755 = vmatmul.f32.gmra.mxu0 %v4494
  %v4756 = vpop.f32.mrf.mxu0
  %v4757 = vadd.f32 0.0, %v4756
  %4758 = vmatmul.f32.gmra.mxu0 %v4497
  %v4759 = vpop.f32.mrf.mxu0
  %v4760 = vadd.f32 0.0, %v4759
  %4761 = vmatmul.f32.gmra.mxu0 %v4500
  %v4762 = vpop.f32.mrf.mxu0
  %v4763 = vadd.f32 0.0, %v4762
  %4764 = vmatmul.f32.gmra.mxu0 %v4503
  %v4765 = vpop.f32.mrf.mxu0
  %v4766 = vadd.f32 0.0, %v4765
  %4767 = vmatmul.f32.gmra.mxu0 %v4506
  %v4768 = vpop.f32.mrf.mxu0
  %v4769 = vadd.f32 0.0, %v4768
  %4770 = vmatmul.f32.gmra.mxu0 %v4509
  %v4771 = vpop.f32.mrf.mxu0
  %v4772 = vadd.f32 0.0, %v4771
  %4773 = vmatmul.f32.gmra.mxu0 %v4512
  %v4774 = vpop.f32.mrf.mxu0
  %v4775 = vadd.f32 0.0, %v4774
  %4776 = vmatmul.f32.gmra.mxu0 %v4515
  %v4777 = vpop.f32.mrf.mxu0
  %v4778 = vadd.f32 0.0, %v4777
  %4779 = vmatmul.f32.gmra.mxu0 %v4518
  %v4780 = vpop.f32.mrf.mxu0
  %v4781 = vadd.f32 0.0, %v4780
  %4782 = vmatmul.f32.gmra.mxu0 %v4521
  %v4783 = vpop.f32.mrf.mxu0
  %v4784 = vadd.f32 0.0, %v4783
  %4785 = vmatmul.f32.gmra.mxu0 %v4524
  %v4786 = vpop.f32.mrf.mxu0
  %v4787 = vadd.f32 0.0, %v4786
  %4788 = vmatmul.f32.gmra.mxu0 %v4527
  %v4789 = vpop.f32.mrf.mxu0
  %v4790 = vadd.f32 0.0, %v4789
  %4791 = vmatmul.f32.gmra.mxu0 %v4530
  %v4792 = vpop.f32.mrf.mxu0
  %v4793 = vadd.f32 0.0, %v4792
  %4794 = vmatmul.f32.gmra.mxu0 %v4533
  %v4795 = vpop.f32.mrf.mxu0
  %v4796 = vadd.f32 0.0, %v4795
  %4797 = vmatmul.f32.gmra.mxu0 %v4536
  %v4798 = vpop.f32.mrf.mxu0
  %v4799 = vadd.f32 0.0, %v4798
  %4800 = vmatmul.f32.gmra.mxu0 %v4539
  %v4801 = vpop.f32.mrf.mxu0
  %v4802 = vadd.f32 0.0, %v4801
  %4803 = vmatmul.f32.gmra.mxu0 %v4542
  %v4804 = vpop.f32.mrf.mxu0
  %v4805 = vadd.f32 0.0, %v4804
  %4806 = vmatmul.f32.gmra.mxu0 %v4545
  %v4807 = vpop.f32.mrf.mxu0
  %v4808 = vadd.f32 0.0, %v4807
  %4809 = vmatmul.f32.gmra.mxu0 %v4548
  %v4810 = vpop.f32.mrf.mxu0
  %v4811 = vadd.f32 0.0, %v4810
  %4812 = vmatmul.f32.gmra.mxu0 %v4551
  %v4813 = vpop.f32.mrf.mxu0
  %v4814 = vadd.f32 0.0, %v4813
  %4815 = vmatmul.f32.gmra.mxu0 %v4554
  %v4816 = vpop.f32.mrf.mxu0
  %v4817 = vadd.f32 0.0, %v4816
  %4818 = vmatmul.f32.gmra.mxu0 %v4557
  %v4819 = vpop.f32.mrf.mxu0
  %v4820 = vadd.f32 0.0, %v4819
  %4821 = vmatmul.f32.gmra.mxu0 %v4560
  %v4822 = vpop.f32.mrf.mxu0
  %v4823 = vadd.f32 0.0, %v4822
  %4824 = vmatmul.f32.gmra.mxu0 %v4563
  %v4825 = vpop.f32.mrf.mxu0
  %v4826 = vadd.f32 0.0, %v4825
  %4827 = vmatmul.f32.gmra.mxu0 %v4566
  %v4828 = vpop.f32.mrf.mxu0
  %v4829 = vadd.f32 0.0, %v4828
  %4830 = vmatmul.f32.gmra.mxu0 %v4569
  %v4831 = vpop.f32.mrf.mxu0
  %v4832 = vadd.f32 0.0, %v4831
  %4833 = vmatmul.f32.gmra.mxu0 %v4572
  %v4834 = vpop.f32.mrf.mxu0
  %v4835 = vadd.f32 0.0, %v4834
  %4836 = vmatmul.f32.gmra.mxu0 %v4575
  %v4837 = vpop.f32.mrf.mxu0
  %v4838 = vadd.f32 0.0, %v4837
  %4839 = vmatmul.f32.gmra.mxu0 %v4578
  %v4840 = vpop.f32.mrf.mxu0
  %v4841 = vadd.f32 0.0, %v4840
  %4842 = vmatmul.f32.gmra.mxu0 %v4581
  %v4843 = vpop.f32.mrf.mxu0
  %v4844 = vadd.f32 0.0, %v4843
  %4845 = vmatmul.f32.gmra.mxu0 %v4584
  %v4846 = vpop.f32.mrf.mxu0
  %v4847 = vadd.f32 0.0, %v4846
  %4848 = vmatmul.f32.gmra.mxu0 %v4587
  %v4849 = vpop.f32.mrf.mxu0
  %v4850 = vadd.f32 0.0, %v4849
  %4851 = vmatmul.f32.gmra.mxu0 %v4590
  %v4852 = vpop.f32.mrf.mxu0
  %v4853 = vadd.f32 0.0, %v4852
  %4854 = vmatmul.f32.gmra.mxu0 %v4593
  %v4855 = vpop.f32.mrf.mxu0
  %v4856 = vadd.f32 0.0, %v4855
  %4857 = vmatmul.f32.gmra.mxu0 %v4596
  %v4858 = vpop.f32.mrf.mxu0
  %v4859 = vadd.f32 0.0, %v4858
  %4860 = vmatmul.f32.gmra.mxu0 %v4599
  %v4861 = vpop.f32.mrf.mxu0
  %v4862 = vadd.f32 0.0, %v4861
  %4863 = vmatmul.f32.gmra.mxu0 %v4602
  %v4864 = vpop.f32.mrf.mxu0
  %v4865 = vadd.f32 0.0, %v4864
  %4866 = vmatmul.f32.gmra.mxu0 %v4605
  %v4867 = vpop.f32.mrf.mxu0
  %v4868 = vadd.f32 0.0, %v4867
  %4869 = vmatmul.f32.gmra.mxu0 %v4608
  %v4870 = vpop.f32.mrf.mxu0
  %v4871 = vadd.f32 0.0, %v4870
  %4872 = vmatmul.f32.gmra.mxu0 %v4611
  %v4873 = vpop.f32.mrf.mxu0
  %v4874 = vadd.f32 0.0, %v4873
  %4875 = vmatmul.f32.gmra.mxu0 %v4614
  %v4876 = vpop.f32.mrf.mxu0
  %v4877 = vadd.f32 0.0, %v4876
  %4878 = vmatmul.f32.gmra.mxu0 %v4617
  %v4879 = vpop.f32.mrf.mxu0
  %v4880 = vadd.f32 0.0, %v4879
  %4881 = vmatmul.f32.gmra.mxu0 %v4620
  %v4882 = vpop.f32.mrf.mxu0
  %v4883 = vadd.f32 0.0, %v4882
  %4884 = vmatmul.f32.gmra.mxu0 %v4623
  %v4885 = vpop.f32.mrf.mxu0
  %v4886 = vadd.f32 0.0, %v4885
  %4887 = vmatmul.f32.gmra.mxu0 %v4626
  %v4888 = vpop.f32.mrf.mxu0
  %v4889 = vadd.f32 0.0, %v4888
  %4890 = vmatmul.f32.gmra.mxu0 %v4629
  %v4891 = vpop.f32.mrf.mxu0
  %v4892 = vadd.f32 0.0, %v4891
  %4893 = vmatmul.f32.gmra.mxu0 %v4632
  %v4894 = vpop.f32.mrf.mxu0
  %v4895 = vadd.f32 0.0, %v4894
  %4896 = vmatmul.f32.gmra.mxu0 %v4635
  %v4897 = vpop.f32.mrf.mxu0
  %v4898 = vadd.f32 0.0, %v4897
  %4899 = vmatmul.f32.gmra.mxu0 %v4638
  %v4900 = vpop.f32.mrf.mxu0
  %v4901 = vadd.f32 0.0, %v4900
  %4902 = vmatmul.f32.gmra.mxu0 %v4641
  %v4903 = vpop.f32.mrf.mxu0
  %v4904 = vadd.f32 0.0, %v4903
  %4905 = vmatmul.f32.gmra.mxu0 %v4644
  %v4906 = vpop.f32.mrf.mxu0
  %v4907 = vadd.f32 0.0, %v4906
  %4908 = vmatmul.f32.gmra.mxu0 %v4647
  %v4909 = vpop.f32.mrf.mxu0
  %v4910 = vadd.f32 0.0, %v4909
  %4911 = vmatmul.f32.gmra.mxu0 %v4650
  %v4912 = vpop.f32.mrf.mxu0
  %v4913 = vadd.f32 0.0, %v4912
  %4914 = vmatmul.f32.gmra.mxu0 %v4653
  %v4915 = vpop.f32.mrf.mxu0
  %v4916 = vadd.f32 0.0, %v4915
  %4917 = vmatmul.f32.gmra.mxu0 %v4656
  %v4918 = vpop.f32.mrf.mxu0
  %v4919 = vadd.f32 0.0, %v4918
  %4920 = vmatmul.f32.gmra.mxu0 %v4659
  %v4921 = vpop.f32.mrf.mxu0
  %v4922 = vadd.f32 0.0, %v4921
  %4923 = vmatmul.f32.gmra.mxu0 %v4662
  %v4924 = vpop.f32.mrf.mxu0
  %v4925 = vadd.f32 0.0, %v4924
  %4926 = vmatmul.f32.gmra.mxu0 %v4665
  %v4927 = vpop.f32.mrf.mxu0
  %v4928 = vadd.f32 0.0, %v4927
  %4929 = vmatmul.f32.gmra.mxu0 %v4668
  %v4930 = vpop.f32.mrf.mxu0
  %v4931 = vadd.f32 0.0, %v4930
  %4932 = vmatmul.f32.gmra.mxu0 %v4671
  %v4933 = vpop.f32.mrf.mxu0
  %v4934 = vadd.f32 0.0, %v4933
  %4935 = vmatmul.f32.gmra.mxu0 %v4674
  %v4936 = vpop.f32.mrf.mxu0
  %v4937 = vadd.f32 0.0, %v4936
  %4938 = vmatmul.f32.gmra.mxu0 %v4677
  %v4939 = vpop.f32.mrf.mxu0
  %v4940 = vadd.f32 0.0, %v4939
  %4941 = vmatmul.f32.gmra.mxu0 %v4680
  %v4942 = vpop.f32.mrf.mxu0
  %v4943 = vadd.f32 0.0, %v4942
  %4944 = vmatmul.f32.gmra.mxu0 %v4683
  %v4945 = vpop.f32.mrf.mxu0
  %v4946 = vadd.f32 0.0, %v4945
  %4947 = vmatmul.f32.gmra.mxu0 %v4686
  %v4948 = vpop.f32.mrf.mxu0
  %v4949 = vadd.f32 0.0, %v4948
  %4950 = vmatmul.f32.gmra.mxu0 %v4689
  %v4951 = vpop.f32.mrf.mxu0
  %v4952 = vadd.f32 0.0, %v4951
  %4953 = vmatmul.f32.gmra.mxu0 %v4692
  %v4954 = vpop.f32.mrf.mxu0
  %v4955 = vadd.f32 0.0, %v4954
  %4956 = vmatmul.f32.gmra.mxu0 %v4695
  %v4957 = vpop.f32.mrf.mxu0
  %v4958 = vadd.f32 0.0, %v4957
  %4959 = vmatmul.f32.gmra.mxu0 %v4698
  %v4960 = vpop.f32.mrf.mxu0
  %v4961 = vadd.f32 0.0, %v4960
  %4962 = vmatmul.f32.gmra.mxu0 %v4701
  %v4963 = vpop.f32.mrf.mxu0
  %v4964 = vadd.f32 0.0, %v4963
  %4965 = vmatmul.f32.gmra.mxu0 %v4704
  %v4966 = vpop.f32.mrf.mxu0
  %v4967 = vadd.f32 0.0, %v4966
  %4968 = vdwg.mxu0
  %v4969 = vadd.f32 %v4299, %v4727
  %v4970 = vadd.f32 %v4300, %v4730
  %v4971 = vadd.f32 %v4301, %v4733
  %v4972 = vadd.f32 %v4302, %v4736
  %v4973 = vadd.f32 %v4303, %v4739
  %v4974 = vadd.f32 %v4304, %v4742
  %v4975 = vadd.f32 %v4305, %v4745
  %v4976 = vadd.f32 %v4306, %v4748
  %v4977 = vadd.f32 %v4307, %v4751
  %v4978 = vadd.f32 %v4308, %v4754
  %v4979 = vadd.f32 %v4309, %v4757
  %v4980 = vadd.f32 %v4310, %v4760
  %v4981 = vadd.f32 %v4311, %v4763
  %v4982 = vadd.f32 %v4312, %v4766
  %v4983 = vadd.f32 %v4313, %v4769
  %v4984 = vadd.f32 %v4314, %v4772
  %v4985 = vadd.f32 %v4315, %v4775
  %v4986 = vadd.f32 %v4316, %v4778
  %v4987 = vadd.f32 %v4317, %v4781
  %v4988 = vadd.f32 %v4318, %v4784
  %v4989 = vadd.f32 %v4319, %v4787
  %v4990 = vadd.f32 %v4320, %v4790
  %v4991 = vadd.f32 %v4321, %v4793
  %v4992 = vadd.f32 %v4322, %v4796
  %v4993 = vadd.f32 %v4323, %v4799
  %v4994 = vadd.f32 %v4324, %v4802
  %v4995 = vadd.f32 %v4325, %v4805
  %v4996 = vadd.f32 %v4326, %v4808
  %v4997 = vadd.f32 %v4327, %v4811
  %v4998 = vadd.f32 %v4328, %v4814
  %v4999 = vadd.f32 %v4329, %v4817
  %v5000 = vadd.f32 %v4330, %v4820
  %v5001 = vadd.f32 %v4331, %v4823
  %v5002 = vadd.f32 %v4332, %v4826
  %v5003 = vadd.f32 %v4333, %v4829
  %v5004 = vadd.f32 %v4334, %v4832
  %v5005 = vadd.f32 %v4335, %v4835
  %v5006 = vadd.f32 %v4336, %v4838
  %v5007 = vadd.f32 %v4337, %v4841
  %v5008 = vadd.f32 %v4338, %v4844
  %v5009 = vadd.f32 %v4339, %v4847
  %v5010 = vadd.f32 %v4340, %v4850
  %v5011 = vadd.f32 %v4341, %v4853
  %v5012 = vadd.f32 %v4342, %v4856
  %v5013 = vadd.f32 %v4343, %v4859
  %v5014 = vadd.f32 %v4344, %v4862
  %v5015 = vadd.f32 %v4345, %v4865
  %v5016 = vadd.f32 %v4346, %v4868
  %v5017 = vadd.f32 %v4347, %v4871
  %v5018 = vadd.f32 %v4348, %v4874
  %v5019 = vadd.f32 %v4349, %v4877
  %v5020 = vadd.f32 %v4350, %v4880
  %v5021 = vadd.f32 %v4351, %v4883
  %v5022 = vadd.f32 %v4352, %v4886
  %v5023 = vadd.f32 %v4353, %v4889
  %v5024 = vadd.f32 %v4354, %v4892
  %v5025 = vadd.f32 %v4355, %v4895
  %v5026 = vadd.f32 %v4356, %v4898
  %v5027 = vadd.f32 %v4357, %v4901
  %v5028 = vadd.f32 %v4358, %v4904
  %v5029 = vadd.f32 %v4359, %v4907
  %v5030 = vadd.f32 %v4360, %v4910
  %v5031 = vadd.f32 %v4361, %v4913
  %v5032 = vadd.f32 %v4362, %v4916
  %v5033 = vadd.f32 %v4363, %v4919
  %v5034 = vadd.f32 %v4364, %v4922
  %v5035 = vadd.f32 %v4365, %v4925
  %v5036 = vadd.f32 %v4366, %v4928
  %v5037 = vadd.f32 %v4367, %v4931
  %v5038 = vadd.f32 %v4368, %v4934
  %v5039 = vadd.f32 %v4369, %v4937
  %v5040 = vadd.f32 %v4370, %v4940
  %v5041 = vadd.f32 %v4371, %v4943
  %v5042 = vadd.f32 %v4372, %v4946
  %v5043 = vadd.f32 %v4373, %v4949
  %v5044 = vadd.f32 %v4374, %v4952
  %v5045 = vadd.f32 %v4375, %v4955
  %v5046 = vadd.f32 %v4376, %v4958
  %v5047 = vadd.f32 %v4377, %v4961
  %v5048 = vadd.f32 %v4378, %v4964
  %v5049 = vadd.f32 %v4379, %v4967
  %v5050 = vld [vmem:[#allocation2 + $0x29] sm:$0xff]
  %v5051 = vld [vmem:[#allocation2 + $0x31] sm:$0xff]
  %v5052 = vld [vmem:[#allocation2 + $0x39] sm:$0xff]
  %v5053 = vld [vmem:[#allocation2 + $0x41] sm:$0xff]
  %v5054 = vld [vmem:[#allocation2 + $0x49] sm:$0xff]
  %v5055 = vld [vmem:[#allocation2 + $0x51] sm:$0xff]
  %v5056 = vld [vmem:[#allocation2 + $0x59] sm:$0xff]
  %v5057 = vld [vmem:[#allocation2 + $0x61] sm:$0xff]
  %v5058 = vld [vmem:[#allocation2 + $0x69] sm:$0xff]
  %v5059 = vld [vmem:[#allocation2 + $0x71] sm:$0xff]
  %v5060 = vld [vmem:[#allocation2 + $0x79] sm:$0xff]
  %v5061 = vld [vmem:[#allocation2 + $0x81] sm:$0xff]
  %v5062 = vld [vmem:[#allocation2 + $0x89] sm:$0xff]
  %v5063 = vld [vmem:[#allocation2 + $0x91] sm:$0xff]
  %v5064 = vld [vmem:[#allocation2 + $0x99] sm:$0xff]
  %v5065 = vld [vmem:[#allocation2 + $0xa1] sm:$0xff]
  %v5066 = vld [vmem:[#allocation2 + $0xa9] sm:$0xff]
  %v5067 = vld [vmem:[#allocation2 + $0xb1] sm:$0xff]
  %v5068 = vld [vmem:[#allocation2 + $0xb9] sm:$0xff]
  %v5069 = vld [vmem:[#allocation2 + $0xc1] sm:$0xff]
  %v5070 = vld [vmem:[#allocation2 + $0xc9] sm:$0xff]
  %v5071 = vld [vmem:[#allocation2 + $0xd1] sm:$0xff]
  %v5072 = vld [vmem:[#allocation2 + $0xd9] sm:$0xff]
  %v5073 = vld [vmem:[#allocation2 + $0xe1] sm:$0xff]
  %v5074 = vld [vmem:[#allocation2 + $0xe9] sm:$0xff]
  %v5075 = vld [vmem:[#allocation2 + $0xf1] sm:$0xff]
  %v5076 = vld [vmem:[#allocation2 + $0xf9] sm:$0xff]
  %v5077 = vld [vmem:[#allocation2 + $0x101] sm:$0xff]
  %v5078 = vld [vmem:[#allocation2 + $0x109] sm:$0xff]
  %v5079 = vld [vmem:[#allocation2 + $0x111] sm:$0xff]
  %v5080 = vld [vmem:[#allocation2 + $0x119] sm:$0xff]
  %v5081 = vld [vmem:[#allocation2 + $0x121] sm:$0xff]
  %v5082 = vld [vmem:[#allocation2 + $0x129] sm:$0xff]
  %v5083 = vld [vmem:[#allocation2 + $0x131] sm:$0xff]
  %v5084 = vld [vmem:[#allocation2 + $0x139] sm:$0xff]
  %v5085 = vld [vmem:[#allocation2 + $0x141] sm:$0xff]
  %v5086 = vld [vmem:[#allocation2 + $0x149] sm:$0xff]
  %v5087 = vld [vmem:[#allocation2 + $0x151] sm:$0xff]
  %v5088 = vld [vmem:[#allocation2 + $0x159] sm:$0xff]
  %v5089 = vld [vmem:[#allocation2 + $0x161] sm:$0xff]
  %v5090 = vld [vmem:[#allocation2 + $0x169] sm:$0xff]
  %v5091 = vld [vmem:[#allocation2 + $0x171] sm:$0xff]
  %v5092 = vld [vmem:[#allocation2 + $0x179] sm:$0xff]
  %v5093 = vld [vmem:[#allocation2 + $0x181] sm:$0xff]
  %v5094 = vld [vmem:[#allocation2 + $0x189] sm:$0xff]
  %v5095 = vld [vmem:[#allocation2 + $0x191] sm:$0xff]
  %v5096 = vld [vmem:[#allocation2 + $0x199] sm:$0xff]
  %v5097 = vld [vmem:[#allocation2 + $0x1a1] sm:$0xff]
  %v5098 = vld [vmem:[#allocation2 + $0x1a9] sm:$0xff]
  %v5099 = vld [vmem:[#allocation2 + $0x1b1] sm:$0xff]
  %v5100 = vld [vmem:[#allocation2 + $0x1b9] sm:$0xff]
  %v5101 = vld [vmem:[#allocation2 + $0x1c1] sm:$0xff]
  %v5102 = vld [vmem:[#allocation2 + $0x1c9] sm:$0xff]
  %v5103 = vld [vmem:[#allocation2 + $0x1d1] sm:$0xff]
  %v5104 = vld [vmem:[#allocation2 + $0x1d9] sm:$0xff]
  %v5105 = vld [vmem:[#allocation2 + $0x1e1] sm:$0xff]
  %v5106 = vld [vmem:[#allocation2 + $0x1e9] sm:$0xff]
  %v5107 = vld [vmem:[#allocation2 + $0x1f1] sm:$0xff]
  %v5108 = vld [vmem:[#allocation2 + $0x1f9] sm:$0xff]
  %v5109 = vld [vmem:[#allocation2 + $0x201] sm:$0xff]
  %v5110 = vld [vmem:[#allocation2 + $0x209] sm:$0xff]
  %v5111 = vld [vmem:[#allocation2 + $0x211] sm:$0xff]
  %v5112 = vld [vmem:[#allocation2 + $0x219] sm:$0xff]
  %v5113 = vld [vmem:[#allocation2 + $0x221] sm:$0xff]
  %v5114 = vld [vmem:[#allocation2 + $0x229] sm:$0xff]
  %v5115 = vld [vmem:[#allocation2 + $0x231] sm:$0xff]
  %v5116 = vld [vmem:[#allocation2 + $0x239] sm:$0xff]
  %v5117 = vld [vmem:[#allocation2 + $0x241] sm:$0xff]
  %v5118 = vld [vmem:[#allocation2 + $0x249] sm:$0xff]
  %v5119 = vld [vmem:[#allocation2 + $0x251] sm:$0xff]
  %v5120 = vld [vmem:[#allocation2 + $0x259] sm:$0xff]
  %v5121 = vld [vmem:[#allocation2 + $0x261] sm:$0xff]
  %v5122 = vld [vmem:[#allocation2 + $0x269] sm:$0xff]
  %v5123 = vld [vmem:[#allocation2 + $0x271] sm:$0xff]
  %v5124 = vld [vmem:[#allocation2 + $0x279] sm:$0xff]
  %v5125 = vld [vmem:[#allocation2 + $0x281] sm:$0xff]
  %v5126 = vld [vmem:[#allocation2 + $0x289] sm:$0xff]
  %v5127 = vld [vmem:[#allocation2 + $0x291] sm:$0xff]
  %v5128 = vld [vmem:[#allocation2 + $0x299] sm:$0xff]
  %v5129 = vld [vmem:[#allocation2 + $0x2a1] sm:$0xff]
  %v5130 = vld [vmem:[#allocation2 + $0x2a9] sm:$0xff]
  %s5131 = scalar_lea.vmem %s3, 24
  %v5132 = vld [vmem:[%s5131] sm:$0xf]
  %v5134 = vsel %vm179, %v5050, 0
  %v5137 = vsel %vm179, %v5051, 0
  %v5140 = vsel %vm179, %v5052, 0
  %v5143 = vsel %vm179, %v5053, 0
  %v5146 = vsel %vm179, %v5054, 0
  %v5149 = vsel %vm179, %v5055, 0
  %v5152 = vsel %vm179, %v5056, 0
  %v5155 = vsel %vm179, %v5057, 0
  %v5158 = vsel %vm179, %v5058, 0
  %v5161 = vsel %vm179, %v5059, 0
  %v5164 = vsel %vm179, %v5060, 0
  %v5167 = vsel %vm179, %v5061, 0
  %v5170 = vsel %vm179, %v5062, 0
  %v5173 = vsel %vm179, %v5063, 0
  %v5176 = vsel %vm179, %v5064, 0
  %v5179 = vsel %vm179, %v5065, 0
  %v5182 = vsel %vm179, %v5066, 0
  %v5185 = vsel %vm179, %v5067, 0
  %v5188 = vsel %vm179, %v5068, 0
  %v5191 = vsel %vm179, %v5069, 0
  %v5194 = vsel %vm179, %v5070, 0
  %v5197 = vsel %vm179, %v5071, 0
  %v5200 = vsel %vm179, %v5072, 0
  %v5203 = vsel %vm179, %v5073, 0
  %v5206 = vsel %vm179, %v5074, 0
  %v5209 = vsel %vm179, %v5075, 0
  %v5212 = vsel %vm179, %v5076, 0
  %v5215 = vsel %vm179, %v5077, 0
  %v5218 = vsel %vm179, %v5078, 0
  %v5221 = vsel %vm179, %v5079, 0
  %v5224 = vsel %vm179, %v5080, 0
  %v5227 = vsel %vm179, %v5081, 0
  %v5230 = vsel %vm179, %v5082, 0
  %v5233 = vsel %vm179, %v5083, 0
  %v5236 = vsel %vm179, %v5084, 0
  %v5239 = vsel %vm179, %v5085, 0
  %v5242 = vsel %vm179, %v5086, 0
  %v5245 = vsel %vm179, %v5087, 0
  %v5248 = vsel %vm179, %v5088, 0
  %v5251 = vsel %vm179, %v5089, 0
  %v5254 = vsel %vm179, %v5090, 0
  %v5257 = vsel %vm179, %v5091, 0
  %v5260 = vsel %vm179, %v5092, 0
  %v5263 = vsel %vm179, %v5093, 0
  %v5266 = vsel %vm179, %v5094, 0
  %v5269 = vsel %vm179, %v5095, 0
  %v5272 = vsel %vm179, %v5096, 0
  %v5275 = vsel %vm179, %v5097, 0
  %v5278 = vsel %vm179, %v5098, 0
  %v5281 = vsel %vm179, %v5099, 0
  %v5284 = vsel %vm179, %v5100, 0
  %v5287 = vsel %vm179, %v5101, 0
  %v5290 = vsel %vm179, %v5102, 0
  %v5293 = vsel %vm179, %v5103, 0
  %v5296 = vsel %vm179, %v5104, 0
  %v5299 = vsel %vm179, %v5105, 0
  %v5302 = vsel %vm179, %v5106, 0
  %v5305 = vsel %vm179, %v5107, 0
  %v5308 = vsel %vm179, %v5108, 0
  %v5311 = vsel %vm179, %v5109, 0
  %v5314 = vsel %vm179, %v5110, 0
  %v5317 = vsel %vm179, %v5111, 0
  %v5320 = vsel %vm179, %v5112, 0
  %v5323 = vsel %vm179, %v5113, 0
  %v5326 = vsel %vm179, %v5114, 0
  %v5329 = vsel %vm179, %v5115, 0
  %v5332 = vsel %vm179, %v5116, 0
  %v5335 = vsel %vm179, %v5117, 0
  %v5338 = vsel %vm179, %v5118, 0
  %v5341 = vsel %vm179, %v5119, 0
  %v5344 = vsel %vm179, %v5120, 0
  %v5347 = vsel %vm179, %v5121, 0
  %v5350 = vsel %vm179, %v5122, 0
  %v5353 = vsel %vm179, %v5123, 0
  %v5356 = vsel %vm179, %v5124, 0
  %v5359 = vsel %vm179, %v5125, 0
  %v5362 = vsel %vm179, %v5126, 0
  %v5365 = vsel %vm179, %v5127, 0
  %v5368 = vsel %vm179, %v5128, 0
  %v5371 = vsel %vm179, %v5129, 0
  %v5374 = vsel %vm179, %v5130, 0
  %v5377 = vsel %vm1600, %v5132, 0
  %5379 = vmatpush.msra.mxu0 0.0
  %5380 = vmatpush.msra.mxu0 0.0
  %5381 = vmatpush.msra.mxu0 0.0
  %5382 = vmatpush.msra.mxu0 0.0
  %5383 = vmatpush.msra.mxu0 0.0
  %5384 = vmatpush.msra.mxu0 0.0
  %5385 = vmatpush.msra.mxu0 0.0
  %5386 = vmatpush.msra.mxu0 0.0
  %5387 = vmatpush.msra.mxu0 0.0
  %5388 = vmatpush.msra.mxu0 0.0
  %5389 = vmatpush.msra.mxu0 0.0
  %5390 = vmatpush.msra.mxu0 0.0
  %5391 = vmatpush.msra.mxu0 0.0
  %5392 = vmatpush.msra.mxu0 0.0
  %5393 = vmatpush.msra.mxu0 0.0
  %5394 = vmatpush.msra.mxu0 %v5377
  %5395 = vmatmul.f32.gmra.mxu0 %v5134
  %v5396 = vpop.f32.mrf.mxu0
  %v5397 = vadd.f32 0.0, %v5396
  %5398 = vmatmul.f32.gmra.mxu0 %v5137
  %v5399 = vpop.f32.mrf.mxu0
  %v5400 = vadd.f32 0.0, %v5399
  %5401 = vmatmul.f32.gmra.mxu0 %v5140
  %v5402 = vpop.f32.mrf.mxu0
  %v5403 = vadd.f32 0.0, %v5402
  %5404 = vmatmul.f32.gmra.mxu0 %v5143
  %v5405 = vpop.f32.mrf.mxu0
  %v5406 = vadd.f32 0.0, %v5405
  %5407 = vmatmul.f32.gmra.mxu0 %v5146
  %v5408 = vpop.f32.mrf.mxu0
  %v5409 = vadd.f32 0.0, %v5408
  %5410 = vmatmul.f32.gmra.mxu0 %v5149
  %v5411 = vpop.f32.mrf.mxu0
  %v5412 = vadd.f32 0.0, %v5411
  %5413 = vmatmul.f32.gmra.mxu0 %v5152
  %v5414 = vpop.f32.mrf.mxu0
  %v5415 = vadd.f32 0.0, %v5414
  %5416 = vmatmul.f32.gmra.mxu0 %v5155
  %v5417 = vpop.f32.mrf.mxu0
  %v5418 = vadd.f32 0.0, %v5417
  %5419 = vmatmul.f32.gmra.mxu0 %v5158
  %v5420 = vpop.f32.mrf.mxu0
  %v5421 = vadd.f32 0.0, %v5420
  %5422 = vmatmul.f32.gmra.mxu0 %v5161
  %v5423 = vpop.f32.mrf.mxu0
  %v5424 = vadd.f32 0.0, %v5423
  %5425 = vmatmul.f32.gmra.mxu0 %v5164
  %v5426 = vpop.f32.mrf.mxu0
  %v5427 = vadd.f32 0.0, %v5426
  %5428 = vmatmul.f32.gmra.mxu0 %v5167
  %v5429 = vpop.f32.mrf.mxu0
  %v5430 = vadd.f32 0.0, %v5429
  %5431 = vmatmul.f32.gmra.mxu0 %v5170
  %v5432 = vpop.f32.mrf.mxu0
  %v5433 = vadd.f32 0.0, %v5432
  %5434 = vmatmul.f32.gmra.mxu0 %v5173
  %v5435 = vpop.f32.mrf.mxu0
  %v5436 = vadd.f32 0.0, %v5435
  %5437 = vmatmul.f32.gmra.mxu0 %v5176
  %v5438 = vpop.f32.mrf.mxu0
  %v5439 = vadd.f32 0.0, %v5438
  %5440 = vmatmul.f32.gmra.mxu0 %v5179
  %v5441 = vpop.f32.mrf.mxu0
  %v5442 = vadd.f32 0.0, %v5441
  %5443 = vmatmul.f32.gmra.mxu0 %v5182
  %v5444 = vpop.f32.mrf.mxu0
  %v5445 = vadd.f32 0.0, %v5444
  %5446 = vmatmul.f32.gmra.mxu0 %v5185
  %v5447 = vpop.f32.mrf.mxu0
  %v5448 = vadd.f32 0.0, %v5447
  %5449 = vmatmul.f32.gmra.mxu0 %v5188
  %v5450 = vpop.f32.mrf.mxu0
  %v5451 = vadd.f32 0.0, %v5450
  %5452 = vmatmul.f32.gmra.mxu0 %v5191
  %v5453 = vpop.f32.mrf.mxu0
  %v5454 = vadd.f32 0.0, %v5453
  %5455 = vmatmul.f32.gmra.mxu0 %v5194
  %v5456 = vpop.f32.mrf.mxu0
  %v5457 = vadd.f32 0.0, %v5456
  %5458 = vmatmul.f32.gmra.mxu0 %v5197
  %v5459 = vpop.f32.mrf.mxu0
  %v5460 = vadd.f32 0.0, %v5459
  %5461 = vmatmul.f32.gmra.mxu0 %v5200
  %v5462 = vpop.f32.mrf.mxu0
  %v5463 = vadd.f32 0.0, %v5462
  %5464 = vmatmul.f32.gmra.mxu0 %v5203
  %v5465 = vpop.f32.mrf.mxu0
  %v5466 = vadd.f32 0.0, %v5465
  %5467 = vmatmul.f32.gmra.mxu0 %v5206
  %v5468 = vpop.f32.mrf.mxu0
  %v5469 = vadd.f32 0.0, %v5468
  %5470 = vmatmul.f32.gmra.mxu0 %v5209
  %v5471 = vpop.f32.mrf.mxu0
  %v5472 = vadd.f32 0.0, %v5471
  %5473 = vmatmul.f32.gmra.mxu0 %v5212
  %v5474 = vpop.f32.mrf.mxu0
  %v5475 = vadd.f32 0.0, %v5474
  %5476 = vmatmul.f32.gmra.mxu0 %v5215
  %v5477 = vpop.f32.mrf.mxu0
  %v5478 = vadd.f32 0.0, %v5477
  %5479 = vmatmul.f32.gmra.mxu0 %v5218
  %v5480 = vpop.f32.mrf.mxu0
  %v5481 = vadd.f32 0.0, %v5480
  %5482 = vmatmul.f32.gmra.mxu0 %v5221
  %v5483 = vpop.f32.mrf.mxu0
  %v5484 = vadd.f32 0.0, %v5483
  %5485 = vmatmul.f32.gmra.mxu0 %v5224
  %v5486 = vpop.f32.mrf.mxu0
  %v5487 = vadd.f32 0.0, %v5486
  %5488 = vmatmul.f32.gmra.mxu0 %v5227
  %v5489 = vpop.f32.mrf.mxu0
  %v5490 = vadd.f32 0.0, %v5489
  %5491 = vmatmul.f32.gmra.mxu0 %v5230
  %v5492 = vpop.f32.mrf.mxu0
  %v5493 = vadd.f32 0.0, %v5492
  %5494 = vmatmul.f32.gmra.mxu0 %v5233
  %v5495 = vpop.f32.mrf.mxu0
  %v5496 = vadd.f32 0.0, %v5495
  %5497 = vmatmul.f32.gmra.mxu0 %v5236
  %v5498 = vpop.f32.mrf.mxu0
  %v5499 = vadd.f32 0.0, %v5498
  %5500 = vmatmul.f32.gmra.mxu0 %v5239
  %v5501 = vpop.f32.mrf.mxu0
  %v5502 = vadd.f32 0.0, %v5501
  %5503 = vmatmul.f32.gmra.mxu0 %v5242
  %v5504 = vpop.f32.mrf.mxu0
  %v5505 = vadd.f32 0.0, %v5504
  %5506 = vmatmul.f32.gmra.mxu0 %v5245
  %v5507 = vpop.f32.mrf.mxu0
  %v5508 = vadd.f32 0.0, %v5507
  %5509 = vmatmul.f32.gmra.mxu0 %v5248
  %v5510 = vpop.f32.mrf.mxu0
  %v5511 = vadd.f32 0.0, %v5510
  %5512 = vmatmul.f32.gmra.mxu0 %v5251
  %v5513 = vpop.f32.mrf.mxu0
  %v5514 = vadd.f32 0.0, %v5513
  %5515 = vmatmul.f32.gmra.mxu0 %v5254
  %v5516 = vpop.f32.mrf.mxu0
  %v5517 = vadd.f32 0.0, %v5516
  %5518 = vmatmul.f32.gmra.mxu0 %v5257
  %v5519 = vpop.f32.mrf.mxu0
  %v5520 = vadd.f32 0.0, %v5519
  %5521 = vmatmul.f32.gmra.mxu0 %v5260
  %v5522 = vpop.f32.mrf.mxu0
  %v5523 = vadd.f32 0.0, %v5522
  %5524 = vmatmul.f32.gmra.mxu0 %v5263
  %v5525 = vpop.f32.mrf.mxu0
  %v5526 = vadd.f32 0.0, %v5525
  %5527 = vmatmul.f32.gmra.mxu0 %v5266
  %v5528 = vpop.f32.mrf.mxu0
  %v5529 = vadd.f32 0.0, %v5528
  %5530 = vmatmul.f32.gmra.mxu0 %v5269
  %v5531 = vpop.f32.mrf.mxu0
  %v5532 = vadd.f32 0.0, %v5531
  %5533 = vmatmul.f32.gmra.mxu0 %v5272
  %v5534 = vpop.f32.mrf.mxu0
  %v5535 = vadd.f32 0.0, %v5534
  %5536 = vmatmul.f32.gmra.mxu0 %v5275
  %v5537 = vpop.f32.mrf.mxu0
  %v5538 = vadd.f32 0.0, %v5537
  %5539 = vmatmul.f32.gmra.mxu0 %v5278
  %v5540 = vpop.f32.mrf.mxu0
  %v5541 = vadd.f32 0.0, %v5540
  %5542 = vmatmul.f32.gmra.mxu0 %v5281
  %v5543 = vpop.f32.mrf.mxu0
  %v5544 = vadd.f32 0.0, %v5543
  %5545 = vmatmul.f32.gmra.mxu0 %v5284
  %v5546 = vpop.f32.mrf.mxu0
  %v5547 = vadd.f32 0.0, %v5546
  %5548 = vmatmul.f32.gmra.mxu0 %v5287
  %v5549 = vpop.f32.mrf.mxu0
  %v5550 = vadd.f32 0.0, %v5549
  %5551 = vmatmul.f32.gmra.mxu0 %v5290
  %v5552 = vpop.f32.mrf.mxu0
  %v5553 = vadd.f32 0.0, %v5552
  %5554 = vmatmul.f32.gmra.mxu0 %v5293
  %v5555 = vpop.f32.mrf.mxu0
  %v5556 = vadd.f32 0.0, %v5555
  %5557 = vmatmul.f32.gmra.mxu0 %v5296
  %v5558 = vpop.f32.mrf.mxu0
  %v5559 = vadd.f32 0.0, %v5558
  %5560 = vmatmul.f32.gmra.mxu0 %v5299
  %v5561 = vpop.f32.mrf.mxu0
  %v5562 = vadd.f32 0.0, %v5561
  %5563 = vmatmul.f32.gmra.mxu0 %v5302
  %v5564 = vpop.f32.mrf.mxu0
  %v5565 = vadd.f32 0.0, %v5564
  %5566 = vmatmul.f32.gmra.mxu0 %v5305
  %v5567 = vpop.f32.mrf.mxu0
  %v5568 = vadd.f32 0.0, %v5567
  %5569 = vmatmul.f32.gmra.mxu0 %v5308
  %v5570 = vpop.f32.mrf.mxu0
  %v5571 = vadd.f32 0.0, %v5570
  %5572 = vmatmul.f32.gmra.mxu0 %v5311
  %v5573 = vpop.f32.mrf.mxu0
  %v5574 = vadd.f32 0.0, %v5573
  %5575 = vmatmul.f32.gmra.mxu0 %v5314
  %v5576 = vpop.f32.mrf.mxu0
  %v5577 = vadd.f32 0.0, %v5576
  %5578 = vmatmul.f32.gmra.mxu0 %v5317
  %v5579 = vpop.f32.mrf.mxu0
  %v5580 = vadd.f32 0.0, %v5579
  %5581 = vmatmul.f32.gmra.mxu0 %v5320
  %v5582 = vpop.f32.mrf.mxu0
  %v5583 = vadd.f32 0.0, %v5582
  %5584 = vmatmul.f32.gmra.mxu0 %v5323
  %v5585 = vpop.f32.mrf.mxu0
  %v5586 = vadd.f32 0.0, %v5585
  %5587 = vmatmul.f32.gmra.mxu0 %v5326
  %v5588 = vpop.f32.mrf.mxu0
  %v5589 = vadd.f32 0.0, %v5588
  %5590 = vmatmul.f32.gmra.mxu0 %v5329
  %v5591 = vpop.f32.mrf.mxu0
  %v5592 = vadd.f32 0.0, %v5591
  %5593 = vmatmul.f32.gmra.mxu0 %v5332
  %v5594 = vpop.f32.mrf.mxu0
  %v5595 = vadd.f32 0.0, %v5594
  %5596 = vmatmul.f32.gmra.mxu0 %v5335
  %v5597 = vpop.f32.mrf.mxu0
  %v5598 = vadd.f32 0.0, %v5597
  %5599 = vmatmul.f32.gmra.mxu0 %v5338
  %v5600 = vpop.f32.mrf.mxu0
  %v5601 = vadd.f32 0.0, %v5600
  %5602 = vmatmul.f32.gmra.mxu0 %v5341
  %v5603 = vpop.f32.mrf.mxu0
  %v5604 = vadd.f32 0.0, %v5603
  %5605 = vmatmul.f32.gmra.mxu0 %v5344
  %v5606 = vpop.f32.mrf.mxu0
  %v5607 = vadd.f32 0.0, %v5606
  %5608 = vmatmul.f32.gmra.mxu0 %v5347
  %v5609 = vpop.f32.mrf.mxu0
  %v5610 = vadd.f32 0.0, %v5609
  %5611 = vmatmul.f32.gmra.mxu0 %v5350
  %v5612 = vpop.f32.mrf.mxu0
  %v5613 = vadd.f32 0.0, %v5612
  %5614 = vmatmul.f32.gmra.mxu0 %v5353
  %v5615 = vpop.f32.mrf.mxu0
  %v5616 = vadd.f32 0.0, %v5615
  %5617 = vmatmul.f32.gmra.mxu0 %v5356
  %v5618 = vpop.f32.mrf.mxu0
  %v5619 = vadd.f32 0.0, %v5618
  %5620 = vmatmul.f32.gmra.mxu0 %v5359
  %v5621 = vpop.f32.mrf.mxu0
  %v5622 = vadd.f32 0.0, %v5621
  %5623 = vmatmul.f32.gmra.mxu0 %v5362
  %v5624 = vpop.f32.mrf.mxu0
  %v5625 = vadd.f32 0.0, %v5624
  %5626 = vmatmul.f32.gmra.mxu0 %v5365
  %v5627 = vpop.f32.mrf.mxu0
  %v5628 = vadd.f32 0.0, %v5627
  %5629 = vmatmul.f32.gmra.mxu0 %v5368
  %v5630 = vpop.f32.mrf.mxu0
  %v5631 = vadd.f32 0.0, %v5630
  %5632 = vmatmul.f32.gmra.mxu0 %v5371
  %v5633 = vpop.f32.mrf.mxu0
  %v5634 = vadd.f32 0.0, %v5633
  %5635 = vmatmul.f32.gmra.mxu0 %v5374
  %v5636 = vpop.f32.mrf.mxu0
  %v5637 = vadd.f32 0.0, %v5636
  %5638 = vdwg.mxu0
  %v5639 = vadd.f32 %v4969, %v5397
  %v5640 = vadd.f32 %v4970, %v5400
  %v5641 = vadd.f32 %v4971, %v5403
  %v5642 = vadd.f32 %v4972, %v5406
  %v5643 = vadd.f32 %v4973, %v5409
  %v5644 = vadd.f32 %v4974, %v5412
  %v5645 = vadd.f32 %v4975, %v5415
  %v5646 = vadd.f32 %v4976, %v5418
  %v5647 = vadd.f32 %v4977, %v5421
  %v5648 = vadd.f32 %v4978, %v5424
  %v5649 = vadd.f32 %v4979, %v5427
  %v5650 = vadd.f32 %v4980, %v5430
  %v5651 = vadd.f32 %v4981, %v5433
  %v5652 = vadd.f32 %v4982, %v5436
  %v5653 = vadd.f32 %v4983, %v5439
  %v5654 = vadd.f32 %v4984, %v5442
  %v5655 = vadd.f32 %v4985, %v5445
  %v5656 = vadd.f32 %v4986, %v5448
  %v5657 = vadd.f32 %v4987, %v5451
  %v5658 = vadd.f32 %v4988, %v5454
  %v5659 = vadd.f32 %v4989, %v5457
  %v5660 = vadd.f32 %v4990, %v5460
  %v5661 = vadd.f32 %v4991, %v5463
  %v5662 = vadd.f32 %v4992, %v5466
  %v5663 = vadd.f32 %v4993, %v5469
  %v5664 = vadd.f32 %v4994, %v5472
  %v5665 = vadd.f32 %v4995, %v5475
  %v5666 = vadd.f32 %v4996, %v5478
  %v5667 = vadd.f32 %v4997, %v5481
  %v5668 = vadd.f32 %v4998, %v5484
  %v5669 = vadd.f32 %v4999, %v5487
  %v5670 = vadd.f32 %v5000, %v5490
  %v5671 = vadd.f32 %v5001, %v5493
  %v5672 = vadd.f32 %v5002, %v5496
  %v5673 = vadd.f32 %v5003, %v5499
  %v5674 = vadd.f32 %v5004, %v5502
  %v5675 = vadd.f32 %v5005, %v5505
  %v5676 = vadd.f32 %v5006, %v5508
  %v5677 = vadd.f32 %v5007, %v5511
  %v5678 = vadd.f32 %v5008, %v5514
  %v5679 = vadd.f32 %v5009, %v5517
  %v5680 = vadd.f32 %v5010, %v5520
  %v5681 = vadd.f32 %v5011, %v5523
  %v5682 = vadd.f32 %v5012, %v5526
  %v5683 = vadd.f32 %v5013, %v5529
  %v5684 = vadd.f32 %v5014, %v5532
  %v5685 = vadd.f32 %v5015, %v5535
  %v5686 = vadd.f32 %v5016, %v5538
  %v5687 = vadd.f32 %v5017, %v5541
  %v5688 = vadd.f32 %v5018, %v5544
  %v5689 = vadd.f32 %v5019, %v5547
  %v5690 = vadd.f32 %v5020, %v5550
  %v5691 = vadd.f32 %v5021, %v5553
  %v5692 = vadd.f32 %v5022, %v5556
  %v5693 = vadd.f32 %v5023, %v5559
  %v5694 = vadd.f32 %v5024, %v5562
  %v5695 = vadd.f32 %v5025, %v5565
  %v5696 = vadd.f32 %v5026, %v5568
  %v5697 = vadd.f32 %v5027, %v5571
  %v5698 = vadd.f32 %v5028, %v5574
  %v5699 = vadd.f32 %v5029, %v5577
  %v5700 = vadd.f32 %v5030, %v5580
  %v5701 = vadd.f32 %v5031, %v5583
  %v5702 = vadd.f32 %v5032, %v5586
  %v5703 = vadd.f32 %v5033, %v5589
  %v5704 = vadd.f32 %v5034, %v5592
  %v5705 = vadd.f32 %v5035, %v5595
  %v5706 = vadd.f32 %v5036, %v5598
  %v5707 = vadd.f32 %v5037, %v5601
  %v5708 = vadd.f32 %v5038, %v5604
  %v5709 = vadd.f32 %v5039, %v5607
  %v5710 = vadd.f32 %v5040, %v5610
  %v5711 = vadd.f32 %v5041, %v5613
  %v5712 = vadd.f32 %v5042, %v5616
  %v5713 = vadd.f32 %v5043, %v5619
  %v5714 = vadd.f32 %v5044, %v5622
  %v5715 = vadd.f32 %v5045, %v5625
  %v5716 = vadd.f32 %v5046, %v5628
  %v5717 = vadd.f32 %v5047, %v5631
  %v5718 = vadd.f32 %v5048, %v5634
  %v5719 = vadd.f32 %v5049, %v5637
  %v5720 = vld [vmem:[#allocation2 + $0x2a] sm:$0xff]
  %v5721 = vld [vmem:[#allocation2 + $0x32] sm:$0xff]
  %v5722 = vld [vmem:[#allocation2 + $0x3a] sm:$0xff]
  %v5723 = vld [vmem:[#allocation2 + $0x42] sm:$0xff]
  %v5724 = vld [vmem:[#allocation2 + $0x4a] sm:$0xff]
  %v5725 = vld [vmem:[#allocation2 + $0x52] sm:$0xff]
  %v5726 = vld [vmem:[#allocation2 + $0x5a] sm:$0xff]
  %v5727 = vld [vmem:[#allocation2 + $0x62] sm:$0xff]
  %v5728 = vld [vmem:[#allocation2 + $0x6a] sm:$0xff]
  %v5729 = vld [vmem:[#allocation2 + $0x72] sm:$0xff]
  %v5730 = vld [vmem:[#allocation2 + $0x7a] sm:$0xff]
  %v5731 = vld [vmem:[#allocation2 + $0x82] sm:$0xff]
  %v5732 = vld [vmem:[#allocation2 + $0x8a] sm:$0xff]
  %v5733 = vld [vmem:[#allocation2 + $0x92] sm:$0xff]
  %v5734 = vld [vmem:[#allocation2 + $0x9a] sm:$0xff]
  %v5735 = vld [vmem:[#allocation2 + $0xa2] sm:$0xff]
  %v5736 = vld [vmem:[#allocation2 + $0xaa] sm:$0xff]
  %v5737 = vld [vmem:[#allocation2 + $0xb2] sm:$0xff]
  %v5738 = vld [vmem:[#allocation2 + $0xba] sm:$0xff]
  %v5739 = vld [vmem:[#allocation2 + $0xc2] sm:$0xff]
  %v5740 = vld [vmem:[#allocation2 + $0xca] sm:$0xff]
  %v5741 = vld [vmem:[#allocation2 + $0xd2] sm:$0xff]
  %v5742 = vld [vmem:[#allocation2 + $0xda] sm:$0xff]
  %v5743 = vld [vmem:[#allocation2 + $0xe2] sm:$0xff]
  %v5744 = vld [vmem:[#allocation2 + $0xea] sm:$0xff]
  %v5745 = vld [vmem:[#allocation2 + $0xf2] sm:$0xff]
  %v5746 = vld [vmem:[#allocation2 + $0xfa] sm:$0xff]
  %v5747 = vld [vmem:[#allocation2 + $0x102] sm:$0xff]
  %v5748 = vld [vmem:[#allocation2 + $0x10a] sm:$0xff]
  %v5749 = vld [vmem:[#allocation2 + $0x112] sm:$0xff]
  %v5750 = vld [vmem:[#allocation2 + $0x11a] sm:$0xff]
  %v5751 = vld [vmem:[#allocation2 + $0x122] sm:$0xff]
  %v5752 = vld [vmem:[#allocation2 + $0x12a] sm:$0xff]
  %v5753 = vld [vmem:[#allocation2 + $0x132] sm:$0xff]
  %v5754 = vld [vmem:[#allocation2 + $0x13a] sm:$0xff]
  %v5755 = vld [vmem:[#allocation2 + $0x142] sm:$0xff]
  %v5756 = vld [vmem:[#allocation2 + $0x14a] sm:$0xff]
  %v5757 = vld [vmem:[#allocation2 + $0x152] sm:$0xff]
  %v5758 = vld [vmem:[#allocation2 + $0x15a] sm:$0xff]
  %v5759 = vld [vmem:[#allocation2 + $0x162] sm:$0xff]
  %v5760 = vld [vmem:[#allocation2 + $0x16a] sm:$0xff]
  %v5761 = vld [vmem:[#allocation2 + $0x172] sm:$0xff]
  %v5762 = vld [vmem:[#allocation2 + $0x17a] sm:$0xff]
  %v5763 = vld [vmem:[#allocation2 + $0x182] sm:$0xff]
  %v5764 = vld [vmem:[#allocation2 + $0x18a] sm:$0xff]
  %v5765 = vld [vmem:[#allocation2 + $0x192] sm:$0xff]
  %v5766 = vld [vmem:[#allocation2 + $0x19a] sm:$0xff]
  %v5767 = vld [vmem:[#allocation2 + $0x1a2] sm:$0xff]
  %v5768 = vld [vmem:[#allocation2 + $0x1aa] sm:$0xff]
  %v5769 = vld [vmem:[#allocation2 + $0x1b2] sm:$0xff]
  %v5770 = vld [vmem:[#allocation2 + $0x1ba] sm:$0xff]
  %v5771 = vld [vmem:[#allocation2 + $0x1c2] sm:$0xff]
  %v5772 = vld [vmem:[#allocation2 + $0x1ca] sm:$0xff]
  %v5773 = vld [vmem:[#allocation2 + $0x1d2] sm:$0xff]
  %v5774 = vld [vmem:[#allocation2 + $0x1da] sm:$0xff]
  %v5775 = vld [vmem:[#allocation2 + $0x1e2] sm:$0xff]
  %v5776 = vld [vmem:[#allocation2 + $0x1ea] sm:$0xff]
  %v5777 = vld [vmem:[#allocation2 + $0x1f2] sm:$0xff]
  %v5778 = vld [vmem:[#allocation2 + $0x1fa] sm:$0xff]
  %v5779 = vld [vmem:[#allocation2 + $0x202] sm:$0xff]
  %v5780 = vld [vmem:[#allocation2 + $0x20a] sm:$0xff]
  %v5781 = vld [vmem:[#allocation2 + $0x212] sm:$0xff]
  %v5782 = vld [vmem:[#allocation2 + $0x21a] sm:$0xff]
  %v5783 = vld [vmem:[#allocation2 + $0x222] sm:$0xff]
  %v5784 = vld [vmem:[#allocation2 + $0x22a] sm:$0xff]
  %v5785 = vld [vmem:[#allocation2 + $0x232] sm:$0xff]
  %v5786 = vld [vmem:[#allocation2 + $0x23a] sm:$0xff]
  %v5787 = vld [vmem:[#allocation2 + $0x242] sm:$0xff]
  %v5788 = vld [vmem:[#allocation2 + $0x24a] sm:$0xff]
  %v5789 = vld [vmem:[#allocation2 + $0x252] sm:$0xff]
  %v5790 = vld [vmem:[#allocation2 + $0x25a] sm:$0xff]
  %v5791 = vld [vmem:[#allocation2 + $0x262] sm:$0xff]
  %v5792 = vld [vmem:[#allocation2 + $0x26a] sm:$0xff]
  %v5793 = vld [vmem:[#allocation2 + $0x272] sm:$0xff]
  %v5794 = vld [vmem:[#allocation2 + $0x27a] sm:$0xff]
  %v5795 = vld [vmem:[#allocation2 + $0x282] sm:$0xff]
  %v5796 = vld [vmem:[#allocation2 + $0x28a] sm:$0xff]
  %v5797 = vld [vmem:[#allocation2 + $0x292] sm:$0xff]
  %v5798 = vld [vmem:[#allocation2 + $0x29a] sm:$0xff]
  %v5799 = vld [vmem:[#allocation2 + $0x2a2] sm:$0xff]
  %v5800 = vld [vmem:[#allocation2 + $0x2aa] sm:$0xff]
  %s5801 = scalar_lea.vmem %s3, 28
  %v5802 = vld [vmem:[%s5801] sm:$0xf]
  %v5804 = vsel %vm179, %v5720, 0
  %v5807 = vsel %vm179, %v5721, 0
  %v5810 = vsel %vm179, %v5722, 0
  %v5813 = vsel %vm179, %v5723, 0
  %v5816 = vsel %vm179, %v5724, 0
  %v5819 = vsel %vm179, %v5725, 0
  %v5822 = vsel %vm179, %v5726, 0
  %v5825 = vsel %vm179, %v5727, 0
  %v5828 = vsel %vm179, %v5728, 0
  %v5831 = vsel %vm179, %v5729, 0
  %v5834 = vsel %vm179, %v5730, 0
  %v5837 = vsel %vm179, %v5731, 0
  %v5840 = vsel %vm179, %v5732, 0
  %v5843 = vsel %vm179, %v5733, 0
  %v5846 = vsel %vm179, %v5734, 0
  %v5849 = vsel %vm179, %v5735, 0
  %v5852 = vsel %vm179, %v5736, 0
  %v5855 = vsel %vm179, %v5737, 0
  %v5858 = vsel %vm179, %v5738, 0
  %v5861 = vsel %vm179, %v5739, 0
  %v5864 = vsel %vm179, %v5740, 0
  %v5867 = vsel %vm179, %v5741, 0
  %v5870 = vsel %vm179, %v5742, 0
  %v5873 = vsel %vm179, %v5743, 0
  %v5876 = vsel %vm179, %v5744, 0
  %v5879 = vsel %vm179, %v5745, 0
  %v5882 = vsel %vm179, %v5746, 0
  %v5885 = vsel %vm179, %v5747, 0
  %v5888 = vsel %vm179, %v5748, 0
  %v5891 = vsel %vm179, %v5749, 0
  %v5894 = vsel %vm179, %v5750, 0
  %v5897 = vsel %vm179, %v5751, 0
  %v5900 = vsel %vm179, %v5752, 0
  %v5903 = vsel %vm179, %v5753, 0
  %v5906 = vsel %vm179, %v5754, 0
  %v5909 = vsel %vm179, %v5755, 0
  %v5912 = vsel %vm179, %v5756, 0
  %v5915 = vsel %vm179, %v5757, 0
  %v5918 = vsel %vm179, %v5758, 0
  %v5921 = vsel %vm179, %v5759, 0
  %v5924 = vsel %vm179, %v5760, 0
  %v5927 = vsel %vm179, %v5761, 0
  %v5930 = vsel %vm179, %v5762, 0
  %v5933 = vsel %vm179, %v5763, 0
  %v5936 = vsel %vm179, %v5764, 0
  %v5939 = vsel %vm179, %v5765, 0
  %v5942 = vsel %vm179, %v5766, 0
  %v5945 = vsel %vm179, %v5767, 0
  %v5948 = vsel %vm179, %v5768, 0
  %v5951 = vsel %vm179, %v5769, 0
  %v5954 = vsel %vm179, %v5770, 0
  %v5957 = vsel %vm179, %v5771, 0
  %v5960 = vsel %vm179, %v5772, 0
  %v5963 = vsel %vm179, %v5773, 0
  %v5966 = vsel %vm179, %v5774, 0
  %v5969 = vsel %vm179, %v5775, 0
  %v5972 = vsel %vm179, %v5776, 0
  %v5975 = vsel %vm179, %v5777, 0
  %v5978 = vsel %vm179, %v5778, 0
  %v5981 = vsel %vm179, %v5779, 0
  %v5984 = vsel %vm179, %v5780, 0
  %v5987 = vsel %vm179, %v5781, 0
  %v5990 = vsel %vm179, %v5782, 0
  %v5993 = vsel %vm179, %v5783, 0
  %v5996 = vsel %vm179, %v5784, 0
  %v5999 = vsel %vm179, %v5785, 0
  %v6002 = vsel %vm179, %v5786, 0
  %v6005 = vsel %vm179, %v5787, 0
  %v6008 = vsel %vm179, %v5788, 0
  %v6011 = vsel %vm179, %v5789, 0
  %v6014 = vsel %vm179, %v5790, 0
  %v6017 = vsel %vm179, %v5791, 0
  %v6020 = vsel %vm179, %v5792, 0
  %v6023 = vsel %vm179, %v5793, 0
  %v6026 = vsel %vm179, %v5794, 0
  %v6029 = vsel %vm179, %v5795, 0
  %v6032 = vsel %vm179, %v5796, 0
  %v6035 = vsel %vm179, %v5797, 0
  %v6038 = vsel %vm179, %v5798, 0
  %v6041 = vsel %vm179, %v5799, 0
  %v6044 = vsel %vm179, %v5800, 0
  %v6047 = vsel %vm1600, %v5802, 0
  %6049 = vmatpush.msra.mxu0 0.0
  %6050 = vmatpush.msra.mxu0 0.0
  %6051 = vmatpush.msra.mxu0 0.0
  %6052 = vmatpush.msra.mxu0 0.0
  %6053 = vmatpush.msra.mxu0 0.0
  %6054 = vmatpush.msra.mxu0 0.0
  %6055 = vmatpush.msra.mxu0 0.0
  %6056 = vmatpush.msra.mxu0 0.0
  %6057 = vmatpush.msra.mxu0 0.0
  %6058 = vmatpush.msra.mxu0 0.0
  %6059 = vmatpush.msra.mxu0 0.0
  %6060 = vmatpush.msra.mxu0 0.0
  %6061 = vmatpush.msra.mxu0 0.0
  %6062 = vmatpush.msra.mxu0 0.0
  %6063 = vmatpush.msra.mxu0 0.0
  %6064 = vmatpush.msra.mxu0 %v6047
  %6065 = vmatmul.f32.gmra.mxu0 %v5804
  %v6066 = vpop.f32.mrf.mxu0
  %v6067 = vadd.f32 0.0, %v6066
  %6068 = vmatmul.f32.gmra.mxu0 %v5807
  %v6069 = vpop.f32.mrf.mxu0
  %v6070 = vadd.f32 0.0, %v6069
  %6071 = vmatmul.f32.gmra.mxu0 %v5810
  %v6072 = vpop.f32.mrf.mxu0
  %v6073 = vadd.f32 0.0, %v6072
  %6074 = vmatmul.f32.gmra.mxu0 %v5813
  %v6075 = vpop.f32.mrf.mxu0
  %v6076 = vadd.f32 0.0, %v6075
  %6077 = vmatmul.f32.gmra.mxu0 %v5816
  %v6078 = vpop.f32.mrf.mxu0
  %v6079 = vadd.f32 0.0, %v6078
  %6080 = vmatmul.f32.gmra.mxu0 %v5819
  %v6081 = vpop.f32.mrf.mxu0
  %v6082 = vadd.f32 0.0, %v6081
  %6083 = vmatmul.f32.gmra.mxu0 %v5822
  %v6084 = vpop.f32.mrf.mxu0
  %v6085 = vadd.f32 0.0, %v6084
  %6086 = vmatmul.f32.gmra.mxu0 %v5825
  %v6087 = vpop.f32.mrf.mxu0
  %v6088 = vadd.f32 0.0, %v6087
  %6089 = vmatmul.f32.gmra.mxu0 %v5828
  %v6090 = vpop.f32.mrf.mxu0
  %v6091 = vadd.f32 0.0, %v6090
  %6092 = vmatmul.f32.gmra.mxu0 %v5831
  %v6093 = vpop.f32.mrf.mxu0
  %v6094 = vadd.f32 0.0, %v6093
  %6095 = vmatmul.f32.gmra.mxu0 %v5834
  %v6096 = vpop.f32.mrf.mxu0
  %v6097 = vadd.f32 0.0, %v6096
  %6098 = vmatmul.f32.gmra.mxu0 %v5837
  %v6099 = vpop.f32.mrf.mxu0
  %v6100 = vadd.f32 0.0, %v6099
  %6101 = vmatmul.f32.gmra.mxu0 %v5840
  %v6102 = vpop.f32.mrf.mxu0
  %v6103 = vadd.f32 0.0, %v6102
  %6104 = vmatmul.f32.gmra.mxu0 %v5843
  %v6105 = vpop.f32.mrf.mxu0
  %v6106 = vadd.f32 0.0, %v6105
  %6107 = vmatmul.f32.gmra.mxu0 %v5846
  %v6108 = vpop.f32.mrf.mxu0
  %v6109 = vadd.f32 0.0, %v6108
  %6110 = vmatmul.f32.gmra.mxu0 %v5849
  %v6111 = vpop.f32.mrf.mxu0
  %v6112 = vadd.f32 0.0, %v6111
  %6113 = vmatmul.f32.gmra.mxu0 %v5852
  %v6114 = vpop.f32.mrf.mxu0
  %v6115 = vadd.f32 0.0, %v6114
  %6116 = vmatmul.f32.gmra.mxu0 %v5855
  %v6117 = vpop.f32.mrf.mxu0
  %v6118 = vadd.f32 0.0, %v6117
  %6119 = vmatmul.f32.gmra.mxu0 %v5858
  %v6120 = vpop.f32.mrf.mxu0
  %v6121 = vadd.f32 0.0, %v6120
  %6122 = vmatmul.f32.gmra.mxu0 %v5861
  %v6123 = vpop.f32.mrf.mxu0
  %v6124 = vadd.f32 0.0, %v6123
  %6125 = vmatmul.f32.gmra.mxu0 %v5864
  %v6126 = vpop.f32.mrf.mxu0
  %v6127 = vadd.f32 0.0, %v6126
  %6128 = vmatmul.f32.gmra.mxu0 %v5867
  %v6129 = vpop.f32.mrf.mxu0
  %v6130 = vadd.f32 0.0, %v6129
  %6131 = vmatmul.f32.gmra.mxu0 %v5870
  %v6132 = vpop.f32.mrf.mxu0
  %v6133 = vadd.f32 0.0, %v6132
  %6134 = vmatmul.f32.gmra.mxu0 %v5873
  %v6135 = vpop.f32.mrf.mxu0
  %v6136 = vadd.f32 0.0, %v6135
  %6137 = vmatmul.f32.gmra.mxu0 %v5876
  %v6138 = vpop.f32.mrf.mxu0
  %v6139 = vadd.f32 0.0, %v6138
  %6140 = vmatmul.f32.gmra.mxu0 %v5879
  %v6141 = vpop.f32.mrf.mxu0
  %v6142 = vadd.f32 0.0, %v6141
  %6143 = vmatmul.f32.gmra.mxu0 %v5882
  %v6144 = vpop.f32.mrf.mxu0
  %v6145 = vadd.f32 0.0, %v6144
  %6146 = vmatmul.f32.gmra.mxu0 %v5885
  %v6147 = vpop.f32.mrf.mxu0
  %v6148 = vadd.f32 0.0, %v6147
  %6149 = vmatmul.f32.gmra.mxu0 %v5888
  %v6150 = vpop.f32.mrf.mxu0
  %v6151 = vadd.f32 0.0, %v6150
  %6152 = vmatmul.f32.gmra.mxu0 %v5891
  %v6153 = vpop.f32.mrf.mxu0
  %v6154 = vadd.f32 0.0, %v6153
  %6155 = vmatmul.f32.gmra.mxu0 %v5894
  %v6156 = vpop.f32.mrf.mxu0
  %v6157 = vadd.f32 0.0, %v6156
  %6158 = vmatmul.f32.gmra.mxu0 %v5897
  %v6159 = vpop.f32.mrf.mxu0
  %v6160 = vadd.f32 0.0, %v6159
  %6161 = vmatmul.f32.gmra.mxu0 %v5900
  %v6162 = vpop.f32.mrf.mxu0
  %v6163 = vadd.f32 0.0, %v6162
  %6164 = vmatmul.f32.gmra.mxu0 %v5903
  %v6165 = vpop.f32.mrf.mxu0
  %v6166 = vadd.f32 0.0, %v6165
  %6167 = vmatmul.f32.gmra.mxu0 %v5906
  %v6168 = vpop.f32.mrf.mxu0
  %v6169 = vadd.f32 0.0, %v6168
  %6170 = vmatmul.f32.gmra.mxu0 %v5909
  %v6171 = vpop.f32.mrf.mxu0
  %v6172 = vadd.f32 0.0, %v6171
  %6173 = vmatmul.f32.gmra.mxu0 %v5912
  %v6174 = vpop.f32.mrf.mxu0
  %v6175 = vadd.f32 0.0, %v6174
  %6176 = vmatmul.f32.gmra.mxu0 %v5915
  %v6177 = vpop.f32.mrf.mxu0
  %v6178 = vadd.f32 0.0, %v6177
  %6179 = vmatmul.f32.gmra.mxu0 %v5918
  %v6180 = vpop.f32.mrf.mxu0
  %v6181 = vadd.f32 0.0, %v6180
  %6182 = vmatmul.f32.gmra.mxu0 %v5921
  %v6183 = vpop.f32.mrf.mxu0
  %v6184 = vadd.f32 0.0, %v6183
  %6185 = vmatmul.f32.gmra.mxu0 %v5924
  %v6186 = vpop.f32.mrf.mxu0
  %v6187 = vadd.f32 0.0, %v6186
  %6188 = vmatmul.f32.gmra.mxu0 %v5927
  %v6189 = vpop.f32.mrf.mxu0
  %v6190 = vadd.f32 0.0, %v6189
  %6191 = vmatmul.f32.gmra.mxu0 %v5930
  %v6192 = vpop.f32.mrf.mxu0
  %v6193 = vadd.f32 0.0, %v6192
  %6194 = vmatmul.f32.gmra.mxu0 %v5933
  %v6195 = vpop.f32.mrf.mxu0
  %v6196 = vadd.f32 0.0, %v6195
  %6197 = vmatmul.f32.gmra.mxu0 %v5936
  %v6198 = vpop.f32.mrf.mxu0
  %v6199 = vadd.f32 0.0, %v6198
  %6200 = vmatmul.f32.gmra.mxu0 %v5939
  %v6201 = vpop.f32.mrf.mxu0
  %v6202 = vadd.f32 0.0, %v6201
  %6203 = vmatmul.f32.gmra.mxu0 %v5942
  %v6204 = vpop.f32.mrf.mxu0
  %v6205 = vadd.f32 0.0, %v6204
  %6206 = vmatmul.f32.gmra.mxu0 %v5945
  %v6207 = vpop.f32.mrf.mxu0
  %v6208 = vadd.f32 0.0, %v6207
  %6209 = vmatmul.f32.gmra.mxu0 %v5948
  %v6210 = vpop.f32.mrf.mxu0
  %v6211 = vadd.f32 0.0, %v6210
  %6212 = vmatmul.f32.gmra.mxu0 %v5951
  %v6213 = vpop.f32.mrf.mxu0
  %v6214 = vadd.f32 0.0, %v6213
  %6215 = vmatmul.f32.gmra.mxu0 %v5954
  %v6216 = vpop.f32.mrf.mxu0
  %v6217 = vadd.f32 0.0, %v6216
  %6218 = vmatmul.f32.gmra.mxu0 %v5957
  %v6219 = vpop.f32.mrf.mxu0
  %v6220 = vadd.f32 0.0, %v6219
  %6221 = vmatmul.f32.gmra.mxu0 %v5960
  %v6222 = vpop.f32.mrf.mxu0
  %v6223 = vadd.f32 0.0, %v6222
  %6224 = vmatmul.f32.gmra.mxu0 %v5963
  %v6225 = vpop.f32.mrf.mxu0
  %v6226 = vadd.f32 0.0, %v6225
  %6227 = vmatmul.f32.gmra.mxu0 %v5966
  %v6228 = vpop.f32.mrf.mxu0
  %v6229 = vadd.f32 0.0, %v6228
  %6230 = vmatmul.f32.gmra.mxu0 %v5969
  %v6231 = vpop.f32.mrf.mxu0
  %v6232 = vadd.f32 0.0, %v6231
  %6233 = vmatmul.f32.gmra.mxu0 %v5972
  %v6234 = vpop.f32.mrf.mxu0
  %v6235 = vadd.f32 0.0, %v6234
  %6236 = vmatmul.f32.gmra.mxu0 %v5975
  %v6237 = vpop.f32.mrf.mxu0
  %v6238 = vadd.f32 0.0, %v6237
  %6239 = vmatmul.f32.gmra.mxu0 %v5978
  %v6240 = vpop.f32.mrf.mxu0
  %v6241 = vadd.f32 0.0, %v6240
  %6242 = vmatmul.f32.gmra.mxu0 %v5981
  %v6243 = vpop.f32.mrf.mxu0
  %v6244 = vadd.f32 0.0, %v6243
  %6245 = vmatmul.f32.gmra.mxu0 %v5984
  %v6246 = vpop.f32.mrf.mxu0
  %v6247 = vadd.f32 0.0, %v6246
  %6248 = vmatmul.f32.gmra.mxu0 %v5987
  %v6249 = vpop.f32.mrf.mxu0
  %v6250 = vadd.f32 0.0, %v6249
  %6251 = vmatmul.f32.gmra.mxu0 %v5990
  %v6252 = vpop.f32.mrf.mxu0
  %v6253 = vadd.f32 0.0, %v6252
  %6254 = vmatmul.f32.gmra.mxu0 %v5993
  %v6255 = vpop.f32.mrf.mxu0
  %v6256 = vadd.f32 0.0, %v6255
  %6257 = vmatmul.f32.gmra.mxu0 %v5996
  %v6258 = vpop.f32.mrf.mxu0
  %v6259 = vadd.f32 0.0, %v6258
  %6260 = vmatmul.f32.gmra.mxu0 %v5999
  %v6261 = vpop.f32.mrf.mxu0
  %v6262 = vadd.f32 0.0, %v6261
  %6263 = vmatmul.f32.gmra.mxu0 %v6002
  %v6264 = vpop.f32.mrf.mxu0
  %v6265 = vadd.f32 0.0, %v6264
  %6266 = vmatmul.f32.gmra.mxu0 %v6005
  %v6267 = vpop.f32.mrf.mxu0
  %v6268 = vadd.f32 0.0, %v6267
  %6269 = vmatmul.f32.gmra.mxu0 %v6008
  %v6270 = vpop.f32.mrf.mxu0
  %v6271 = vadd.f32 0.0, %v6270
  %6272 = vmatmul.f32.gmra.mxu0 %v6011
  %v6273 = vpop.f32.mrf.mxu0
  %v6274 = vadd.f32 0.0, %v6273
  %6275 = vmatmul.f32.gmra.mxu0 %v6014
  %v6276 = vpop.f32.mrf.mxu0
  %v6277 = vadd.f32 0.0, %v6276
  %6278 = vmatmul.f32.gmra.mxu0 %v6017
  %v6279 = vpop.f32.mrf.mxu0
  %v6280 = vadd.f32 0.0, %v6279
  %6281 = vmatmul.f32.gmra.mxu0 %v6020
  %v6282 = vpop.f32.mrf.mxu0
  %v6283 = vadd.f32 0.0, %v6282
  %6284 = vmatmul.f32.gmra.mxu0 %v6023
  %v6285 = vpop.f32.mrf.mxu0
  %v6286 = vadd.f32 0.0, %v6285
  %6287 = vmatmul.f32.gmra.mxu0 %v6026
  %v6288 = vpop.f32.mrf.mxu0
  %v6289 = vadd.f32 0.0, %v6288
  %6290 = vmatmul.f32.gmra.mxu0 %v6029
  %v6291 = vpop.f32.mrf.mxu0
  %v6292 = vadd.f32 0.0, %v6291
  %6293 = vmatmul.f32.gmra.mxu0 %v6032
  %v6294 = vpop.f32.mrf.mxu0
  %v6295 = vadd.f32 0.0, %v6294
  %6296 = vmatmul.f32.gmra.mxu0 %v6035
  %v6297 = vpop.f32.mrf.mxu0
  %v6298 = vadd.f32 0.0, %v6297
  %6299 = vmatmul.f32.gmra.mxu0 %v6038
  %v6300 = vpop.f32.mrf.mxu0
  %v6301 = vadd.f32 0.0, %v6300
  %6302 = vmatmul.f32.gmra.mxu0 %v6041
  %v6303 = vpop.f32.mrf.mxu0
  %v6304 = vadd.f32 0.0, %v6303
  %6305 = vmatmul.f32.gmra.mxu0 %v6044
  %v6306 = vpop.f32.mrf.mxu0
  %v6307 = vadd.f32 0.0, %v6306
  %6308 = vdwg.mxu0
  %v6309 = vadd.f32 %v5639, %v6067
  %v6310 = vadd.f32 %v5640, %v6070
  %v6311 = vadd.f32 %v5641, %v6073
  %v6312 = vadd.f32 %v5642, %v6076
  %v6313 = vadd.f32 %v5643, %v6079
  %v6314 = vadd.f32 %v5644, %v6082
  %v6315 = vadd.f32 %v5645, %v6085
  %v6316 = vadd.f32 %v5646, %v6088
  %v6317 = vadd.f32 %v5647, %v6091
  %v6318 = vadd.f32 %v5648, %v6094
  %v6319 = vadd.f32 %v5649, %v6097
  %v6320 = vadd.f32 %v5650, %v6100
  %v6321 = vadd.f32 %v5651, %v6103
  %v6322 = vadd.f32 %v5652, %v6106
  %v6323 = vadd.f32 %v5653, %v6109
  %v6324 = vadd.f32 %v5654, %v6112
  %v6325 = vadd.f32 %v5655, %v6115
  %v6326 = vadd.f32 %v5656, %v6118
  %v6327 = vadd.f32 %v5657, %v6121
  %v6328 = vadd.f32 %v5658, %v6124
  %v6329 = vadd.f32 %v5659, %v6127
  %v6330 = vadd.f32 %v5660, %v6130
  %v6331 = vadd.f32 %v5661, %v6133
  %v6332 = vadd.f32 %v5662, %v6136
  %v6333 = vadd.f32 %v5663, %v6139
  %v6334 = vadd.f32 %v5664, %v6142
  %v6335 = vadd.f32 %v5665, %v6145
  %v6336 = vadd.f32 %v5666, %v6148
  %v6337 = vadd.f32 %v5667, %v6151
  %v6338 = vadd.f32 %v5668, %v6154
  %v6339 = vadd.f32 %v5669, %v6157
  %v6340 = vadd.f32 %v5670, %v6160
  %v6341 = vadd.f32 %v5671, %v6163
  %v6342 = vadd.f32 %v5672, %v6166
  %v6343 = vadd.f32 %v5673, %v6169
  %v6344 = vadd.f32 %v5674, %v6172
  %v6345 = vadd.f32 %v5675, %v6175
  %v6346 = vadd.f32 %v5676, %v6178
  %v6347 = vadd.f32 %v5677, %v6181
  %v6348 = vadd.f32 %v5678, %v6184
  %v6349 = vadd.f32 %v5679, %v6187
  %v6350 = vadd.f32 %v5680, %v6190
  %v6351 = vadd.f32 %v5681, %v6193
  %v6352 = vadd.f32 %v5682, %v6196
  %v6353 = vadd.f32 %v5683, %v6199
  %v6354 = vadd.f32 %v5684, %v6202
  %v6355 = vadd.f32 %v5685, %v6205
  %v6356 = vadd.f32 %v5686, %v6208
  %v6357 = vadd.f32 %v5687, %v6211
  %v6358 = vadd.f32 %v5688, %v6214
  %v6359 = vadd.f32 %v5689, %v6217
  %v6360 = vadd.f32 %v5690, %v6220
  %v6361 = vadd.f32 %v5691, %v6223
  %v6362 = vadd.f32 %v5692, %v6226
  %v6363 = vadd.f32 %v5693, %v6229
  %v6364 = vadd.f32 %v5694, %v6232
  %v6365 = vadd.f32 %v5695, %v6235
  %v6366 = vadd.f32 %v5696, %v6238
  %v6367 = vadd.f32 %v5697, %v6241
  %v6368 = vadd.f32 %v5698, %v6244
  %v6369 = vadd.f32 %v5699, %v6247
  %v6370 = vadd.f32 %v5700, %v6250
  %v6371 = vadd.f32 %v5701, %v6253
  %v6372 = vadd.f32 %v5702, %v6256
  %v6373 = vadd.f32 %v5703, %v6259
  %v6374 = vadd.f32 %v5704, %v6262
  %v6375 = vadd.f32 %v5705, %v6265
  %v6376 = vadd.f32 %v5706, %v6268
  %v6377 = vadd.f32 %v5707, %v6271
  %v6378 = vadd.f32 %v5708, %v6274
  %v6379 = vadd.f32 %v5709, %v6277
  %v6380 = vadd.f32 %v5710, %v6280
  %v6381 = vadd.f32 %v5711, %v6283
  %v6382 = vadd.f32 %v5712, %v6286
  %v6383 = vadd.f32 %v5713, %v6289
  %v6384 = vadd.f32 %v5714, %v6292
  %v6385 = vadd.f32 %v5715, %v6295
  %v6386 = vadd.f32 %v5716, %v6298
  %v6387 = vadd.f32 %v5717, %v6301
  %v6388 = vadd.f32 %v5718, %v6304
  %v6389 = vadd.f32 %v5719, %v6307
  %v6390 = vld [vmem:[#allocation2 + $0x2b] sm:$0xff]
  %v6391 = vld [vmem:[#allocation2 + $0x33] sm:$0xff]
  %v6392 = vld [vmem:[#allocation2 + $0x3b] sm:$0xff]
  %v6393 = vld [vmem:[#allocation2 + $0x43] sm:$0xff]
  %v6394 = vld [vmem:[#allocation2 + $0x4b] sm:$0xff]
  %v6395 = vld [vmem:[#allocation2 + $0x53] sm:$0xff]
  %v6396 = vld [vmem:[#allocation2 + $0x5b] sm:$0xff]
  %v6397 = vld [vmem:[#allocation2 + $0x63] sm:$0xff]
  %v6398 = vld [vmem:[#allocation2 + $0x6b] sm:$0xff]
  %v6399 = vld [vmem:[#allocation2 + $0x73] sm:$0xff]
  %v6400 = vld [vmem:[#allocation2 + $0x7b] sm:$0xff]
  %v6401 = vld [vmem:[#allocation2 + $0x83] sm:$0xff]
  %v6402 = vld [vmem:[#allocation2 + $0x8b] sm:$0xff]
  %v6403 = vld [vmem:[#allocation2 + $0x93] sm:$0xff]
  %v6404 = vld [vmem:[#allocation2 + $0x9b] sm:$0xff]
  %v6405 = vld [vmem:[#allocation2 + $0xa3] sm:$0xff]
  %v6406 = vld [vmem:[#allocation2 + $0xab] sm:$0xff]
  %v6407 = vld [vmem:[#allocation2 + $0xb3] sm:$0xff]
  %v6408 = vld [vmem:[#allocation2 + $0xbb] sm:$0xff]
  %v6409 = vld [vmem:[#allocation2 + $0xc3] sm:$0xff]
  %v6410 = vld [vmem:[#allocation2 + $0xcb] sm:$0xff]
  %v6411 = vld [vmem:[#allocation2 + $0xd3] sm:$0xff]
  %v6412 = vld [vmem:[#allocation2 + $0xdb] sm:$0xff]
  %v6413 = vld [vmem:[#allocation2 + $0xe3] sm:$0xff]
  %v6414 = vld [vmem:[#allocation2 + $0xeb] sm:$0xff]
  %v6415 = vld [vmem:[#allocation2 + $0xf3] sm:$0xff]
  %v6416 = vld [vmem:[#allocation2 + $0xfb] sm:$0xff]
  %v6417 = vld [vmem:[#allocation2 + $0x103] sm:$0xff]
  %v6418 = vld [vmem:[#allocation2 + $0x10b] sm:$0xff]
  %v6419 = vld [vmem:[#allocation2 + $0x113] sm:$0xff]
  %v6420 = vld [vmem:[#allocation2 + $0x11b] sm:$0xff]
  %v6421 = vld [vmem:[#allocation2 + $0x123] sm:$0xff]
  %v6422 = vld [vmem:[#allocation2 + $0x12b] sm:$0xff]
  %v6423 = vld [vmem:[#allocation2 + $0x133] sm:$0xff]
  %v6424 = vld [vmem:[#allocation2 + $0x13b] sm:$0xff]
  %v6425 = vld [vmem:[#allocation2 + $0x143] sm:$0xff]
  %v6426 = vld [vmem:[#allocation2 + $0x14b] sm:$0xff]
  %v6427 = vld [vmem:[#allocation2 + $0x153] sm:$0xff]
  %v6428 = vld [vmem:[#allocation2 + $0x15b] sm:$0xff]
  %v6429 = vld [vmem:[#allocation2 + $0x163] sm:$0xff]
  %v6430 = vld [vmem:[#allocation2 + $0x16b] sm:$0xff]
  %v6431 = vld [vmem:[#allocation2 + $0x173] sm:$0xff]
  %v6432 = vld [vmem:[#allocation2 + $0x17b] sm:$0xff]
  %v6433 = vld [vmem:[#allocation2 + $0x183] sm:$0xff]
  %v6434 = vld [vmem:[#allocation2 + $0x18b] sm:$0xff]
  %v6435 = vld [vmem:[#allocation2 + $0x193] sm:$0xff]
  %v6436 = vld [vmem:[#allocation2 + $0x19b] sm:$0xff]
  %v6437 = vld [vmem:[#allocation2 + $0x1a3] sm:$0xff]
  %v6438 = vld [vmem:[#allocation2 + $0x1ab] sm:$0xff]
  %v6439 = vld [vmem:[#allocation2 + $0x1b3] sm:$0xff]
  %v6440 = vld [vmem:[#allocation2 + $0x1bb] sm:$0xff]
  %v6441 = vld [vmem:[#allocation2 + $0x1c3] sm:$0xff]
  %v6442 = vld [vmem:[#allocation2 + $0x1cb] sm:$0xff]
  %v6443 = vld [vmem:[#allocation2 + $0x1d3] sm:$0xff]
  %v6444 = vld [vmem:[#allocation2 + $0x1db] sm:$0xff]
  %v6445 = vld [vmem:[#allocation2 + $0x1e3] sm:$0xff]
  %v6446 = vld [vmem:[#allocation2 + $0x1eb] sm:$0xff]
  %v6447 = vld [vmem:[#allocation2 + $0x1f3] sm:$0xff]
  %v6448 = vld [vmem:[#allocation2 + $0x1fb] sm:$0xff]
  %v6449 = vld [vmem:[#allocation2 + $0x203] sm:$0xff]
  %v6450 = vld [vmem:[#allocation2 + $0x20b] sm:$0xff]
  %v6451 = vld [vmem:[#allocation2 + $0x213] sm:$0xff]
  %v6452 = vld [vmem:[#allocation2 + $0x21b] sm:$0xff]
  %v6453 = vld [vmem:[#allocation2 + $0x223] sm:$0xff]
  %v6454 = vld [vmem:[#allocation2 + $0x22b] sm:$0xff]
  %v6455 = vld [vmem:[#allocation2 + $0x233] sm:$0xff]
  %v6456 = vld [vmem:[#allocation2 + $0x23b] sm:$0xff]
  %v6457 = vld [vmem:[#allocation2 + $0x243] sm:$0xff]
  %v6458 = vld [vmem:[#allocation2 + $0x24b] sm:$0xff]
  %v6459 = vld [vmem:[#allocation2 + $0x253] sm:$0xff]
  %v6460 = vld [vmem:[#allocation2 + $0x25b] sm:$0xff]
  %v6461 = vld [vmem:[#allocation2 + $0x263] sm:$0xff]
  %v6462 = vld [vmem:[#allocation2 + $0x26b] sm:$0xff]
  %v6463 = vld [vmem:[#allocation2 + $0x273] sm:$0xff]
  %v6464 = vld [vmem:[#allocation2 + $0x27b] sm:$0xff]
  %v6465 = vld [vmem:[#allocation2 + $0x283] sm:$0xff]
  %v6466 = vld [vmem:[#allocation2 + $0x28b] sm:$0xff]
  %v6467 = vld [vmem:[#allocation2 + $0x293] sm:$0xff]
  %v6468 = vld [vmem:[#allocation2 + $0x29b] sm:$0xff]
  %v6469 = vld [vmem:[#allocation2 + $0x2a3] sm:$0xff]
  %v6470 = vld [vmem:[#allocation2 + $0x2ab] sm:$0xff]
  %s6471 = scalar_lea.vmem %s3, 32
  %v6472 = vld [vmem:[%s6471] sm:$0xf]
  %v6474 = vsel %vm179, %v6390, 0
  %v6477 = vsel %vm179, %v6391, 0
  %v6480 = vsel %vm179, %v6392, 0
  %v6483 = vsel %vm179, %v6393, 0
  %v6486 = vsel %vm179, %v6394, 0
  %v6489 = vsel %vm179, %v6395, 0
  %v6492 = vsel %vm179, %v6396, 0
  %v6495 = vsel %vm179, %v6397, 0
  %v6498 = vsel %vm179, %v6398, 0
  %v6501 = vsel %vm179, %v6399, 0
  %v6504 = vsel %vm179, %v6400, 0
  %v6507 = vsel %vm179, %v6401, 0
  %v6510 = vsel %vm179, %v6402, 0
  %v6513 = vsel %vm179, %v6403, 0
  %v6516 = vsel %vm179, %v6404, 0
  %v6519 = vsel %vm179, %v6405, 0
  %v6522 = vsel %vm179, %v6406, 0
  %v6525 = vsel %vm179, %v6407, 0
  %v6528 = vsel %vm179, %v6408, 0
  %v6531 = vsel %vm179, %v6409, 0
  %v6534 = vsel %vm179, %v6410, 0
  %v6537 = vsel %vm179, %v6411, 0
  %v6540 = vsel %vm179, %v6412, 0
  %v6543 = vsel %vm179, %v6413, 0
  %v6546 = vsel %vm179, %v6414, 0
  %v6549 = vsel %vm179, %v6415, 0
  %v6552 = vsel %vm179, %v6416, 0
  %v6555 = vsel %vm179, %v6417, 0
  %v6558 = vsel %vm179, %v6418, 0
  %v6561 = vsel %vm179, %v6419, 0
  %v6564 = vsel %vm179, %v6420, 0
  %v6567 = vsel %vm179, %v6421, 0
  %v6570 = vsel %vm179, %v6422, 0
  %v6573 = vsel %vm179, %v6423, 0
  %v6576 = vsel %vm179, %v6424, 0
  %v6579 = vsel %vm179, %v6425, 0
  %v6582 = vsel %vm179, %v6426, 0
  %v6585 = vsel %vm179, %v6427, 0
  %v6588 = vsel %vm179, %v6428, 0
  %v6591 = vsel %vm179, %v6429, 0
  %v6594 = vsel %vm179, %v6430, 0
  %v6597 = vsel %vm179, %v6431, 0
  %v6600 = vsel %vm179, %v6432, 0
  %v6603 = vsel %vm179, %v6433, 0
  %v6606 = vsel %vm179, %v6434, 0
  %v6609 = vsel %vm179, %v6435, 0
  %v6612 = vsel %vm179, %v6436, 0
  %v6615 = vsel %vm179, %v6437, 0
  %v6618 = vsel %vm179, %v6438, 0
  %v6621 = vsel %vm179, %v6439, 0
  %v6624 = vsel %vm179, %v6440, 0
  %v6627 = vsel %vm179, %v6441, 0
  %v6630 = vsel %vm179, %v6442, 0
  %v6633 = vsel %vm179, %v6443, 0
  %v6636 = vsel %vm179, %v6444, 0
  %v6639 = vsel %vm179, %v6445, 0
  %v6642 = vsel %vm179, %v6446, 0
  %v6645 = vsel %vm179, %v6447, 0
  %v6648 = vsel %vm179, %v6448, 0
  %v6651 = vsel %vm179, %v6449, 0
  %v6654 = vsel %vm179, %v6450, 0
  %v6657 = vsel %vm179, %v6451, 0
  %v6660 = vsel %vm179, %v6452, 0
  %v6663 = vsel %vm179, %v6453, 0
  %v6666 = vsel %vm179, %v6454, 0
  %v6669 = vsel %vm179, %v6455, 0
  %v6672 = vsel %vm179, %v6456, 0
  %v6675 = vsel %vm179, %v6457, 0
  %v6678 = vsel %vm179, %v6458, 0
  %v6681 = vsel %vm179, %v6459, 0
  %v6684 = vsel %vm179, %v6460, 0
  %v6687 = vsel %vm179, %v6461, 0
  %v6690 = vsel %vm179, %v6462, 0
  %v6693 = vsel %vm179, %v6463, 0
  %v6696 = vsel %vm179, %v6464, 0
  %v6699 = vsel %vm179, %v6465, 0
  %v6702 = vsel %vm179, %v6466, 0
  %v6705 = vsel %vm179, %v6467, 0
  %v6708 = vsel %vm179, %v6468, 0
  %v6711 = vsel %vm179, %v6469, 0
  %v6714 = vsel %vm179, %v6470, 0
  %v6717 = vsel %vm1600, %v6472, 0
  %6719 = vmatpush.msra.mxu0 0.0
  %6720 = vmatpush.msra.mxu0 0.0
  %6721 = vmatpush.msra.mxu0 0.0
  %6722 = vmatpush.msra.mxu0 0.0
  %6723 = vmatpush.msra.mxu0 0.0
  %6724 = vmatpush.msra.mxu0 0.0
  %6725 = vmatpush.msra.mxu0 0.0
  %6726 = vmatpush.msra.mxu0 0.0
  %6727 = vmatpush.msra.mxu0 0.0
  %6728 = vmatpush.msra.mxu0 0.0
  %6729 = vmatpush.msra.mxu0 0.0
  %6730 = vmatpush.msra.mxu0 0.0
  %6731 = vmatpush.msra.mxu0 0.0
  %6732 = vmatpush.msra.mxu0 0.0
  %6733 = vmatpush.msra.mxu0 0.0
  %6734 = vmatpush.msra.mxu0 %v6717
  %6735 = vmatmul.f32.gmra.mxu0 %v6474
  %v6736 = vpop.f32.mrf.mxu0
  %v6737 = vadd.f32 0.0, %v6736
  %6738 = vmatmul.f32.gmra.mxu0 %v6477
  %v6739 = vpop.f32.mrf.mxu0
  %v6740 = vadd.f32 0.0, %v6739
  %6741 = vmatmul.f32.gmra.mxu0 %v6480
  %v6742 = vpop.f32.mrf.mxu0
  %v6743 = vadd.f32 0.0, %v6742
  %6744 = vmatmul.f32.gmra.mxu0 %v6483
  %v6745 = vpop.f32.mrf.mxu0
  %v6746 = vadd.f32 0.0, %v6745
  %6747 = vmatmul.f32.gmra.mxu0 %v6486
  %v6748 = vpop.f32.mrf.mxu0
  %v6749 = vadd.f32 0.0, %v6748
  %6750 = vmatmul.f32.gmra.mxu0 %v6489
  %v6751 = vpop.f32.mrf.mxu0
  %v6752 = vadd.f32 0.0, %v6751
  %6753 = vmatmul.f32.gmra.mxu0 %v6492
  %v6754 = vpop.f32.mrf.mxu0
  %v6755 = vadd.f32 0.0, %v6754
  %6756 = vmatmul.f32.gmra.mxu0 %v6495
  %v6757 = vpop.f32.mrf.mxu0
  %v6758 = vadd.f32 0.0, %v6757
  %6759 = vmatmul.f32.gmra.mxu0 %v6498
  %v6760 = vpop.f32.mrf.mxu0
  %v6761 = vadd.f32 0.0, %v6760
  %6762 = vmatmul.f32.gmra.mxu0 %v6501
  %v6763 = vpop.f32.mrf.mxu0
  %v6764 = vadd.f32 0.0, %v6763
  %6765 = vmatmul.f32.gmra.mxu0 %v6504
  %v6766 = vpop.f32.mrf.mxu0
  %v6767 = vadd.f32 0.0, %v6766
  %6768 = vmatmul.f32.gmra.mxu0 %v6507
  %v6769 = vpop.f32.mrf.mxu0
  %v6770 = vadd.f32 0.0, %v6769
  %6771 = vmatmul.f32.gmra.mxu0 %v6510
  %v6772 = vpop.f32.mrf.mxu0
  %v6773 = vadd.f32 0.0, %v6772
  %6774 = vmatmul.f32.gmra.mxu0 %v6513
  %v6775 = vpop.f32.mrf.mxu0
  %v6776 = vadd.f32 0.0, %v6775
  %6777 = vmatmul.f32.gmra.mxu0 %v6516
  %v6778 = vpop.f32.mrf.mxu0
  %v6779 = vadd.f32 0.0, %v6778
  %6780 = vmatmul.f32.gmra.mxu0 %v6519
  %v6781 = vpop.f32.mrf.mxu0
  %v6782 = vadd.f32 0.0, %v6781
  %6783 = vmatmul.f32.gmra.mxu0 %v6522
  %v6784 = vpop.f32.mrf.mxu0
  %v6785 = vadd.f32 0.0, %v6784
  %6786 = vmatmul.f32.gmra.mxu0 %v6525
  %v6787 = vpop.f32.mrf.mxu0
  %v6788 = vadd.f32 0.0, %v6787
  %6789 = vmatmul.f32.gmra.mxu0 %v6528
  %v6790 = vpop.f32.mrf.mxu0
  %v6791 = vadd.f32 0.0, %v6790
  %6792 = vmatmul.f32.gmra.mxu0 %v6531
  %v6793 = vpop.f32.mrf.mxu0
  %v6794 = vadd.f32 0.0, %v6793
  %6795 = vmatmul.f32.gmra.mxu0 %v6534
  %v6796 = vpop.f32.mrf.mxu0
  %v6797 = vadd.f32 0.0, %v6796
  %6798 = vmatmul.f32.gmra.mxu0 %v6537
  %v6799 = vpop.f32.mrf.mxu0
  %v6800 = vadd.f32 0.0, %v6799
  %6801 = vmatmul.f32.gmra.mxu0 %v6540
  %v6802 = vpop.f32.mrf.mxu0
  %v6803 = vadd.f32 0.0, %v6802
  %6804 = vmatmul.f32.gmra.mxu0 %v6543
  %v6805 = vpop.f32.mrf.mxu0
  %v6806 = vadd.f32 0.0, %v6805
  %6807 = vmatmul.f32.gmra.mxu0 %v6546
  %v6808 = vpop.f32.mrf.mxu0
  %v6809 = vadd.f32 0.0, %v6808
  %6810 = vmatmul.f32.gmra.mxu0 %v6549
  %v6811 = vpop.f32.mrf.mxu0
  %v6812 = vadd.f32 0.0, %v6811
  %6813 = vmatmul.f32.gmra.mxu0 %v6552
  %v6814 = vpop.f32.mrf.mxu0
  %v6815 = vadd.f32 0.0, %v6814
  %6816 = vmatmul.f32.gmra.mxu0 %v6555
  %v6817 = vpop.f32.mrf.mxu0
  %v6818 = vadd.f32 0.0, %v6817
  %6819 = vmatmul.f32.gmra.mxu0 %v6558
  %v6820 = vpop.f32.mrf.mxu0
  %v6821 = vadd.f32 0.0, %v6820
  %6822 = vmatmul.f32.gmra.mxu0 %v6561
  %v6823 = vpop.f32.mrf.mxu0
  %v6824 = vadd.f32 0.0, %v6823
  %6825 = vmatmul.f32.gmra.mxu0 %v6564
  %v6826 = vpop.f32.mrf.mxu0
  %v6827 = vadd.f32 0.0, %v6826
  %6828 = vmatmul.f32.gmra.mxu0 %v6567
  %v6829 = vpop.f32.mrf.mxu0
  %v6830 = vadd.f32 0.0, %v6829
  %6831 = vmatmul.f32.gmra.mxu0 %v6570
  %v6832 = vpop.f32.mrf.mxu0
  %v6833 = vadd.f32 0.0, %v6832
  %6834 = vmatmul.f32.gmra.mxu0 %v6573
  %v6835 = vpop.f32.mrf.mxu0
  %v6836 = vadd.f32 0.0, %v6835
  %6837 = vmatmul.f32.gmra.mxu0 %v6576
  %v6838 = vpop.f32.mrf.mxu0
  %v6839 = vadd.f32 0.0, %v6838
  %6840 = vmatmul.f32.gmra.mxu0 %v6579
  %v6841 = vpop.f32.mrf.mxu0
  %v6842 = vadd.f32 0.0, %v6841
  %6843 = vmatmul.f32.gmra.mxu0 %v6582
  %v6844 = vpop.f32.mrf.mxu0
  %v6845 = vadd.f32 0.0, %v6844
  %6846 = vmatmul.f32.gmra.mxu0 %v6585
  %v6847 = vpop.f32.mrf.mxu0
  %v6848 = vadd.f32 0.0, %v6847
  %6849 = vmatmul.f32.gmra.mxu0 %v6588
  %v6850 = vpop.f32.mrf.mxu0
  %v6851 = vadd.f32 0.0, %v6850
  %6852 = vmatmul.f32.gmra.mxu0 %v6591
  %v6853 = vpop.f32.mrf.mxu0
  %v6854 = vadd.f32 0.0, %v6853
  %6855 = vmatmul.f32.gmra.mxu0 %v6594
  %v6856 = vpop.f32.mrf.mxu0
  %v6857 = vadd.f32 0.0, %v6856
  %6858 = vmatmul.f32.gmra.mxu0 %v6597
  %v6859 = vpop.f32.mrf.mxu0
  %v6860 = vadd.f32 0.0, %v6859
  %6861 = vmatmul.f32.gmra.mxu0 %v6600
  %v6862 = vpop.f32.mrf.mxu0
  %v6863 = vadd.f32 0.0, %v6862
  %6864 = vmatmul.f32.gmra.mxu0 %v6603
  %v6865 = vpop.f32.mrf.mxu0
  %v6866 = vadd.f32 0.0, %v6865
  %6867 = vmatmul.f32.gmra.mxu0 %v6606
  %v6868 = vpop.f32.mrf.mxu0
  %v6869 = vadd.f32 0.0, %v6868
  %6870 = vmatmul.f32.gmra.mxu0 %v6609
  %v6871 = vpop.f32.mrf.mxu0
  %v6872 = vadd.f32 0.0, %v6871
  %6873 = vmatmul.f32.gmra.mxu0 %v6612
  %v6874 = vpop.f32.mrf.mxu0
  %v6875 = vadd.f32 0.0, %v6874
  %6876 = vmatmul.f32.gmra.mxu0 %v6615
  %v6877 = vpop.f32.mrf.mxu0
  %v6878 = vadd.f32 0.0, %v6877
  %6879 = vmatmul.f32.gmra.mxu0 %v6618
  %v6880 = vpop.f32.mrf.mxu0
  %v6881 = vadd.f32 0.0, %v6880
  %6882 = vmatmul.f32.gmra.mxu0 %v6621
  %v6883 = vpop.f32.mrf.mxu0
  %v6884 = vadd.f32 0.0, %v6883
  %6885 = vmatmul.f32.gmra.mxu0 %v6624
  %v6886 = vpop.f32.mrf.mxu0
  %v6887 = vadd.f32 0.0, %v6886
  %6888 = vmatmul.f32.gmra.mxu0 %v6627
  %v6889 = vpop.f32.mrf.mxu0
  %v6890 = vadd.f32 0.0, %v6889
  %6891 = vmatmul.f32.gmra.mxu0 %v6630
  %v6892 = vpop.f32.mrf.mxu0
  %v6893 = vadd.f32 0.0, %v6892
  %6894 = vmatmul.f32.gmra.mxu0 %v6633
  %v6895 = vpop.f32.mrf.mxu0
  %v6896 = vadd.f32 0.0, %v6895
  %6897 = vmatmul.f32.gmra.mxu0 %v6636
  %v6898 = vpop.f32.mrf.mxu0
  %v6899 = vadd.f32 0.0, %v6898
  %6900 = vmatmul.f32.gmra.mxu0 %v6639
  %v6901 = vpop.f32.mrf.mxu0
  %v6902 = vadd.f32 0.0, %v6901
  %6903 = vmatmul.f32.gmra.mxu0 %v6642
  %v6904 = vpop.f32.mrf.mxu0
  %v6905 = vadd.f32 0.0, %v6904
  %6906 = vmatmul.f32.gmra.mxu0 %v6645
  %v6907 = vpop.f32.mrf.mxu0
  %v6908 = vadd.f32 0.0, %v6907
  %6909 = vmatmul.f32.gmra.mxu0 %v6648
  %v6910 = vpop.f32.mrf.mxu0
  %v6911 = vadd.f32 0.0, %v6910
  %6912 = vmatmul.f32.gmra.mxu0 %v6651
  %v6913 = vpop.f32.mrf.mxu0
  %v6914 = vadd.f32 0.0, %v6913
  %6915 = vmatmul.f32.gmra.mxu0 %v6654
  %v6916 = vpop.f32.mrf.mxu0
  %v6917 = vadd.f32 0.0, %v6916
  %6918 = vmatmul.f32.gmra.mxu0 %v6657
  %v6919 = vpop.f32.mrf.mxu0
  %v6920 = vadd.f32 0.0, %v6919
  %6921 = vmatmul.f32.gmra.mxu0 %v6660
  %v6922 = vpop.f32.mrf.mxu0
  %v6923 = vadd.f32 0.0, %v6922
  %6924 = vmatmul.f32.gmra.mxu0 %v6663
  %v6925 = vpop.f32.mrf.mxu0
  %v6926 = vadd.f32 0.0, %v6925
  %6927 = vmatmul.f32.gmra.mxu0 %v6666
  %v6928 = vpop.f32.mrf.mxu0
  %v6929 = vadd.f32 0.0, %v6928
  %6930 = vmatmul.f32.gmra.mxu0 %v6669
  %v6931 = vpop.f32.mrf.mxu0
  %v6932 = vadd.f32 0.0, %v6931
  %6933 = vmatmul.f32.gmra.mxu0 %v6672
  %v6934 = vpop.f32.mrf.mxu0
  %v6935 = vadd.f32 0.0, %v6934
  %6936 = vmatmul.f32.gmra.mxu0 %v6675
  %v6937 = vpop.f32.mrf.mxu0
  %v6938 = vadd.f32 0.0, %v6937
  %6939 = vmatmul.f32.gmra.mxu0 %v6678
  %v6940 = vpop.f32.mrf.mxu0
  %v6941 = vadd.f32 0.0, %v6940
  %6942 = vmatmul.f32.gmra.mxu0 %v6681
  %v6943 = vpop.f32.mrf.mxu0
  %v6944 = vadd.f32 0.0, %v6943
  %6945 = vmatmul.f32.gmra.mxu0 %v6684
  %v6946 = vpop.f32.mrf.mxu0
  %v6947 = vadd.f32 0.0, %v6946
  %6948 = vmatmul.f32.gmra.mxu0 %v6687
  %v6949 = vpop.f32.mrf.mxu0
  %v6950 = vadd.f32 0.0, %v6949
  %6951 = vmatmul.f32.gmra.mxu0 %v6690
  %v6952 = vpop.f32.mrf.mxu0
  %v6953 = vadd.f32 0.0, %v6952
  %6954 = vmatmul.f32.gmra.mxu0 %v6693
  %v6955 = vpop.f32.mrf.mxu0
  %v6956 = vadd.f32 0.0, %v6955
  %6957 = vmatmul.f32.gmra.mxu0 %v6696
  %v6958 = vpop.f32.mrf.mxu0
  %v6959 = vadd.f32 0.0, %v6958
  %6960 = vmatmul.f32.gmra.mxu0 %v6699
  %v6961 = vpop.f32.mrf.mxu0
  %v6962 = vadd.f32 0.0, %v6961
  %6963 = vmatmul.f32.gmra.mxu0 %v6702
  %v6964 = vpop.f32.mrf.mxu0
  %v6965 = vadd.f32 0.0, %v6964
  %6966 = vmatmul.f32.gmra.mxu0 %v6705
  %v6967 = vpop.f32.mrf.mxu0
  %v6968 = vadd.f32 0.0, %v6967
  %6969 = vmatmul.f32.gmra.mxu0 %v6708
  %v6970 = vpop.f32.mrf.mxu0
  %v6971 = vadd.f32 0.0, %v6970
  %6972 = vmatmul.f32.gmra.mxu0 %v6711
  %v6973 = vpop.f32.mrf.mxu0
  %v6974 = vadd.f32 0.0, %v6973
  %6975 = vmatmul.f32.gmra.mxu0 %v6714
  %v6976 = vpop.f32.mrf.mxu0
  %v6977 = vadd.f32 0.0, %v6976
  %6978 = vdwg.mxu0
  %v6979 = vadd.f32 %v6309, %v6737
  %v6980 = vadd.f32 %v6310, %v6740
  %v6981 = vadd.f32 %v6311, %v6743
  %v6982 = vadd.f32 %v6312, %v6746
  %v6983 = vadd.f32 %v6313, %v6749
  %v6984 = vadd.f32 %v6314, %v6752
  %v6985 = vadd.f32 %v6315, %v6755
  %v6986 = vadd.f32 %v6316, %v6758
  %v6987 = vadd.f32 %v6317, %v6761
  %v6988 = vadd.f32 %v6318, %v6764
  %v6989 = vadd.f32 %v6319, %v6767
  %v6990 = vadd.f32 %v6320, %v6770
  %v6991 = vadd.f32 %v6321, %v6773
  %v6992 = vadd.f32 %v6322, %v6776
  %v6993 = vadd.f32 %v6323, %v6779
  %v6994 = vadd.f32 %v6324, %v6782
  %v6995 = vadd.f32 %v6325, %v6785
  %v6996 = vadd.f32 %v6326, %v6788
  %v6997 = vadd.f32 %v6327, %v6791
  %v6998 = vadd.f32 %v6328, %v6794
  %v6999 = vadd.f32 %v6329, %v6797
  %v7000 = vadd.f32 %v6330, %v6800
  %v7001 = vadd.f32 %v6331, %v6803
  %v7002 = vadd.f32 %v6332, %v6806
  %v7003 = vadd.f32 %v6333, %v6809
  %v7004 = vadd.f32 %v6334, %v6812
  %v7005 = vadd.f32 %v6335, %v6815
  %v7006 = vadd.f32 %v6336, %v6818
  %v7007 = vadd.f32 %v6337, %v6821
  %v7008 = vadd.f32 %v6338, %v6824
  %v7009 = vadd.f32 %v6339, %v6827
  %v7010 = vadd.f32 %v6340, %v6830
  %v7011 = vadd.f32 %v6341, %v6833
  %v7012 = vadd.f32 %v6342, %v6836
  %v7013 = vadd.f32 %v6343, %v6839
  %v7014 = vadd.f32 %v6344, %v6842
  %v7015 = vadd.f32 %v6345, %v6845
  %v7016 = vadd.f32 %v6346, %v6848
  %v7017 = vadd.f32 %v6347, %v6851
  %v7018 = vadd.f32 %v6348, %v6854
  %v7019 = vadd.f32 %v6349, %v6857
  %v7020 = vadd.f32 %v6350, %v6860
  %v7021 = vadd.f32 %v6351, %v6863
  %v7022 = vadd.f32 %v6352, %v6866
  %v7023 = vadd.f32 %v6353, %v6869
  %v7024 = vadd.f32 %v6354, %v6872
  %v7025 = vadd.f32 %v6355, %v6875
  %v7026 = vadd.f32 %v6356, %v6878
  %v7027 = vadd.f32 %v6357, %v6881
  %v7028 = vadd.f32 %v6358, %v6884
  %v7029 = vadd.f32 %v6359, %v6887
  %v7030 = vadd.f32 %v6360, %v6890
  %v7031 = vadd.f32 %v6361, %v6893
  %v7032 = vadd.f32 %v6362, %v6896
  %v7033 = vadd.f32 %v6363, %v6899
  %v7034 = vadd.f32 %v6364, %v6902
  %v7035 = vadd.f32 %v6365, %v6905
  %v7036 = vadd.f32 %v6366, %v6908
  %v7037 = vadd.f32 %v6367, %v6911
  %v7038 = vadd.f32 %v6368, %v6914
  %v7039 = vadd.f32 %v6369, %v6917
  %v7040 = vadd.f32 %v6370, %v6920
  %v7041 = vadd.f32 %v6371, %v6923
  %v7042 = vadd.f32 %v6372, %v6926
  %v7043 = vadd.f32 %v6373, %v6929
  %v7044 = vadd.f32 %v6374, %v6932
  %v7045 = vadd.f32 %v6375, %v6935
  %v7046 = vadd.f32 %v6376, %v6938
  %v7047 = vadd.f32 %v6377, %v6941
  %v7048 = vadd.f32 %v6378, %v6944
  %v7049 = vadd.f32 %v6379, %v6947
  %v7050 = vadd.f32 %v6380, %v6950
  %v7051 = vadd.f32 %v6381, %v6953
  %v7052 = vadd.f32 %v6382, %v6956
  %v7053 = vadd.f32 %v6383, %v6959
  %v7054 = vadd.f32 %v6384, %v6962
  %v7055 = vadd.f32 %v6385, %v6965
  %v7056 = vadd.f32 %v6386, %v6968
  %v7057 = vadd.f32 %v6387, %v6971
  %v7058 = vadd.f32 %v6388, %v6974
  %v7059 = vadd.f32 %v6389, %v6977
  %v7060 = vperm.slane %v188, 0
  %v7061 = vadd.f32 %v6979, %v7060
  %v7062 = vadd.f32 %v6980, %v7060
  %v7063 = vadd.f32 %v6981, %v7060
  %v7064 = vadd.f32 %v6982, %v7060
  %v7065 = vadd.f32 %v6983, %v7060
  %v7066 = vadd.f32 %v6984, %v7060
  %v7067 = vadd.f32 %v6985, %v7060
  %v7068 = vadd.f32 %v6986, %v7060
  %v7069 = vadd.f32 %v6987, %v7060
  %v7070 = vadd.f32 %v6988, %v7060
  %v7071 = vadd.f32 %v6989, %v7060
  %v7072 = vadd.f32 %v6990, %v7060
  %v7073 = vadd.f32 %v6991, %v7060
  %v7074 = vadd.f32 %v6992, %v7060
  %v7075 = vadd.f32 %v6993, %v7060
  %v7076 = vadd.f32 %v6994, %v7060
  %v7077 = vadd.f32 %v6995, %v7060
  %v7078 = vadd.f32 %v6996, %v7060
  %v7079 = vadd.f32 %v6997, %v7060
  %v7080 = vadd.f32 %v6998, %v7060
  %v7081 = vadd.f32 %v6999, %v7060
  %v7082 = vadd.f32 %v7000, %v7060
  %v7083 = vadd.f32 %v7001, %v7060
  %v7084 = vadd.f32 %v7002, %v7060
  %v7085 = vadd.f32 %v7003, %v7060
  %v7086 = vadd.f32 %v7004, %v7060
  %v7087 = vadd.f32 %v7005, %v7060
  %v7088 = vadd.f32 %v7006, %v7060
  %v7089 = vadd.f32 %v7007, %v7060
  %v7090 = vadd.f32 %v7008, %v7060
  %v7091 = vadd.f32 %v7009, %v7060
  %v7092 = vadd.f32 %v7010, %v7060
  %v7093 = vadd.f32 %v7011, %v7060
  %v7094 = vadd.f32 %v7012, %v7060
  %v7095 = vadd.f32 %v7013, %v7060
  %v7096 = vadd.f32 %v7014, %v7060
  %v7097 = vadd.f32 %v7015, %v7060
  %v7098 = vadd.f32 %v7016, %v7060
  %v7099 = vadd.f32 %v7017, %v7060
  %v7100 = vadd.f32 %v7018, %v7060
  %v7101 = vadd.f32 %v7019, %v7060
  %v7102 = vadd.f32 %v7020, %v7060
  %v7103 = vadd.f32 %v7021, %v7060
  %v7104 = vadd.f32 %v7022, %v7060
  %v7105 = vadd.f32 %v7023, %v7060
  %v7106 = vadd.f32 %v7024, %v7060
  %v7107 = vadd.f32 %v7025, %v7060
  %v7108 = vadd.f32 %v7026, %v7060
  %v7109 = vadd.f32 %v7027, %v7060
  %v7110 = vadd.f32 %v7028, %v7060
  %v7111 = vadd.f32 %v7029, %v7060
  %v7112 = vadd.f32 %v7030, %v7060
  %v7113 = vadd.f32 %v7031, %v7060
  %v7114 = vadd.f32 %v7032, %v7060
  %v7115 = vadd.f32 %v7033, %v7060
  %v7116 = vadd.f32 %v7034, %v7060
  %v7117 = vadd.f32 %v7035, %v7060
  %v7118 = vadd.f32 %v7036, %v7060
  %v7119 = vadd.f32 %v7037, %v7060
  %v7120 = vadd.f32 %v7038, %v7060
  %v7121 = vadd.f32 %v7039, %v7060
  %v7122 = vadd.f32 %v7040, %v7060
  %v7123 = vadd.f32 %v7041, %v7060
  %v7124 = vadd.f32 %v7042, %v7060
  %v7125 = vadd.f32 %v7043, %v7060
  %v7126 = vadd.f32 %v7044, %v7060
  %v7127 = vadd.f32 %v7045, %v7060
  %v7128 = vadd.f32 %v7046, %v7060
  %v7129 = vadd.f32 %v7047, %v7060
  %v7130 = vadd.f32 %v7048, %v7060
  %v7131 = vadd.f32 %v7049, %v7060
  %v7132 = vadd.f32 %v7050, %v7060
  %v7133 = vadd.f32 %v7051, %v7060
  %v7134 = vadd.f32 %v7052, %v7060
  %v7135 = vadd.f32 %v7053, %v7060
  %v7136 = vadd.f32 %v7054, %v7060
  %v7137 = vadd.f32 %v7055, %v7060
  %v7138 = vadd.f32 %v7056, %v7060
  %v7139 = vadd.f32 %v7057, %v7060
  %v7140 = vadd.f32 %v7058, %v7060
  %v7141 = vadd.f32 %v7059, %v7060
  %v7142 = vmul.f32 %v7061, %v98
  %v7143 = vmul.f32 %v7062, %v99
  %v7144 = vmul.f32 %v7063, %v100
  %v7145 = vmul.f32 %v7064, %v101
  %v7146 = vmul.f32 %v7065, %v102
  %v7147 = vmul.f32 %v7066, %v103
  %v7148 = vmul.f32 %v7067, %v104
  %v7149 = vmul.f32 %v7068, %v105
  %v7150 = vmul.f32 %v7069, %v106
  %v7151 = vmul.f32 %v7070, %v107
  %v7152 = vmul.f32 %v7071, %v108
  %v7153 = vmul.f32 %v7072, %v109
  %v7154 = vmul.f32 %v7073, %v110
  %v7155 = vmul.f32 %v7074, %v111
  %v7156 = vmul.f32 %v7075, %v112
  %v7157 = vmul.f32 %v7076, %v113
  %v7158 = vmul.f32 %v7077, %v114
  %v7159 = vmul.f32 %v7078, %v115
  %v7160 = vmul.f32 %v7079, %v116
  %v7161 = vmul.f32 %v7080, %v117
  %v7162 = vmul.f32 %v7081, %v118
  %v7163 = vmul.f32 %v7082, %v119
  %v7164 = vmul.f32 %v7083, %v120
  %v7165 = vmul.f32 %v7084, %v121
  %v7166 = vmul.f32 %v7085, %v122
  %v7167 = vmul.f32 %v7086, %v123
  %v7168 = vmul.f32 %v7087, %v124
  %v7169 = vmul.f32 %v7088, %v125
  %v7170 = vmul.f32 %v7089, %v126
  %v7171 = vmul.f32 %v7090, %v127
  %v7172 = vmul.f32 %v7091, %v128
  %v7173 = vmul.f32 %v7092, %v129
  %v7174 = vmul.f32 %v7093, %v130
  %v7175 = vmul.f32 %v7094, %v131
  %v7176 = vmul.f32 %v7095, %v132
  %v7177 = vmul.f32 %v7096, %v133
  %v7178 = vmul.f32 %v7097, %v134
  %v7179 = vmul.f32 %v7098, %v135
  %v7180 = vmul.f32 %v7099, %v136
  %v7181 = vmul.f32 %v7100, %v137
  %v7182 = vmul.f32 %v7101, %v138
  %v7183 = vmul.f32 %v7102, %v139
  %v7184 = vmul.f32 %v7103, %v140
  %v7185 = vmul.f32 %v7104, %v141
  %v7186 = vmul.f32 %v7105, %v142
  %v7187 = vmul.f32 %v7106, %v143
  %v7188 = vmul.f32 %v7107, %v144
  %v7189 = vmul.f32 %v7108, %v145
  %v7190 = vmul.f32 %v7109, %v146
  %v7191 = vmul.f32 %v7110, %v147
  %v7192 = vmul.f32 %v7111, %v148
  %v7193 = vmul.f32 %v7112, %v149
  %v7194 = vmul.f32 %v7113, %v150
  %v7195 = vmul.f32 %v7114, %v151
  %v7196 = vmul.f32 %v7115, %v152
  %v7197 = vmul.f32 %v7116, %v153
  %v7198 = vmul.f32 %v7117, %v154
  %v7199 = vmul.f32 %v7118, %v155
  %v7200 = vmul.f32 %v7119, %v156
  %v7201 = vmul.f32 %v7120, %v157
  %v7202 = vmul.f32 %v7121, %v158
  %v7203 = vmul.f32 %v7122, %v159
  %v7204 = vmul.f32 %v7123, %v160
  %v7205 = vmul.f32 %v7124, %v161
  %v7206 = vmul.f32 %v7125, %v162
  %v7207 = vmul.f32 %v7126, %v163
  %v7208 = vmul.f32 %v7127, %v164
  %v7209 = vmul.f32 %v7128, %v165
  %v7210 = vmul.f32 %v7129, %v166
  %v7211 = vmul.f32 %v7130, %v167
  %v7212 = vmul.f32 %v7131, %v168
  %v7213 = vmul.f32 %v7132, %v169
  %v7214 = vmul.f32 %v7133, %v170
  %v7215 = vmul.f32 %v7134, %v171
  %v7216 = vmul.f32 %v7135, %v172
  %v7217 = vmul.f32 %v7136, %v173
  %v7218 = vmul.f32 %v7137, %v174
  %v7219 = vmul.f32 %v7138, %v175
  %v7220 = vmul.f32 %v7139, %v176
  %v7221 = vmul.f32 %v7140, %v177
  %v7222 = vmul.f32 %v7141, %v178
  %v7223 = vsel %vm179, %v7142, 0.0
  %v7224 = vsel %vm179, %v7143, 0.0
  %v7225 = vadd.f32 %v7223, %v7224
  %v7226 = vsel %vm179, %v7144, 0.0
  %v7227 = vadd.f32 %v7225, %v7226
  %v7228 = vsel %vm179, %v7145, 0.0
  %v7229 = vadd.f32 %v7227, %v7228
  %v7230 = vsel %vm179, %v7146, 0.0
  %v7231 = vadd.f32 %v7229, %v7230
  %v7232 = vsel %vm179, %v7147, 0.0
  %v7233 = vadd.f32 %v7231, %v7232
  %v7234 = vsel %vm179, %v7148, 0.0
  %v7235 = vadd.f32 %v7233, %v7234
  %v7236 = vsel %vm179, %v7149, 0.0
  %v7237 = vadd.f32 %v7235, %v7236
  %v7238 = vsel %vm179, %v7150, 0.0
  %v7239 = vadd.f32 %v7237, %v7238
  %v7240 = vsel %vm179, %v7151, 0.0
  %v7241 = vadd.f32 %v7239, %v7240
  %v7242 = vsel %vm179, %v7152, 0.0
  %v7243 = vadd.f32 %v7241, %v7242
  %v7244 = vsel %vm179, %v7153, 0.0
  %v7245 = vadd.f32 %v7243, %v7244
  %v7246 = vsel %vm179, %v7154, 0.0
  %v7247 = vadd.f32 %v7245, %v7246
  %v7248 = vsel %vm179, %v7155, 0.0
  %v7249 = vadd.f32 %v7247, %v7248
  %v7250 = vsel %vm179, %v7156, 0.0
  %v7251 = vadd.f32 %v7249, %v7250
  %v7252 = vsel %vm179, %v7157, 0.0
  %v7253 = vadd.f32 %v7251, %v7252
  %v7254 = vsel %vm179, %v7158, 0.0
  %v7255 = vadd.f32 %v7253, %v7254
  %v7256 = vsel %vm179, %v7159, 0.0
  %v7257 = vadd.f32 %v7255, %v7256
  %v7258 = vsel %vm179, %v7160, 0.0
  %v7259 = vadd.f32 %v7257, %v7258
  %v7260 = vsel %vm179, %v7161, 0.0
  %v7261 = vadd.f32 %v7259, %v7260
  %v7262 = vsel %vm179, %v7162, 0.0
  %v7263 = vadd.f32 %v7261, %v7262
  %v7264 = vsel %vm179, %v7163, 0.0
  %v7265 = vadd.f32 %v7263, %v7264
  %v7266 = vsel %vm179, %v7164, 0.0
  %v7267 = vadd.f32 %v7265, %v7266
  %v7268 = vsel %vm179, %v7165, 0.0
  %v7269 = vadd.f32 %v7267, %v7268
  %v7270 = vsel %vm179, %v7166, 0.0
  %v7271 = vadd.f32 %v7269, %v7270
  %v7272 = vsel %vm179, %v7167, 0.0
  %v7273 = vadd.f32 %v7271, %v7272
  %v7274 = vsel %vm179, %v7168, 0.0
  %v7275 = vadd.f32 %v7273, %v7274
  %v7276 = vsel %vm179, %v7169, 0.0
  %v7277 = vadd.f32 %v7275, %v7276
  %v7278 = vsel %vm179, %v7170, 0.0
  %v7279 = vadd.f32 %v7277, %v7278
  %v7280 = vsel %vm179, %v7171, 0.0
  %v7281 = vadd.f32 %v7279, %v7280
  %v7282 = vsel %vm179, %v7172, 0.0
  %v7283 = vadd.f32 %v7281, %v7282
  %v7284 = vsel %vm179, %v7173, 0.0
  %v7285 = vadd.f32 %v7283, %v7284
  %v7286 = vsel %vm179, %v7174, 0.0
  %v7287 = vadd.f32 %v7285, %v7286
  %v7288 = vsel %vm179, %v7175, 0.0
  %v7289 = vadd.f32 %v7287, %v7288
  %v7290 = vsel %vm179, %v7176, 0.0
  %v7291 = vadd.f32 %v7289, %v7290
  %v7292 = vsel %vm179, %v7177, 0.0
  %v7293 = vadd.f32 %v7291, %v7292
  %v7294 = vsel %vm179, %v7178, 0.0
  %v7295 = vadd.f32 %v7293, %v7294
  %v7296 = vsel %vm179, %v7179, 0.0
  %v7297 = vadd.f32 %v7295, %v7296
  %v7298 = vsel %vm179, %v7180, 0.0
  %v7299 = vadd.f32 %v7297, %v7298
  %v7300 = vsel %vm179, %v7181, 0.0
  %v7301 = vadd.f32 %v7299, %v7300
  %v7302 = vsel %vm179, %v7182, 0.0
  %v7303 = vadd.f32 %v7301, %v7302
  %v7304 = vsel %vm179, %v7183, 0.0
  %v7305 = vadd.f32 %v7303, %v7304
  %v7306 = vsel %vm179, %v7184, 0.0
  %v7307 = vadd.f32 %v7305, %v7306
  %v7308 = vsel %vm179, %v7185, 0.0
  %v7309 = vadd.f32 %v7307, %v7308
  %v7310 = vsel %vm179, %v7186, 0.0
  %v7311 = vadd.f32 %v7309, %v7310
  %v7312 = vsel %vm179, %v7187, 0.0
  %v7313 = vadd.f32 %v7311, %v7312
  %v7314 = vsel %vm179, %v7188, 0.0
  %v7315 = vadd.f32 %v7313, %v7314
  %v7316 = vsel %vm179, %v7189, 0.0
  %v7317 = vadd.f32 %v7315, %v7316
  %v7318 = vsel %vm179, %v7190, 0.0
  %v7319 = vadd.f32 %v7317, %v7318
  %v7320 = vsel %vm179, %v7191, 0.0
  %v7321 = vadd.f32 %v7319, %v7320
  %v7322 = vsel %vm179, %v7192, 0.0
  %v7323 = vadd.f32 %v7321, %v7322
  %v7324 = vsel %vm179, %v7193, 0.0
  %v7325 = vadd.f32 %v7323, %v7324
  %v7326 = vsel %vm179, %v7194, 0.0
  %v7327 = vadd.f32 %v7325, %v7326
  %v7328 = vsel %vm179, %v7195, 0.0
  %v7329 = vadd.f32 %v7327, %v7328
  %v7330 = vsel %vm179, %v7196, 0.0
  %v7331 = vadd.f32 %v7329, %v7330
  %v7332 = vsel %vm179, %v7197, 0.0
  %v7333 = vadd.f32 %v7331, %v7332
  %v7334 = vsel %vm179, %v7198, 0.0
  %v7335 = vadd.f32 %v7333, %v7334
  %v7336 = vsel %vm179, %v7199, 0.0
  %v7337 = vadd.f32 %v7335, %v7336
  %v7338 = vsel %vm179, %v7200, 0.0
  %v7339 = vadd.f32 %v7337, %v7338
  %v7340 = vsel %vm179, %v7201, 0.0
  %v7341 = vadd.f32 %v7339, %v7340
  %v7342 = vsel %vm179, %v7202, 0.0
  %v7343 = vadd.f32 %v7341, %v7342
  %v7344 = vsel %vm179, %v7203, 0.0
  %v7345 = vadd.f32 %v7343, %v7344
  %v7346 = vsel %vm179, %v7204, 0.0
  %v7347 = vadd.f32 %v7345, %v7346
  %v7348 = vsel %vm179, %v7205, 0.0
  %v7349 = vadd.f32 %v7347, %v7348
  %v7350 = vsel %vm179, %v7206, 0.0
  %v7351 = vadd.f32 %v7349, %v7350
  %v7352 = vsel %vm179, %v7207, 0.0
  %v7353 = vadd.f32 %v7351, %v7352
  %v7354 = vsel %vm179, %v7208, 0.0
  %v7355 = vadd.f32 %v7353, %v7354
  %v7356 = vsel %vm179, %v7209, 0.0
  %v7357 = vadd.f32 %v7355, %v7356
  %v7358 = vsel %vm179, %v7210, 0.0
  %v7359 = vadd.f32 %v7357, %v7358
  %v7360 = vsel %vm179, %v7211, 0.0
  %v7361 = vadd.f32 %v7359, %v7360
  %v7362 = vsel %vm179, %v7212, 0.0
  %v7363 = vadd.f32 %v7361, %v7362
  %v7364 = vsel %vm179, %v7213, 0.0
  %v7365 = vadd.f32 %v7363, %v7364
  %v7366 = vsel %vm179, %v7214, 0.0
  %v7367 = vadd.f32 %v7365, %v7366
  %v7368 = vsel %vm179, %v7215, 0.0
  %v7369 = vadd.f32 %v7367, %v7368
  %v7370 = vsel %vm179, %v7216, 0.0
  %v7371 = vadd.f32 %v7369, %v7370
  %v7372 = vsel %vm179, %v7217, 0.0
  %v7373 = vadd.f32 %v7371, %v7372
  %v7374 = vsel %vm179, %v7218, 0.0
  %v7375 = vadd.f32 %v7373, %v7374
  %v7376 = vsel %vm179, %v7219, 0.0
  %v7377 = vadd.f32 %v7375, %v7376
  %v7378 = vsel %vm179, %v7220, 0.0
  %v7379 = vadd.f32 %v7377, %v7378
  %v7380 = vsel %vm179, %v7221, 0.0
  %v7381 = vadd.f32 %v7379, %v7380
  %v7382 = vsel %vm179, %v7222, 0.0
  %v7383 = vadd.f32 %v7381, %v7382
  %v7384 = vrot.slane %v7383, 4
  %v7385 = vadd.f32 %v7383, %v7384
  %v7386 = vrot.slane %v7385, 2
  %v7387 = vadd.f32 %v7385, %v7386
  %v7388 = vrot.slane %v7387, 1
  %v7389 = vadd.f32 %v7387, %v7388
  %v7390 = vmul.f32 %v7389, 0.001953125
  %v7391 = vsub.f32 %v7142, %v7390
  %v7392 = vsub.f32 %v7143, %v7390
  %v7393 = vsub.f32 %v7144, %v7390
  %v7394 = vsub.f32 %v7145, %v7390
  %v7395 = vsub.f32 %v7146, %v7390
  %v7396 = vsub.f32 %v7147, %v7390
  %v7397 = vsub.f32 %v7148, %v7390
  %v7398 = vsub.f32 %v7149, %v7390
  %v7399 = vsub.f32 %v7150, %v7390
  %v7400 = vsub.f32 %v7151, %v7390
  %v7401 = vsub.f32 %v7152, %v7390
  %v7402 = vsub.f32 %v7153, %v7390
  %v7403 = vsub.f32 %v7154, %v7390
  %v7404 = vsub.f32 %v7155, %v7390
  %v7405 = vsub.f32 %v7156, %v7390
  %v7406 = vsub.f32 %v7157, %v7390
  %v7407 = vsub.f32 %v7158, %v7390
  %v7408 = vsub.f32 %v7159, %v7390
  %v7409 = vsub.f32 %v7160, %v7390
  %v7410 = vsub.f32 %v7161, %v7390
  %v7411 = vsub.f32 %v7162, %v7390
  %v7412 = vsub.f32 %v7163, %v7390
  %v7413 = vsub.f32 %v7164, %v7390
  %v7414 = vsub.f32 %v7165, %v7390
  %v7415 = vsub.f32 %v7166, %v7390
  %v7416 = vsub.f32 %v7167, %v7390
  %v7417 = vsub.f32 %v7168, %v7390
  %v7418 = vsub.f32 %v7169, %v7390
  %v7419 = vsub.f32 %v7170, %v7390
  %v7420 = vsub.f32 %v7171, %v7390
  %v7421 = vsub.f32 %v7172, %v7390
  %v7422 = vsub.f32 %v7173, %v7390
  %v7423 = vsub.f32 %v7174, %v7390
  %v7424 = vsub.f32 %v7175, %v7390
  %v7425 = vsub.f32 %v7176, %v7390
  %v7426 = vsub.f32 %v7177, %v7390
  %v7427 = vsub.f32 %v7178, %v7390
  %v7428 = vsub.f32 %v7179, %v7390
  %v7429 = vsub.f32 %v7180, %v7390
  %v7430 = vsub.f32 %v7181, %v7390
  %v7431 = vsub.f32 %v7182, %v7390
  %v7432 = vsub.f32 %v7183, %v7390
  %v7433 = vsub.f32 %v7184, %v7390
  %v7434 = vsub.f32 %v7185, %v7390
  %v7435 = vsub.f32 %v7186, %v7390
  %v7436 = vsub.f32 %v7187, %v7390
  %v7437 = vsub.f32 %v7188, %v7390
  %v7438 = vsub.f32 %v7189, %v7390
  %v7439 = vsub.f32 %v7190, %v7390
  %v7440 = vsub.f32 %v7191, %v7390
  %v7441 = vsub.f32 %v7192, %v7390
  %v7442 = vsub.f32 %v7193, %v7390
  %v7443 = vsub.f32 %v7194, %v7390
  %v7444 = vsub.f32 %v7195, %v7390
  %v7445 = vsub.f32 %v7196, %v7390
  %v7446 = vsub.f32 %v7197, %v7390
  %v7447 = vsub.f32 %v7198, %v7390
  %v7448 = vsub.f32 %v7199, %v7390
  %v7449 = vsub.f32 %v7200, %v7390
  %v7450 = vsub.f32 %v7201, %v7390
  %v7451 = vsub.f32 %v7202, %v7390
  %v7452 = vsub.f32 %v7203, %v7390
  %v7453 = vsub.f32 %v7204, %v7390
  %v7454 = vsub.f32 %v7205, %v7390
  %v7455 = vsub.f32 %v7206, %v7390
  %v7456 = vsub.f32 %v7207, %v7390
  %v7457 = vsub.f32 %v7208, %v7390
  %v7458 = vsub.f32 %v7209, %v7390
  %v7459 = vsub.f32 %v7210, %v7390
  %v7460 = vsub.f32 %v7211, %v7390
  %v7461 = vsub.f32 %v7212, %v7390
  %v7462 = vsub.f32 %v7213, %v7390
  %v7463 = vsub.f32 %v7214, %v7390
  %v7464 = vsub.f32 %v7215, %v7390
  %v7465 = vsub.f32 %v7216, %v7390
  %v7466 = vsub.f32 %v7217, %v7390
  %v7467 = vsub.f32 %v7218, %v7390
  %v7468 = vsub.f32 %v7219, %v7390
  %v7469 = vsub.f32 %v7220, %v7390
  %v7470 = vsub.f32 %v7221, %v7390
  %v7471 = vsub.f32 %v7222, %v7390
  %v7472 = vmul.f32 %v7391, %v98
  %v7473 = vmul.f32 %v7392, %v99
  %v7474 = vmul.f32 %v7393, %v100
  %v7475 = vmul.f32 %v7394, %v101
  %v7476 = vmul.f32 %v7395, %v102
  %v7477 = vmul.f32 %v7396, %v103
  %v7478 = vmul.f32 %v7397, %v104
  %v7479 = vmul.f32 %v7398, %v105
  %v7480 = vmul.f32 %v7399, %v106
  %v7481 = vmul.f32 %v7400, %v107
  %v7482 = vmul.f32 %v7401, %v108
  %v7483 = vmul.f32 %v7402, %v109
  %v7484 = vmul.f32 %v7403, %v110
  %v7485 = vmul.f32 %v7404, %v111
  %v7486 = vmul.f32 %v7405, %v112
  %v7487 = vmul.f32 %v7406, %v113
  %v7488 = vmul.f32 %v7407, %v114
  %v7489 = vmul.f32 %v7408, %v115
  %v7490 = vmul.f32 %v7409, %v116
  %v7491 = vmul.f32 %v7410, %v117
  %v7492 = vmul.f32 %v7411, %v118
  %v7493 = vmul.f32 %v7412, %v119
  %v7494 = vmul.f32 %v7413, %v120
  %v7495 = vmul.f32 %v7414, %v121
  %v7496 = vmul.f32 %v7415, %v122
  %v7497 = vmul.f32 %v7416, %v123
  %v7498 = vmul.f32 %v7417, %v124
  %v7499 = vmul.f32 %v7418, %v125
  %v7500 = vmul.f32 %v7419, %v126
  %v7501 = vmul.f32 %v7420, %v127
  %v7502 = vmul.f32 %v7421, %v128
  %v7503 = vmul.f32 %v7422, %v129
  %v7504 = vmul.f32 %v7423, %v130
  %v7505 = vmul.f32 %v7424, %v131
  %v7506 = vmul.f32 %v7425, %v132
  %v7507 = vmul.f32 %v7426, %v133
  %v7508 = vmul.f32 %v7427, %v134
  %v7509 = vmul.f32 %v7428, %v135
  %v7510 = vmul.f32 %v7429, %v136
  %v7511 = vmul.f32 %v7430, %v137
  %v7512 = vmul.f32 %v7431, %v138
  %v7513 = vmul.f32 %v7432, %v139
  %v7514 = vmul.f32 %v7433, %v140
  %v7515 = vmul.f32 %v7434, %v141
  %v7516 = vmul.f32 %v7435, %v142
  %v7517 = vmul.f32 %v7436, %v143
  %v7518 = vmul.f32 %v7437, %v144
  %v7519 = vmul.f32 %v7438, %v145
  %v7520 = vmul.f32 %v7439, %v146
  %v7521 = vmul.f32 %v7440, %v147
  %v7522 = vmul.f32 %v7441, %v148
  %v7523 = vmul.f32 %v7442, %v149
  %v7524 = vmul.f32 %v7443, %v150
  %v7525 = vmul.f32 %v7444, %v151
  %v7526 = vmul.f32 %v7445, %v152
  %v7527 = vmul.f32 %v7446, %v153
  %v7528 = vmul.f32 %v7447, %v154
  %v7529 = vmul.f32 %v7448, %v155
  %v7530 = vmul.f32 %v7449, %v156
  %v7531 = vmul.f32 %v7450, %v157
  %v7532 = vmul.f32 %v7451, %v158
  %v7533 = vmul.f32 %v7452, %v159
  %v7534 = vmul.f32 %v7453, %v160
  %v7535 = vmul.f32 %v7454, %v161
  %v7536 = vmul.f32 %v7455, %v162
  %v7537 = vmul.f32 %v7456, %v163
  %v7538 = vmul.f32 %v7457, %v164
  %v7539 = vmul.f32 %v7458, %v165
  %v7540 = vmul.f32 %v7459, %v166
  %v7541 = vmul.f32 %v7460, %v167
  %v7542 = vmul.f32 %v7461, %v168
  %v7543 = vmul.f32 %v7462, %v169
  %v7544 = vmul.f32 %v7463, %v170
  %v7545 = vmul.f32 %v7464, %v171
  %v7546 = vmul.f32 %v7465, %v172
  %v7547 = vmul.f32 %v7466, %v173
  %v7548 = vmul.f32 %v7467, %v174
  %v7549 = vmul.f32 %v7468, %v175
  %v7550 = vmul.f32 %v7469, %v176
  %v7551 = vmul.f32 %v7470, %v177
  %v7552 = vmul.f32 %v7471, %v178
  %v7553 = vmul.f32 %v7472, %v7472
  %v7554 = vmul.f32 %v7473, %v7473
  %v7555 = vmul.f32 %v7474, %v7474
  %v7556 = vmul.f32 %v7475, %v7475
  %v7557 = vmul.f32 %v7476, %v7476
  %v7558 = vmul.f32 %v7477, %v7477
  %v7559 = vmul.f32 %v7478, %v7478
  %v7560 = vmul.f32 %v7479, %v7479
  %v7561 = vmul.f32 %v7480, %v7480
  %v7562 = vmul.f32 %v7481, %v7481
  %v7563 = vmul.f32 %v7482, %v7482
  %v7564 = vmul.f32 %v7483, %v7483
  %v7565 = vmul.f32 %v7484, %v7484
  %v7566 = vmul.f32 %v7485, %v7485
  %v7567 = vmul.f32 %v7486, %v7486
  %v7568 = vmul.f32 %v7487, %v7487
  %v7569 = vmul.f32 %v7488, %v7488
  %v7570 = vmul.f32 %v7489, %v7489
  %v7571 = vmul.f32 %v7490, %v7490
  %v7572 = vmul.f32 %v7491, %v7491
  %v7573 = vmul.f32 %v7492, %v7492
  %v7574 = vmul.f32 %v7493, %v7493
  %v7575 = vmul.f32 %v7494, %v7494
  %v7576 = vmul.f32 %v7495, %v7495
  %v7577 = vmul.f32 %v7496, %v7496
  %v7578 = vmul.f32 %v7497, %v7497
  %v7579 = vmul.f32 %v7498, %v7498
  %v7580 = vmul.f32 %v7499, %v7499
  %v7581 = vmul.f32 %v7500, %v7500
  %v7582 = vmul.f32 %v7501, %v7501
  %v7583 = vmul.f32 %v7502, %v7502
  %v7584 = vmul.f32 %v7503, %v7503
  %v7585 = vmul.f32 %v7504, %v7504
  %v7586 = vmul.f32 %v7505, %v7505
  %v7587 = vmul.f32 %v7506, %v7506
  %v7588 = vmul.f32 %v7507, %v7507
  %v7589 = vmul.f32 %v7508, %v7508
  %v7590 = vmul.f32 %v7509, %v7509
  %v7591 = vmul.f32 %v7510, %v7510
  %v7592 = vmul.f32 %v7511, %v7511
  %v7593 = vmul.f32 %v7512, %v7512
  %v7594 = vmul.f32 %v7513, %v7513
  %v7595 = vmul.f32 %v7514, %v7514
  %v7596 = vmul.f32 %v7515, %v7515
  %v7597 = vmul.f32 %v7516, %v7516
  %v7598 = vmul.f32 %v7517, %v7517
  %v7599 = vmul.f32 %v7518, %v7518
  %v7600 = vmul.f32 %v7519, %v7519
  %v7601 = vmul.f32 %v7520, %v7520
  %v7602 = vmul.f32 %v7521, %v7521
  %v7603 = vmul.f32 %v7522, %v7522
  %v7604 = vmul.f32 %v7523, %v7523
  %v7605 = vmul.f32 %v7524, %v7524
  %v7606 = vmul.f32 %v7525, %v7525
  %v7607 = vmul.f32 %v7526, %v7526
  %v7608 = vmul.f32 %v7527, %v7527
  %v7609 = vmul.f32 %v7528, %v7528
  %v7610 = vmul.f32 %v7529, %v7529
  %v7611 = vmul.f32 %v7530, %v7530
  %v7612 = vmul.f32 %v7531, %v7531
  %v7613 = vmul.f32 %v7532, %v7532
  %v7614 = vmul.f32 %v7533, %v7533
  %v7615 = vmul.f32 %v7534, %v7534
  %v7616 = vmul.f32 %v7535, %v7535
  %v7617 = vmul.f32 %v7536, %v7536
  %v7618 = vmul.f32 %v7537, %v7537
  %v7619 = vmul.f32 %v7538, %v7538
  %v7620 = vmul.f32 %v7539, %v7539
  %v7621 = vmul.f32 %v7540, %v7540
  %v7622 = vmul.f32 %v7541, %v7541
  %v7623 = vmul.f32 %v7542, %v7542
  %v7624 = vmul.f32 %v7543, %v7543
  %v7625 = vmul.f32 %v7544, %v7544
  %v7626 = vmul.f32 %v7545, %v7545
  %v7627 = vmul.f32 %v7546, %v7546
  %v7628 = vmul.f32 %v7547, %v7547
  %v7629 = vmul.f32 %v7548, %v7548
  %v7630 = vmul.f32 %v7549, %v7549
  %v7631 = vmul.f32 %v7550, %v7550
  %v7632 = vmul.f32 %v7551, %v7551
  %v7633 = vmul.f32 %v7552, %v7552
  %v7634 = vsel %vm179, %v7553, 0.0
  %v7635 = vsel %vm179, %v7554, 0.0
  %v7636 = vadd.f32 %v7634, %v7635
  %v7637 = vsel %vm179, %v7555, 0.0
  %v7638 = vadd.f32 %v7636, %v7637
  %v7639 = vsel %vm179, %v7556, 0.0
  %v7640 = vadd.f32 %v7638, %v7639
  %v7641 = vsel %vm179, %v7557, 0.0
  %v7642 = vadd.f32 %v7640, %v7641
  %v7643 = vsel %vm179, %v7558, 0.0
  %v7644 = vadd.f32 %v7642, %v7643
  %v7645 = vsel %vm179, %v7559, 0.0
  %v7646 = vadd.f32 %v7644, %v7645
  %v7647 = vsel %vm179, %v7560, 0.0
  %v7648 = vadd.f32 %v7646, %v7647
  %v7649 = vsel %vm179, %v7561, 0.0
  %v7650 = vadd.f32 %v7648, %v7649
  %v7651 = vsel %vm179, %v7562, 0.0
  %v7652 = vadd.f32 %v7650, %v7651
  %v7653 = vsel %vm179, %v7563, 0.0
  %v7654 = vadd.f32 %v7652, %v7653
  %v7655 = vsel %vm179, %v7564, 0.0
  %v7656 = vadd.f32 %v7654, %v7655
  %v7657 = vsel %vm179, %v7565, 0.0
  %v7658 = vadd.f32 %v7656, %v7657
  %v7659 = vsel %vm179, %v7566, 0.0
  %v7660 = vadd.f32 %v7658, %v7659
  %v7661 = vsel %vm179, %v7567, 0.0
  %v7662 = vadd.f32 %v7660, %v7661
  %v7663 = vsel %vm179, %v7568, 0.0
  %v7664 = vadd.f32 %v7662, %v7663
  %v7665 = vsel %vm179, %v7569, 0.0
  %v7666 = vadd.f32 %v7664, %v7665
  %v7667 = vsel %vm179, %v7570, 0.0
  %v7668 = vadd.f32 %v7666, %v7667
  %v7669 = vsel %vm179, %v7571, 0.0
  %v7670 = vadd.f32 %v7668, %v7669
  %v7671 = vsel %vm179, %v7572, 0.0
  %v7672 = vadd.f32 %v7670, %v7671
  %v7673 = vsel %vm179, %v7573, 0.0
  %v7674 = vadd.f32 %v7672, %v7673
  %v7675 = vsel %vm179, %v7574, 0.0
  %v7676 = vadd.f32 %v7674, %v7675
  %v7677 = vsel %vm179, %v7575, 0.0
  %v7678 = vadd.f32 %v7676, %v7677
  %v7679 = vsel %vm179, %v7576, 0.0
  %v7680 = vadd.f32 %v7678, %v7679
  %v7681 = vsel %vm179, %v7577, 0.0
  %v7682 = vadd.f32 %v7680, %v7681
  %v7683 = vsel %vm179, %v7578, 0.0
  %v7684 = vadd.f32 %v7682, %v7683
  %v7685 = vsel %vm179, %v7579, 0.0
  %v7686 = vadd.f32 %v7684, %v7685
  %v7687 = vsel %vm179, %v7580, 0.0
  %v7688 = vadd.f32 %v7686, %v7687
  %v7689 = vsel %vm179, %v7581, 0.0
  %v7690 = vadd.f32 %v7688, %v7689
  %v7691 = vsel %vm179, %v7582, 0.0
  %v7692 = vadd.f32 %v7690, %v7691
  %v7693 = vsel %vm179, %v7583, 0.0
  %v7694 = vadd.f32 %v7692, %v7693
  %v7695 = vsel %vm179, %v7584, 0.0
  %v7696 = vadd.f32 %v7694, %v7695
  %v7697 = vsel %vm179, %v7585, 0.0
  %v7698 = vadd.f32 %v7696, %v7697
  %v7699 = vsel %vm179, %v7586, 0.0
  %v7700 = vadd.f32 %v7698, %v7699
  %v7701 = vsel %vm179, %v7587, 0.0
  %v7702 = vadd.f32 %v7700, %v7701
  %v7703 = vsel %vm179, %v7588, 0.0
  %v7704 = vadd.f32 %v7702, %v7703
  %v7705 = vsel %vm179, %v7589, 0.0
  %v7706 = vadd.f32 %v7704, %v7705
  %v7707 = vsel %vm179, %v7590, 0.0
  %v7708 = vadd.f32 %v7706, %v7707
  %v7709 = vsel %vm179, %v7591, 0.0
  %v7710 = vadd.f32 %v7708, %v7709
  %v7711 = vsel %vm179, %v7592, 0.0
  %v7712 = vadd.f32 %v7710, %v7711
  %v7713 = vsel %vm179, %v7593, 0.0
  %v7714 = vadd.f32 %v7712, %v7713
  %v7715 = vsel %vm179, %v7594, 0.0
  %v7716 = vadd.f32 %v7714, %v7715
  %v7717 = vsel %vm179, %v7595, 0.0
  %v7718 = vadd.f32 %v7716, %v7717
  %v7719 = vsel %vm179, %v7596, 0.0
  %v7720 = vadd.f32 %v7718, %v7719
  %v7721 = vsel %vm179, %v7597, 0.0
  %v7722 = vadd.f32 %v7720, %v7721
  %v7723 = vsel %vm179, %v7598, 0.0
  %v7724 = vadd.f32 %v7722, %v7723
  %v7725 = vsel %vm179, %v7599, 0.0
  %v7726 = vadd.f32 %v7724, %v7725
  %v7727 = vsel %vm179, %v7600, 0.0
  %v7728 = vadd.f32 %v7726, %v7727
  %v7729 = vsel %vm179, %v7601, 0.0
  %v7730 = vadd.f32 %v7728, %v7729
  %v7731 = vsel %vm179, %v7602, 0.0
  %v7732 = vadd.f32 %v7730, %v7731
  %v7733 = vsel %vm179, %v7603, 0.0
  %v7734 = vadd.f32 %v7732, %v7733
  %v7735 = vsel %vm179, %v7604, 0.0
  %v7736 = vadd.f32 %v7734, %v7735
  %v7737 = vsel %vm179, %v7605, 0.0
  %v7738 = vadd.f32 %v7736, %v7737
  %v7739 = vsel %vm179, %v7606, 0.0
  %v7740 = vadd.f32 %v7738, %v7739
  %v7741 = vsel %vm179, %v7607, 0.0
  %v7742 = vadd.f32 %v7740, %v7741
  %v7743 = vsel %vm179, %v7608, 0.0
  %v7744 = vadd.f32 %v7742, %v7743
  %v7745 = vsel %vm179, %v7609, 0.0
  %v7746 = vadd.f32 %v7744, %v7745
  %v7747 = vsel %vm179, %v7610, 0.0
  %v7748 = vadd.f32 %v7746, %v7747
  %v7749 = vsel %vm179, %v7611, 0.0
  %v7750 = vadd.f32 %v7748, %v7749
  %v7751 = vsel %vm179, %v7612, 0.0
  %v7752 = vadd.f32 %v7750, %v7751
  %v7753 = vsel %vm179, %v7613, 0.0
  %v7754 = vadd.f32 %v7752, %v7753
  %v7755 = vsel %vm179, %v7614, 0.0
  %v7756 = vadd.f32 %v7754, %v7755
  %v7757 = vsel %vm179, %v7615, 0.0
  %v7758 = vadd.f32 %v7756, %v7757
  %v7759 = vsel %vm179, %v7616, 0.0
  %v7760 = vadd.f32 %v7758, %v7759
  %v7761 = vsel %vm179, %v7617, 0.0
  %v7762 = vadd.f32 %v7760, %v7761
  %v7763 = vsel %vm179, %v7618, 0.0
  %v7764 = vadd.f32 %v7762, %v7763
  %v7765 = vsel %vm179, %v7619, 0.0
  %v7766 = vadd.f32 %v7764, %v7765
  %v7767 = vsel %vm179, %v7620, 0.0
  %v7768 = vadd.f32 %v7766, %v7767
  %v7769 = vsel %vm179, %v7621, 0.0
  %v7770 = vadd.f32 %v7768, %v7769
  %v7771 = vsel %vm179, %v7622, 0.0
  %v7772 = vadd.f32 %v7770, %v7771
  %v7773 = vsel %vm179, %v7623, 0.0
  %v7774 = vadd.f32 %v7772, %v7773
  %v7775 = vsel %vm179, %v7624, 0.0
  %v7776 = vadd.f32 %v7774, %v7775
  %v7777 = vsel %vm179, %v7625, 0.0
  %v7778 = vadd.f32 %v7776, %v7777
  %v7779 = vsel %vm179, %v7626, 0.0
  %v7780 = vadd.f32 %v7778, %v7779
  %v7781 = vsel %vm179, %v7627, 0.0
  %v7782 = vadd.f32 %v7780, %v7781
  %v7783 = vsel %vm179, %v7628, 0.0
  %v7784 = vadd.f32 %v7782, %v7783
  %v7785 = vsel %vm179, %v7629, 0.0
  %v7786 = vadd.f32 %v7784, %v7785
  %v7787 = vsel %vm179, %v7630, 0.0
  %v7788 = vadd.f32 %v7786, %v7787
  %v7789 = vsel %vm179, %v7631, 0.0
  %v7790 = vadd.f32 %v7788, %v7789
  %v7791 = vsel %vm179, %v7632, 0.0
  %v7792 = vadd.f32 %v7790, %v7791
  %v7793 = vsel %vm179, %v7633, 0.0
  %v7794 = vadd.f32 %v7792, %v7793
  %v7795 = vrot.slane %v7794, 4
  %v7796 = vadd.f32 %v7794, %v7795
  %v7797 = vrot.slane %v7796, 2
  %v7798 = vadd.f32 %v7796, %v7797
  %v7799 = vrot.slane %v7798, 1
  %v7800 = vadd.f32 %v7798, %v7799
  %v7801 = vmul.f32 %v7800, 0.001953125
  %v7802 = vadd.f32 %v7801, 1e-05
  %v7803 = vrsqrt.pop %v7802
  %v7804 = vmul.f32 %v7803, %v7802
  %v7805 = vmul.f32 %v7804, %v7803
  %v7806 = vmul.f32 0.5, %v7805
  %v7807 = vsub.f32 1.5, %v7806
  %v7808 = vmul.f32 %v7803, %v7807
  %vm7809 = vweird.f32 %v7802
  %vm7810 = vweird.f32 %v7803
  %vm7811 = vmor %vm7809, %vm7810
  %v7812 = vsel %vm7811, %v7803, %v7808
  %v7813 = vmul.f32 %v189, %v7812
  %v7814 = vmul.f32 %v7390, %v7813
  %v7815 = vsub.f32 %v190, %v7814
  %v7816 = vperm.slane %v7813, 0
  %v7817 = vmul.f32 %v7142, %v7816
  %v7818 = vmul.f32 %v7143, %v7816
  %v7819 = vmul.f32 %v7144, %v7816
  %v7820 = vmul.f32 %v7145, %v7816
  %v7821 = vmul.f32 %v7146, %v7816
  %v7822 = vmul.f32 %v7147, %v7816
  %v7823 = vmul.f32 %v7148, %v7816
  %v7824 = vmul.f32 %v7149, %v7816
  %v7825 = vmul.f32 %v7150, %v7816
  %v7826 = vmul.f32 %v7151, %v7816
  %v7827 = vmul.f32 %v7152, %v7816
  %v7828 = vmul.f32 %v7153, %v7816
  %v7829 = vmul.f32 %v7154, %v7816
  %v7830 = vmul.f32 %v7155, %v7816
  %v7831 = vmul.f32 %v7156, %v7816
  %v7832 = vmul.f32 %v7157, %v7816
  %v7833 = vmul.f32 %v7158, %v7816
  %v7834 = vmul.f32 %v7159, %v7816
  %v7835 = vmul.f32 %v7160, %v7816
  %v7836 = vmul.f32 %v7161, %v7816
  %v7837 = vmul.f32 %v7162, %v7816
  %v7838 = vmul.f32 %v7163, %v7816
  %v7839 = vmul.f32 %v7164, %v7816
  %v7840 = vmul.f32 %v7165, %v7816
  %v7841 = vmul.f32 %v7166, %v7816
  %v7842 = vmul.f32 %v7167, %v7816
  %v7843 = vmul.f32 %v7168, %v7816
  %v7844 = vmul.f32 %v7169, %v7816
  %v7845 = vmul.f32 %v7170, %v7816
  %v7846 = vmul.f32 %v7171, %v7816
  %v7847 = vmul.f32 %v7172, %v7816
  %v7848 = vmul.f32 %v7173, %v7816
  %v7849 = vmul.f32 %v7174, %v7816
  %v7850 = vmul.f32 %v7175, %v7816
  %v7851 = vmul.f32 %v7176, %v7816
  %v7852 = vmul.f32 %v7177, %v7816
  %v7853 = vmul.f32 %v7178, %v7816
  %v7854 = vmul.f32 %v7179, %v7816
  %v7855 = vmul.f32 %v7180, %v7816
  %v7856 = vmul.f32 %v7181, %v7816
  %v7857 = vmul.f32 %v7182, %v7816
  %v7858 = vmul.f32 %v7183, %v7816
  %v7859 = vmul.f32 %v7184, %v7816
  %v7860 = vmul.f32 %v7185, %v7816
  %v7861 = vmul.f32 %v7186, %v7816
  %v7862 = vmul.f32 %v7187, %v7816
  %v7863 = vmul.f32 %v7188, %v7816
  %v7864 = vmul.f32 %v7189, %v7816
  %v7865 = vmul.f32 %v7190, %v7816
  %v7866 = vmul.f32 %v7191, %v7816
  %v7867 = vmul.f32 %v7192, %v7816
  %v7868 = vmul.f32 %v7193, %v7816
  %v7869 = vmul.f32 %v7194, %v7816
  %v7870 = vmul.f32 %v7195, %v7816
  %v7871 = vmul.f32 %v7196, %v7816
  %v7872 = vmul.f32 %v7197, %v7816
  %v7873 = vmul.f32 %v7198, %v7816
  %v7874 = vmul.f32 %v7199, %v7816
  %v7875 = vmul.f32 %v7200, %v7816
  %v7876 = vmul.f32 %v7201, %v7816
  %v7877 = vmul.f32 %v7202, %v7816
  %v7878 = vmul.f32 %v7203, %v7816
  %v7879 = vmul.f32 %v7204, %v7816
  %v7880 = vmul.f32 %v7205, %v7816
  %v7881 = vmul.f32 %v7206, %v7816
  %v7882 = vmul.f32 %v7207, %v7816
  %v7883 = vmul.f32 %v7208, %v7816
  %v7884 = vmul.f32 %v7209, %v7816
  %v7885 = vmul.f32 %v7210, %v7816
  %v7886 = vmul.f32 %v7211, %v7816
  %v7887 = vmul.f32 %v7212, %v7816
  %v7888 = vmul.f32 %v7213, %v7816
  %v7889 = vmul.f32 %v7214, %v7816
  %v7890 = vmul.f32 %v7215, %v7816
  %v7891 = vmul.f32 %v7216, %v7816
  %v7892 = vmul.f32 %v7217, %v7816
  %v7893 = vmul.f32 %v7218, %v7816
  %v7894 = vmul.f32 %v7219, %v7816
  %v7895 = vmul.f32 %v7220, %v7816
  %v7896 = vmul.f32 %v7221, %v7816
  %v7897 = vmul.f32 %v7222, %v7816
  %v7898 = vperm.slane %v7815, 0
  %v7899 = vadd.f32 %v7817, %v7898
  %v7900 = vadd.f32 %v7818, %v7898
  %v7901 = vadd.f32 %v7819, %v7898
  %v7902 = vadd.f32 %v7820, %v7898
  %v7903 = vadd.f32 %v7821, %v7898
  %v7904 = vadd.f32 %v7822, %v7898
  %v7905 = vadd.f32 %v7823, %v7898
  %v7906 = vadd.f32 %v7824, %v7898
  %v7907 = vadd.f32 %v7825, %v7898
  %v7908 = vadd.f32 %v7826, %v7898
  %v7909 = vadd.f32 %v7827, %v7898
  %v7910 = vadd.f32 %v7828, %v7898
  %v7911 = vadd.f32 %v7829, %v7898
  %v7912 = vadd.f32 %v7830, %v7898
  %v7913 = vadd.f32 %v7831, %v7898
  %v7914 = vadd.f32 %v7832, %v7898
  %v7915 = vadd.f32 %v7833, %v7898
  %v7916 = vadd.f32 %v7834, %v7898
  %v7917 = vadd.f32 %v7835, %v7898
  %v7918 = vadd.f32 %v7836, %v7898
  %v7919 = vadd.f32 %v7837, %v7898
  %v7920 = vadd.f32 %v7838, %v7898
  %v7921 = vadd.f32 %v7839, %v7898
  %v7922 = vadd.f32 %v7840, %v7898
  %v7923 = vadd.f32 %v7841, %v7898
  %v7924 = vadd.f32 %v7842, %v7898
  %v7925 = vadd.f32 %v7843, %v7898
  %v7926 = vadd.f32 %v7844, %v7898
  %v7927 = vadd.f32 %v7845, %v7898
  %v7928 = vadd.f32 %v7846, %v7898
  %v7929 = vadd.f32 %v7847, %v7898
  %v7930 = vadd.f32 %v7848, %v7898
  %v7931 = vadd.f32 %v7849, %v7898
  %v7932 = vadd.f32 %v7850, %v7898
  %v7933 = vadd.f32 %v7851, %v7898
  %v7934 = vadd.f32 %v7852, %v7898
  %v7935 = vadd.f32 %v7853, %v7898
  %v7936 = vadd.f32 %v7854, %v7898
  %v7937 = vadd.f32 %v7855, %v7898
  %v7938 = vadd.f32 %v7856, %v7898
  %v7939 = vadd.f32 %v7857, %v7898
  %v7940 = vadd.f32 %v7858, %v7898
  %v7941 = vadd.f32 %v7859, %v7898
  %v7942 = vadd.f32 %v7860, %v7898
  %v7943 = vadd.f32 %v7861, %v7898
  %v7944 = vadd.f32 %v7862, %v7898
  %v7945 = vadd.f32 %v7863, %v7898
  %v7946 = vadd.f32 %v7864, %v7898
  %v7947 = vadd.f32 %v7865, %v7898
  %v7948 = vadd.f32 %v7866, %v7898
  %v7949 = vadd.f32 %v7867, %v7898
  %v7950 = vadd.f32 %v7868, %v7898
  %v7951 = vadd.f32 %v7869, %v7898
  %v7952 = vadd.f32 %v7870, %v7898
  %v7953 = vadd.f32 %v7871, %v7898
  %v7954 = vadd.f32 %v7872, %v7898
  %v7955 = vadd.f32 %v7873, %v7898
  %v7956 = vadd.f32 %v7874, %v7898
  %v7957 = vadd.f32 %v7875, %v7898
  %v7958 = vadd.f32 %v7876, %v7898
  %v7959 = vadd.f32 %v7877, %v7898
  %v7960 = vadd.f32 %v7878, %v7898
  %v7961 = vadd.f32 %v7879, %v7898
  %v7962 = vadd.f32 %v7880, %v7898
  %v7963 = vadd.f32 %v7881, %v7898
  %v7964 = vadd.f32 %v7882, %v7898
  %v7965 = vadd.f32 %v7883, %v7898
  %v7966 = vadd.f32 %v7884, %v7898
  %v7967 = vadd.f32 %v7885, %v7898
  %v7968 = vadd.f32 %v7886, %v7898
  %v7969 = vadd.f32 %v7887, %v7898
  %v7970 = vadd.f32 %v7888, %v7898
  %v7971 = vadd.f32 %v7889, %v7898
  %v7972 = vadd.f32 %v7890, %v7898
  %v7973 = vadd.f32 %v7891, %v7898
  %v7974 = vadd.f32 %v7892, %v7898
  %v7975 = vadd.f32 %v7893, %v7898
  %v7976 = vadd.f32 %v7894, %v7898
  %v7977 = vadd.f32 %v7895, %v7898
  %v7978 = vadd.f32 %v7896, %v7898
  %v7979 = vadd.f32 %v7897, %v7898
  %v7980 = vmax.f32 %v7899, 0.0
  %v7981 = vmax.f32 %v7900, 0.0
  %v7982 = vmax.f32 %v7901, 0.0
  %v7983 = vmax.f32 %v7902, 0.0
  %v7984 = vmax.f32 %v7903, 0.0
  %v7985 = vmax.f32 %v7904, 0.0
  %v7986 = vmax.f32 %v7905, 0.0
  %v7987 = vmax.f32 %v7906, 0.0
  %v7988 = vmax.f32 %v7907, 0.0
  %v7989 = vmax.f32 %v7908, 0.0
  %v7990 = vmax.f32 %v7909, 0.0
  %v7991 = vmax.f32 %v7910, 0.0
  %v7992 = vmax.f32 %v7911, 0.0
  %v7993 = vmax.f32 %v7912, 0.0
  %v7994 = vmax.f32 %v7913, 0.0
  %v7995 = vmax.f32 %v7914, 0.0
  %v7996 = vmax.f32 %v7915, 0.0
  %v7997 = vmax.f32 %v7916, 0.0
  %v7998 = vmax.f32 %v7917, 0.0
  %v7999 = vmax.f32 %v7918, 0.0
  %v8000 = vmax.f32 %v7919, 0.0
  %v8001 = vmax.f32 %v7920, 0.0
  %v8002 = vmax.f32 %v7921, 0.0
  %v8003 = vmax.f32 %v7922, 0.0
  %v8004 = vmax.f32 %v7923, 0.0
  %v8005 = vmax.f32 %v7924, 0.0
  %v8006 = vmax.f32 %v7925, 0.0
  %v8007 = vmax.f32 %v7926, 0.0
  %v8008 = vmax.f32 %v7927, 0.0
  %v8009 = vmax.f32 %v7928, 0.0
  %v8010 = vmax.f32 %v7929, 0.0
  %v8011 = vmax.f32 %v7930, 0.0
  %v8012 = vmax.f32 %v7931, 0.0
  %v8013 = vmax.f32 %v7932, 0.0
  %v8014 = vmax.f32 %v7933, 0.0
  %v8015 = vmax.f32 %v7934, 0.0
  %v8016 = vmax.f32 %v7935, 0.0
  %v8017 = vmax.f32 %v7936, 0.0
  %v8018 = vmax.f32 %v7937, 0.0
  %v8019 = vmax.f32 %v7938, 0.0
  %v8020 = vmax.f32 %v7939, 0.0
  %v8021 = vmax.f32 %v7940, 0.0
  %v8022 = vmax.f32 %v7941, 0.0
  %v8023 = vmax.f32 %v7942, 0.0
  %v8024 = vmax.f32 %v7943, 0.0
  %v8025 = vmax.f32 %v7944, 0.0
  %v8026 = vmax.f32 %v7945, 0.0
  %v8027 = vmax.f32 %v7946, 0.0
  %v8028 = vmax.f32 %v7947, 0.0
  %v8029 = vmax.f32 %v7948, 0.0
  %v8030 = vmax.f32 %v7949, 0.0
  %v8031 = vmax.f32 %v7950, 0.0
  %v8032 = vmax.f32 %v7951, 0.0
  %v8033 = vmax.f32 %v7952, 0.0
  %v8034 = vmax.f32 %v7953, 0.0
  %v8035 = vmax.f32 %v7954, 0.0
  %v8036 = vmax.f32 %v7955, 0.0
  %v8037 = vmax.f32 %v7956, 0.0
  %v8038 = vmax.f32 %v7957, 0.0
  %v8039 = vmax.f32 %v7958, 0.0
  %v8040 = vmax.f32 %v7959, 0.0
  %v8041 = vmax.f32 %v7960, 0.0
  %v8042 = vmax.f32 %v7961, 0.0
  %v8043 = vmax.f32 %v7962, 0.0
  %v8044 = vmax.f32 %v7963, 0.0
  %v8045 = vmax.f32 %v7964, 0.0
  %v8046 = vmax.f32 %v7965, 0.0
  %v8047 = vmax.f32 %v7966, 0.0
  %v8048 = vmax.f32 %v7967, 0.0
  %v8049 = vmax.f32 %v7968, 0.0
  %v8050 = vmax.f32 %v7969, 0.0
  %v8051 = vmax.f32 %v7970, 0.0
  %v8052 = vmax.f32 %v7971, 0.0
  %v8053 = vmax.f32 %v7972, 0.0
  %v8054 = vmax.f32 %v7973, 0.0
  %v8055 = vmax.f32 %v7974, 0.0
  %v8056 = vmax.f32 %v7975, 0.0
  %v8057 = vmax.f32 %v7976, 0.0
  %v8058 = vmax.f32 %v7977, 0.0
  %v8059 = vmax.f32 %v7978, 0.0
  %v8060 = vmax.f32 %v7979, 0.0
  %v8061 = vmul.f32 %v7980, %v98
  %v8062 = vmul.f32 %v7981, %v99
  %v8063 = vmul.f32 %v7982, %v100
  %v8064 = vmul.f32 %v7983, %v101
  %v8065 = vmul.f32 %v7984, %v102
  %v8066 = vmul.f32 %v7985, %v103
  %v8067 = vmul.f32 %v7986, %v104
  %v8068 = vmul.f32 %v7987, %v105
  %v8069 = vmul.f32 %v7988, %v106
  %v8070 = vmul.f32 %v7989, %v107
  %v8071 = vmul.f32 %v7990, %v108
  %v8072 = vmul.f32 %v7991, %v109
  %v8073 = vmul.f32 %v7992, %v110
  %v8074 = vmul.f32 %v7993, %v111
  %v8075 = vmul.f32 %v7994, %v112
  %v8076 = vmul.f32 %v7995, %v113
  %v8077 = vmul.f32 %v7996, %v114
  %v8078 = vmul.f32 %v7997, %v115
  %v8079 = vmul.f32 %v7998, %v116
  %v8080 = vmul.f32 %v7999, %v117
  %v8081 = vmul.f32 %v8000, %v118
  %v8082 = vmul.f32 %v8001, %v119
  %v8083 = vmul.f32 %v8002, %v120
  %v8084 = vmul.f32 %v8003, %v121
  %v8085 = vmul.f32 %v8004, %v122
  %v8086 = vmul.f32 %v8005, %v123
  %v8087 = vmul.f32 %v8006, %v124
  %v8088 = vmul.f32 %v8007, %v125
  %v8089 = vmul.f32 %v8008, %v126
  %v8090 = vmul.f32 %v8009, %v127
  %v8091 = vmul.f32 %v8010, %v128
  %v8092 = vmul.f32 %v8011, %v129
  %v8093 = vmul.f32 %v8012, %v130
  %v8094 = vmul.f32 %v8013, %v131
  %v8095 = vmul.f32 %v8014, %v132
  %v8096 = vmul.f32 %v8015, %v133
  %v8097 = vmul.f32 %v8016, %v134
  %v8098 = vmul.f32 %v8017, %v135
  %v8099 = vmul.f32 %v8018, %v136
  %v8100 = vmul.f32 %v8019, %v137
  %v8101 = vmul.f32 %v8020, %v138
  %v8102 = vmul.f32 %v8021, %v139
  %v8103 = vmul.f32 %v8022, %v140
  %v8104 = vmul.f32 %v8023, %v141
  %v8105 = vmul.f32 %v8024, %v142
  %v8106 = vmul.f32 %v8025, %v143
  %v8107 = vmul.f32 %v8026, %v144
  %v8108 = vmul.f32 %v8027, %v145
  %v8109 = vmul.f32 %v8028, %v146
  %v8110 = vmul.f32 %v8029, %v147
  %v8111 = vmul.f32 %v8030, %v148
  %v8112 = vmul.f32 %v8031, %v149
  %v8113 = vmul.f32 %v8032, %v150
  %v8114 = vmul.f32 %v8033, %v151
  %v8115 = vmul.f32 %v8034, %v152
  %v8116 = vmul.f32 %v8035, %v153
  %v8117 = vmul.f32 %v8036, %v154
  %v8118 = vmul.f32 %v8037, %v155
  %v8119 = vmul.f32 %v8038, %v156
  %v8120 = vmul.f32 %v8039, %v157
  %v8121 = vmul.f32 %v8040, %v158
  %v8122 = vmul.f32 %v8041, %v159
  %v8123 = vmul.f32 %v8042, %v160
  %v8124 = vmul.f32 %v8043, %v161
  %v8125 = vmul.f32 %v8044, %v162
  %v8126 = vmul.f32 %v8045, %v163
  %v8127 = vmul.f32 %v8046, %v164
  %v8128 = vmul.f32 %v8047, %v165
  %v8129 = vmul.f32 %v8048, %v166
  %v8130 = vmul.f32 %v8049, %v167
  %v8131 = vmul.f32 %v8050, %v168
  %v8132 = vmul.f32 %v8051, %v169
  %v8133 = vmul.f32 %v8052, %v170
  %v8134 = vmul.f32 %v8053, %v171
  %v8135 = vmul.f32 %v8054, %v172
  %v8136 = vmul.f32 %v8055, %v173
  %v8137 = vmul.f32 %v8056, %v174
  %v8138 = vmul.f32 %v8057, %v175
  %v8139 = vmul.f32 %v8058, %v176
  %v8140 = vmul.f32 %v8059, %v177
  %v8141 = vmul.f32 %v8060, %v178
  %8142 = vst.msk [vmem:[#allocation2 + $0x18] sm:$0xff] %vm179, %v8061
  %8143 = vst.msk [vmem:[#allocation2 + $0x20] sm:$0xff] %vm179, %v8062
  %8144 = vst.msk [vmem:[#allocation2 + $0x28] sm:$0xff] %vm179, %v8063
  %8145 = vst.msk [vmem:[#allocation2 + $0x30] sm:$0xff] %vm179, %v8064
  %8146 = vst.msk [vmem:[#allocation2 + $0x38] sm:$0xff] %vm179, %v8065
  %8147 = vst.msk [vmem:[#allocation2 + $0x40] sm:$0xff] %vm179, %v8066
  %8148 = vst.msk [vmem:[#allocation2 + $0x48] sm:$0xff] %vm179, %v8067
  %8149 = vst.msk [vmem:[#allocation2 + $0x50] sm:$0xff] %vm179, %v8068
  %8150 = vst.msk [vmem:[#allocation2 + $0x58] sm:$0xff] %vm179, %v8069
  %8151 = vst.msk [vmem:[#allocation2 + $0x60] sm:$0xff] %vm179, %v8070
  %8152 = vst.msk [vmem:[#allocation2 + $0x68] sm:$0xff] %vm179, %v8071
  %8153 = vst.msk [vmem:[#allocation2 + $0x70] sm:$0xff] %vm179, %v8072
  %8154 = vst.msk [vmem:[#allocation2 + $0x78] sm:$0xff] %vm179, %v8073
  %8155 = vst.msk [vmem:[#allocation2 + $0x80] sm:$0xff] %vm179, %v8074
  %8156 = vst.msk [vmem:[#allocation2 + $0x88] sm:$0xff] %vm179, %v8075
  %8157 = vst.msk [vmem:[#allocation2 + $0x90] sm:$0xff] %vm179, %v8076
  %8158 = vst.msk [vmem:[#allocation2 + $0x98] sm:$0xff] %vm179, %v8077
  %8159 = vst.msk [vmem:[#allocation2 + $0xa0] sm:$0xff] %vm179, %v8078
  %8160 = vst.msk [vmem:[#allocation2 + $0xa8] sm:$0xff] %vm179, %v8079
  %8161 = vst.msk [vmem:[#allocation2 + $0xb0] sm:$0xff] %vm179, %v8080
  %8162 = vst.msk [vmem:[#allocation2 + $0xb8] sm:$0xff] %vm179, %v8081
  %8163 = vst.msk [vmem:[#allocation2 + $0xc0] sm:$0xff] %vm179, %v8082
  %8164 = vst.msk [vmem:[#allocation2 + $0xc8] sm:$0xff] %vm179, %v8083
  %8165 = vst.msk [vmem:[#allocation2 + $0xd0] sm:$0xff] %vm179, %v8084
  %8166 = vst.msk [vmem:[#allocation2 + $0xd8] sm:$0xff] %vm179, %v8085
  %8167 = vst.msk [vmem:[#allocation2 + $0xe0] sm:$0xff] %vm179, %v8086
  %8168 = vst.msk [vmem:[#allocation2 + $0xe8] sm:$0xff] %vm179, %v8087
  %8169 = vst.msk [vmem:[#allocation2 + $0xf0] sm:$0xff] %vm179, %v8088
  %8170 = vst.msk [vmem:[#allocation2 + $0xf8] sm:$0xff] %vm179, %v8089
  %8171 = vst.msk [vmem:[#allocation2 + $0x100] sm:$0xff] %vm179, %v8090
  %8172 = vst.msk [vmem:[#allocation2 + $0x108] sm:$0xff] %vm179, %v8091
  %8173 = vst.msk [vmem:[#allocation2 + $0x110] sm:$0xff] %vm179, %v8092
  %8174 = vst.msk [vmem:[#allocation2 + $0x118] sm:$0xff] %vm179, %v8093
  %8175 = vst.msk [vmem:[#allocation2 + $0x120] sm:$0xff] %vm179, %v8094
  %8176 = vst.msk [vmem:[#allocation2 + $0x128] sm:$0xff] %vm179, %v8095
  %8177 = vst.msk [vmem:[#allocation2 + $0x130] sm:$0xff] %vm179, %v8096
  %8178 = vst.msk [vmem:[#allocation2 + $0x138] sm:$0xff] %vm179, %v8097
  %8179 = vst.msk [vmem:[#allocation2 + $0x140] sm:$0xff] %vm179, %v8098
  %8180 = vst.msk [vmem:[#allocation2 + $0x148] sm:$0xff] %vm179, %v8099
  %8181 = vst.msk [vmem:[#allocation2 + $0x150] sm:$0xff] %vm179, %v8100
  %8182 = vst.msk [vmem:[#allocation2 + $0x158] sm:$0xff] %vm179, %v8101
  %8183 = vst.msk [vmem:[#allocation2 + $0x160] sm:$0xff] %vm179, %v8102
  %8184 = vst.msk [vmem:[#allocation2 + $0x168] sm:$0xff] %vm179, %v8103
  %8185 = vst.msk [vmem:[#allocation2 + $0x170] sm:$0xff] %vm179, %v8104
  %8186 = vst.msk [vmem:[#allocation2 + $0x178] sm:$0xff] %vm179, %v8105
  %8187 = vst.msk [vmem:[#allocation2 + $0x180] sm:$0xff] %vm179, %v8106
  %8188 = vst.msk [vmem:[#allocation2 + $0x188] sm:$0xff] %vm179, %v8107
  %8189 = vst.msk [vmem:[#allocation2 + $0x190] sm:$0xff] %vm179, %v8108
  %8190 = vst.msk [vmem:[#allocation2 + $0x198] sm:$0xff] %vm179, %v8109
  %8191 = vst.msk [vmem:[#allocation2 + $0x1a0] sm:$0xff] %vm179, %v8110
  %8192 = vst.msk [vmem:[#allocation2 + $0x1a8] sm:$0xff] %vm179, %v8111
  %8193 = vst.msk [vmem:[#allocation2 + $0x1b0] sm:$0xff] %vm179, %v8112
  %8194 = vst.msk [vmem:[#allocation2 + $0x1b8] sm:$0xff] %vm179, %v8113
  %8195 = vst.msk [vmem:[#allocation2 + $0x1c0] sm:$0xff] %vm179, %v8114
  %8196 = vst.msk [vmem:[#allocation2 + $0x1c8] sm:$0xff] %vm179, %v8115
  %8197 = vst.msk [vmem:[#allocation2 + $0x1d0] sm:$0xff] %vm179, %v8116
  %8198 = vst.msk [vmem:[#allocation2 + $0x1d8] sm:$0xff] %vm179, %v8117
  %8199 = vst.msk [vmem:[#allocation2 + $0x1e0] sm:$0xff] %vm179, %v8118
  %8200 = vst.msk [vmem:[#allocation2 + $0x1e8] sm:$0xff] %vm179, %v8119
  %8201 = vst.msk [vmem:[#allocation2 + $0x1f0] sm:$0xff] %vm179, %v8120
  %8202 = vst.msk [vmem:[#allocation2 + $0x1f8] sm:$0xff] %vm179, %v8121
  %8203 = vst.msk [vmem:[#allocation2 + $0x200] sm:$0xff] %vm179, %v8122
  %8204 = vst.msk [vmem:[#allocation2 + $0x208] sm:$0xff] %vm179, %v8123
  %8205 = vst.msk [vmem:[#allocation2 + $0x210] sm:$0xff] %vm179, %v8124
  %8206 = vst.msk [vmem:[#allocation2 + $0x218] sm:$0xff] %vm179, %v8125
  %8207 = vst.msk [vmem:[#allocation2 + $0x220] sm:$0xff] %vm179, %v8126
  %8208 = vst.msk [vmem:[#allocation2 + $0x228] sm:$0xff] %vm179, %v8127
  %8209 = vst.msk [vmem:[#allocation2 + $0x230] sm:$0xff] %vm179, %v8128
  %8210 = vst.msk [vmem:[#allocation2 + $0x238] sm:$0xff] %vm179, %v8129
  %8211 = vst.msk [vmem:[#allocation2 + $0x240] sm:$0xff] %vm179, %v8130
  %8212 = vst.msk [vmem:[#allocation2 + $0x248] sm:$0xff] %vm179, %v8131
  %8213 = vst.msk [vmem:[#allocation2 + $0x250] sm:$0xff] %vm179, %v8132
  %8214 = vst.msk [vmem:[#allocation2 + $0x258] sm:$0xff] %vm179, %v8133
  %8215 = vst.msk [vmem:[#allocation2 + $0x260] sm:$0xff] %vm179, %v8134
  %8216 = vst.msk [vmem:[#allocation2 + $0x268] sm:$0xff] %vm179, %v8135
  %8217 = vst.msk [vmem:[#allocation2 + $0x270] sm:$0xff] %vm179, %v8136
  %8218 = vst.msk [vmem:[#allocation2 + $0x278] sm:$0xff] %vm179, %v8137
  %8219 = vst.msk [vmem:[#allocation2 + $0x280] sm:$0xff] %vm179, %v8138
  %8220 = vst.msk [vmem:[#allocation2 + $0x288] sm:$0xff] %vm179, %v8139
  %8221 = vst.msk [vmem:[#allocation2 + $0x290] sm:$0xff] %vm179, %v8140
  %8222 = vst.msk [vmem:[#allocation2 + $0x298] sm:$0xff] %vm179, %v8141
  %v8223 = vld [vmem:[#allocation2 + $0x5] sm:$0xff]
  %v8224 = vld [vmem:[#allocation2 + $0xd] sm:$0xff]
  %v8225 = vld [vmem:[#allocation2 + $0x15] sm:$0xff]
  %v8226 = vld [vmem:[#allocation2 + $0x1d] sm:$0xff]
  %v8227 = vld [vmem:[#allocation2 + $0x25] sm:$0xff]
  %v8228 = vld [vmem:[#allocation2 + $0x2d] sm:$0xff]
  %v8229 = vld [vmem:[#allocation2 + $0x35] sm:$0xff]
  %v8230 = vld [vmem:[#allocation2 + $0x3d] sm:$0xff]
  %v8231 = vld [vmem:[#allocation2 + $0x45] sm:$0xff]
  %v8232 = vld [vmem:[#allocation2 + $0x4d] sm:$0xff]
  %v8233 = vld [vmem:[#allocation2 + $0x55] sm:$0xff]
  %v8234 = vld [vmem:[#allocation2 + $0x5d] sm:$0xff]
  %v8235 = vld [vmem:[#allocation2 + $0x65] sm:$0xff]
  %v8236 = vld [vmem:[#allocation2 + $0x6d] sm:$0xff]
  %v8237 = vld [vmem:[#allocation2 + $0x75] sm:$0xff]
  %v8238 = vld [vmem:[#allocation2 + $0x7d] sm:$0xff]
  %v8239 = vld [vmem:[#allocation2 + $0x85] sm:$0xff]
  %v8240 = vld [vmem:[#allocation2 + $0x8d] sm:$0xff]
  %v8241 = vld [vmem:[#allocation2 + $0x95] sm:$0xff]
  %v8242 = vld [vmem:[#allocation2 + $0x9d] sm:$0xff]
  %v8243 = vld [vmem:[#allocation2 + $0xa5] sm:$0xff]
  %v8244 = vld [vmem:[#allocation2 + $0xad] sm:$0xff]
  %v8245 = vld [vmem:[#allocation2 + $0xb5] sm:$0xff]
  %v8246 = vld [vmem:[#allocation2 + $0xbd] sm:$0xff]
  %v8247 = vld [vmem:[#allocation2 + $0xc5] sm:$0xff]
  %v8248 = vld [vmem:[#allocation2 + $0xcd] sm:$0xff]
  %v8249 = vld [vmem:[#allocation2 + $0xd5] sm:$0xff]
  %v8250 = vld [vmem:[#allocation2 + $0xdd] sm:$0xff]
  %v8251 = vld [vmem:[#allocation2 + $0xe5] sm:$0xff]
  %v8252 = vld [vmem:[#allocation2 + $0xed] sm:$0xff]
  %v8253 = vld [vmem:[#allocation2 + $0xf5] sm:$0xff]
  %v8254 = vld [vmem:[#allocation2 + $0xfd] sm:$0xff]
  %v8255 = vld [vmem:[#allocation2 + $0x105] sm:$0xff]
  %v8256 = vld [vmem:[#allocation2 + $0x10d] sm:$0xff]
  %v8257 = vld [vmem:[#allocation2 + $0x115] sm:$0xff]
  %v8258 = vld [vmem:[#allocation2 + $0x11d] sm:$0xff]
  %v8259 = vld [vmem:[#allocation2 + $0x125] sm:$0xff]
  %v8260 = vld [vmem:[#allocation2 + $0x12d] sm:$0xff]
  %v8261 = vld [vmem:[#allocation2 + $0x135] sm:$0xff]
  %v8262 = vld [vmem:[#allocation2 + $0x13d] sm:$0xff]
  %v8263 = vld [vmem:[#allocation2 + $0x145] sm:$0xff]
  %v8264 = vld [vmem:[#allocation2 + $0x14d] sm:$0xff]
  %v8265 = vld [vmem:[#allocation2 + $0x155] sm:$0xff]
  %v8266 = vld [vmem:[#allocation2 + $0x15d] sm:$0xff]
  %v8267 = vld [vmem:[#allocation2 + $0x165] sm:$0xff]
  %v8268 = vld [vmem:[#allocation2 + $0x16d] sm:$0xff]
  %v8269 = vld [vmem:[#allocation2 + $0x175] sm:$0xff]
  %v8270 = vld [vmem:[#allocation2 + $0x17d] sm:$0xff]
  %v8271 = vld [vmem:[#allocation2 + $0x185] sm:$0xff]
  %v8272 = vld [vmem:[#allocation2 + $0x18d] sm:$0xff]
  %v8273 = vld [vmem:[#allocation2 + $0x195] sm:$0xff]
  %v8274 = vld [vmem:[#allocation2 + $0x19d] sm:$0xff]
  %v8275 = vld [vmem:[#allocation2 + $0x1a5] sm:$0xff]
  %v8276 = vld [vmem:[#allocation2 + $0x1ad] sm:$0xff]
  %v8277 = vld [vmem:[#allocation2 + $0x1b5] sm:$0xff]
  %v8278 = vld [vmem:[#allocation2 + $0x1bd] sm:$0xff]
  %v8279 = vld [vmem:[#allocation2 + $0x1c5] sm:$0xff]
  %v8280 = vld [vmem:[#allocation2 + $0x1cd] sm:$0xff]
  %v8281 = vld [vmem:[#allocation2 + $0x1d5] sm:$0xff]
  %v8282 = vld [vmem:[#allocation2 + $0x1dd] sm:$0xff]
  %v8283 = vld [vmem:[#allocation2 + $0x1e5] sm:$0xff]
  %v8284 = vld [vmem:[#allocation2 + $0x1ed] sm:$0xff]
  %v8285 = vld [vmem:[#allocation2 + $0x1f5] sm:$0xff]
  %v8286 = vld [vmem:[#allocation2 + $0x1fd] sm:$0xff]
  %v8287 = vld [vmem:[#allocation2 + $0x205] sm:$0xff]
  %v8288 = vld [vmem:[#allocation2 + $0x20d] sm:$0xff]
  %v8289 = vld [vmem:[#allocation2 + $0x215] sm:$0xff]
  %v8290 = vld [vmem:[#allocation2 + $0x21d] sm:$0xff]
  %v8291 = vld [vmem:[#allocation2 + $0x225] sm:$0xff]
  %v8292 = vld [vmem:[#allocation2 + $0x22d] sm:$0xff]
  %v8293 = vld [vmem:[#allocation2 + $0x235] sm:$0xff]
  %v8294 = vld [vmem:[#allocation2 + $0x23d] sm:$0xff]
  %v8295 = vld [vmem:[#allocation2 + $0x245] sm:$0xff]
  %v8296 = vld [vmem:[#allocation2 + $0x24d] sm:$0xff]
  %v8297 = vld [vmem:[#allocation2 + $0x255] sm:$0xff]
  %v8298 = vld [vmem:[#allocation2 + $0x25d] sm:$0xff]
  %v8299 = vld [vmem:[#allocation2 + $0x265] sm:$0xff]
  %v8300 = vld [vmem:[#allocation2 + $0x26d] sm:$0xff]
  %v8301 = vld [vmem:[#allocation2 + $0x275] sm:$0xff]
  %v8302 = vld [vmem:[#allocation2 + $0x27d] sm:$0xff]
  %v8303 = vld [vmem:[#allocation2 + $0x285] sm:$0xff]
  %s8304 = scalar_lea.vmem %s3, 36
  %v8305 = vld [vmem:[%s8304] sm:$0xf]
  %v8306 = vld [vmem:[#allocation2 + $0x6] sm:$0xff]
  %v8307 = vld [vmem:[#allocation2 + $0xe] sm:$0xff]
  %v8308 = vld [vmem:[#allocation2 + $0x16] sm:$0xff]
  %v8309 = vld [vmem:[#allocation2 + $0x1e] sm:$0xff]
  %v8310 = vld [vmem:[#allocation2 + $0x26] sm:$0xff]
  %v8311 = vld [vmem:[#allocation2 + $0x2e] sm:$0xff]
  %v8312 = vld [vmem:[#allocation2 + $0x36] sm:$0xff]
  %v8313 = vld [vmem:[#allocation2 + $0x3e] sm:$0xff]
  %v8314 = vld [vmem:[#allocation2 + $0x46] sm:$0xff]
  %v8315 = vld [vmem:[#allocation2 + $0x4e] sm:$0xff]
  %v8316 = vld [vmem:[#allocation2 + $0x56] sm:$0xff]
  %v8317 = vld [vmem:[#allocation2 + $0x5e] sm:$0xff]
  %v8318 = vld [vmem:[#allocation2 + $0x66] sm:$0xff]
  %v8319 = vld [vmem:[#allocation2 + $0x6e] sm:$0xff]
  %v8320 = vld [vmem:[#allocation2 + $0x76] sm:$0xff]
  %v8321 = vld [vmem:[#allocation2 + $0x7e] sm:$0xff]
  %v8322 = vld [vmem:[#allocation2 + $0x86] sm:$0xff]
  %v8323 = vld [vmem:[#allocation2 + $0x8e] sm:$0xff]
  %v8324 = vld [vmem:[#allocation2 + $0x96] sm:$0xff]
  %v8325 = vld [vmem:[#allocation2 + $0x9e] sm:$0xff]
  %v8326 = vld [vmem:[#allocation2 + $0xa6] sm:$0xff]
  %v8327 = vld [vmem:[#allocation2 + $0xae] sm:$0xff]
  %v8328 = vld [vmem:[#allocation2 + $0xb6] sm:$0xff]
  %v8329 = vld [vmem:[#allocation2 + $0xbe] sm:$0xff]
  %v8330 = vld [vmem:[#allocation2 + $0xc6] sm:$0xff]
  %v8331 = vld [vmem:[#allocation2 + $0xce] sm:$0xff]
  %v8332 = vld [vmem:[#allocation2 + $0xd6] sm:$0xff]
  %v8333 = vld [vmem:[#allocation2 + $0xde] sm:$0xff]
  %v8334 = vld [vmem:[#allocation2 + $0xe6] sm:$0xff]
  %v8335 = vld [vmem:[#allocation2 + $0xee] sm:$0xff]
  %v8336 = vld [vmem:[#allocation2 + $0xf6] sm:$0xff]
  %v8337 = vld [vmem:[#allocation2 + $0xfe] sm:$0xff]
  %v8338 = vld [vmem:[#allocation2 + $0x106] sm:$0xff]
  %v8339 = vld [vmem:[#allocation2 + $0x10e] sm:$0xff]
  %v8340 = vld [vmem:[#allocation2 + $0x116] sm:$0xff]
  %v8341 = vld [vmem:[#allocation2 + $0x11e] sm:$0xff]
  %v8342 = vld [vmem:[#allocation2 + $0x126] sm:$0xff]
  %v8343 = vld [vmem:[#allocation2 + $0x12e] sm:$0xff]
  %v8344 = vld [vmem:[#allocation2 + $0x136] sm:$0xff]
  %v8345 = vld [vmem:[#allocation2 + $0x13e] sm:$0xff]
  %v8346 = vld [vmem:[#allocation2 + $0x146] sm:$0xff]
  %v8347 = vld [vmem:[#allocation2 + $0x14e] sm:$0xff]
  %v8348 = vld [vmem:[#allocation2 + $0x156] sm:$0xff]
  %v8349 = vld [vmem:[#allocation2 + $0x15e] sm:$0xff]
  %v8350 = vld [vmem:[#allocation2 + $0x166] sm:$0xff]
  %v8351 = vld [vmem:[#allocation2 + $0x16e] sm:$0xff]
  %v8352 = vld [vmem:[#allocation2 + $0x176] sm:$0xff]
  %v8353 = vld [vmem:[#allocation2 + $0x17e] sm:$0xff]
  %v8354 = vld [vmem:[#allocation2 + $0x186] sm:$0xff]
  %v8355 = vld [vmem:[#allocation2 + $0x18e] sm:$0xff]
  %v8356 = vld [vmem:[#allocation2 + $0x196] sm:$0xff]
  %v8357 = vld [vmem:[#allocation2 + $0x19e] sm:$0xff]
  %v8358 = vld [vmem:[#allocation2 + $0x1a6] sm:$0xff]
  %v8359 = vld [vmem:[#allocation2 + $0x1ae] sm:$0xff]
  %v8360 = vld [vmem:[#allocation2 + $0x1b6] sm:$0xff]
  %v8361 = vld [vmem:[#allocation2 + $0x1be] sm:$0xff]
  %v8362 = vld [vmem:[#allocation2 + $0x1c6] sm:$0xff]
  %v8363 = vld [vmem:[#allocation2 + $0x1ce] sm:$0xff]
  %v8364 = vld [vmem:[#allocation2 + $0x1d6] sm:$0xff]
  %v8365 = vld [vmem:[#allocation2 + $0x1de] sm:$0xff]
  %v8366 = vld [vmem:[#allocation2 + $0x1e6] sm:$0xff]
  %v8367 = vld [vmem:[#allocation2 + $0x1ee] sm:$0xff]
  %v8368 = vld [vmem:[#allocation2 + $0x1f6] sm:$0xff]
  %v8369 = vld [vmem:[#allocation2 + $0x1fe] sm:$0xff]
  %v8370 = vld [vmem:[#allocation2 + $0x206] sm:$0xff]
  %v8371 = vld [vmem:[#allocation2 + $0x20e] sm:$0xff]
  %v8372 = vld [vmem:[#allocation2 + $0x216] sm:$0xff]
  %v8373 = vld [vmem:[#allocation2 + $0x21e] sm:$0xff]
  %v8374 = vld [vmem:[#allocation2 + $0x226] sm:$0xff]
  %v8375 = vld [vmem:[#allocation2 + $0x22e] sm:$0xff]
  %v8376 = vld [vmem:[#allocation2 + $0x236] sm:$0xff]
  %v8377 = vld [vmem:[#allocation2 + $0x23e] sm:$0xff]
  %v8378 = vld [vmem:[#allocation2 + $0x246] sm:$0xff]
  %v8379 = vld [vmem:[#allocation2 + $0x24e] sm:$0xff]
  %v8380 = vld [vmem:[#allocation2 + $0x256] sm:$0xff]
  %v8381 = vld [vmem:[#allocation2 + $0x25e] sm:$0xff]
  %v8382 = vld [vmem:[#allocation2 + $0x266] sm:$0xff]
  %v8383 = vld [vmem:[#allocation2 + $0x26e] sm:$0xff]
  %v8384 = vld [vmem:[#allocation2 + $0x276] sm:$0xff]
  %v8385 = vld [vmem:[#allocation2 + $0x27e] sm:$0xff]
  %v8386 = vld [vmem:[#allocation2 + $0x286] sm:$0xff]
  %s8387 = scalar_lea.vmem %s3, 40
  %v8388 = vld [vmem:[%s8387] sm:$0xf]
  %v8390 = vsel %vm179, %v8306, 0
  %v8393 = vsel %vm179, %v8307, 0
  %v8396 = vsel %vm179, %v8308, 0
  %v8399 = vsel %vm179, %v8309, 0
  %v8402 = vsel %vm179, %v8310, 0
  %v8405 = vsel %vm179, %v8311, 0
  %v8408 = vsel %vm179, %v8312, 0
  %v8411 = vsel %vm179, %v8313, 0
  %v8414 = vsel %vm179, %v8314, 0
  %v8417 = vsel %vm179, %v8315, 0
  %v8420 = vsel %vm179, %v8316, 0
  %v8423 = vsel %vm179, %v8317, 0
  %v8426 = vsel %vm179, %v8318, 0
  %v8429 = vsel %vm179, %v8319, 0
  %v8432 = vsel %vm179, %v8320, 0
  %v8435 = vsel %vm179, %v8321, 0
  %v8438 = vsel %vm179, %v8322, 0
  %v8441 = vsel %vm179, %v8323, 0
  %v8444 = vsel %vm179, %v8324, 0
  %v8447 = vsel %vm179, %v8325, 0
  %v8450 = vsel %vm179, %v8326, 0
  %v8453 = vsel %vm179, %v8327, 0
  %v8456 = vsel %vm179, %v8328, 0
  %v8459 = vsel %vm179, %v8329, 0
  %v8462 = vsel %vm179, %v8330, 0
  %v8465 = vsel %vm179, %v8331, 0
  %v8468 = vsel %vm179, %v8332, 0
  %v8471 = vsel %vm179, %v8333, 0
  %v8474 = vsel %vm179, %v8334, 0
  %v8477 = vsel %vm179, %v8335, 0
  %v8480 = vsel %vm179, %v8336, 0
  %v8483 = vsel %vm179, %v8337, 0
  %v8486 = vsel %vm179, %v8338, 0
  %v8489 = vsel %vm179, %v8339, 0
  %v8492 = vsel %vm179, %v8340, 0
  %v8495 = vsel %vm179, %v8341, 0
  %v8498 = vsel %vm179, %v8342, 0
  %v8501 = vsel %vm179, %v8343, 0
  %v8504 = vsel %vm179, %v8344, 0
  %v8507 = vsel %vm179, %v8345, 0
  %v8510 = vsel %vm179, %v8346, 0
  %v8513 = vsel %vm179, %v8347, 0
  %v8516 = vsel %vm179, %v8348, 0
  %v8519 = vsel %vm179, %v8349, 0
  %v8522 = vsel %vm179, %v8350, 0
  %v8525 = vsel %vm179, %v8351, 0
  %v8528 = vsel %vm179, %v8352, 0
  %v8531 = vsel %vm179, %v8353, 0
  %v8534 = vsel %vm179, %v8354, 0
  %v8537 = vsel %vm179, %v8355, 0
  %v8540 = vsel %vm179, %v8356, 0
  %v8543 = vsel %vm179, %v8357, 0
  %v8546 = vsel %vm179, %v8358, 0
  %v8549 = vsel %vm179, %v8359, 0
  %v8552 = vsel %vm179, %v8360, 0
  %v8555 = vsel %vm179, %v8361, 0
  %v8558 = vsel %vm179, %v8362, 0
  %v8561 = vsel %vm179, %v8363, 0
  %v8564 = vsel %vm179, %v8364, 0
  %v8567 = vsel %vm179, %v8365, 0
  %v8570 = vsel %vm179, %v8366, 0
  %v8573 = vsel %vm179, %v8367, 0
  %v8576 = vsel %vm179, %v8368, 0
  %v8579 = vsel %vm179, %v8369, 0
  %v8582 = vsel %vm179, %v8370, 0
  %v8585 = vsel %vm179, %v8371, 0
  %v8588 = vsel %vm179, %v8372, 0
  %v8591 = vsel %vm179, %v8373, 0
  %v8594 = vsel %vm179, %v8374, 0
  %v8597 = vsel %vm179, %v8375, 0
  %v8600 = vsel %vm179, %v8376, 0
  %v8603 = vsel %vm179, %v8377, 0
  %v8606 = vsel %vm179, %v8378, 0
  %v8609 = vsel %vm179, %v8379, 0
  %v8612 = vsel %vm179, %v8380, 0
  %v8615 = vsel %vm179, %v8381, 0
  %v8618 = vsel %vm179, %v8382, 0
  %v8621 = vsel %vm179, %v8383, 0
  %v8624 = vsel %vm179, %v8384, 0
  %v8627 = vsel %vm179, %v8385, 0
  %v8630 = vsel %vm179, %v8386, 0
  %v8633 = vsel %vm1600, %v8388, 0
  %8635 = vmatpush.msra.mxu0 0.0
  %8636 = vmatpush.msra.mxu0 0.0
  %8637 = vmatpush.msra.mxu0 0.0
  %8638 = vmatpush.msra.mxu0 0.0
  %8639 = vmatpush.msra.mxu0 0.0
  %8640 = vmatpush.msra.mxu0 0.0
  %8641 = vmatpush.msra.mxu0 0.0
  %8642 = vmatpush.msra.mxu0 0.0
  %8643 = vmatpush.msra.mxu0 0.0
  %8644 = vmatpush.msra.mxu0 0.0
  %8645 = vmatpush.msra.mxu0 0.0
  %8646 = vmatpush.msra.mxu0 0.0
  %8647 = vmatpush.msra.mxu0 0.0
  %8648 = vmatpush.msra.mxu0 0.0
  %8649 = vmatpush.msra.mxu0 0.0
  %8650 = vmatpush.msra.mxu0 %v8633
  %8651 = vmatmul.f32.gmra.mxu0 %v8390
  %v8652 = vpop.f32.mrf.mxu0
  %v8653 = vadd.f32 0.0, %v8652
  %8654 = vmatmul.f32.gmra.mxu0 %v8393
  %v8655 = vpop.f32.mrf.mxu0
  %v8656 = vadd.f32 0.0, %v8655
  %8657 = vmatmul.f32.gmra.mxu0 %v8396
  %v8658 = vpop.f32.mrf.mxu0
  %v8659 = vadd.f32 0.0, %v8658
  %8660 = vmatmul.f32.gmra.mxu0 %v8399
  %v8661 = vpop.f32.mrf.mxu0
  %v8662 = vadd.f32 0.0, %v8661
  %8663 = vmatmul.f32.gmra.mxu0 %v8402
  %v8664 = vpop.f32.mrf.mxu0
  %v8665 = vadd.f32 0.0, %v8664
  %8666 = vmatmul.f32.gmra.mxu0 %v8405
  %v8667 = vpop.f32.mrf.mxu0
  %v8668 = vadd.f32 0.0, %v8667
  %8669 = vmatmul.f32.gmra.mxu0 %v8408
  %v8670 = vpop.f32.mrf.mxu0
  %v8671 = vadd.f32 0.0, %v8670
  %8672 = vmatmul.f32.gmra.mxu0 %v8411
  %v8673 = vpop.f32.mrf.mxu0
  %v8674 = vadd.f32 0.0, %v8673
  %8675 = vmatmul.f32.gmra.mxu0 %v8414
  %v8676 = vpop.f32.mrf.mxu0
  %v8677 = vadd.f32 0.0, %v8676
  %8678 = vmatmul.f32.gmra.mxu0 %v8417
  %v8679 = vpop.f32.mrf.mxu0
  %v8680 = vadd.f32 0.0, %v8679
  %8681 = vmatmul.f32.gmra.mxu0 %v8420
  %v8682 = vpop.f32.mrf.mxu0
  %v8683 = vadd.f32 0.0, %v8682
  %8684 = vmatmul.f32.gmra.mxu0 %v8423
  %v8685 = vpop.f32.mrf.mxu0
  %v8686 = vadd.f32 0.0, %v8685
  %8687 = vmatmul.f32.gmra.mxu0 %v8426
  %v8688 = vpop.f32.mrf.mxu0
  %v8689 = vadd.f32 0.0, %v8688
  %8690 = vmatmul.f32.gmra.mxu0 %v8429
  %v8691 = vpop.f32.mrf.mxu0
  %v8692 = vadd.f32 0.0, %v8691
  %8693 = vmatmul.f32.gmra.mxu0 %v8432
  %v8694 = vpop.f32.mrf.mxu0
  %v8695 = vadd.f32 0.0, %v8694
  %8696 = vmatmul.f32.gmra.mxu0 %v8435
  %v8697 = vpop.f32.mrf.mxu0
  %v8698 = vadd.f32 0.0, %v8697
  %8699 = vmatmul.f32.gmra.mxu0 %v8438
  %v8700 = vpop.f32.mrf.mxu0
  %v8701 = vadd.f32 0.0, %v8700
  %8702 = vmatmul.f32.gmra.mxu0 %v8441
  %v8703 = vpop.f32.mrf.mxu0
  %v8704 = vadd.f32 0.0, %v8703
  %8705 = vmatmul.f32.gmra.mxu0 %v8444
  %v8706 = vpop.f32.mrf.mxu0
  %v8707 = vadd.f32 0.0, %v8706
  %8708 = vmatmul.f32.gmra.mxu0 %v8447
  %v8709 = vpop.f32.mrf.mxu0
  %v8710 = vadd.f32 0.0, %v8709
  %8711 = vmatmul.f32.gmra.mxu0 %v8450
  %v8712 = vpop.f32.mrf.mxu0
  %v8713 = vadd.f32 0.0, %v8712
  %8714 = vmatmul.f32.gmra.mxu0 %v8453
  %v8715 = vpop.f32.mrf.mxu0
  %v8716 = vadd.f32 0.0, %v8715
  %8717 = vmatmul.f32.gmra.mxu0 %v8456
  %v8718 = vpop.f32.mrf.mxu0
  %v8719 = vadd.f32 0.0, %v8718
  %8720 = vmatmul.f32.gmra.mxu0 %v8459
  %v8721 = vpop.f32.mrf.mxu0
  %v8722 = vadd.f32 0.0, %v8721
  %8723 = vmatmul.f32.gmra.mxu0 %v8462
  %v8724 = vpop.f32.mrf.mxu0
  %v8725 = vadd.f32 0.0, %v8724
  %8726 = vmatmul.f32.gmra.mxu0 %v8465
  %v8727 = vpop.f32.mrf.mxu0
  %v8728 = vadd.f32 0.0, %v8727
  %8729 = vmatmul.f32.gmra.mxu0 %v8468
  %v8730 = vpop.f32.mrf.mxu0
  %v8731 = vadd.f32 0.0, %v8730
  %8732 = vmatmul.f32.gmra.mxu0 %v8471
  %v8733 = vpop.f32.mrf.mxu0
  %v8734 = vadd.f32 0.0, %v8733
  %8735 = vmatmul.f32.gmra.mxu0 %v8474
  %v8736 = vpop.f32.mrf.mxu0
  %v8737 = vadd.f32 0.0, %v8736
  %8738 = vmatmul.f32.gmra.mxu0 %v8477
  %v8739 = vpop.f32.mrf.mxu0
  %v8740 = vadd.f32 0.0, %v8739
  %8741 = vmatmul.f32.gmra.mxu0 %v8480
  %v8742 = vpop.f32.mrf.mxu0
  %v8743 = vadd.f32 0.0, %v8742
  %8744 = vmatmul.f32.gmra.mxu0 %v8483
  %v8745 = vpop.f32.mrf.mxu0
  %v8746 = vadd.f32 0.0, %v8745
  %8747 = vmatmul.f32.gmra.mxu0 %v8486
  %v8748 = vpop.f32.mrf.mxu0
  %v8749 = vadd.f32 0.0, %v8748
  %8750 = vmatmul.f32.gmra.mxu0 %v8489
  %v8751 = vpop.f32.mrf.mxu0
  %v8752 = vadd.f32 0.0, %v8751
  %8753 = vmatmul.f32.gmra.mxu0 %v8492
  %v8754 = vpop.f32.mrf.mxu0
  %v8755 = vadd.f32 0.0, %v8754
  %8756 = vmatmul.f32.gmra.mxu0 %v8495
  %v8757 = vpop.f32.mrf.mxu0
  %v8758 = vadd.f32 0.0, %v8757
  %8759 = vmatmul.f32.gmra.mxu0 %v8498
  %v8760 = vpop.f32.mrf.mxu0
  %v8761 = vadd.f32 0.0, %v8760
  %8762 = vmatmul.f32.gmra.mxu0 %v8501
  %v8763 = vpop.f32.mrf.mxu0
  %v8764 = vadd.f32 0.0, %v8763
  %8765 = vmatmul.f32.gmra.mxu0 %v8504
  %v8766 = vpop.f32.mrf.mxu0
  %v8767 = vadd.f32 0.0, %v8766
  %8768 = vmatmul.f32.gmra.mxu0 %v8507
  %v8769 = vpop.f32.mrf.mxu0
  %v8770 = vadd.f32 0.0, %v8769
  %8771 = vmatmul.f32.gmra.mxu0 %v8510
  %v8772 = vpop.f32.mrf.mxu0
  %v8773 = vadd.f32 0.0, %v8772
  %8774 = vmatmul.f32.gmra.mxu0 %v8513
  %v8775 = vpop.f32.mrf.mxu0
  %v8776 = vadd.f32 0.0, %v8775
  %8777 = vmatmul.f32.gmra.mxu0 %v8516
  %v8778 = vpop.f32.mrf.mxu0
  %v8779 = vadd.f32 0.0, %v8778
  %8780 = vmatmul.f32.gmra.mxu0 %v8519
  %v8781 = vpop.f32.mrf.mxu0
  %v8782 = vadd.f32 0.0, %v8781
  %8783 = vmatmul.f32.gmra.mxu0 %v8522
  %v8784 = vpop.f32.mrf.mxu0
  %v8785 = vadd.f32 0.0, %v8784
  %8786 = vmatmul.f32.gmra.mxu0 %v8525
  %v8787 = vpop.f32.mrf.mxu0
  %v8788 = vadd.f32 0.0, %v8787
  %8789 = vmatmul.f32.gmra.mxu0 %v8528
  %v8790 = vpop.f32.mrf.mxu0
  %v8791 = vadd.f32 0.0, %v8790
  %8792 = vmatmul.f32.gmra.mxu0 %v8531
  %v8793 = vpop.f32.mrf.mxu0
  %v8794 = vadd.f32 0.0, %v8793
  %8795 = vmatmul.f32.gmra.mxu0 %v8534
  %v8796 = vpop.f32.mrf.mxu0
  %v8797 = vadd.f32 0.0, %v8796
  %8798 = vmatmul.f32.gmra.mxu0 %v8537
  %v8799 = vpop.f32.mrf.mxu0
  %v8800 = vadd.f32 0.0, %v8799
  %8801 = vmatmul.f32.gmra.mxu0 %v8540
  %v8802 = vpop.f32.mrf.mxu0
  %v8803 = vadd.f32 0.0, %v8802
  %8804 = vmatmul.f32.gmra.mxu0 %v8543
  %v8805 = vpop.f32.mrf.mxu0
  %v8806 = vadd.f32 0.0, %v8805
  %8807 = vmatmul.f32.gmra.mxu0 %v8546
  %v8808 = vpop.f32.mrf.mxu0
  %v8809 = vadd.f32 0.0, %v8808
  %8810 = vmatmul.f32.gmra.mxu0 %v8549
  %v8811 = vpop.f32.mrf.mxu0
  %v8812 = vadd.f32 0.0, %v8811
  %8813 = vmatmul.f32.gmra.mxu0 %v8552
  %v8814 = vpop.f32.mrf.mxu0
  %v8815 = vadd.f32 0.0, %v8814
  %8816 = vmatmul.f32.gmra.mxu0 %v8555
  %v8817 = vpop.f32.mrf.mxu0
  %v8818 = vadd.f32 0.0, %v8817
  %8819 = vmatmul.f32.gmra.mxu0 %v8558
  %v8820 = vpop.f32.mrf.mxu0
  %v8821 = vadd.f32 0.0, %v8820
  %8822 = vmatmul.f32.gmra.mxu0 %v8561
  %v8823 = vpop.f32.mrf.mxu0
  %v8824 = vadd.f32 0.0, %v8823
  %8825 = vmatmul.f32.gmra.mxu0 %v8564
  %v8826 = vpop.f32.mrf.mxu0
  %v8827 = vadd.f32 0.0, %v8826
  %8828 = vmatmul.f32.gmra.mxu0 %v8567
  %v8829 = vpop.f32.mrf.mxu0
  %v8830 = vadd.f32 0.0, %v8829
  %8831 = vmatmul.f32.gmra.mxu0 %v8570
  %v8832 = vpop.f32.mrf.mxu0
  %v8833 = vadd.f32 0.0, %v8832
  %8834 = vmatmul.f32.gmra.mxu0 %v8573
  %v8835 = vpop.f32.mrf.mxu0
  %v8836 = vadd.f32 0.0, %v8835
  %8837 = vmatmul.f32.gmra.mxu0 %v8576
  %v8838 = vpop.f32.mrf.mxu0
  %v8839 = vadd.f32 0.0, %v8838
  %8840 = vmatmul.f32.gmra.mxu0 %v8579
  %v8841 = vpop.f32.mrf.mxu0
  %v8842 = vadd.f32 0.0, %v8841
  %8843 = vmatmul.f32.gmra.mxu0 %v8582
  %v8844 = vpop.f32.mrf.mxu0
  %v8845 = vadd.f32 0.0, %v8844
  %8846 = vmatmul.f32.gmra.mxu0 %v8585
  %v8847 = vpop.f32.mrf.mxu0
  %v8848 = vadd.f32 0.0, %v8847
  %8849 = vmatmul.f32.gmra.mxu0 %v8588
  %v8850 = vpop.f32.mrf.mxu0
  %v8851 = vadd.f32 0.0, %v8850
  %8852 = vmatmul.f32.gmra.mxu0 %v8591
  %v8853 = vpop.f32.mrf.mxu0
  %v8854 = vadd.f32 0.0, %v8853
  %8855 = vmatmul.f32.gmra.mxu0 %v8594
  %v8856 = vpop.f32.mrf.mxu0
  %v8857 = vadd.f32 0.0, %v8856
  %8858 = vmatmul.f32.gmra.mxu0 %v8597
  %v8859 = vpop.f32.mrf.mxu0
  %v8860 = vadd.f32 0.0, %v8859
  %8861 = vmatmul.f32.gmra.mxu0 %v8600
  %v8862 = vpop.f32.mrf.mxu0
  %v8863 = vadd.f32 0.0, %v8862
  %8864 = vmatmul.f32.gmra.mxu0 %v8603
  %v8865 = vpop.f32.mrf.mxu0
  %v8866 = vadd.f32 0.0, %v8865
  %8867 = vmatmul.f32.gmra.mxu0 %v8606
  %v8868 = vpop.f32.mrf.mxu0
  %v8869 = vadd.f32 0.0, %v8868
  %8870 = vmatmul.f32.gmra.mxu0 %v8609
  %v8871 = vpop.f32.mrf.mxu0
  %v8872 = vadd.f32 0.0, %v8871
  %8873 = vmatmul.f32.gmra.mxu0 %v8612
  %v8874 = vpop.f32.mrf.mxu0
  %v8875 = vadd.f32 0.0, %v8874
  %8876 = vmatmul.f32.gmra.mxu0 %v8615
  %v8877 = vpop.f32.mrf.mxu0
  %v8878 = vadd.f32 0.0, %v8877
  %8879 = vmatmul.f32.gmra.mxu0 %v8618
  %v8880 = vpop.f32.mrf.mxu0
  %v8881 = vadd.f32 0.0, %v8880
  %8882 = vmatmul.f32.gmra.mxu0 %v8621
  %v8883 = vpop.f32.mrf.mxu0
  %v8884 = vadd.f32 0.0, %v8883
  %8885 = vmatmul.f32.gmra.mxu0 %v8624
  %v8886 = vpop.f32.mrf.mxu0
  %v8887 = vadd.f32 0.0, %v8886
  %8888 = vmatmul.f32.gmra.mxu0 %v8627
  %v8889 = vpop.f32.mrf.mxu0
  %v8890 = vadd.f32 0.0, %v8889
  %8891 = vmatmul.f32.gmra.mxu0 %v8630
  %v8892 = vpop.f32.mrf.mxu0
  %v8893 = vadd.f32 0.0, %v8892
  %8894 = vdwg.mxu0
  %v8896 = vsel %vm179, %v8223, 0
  %v8899 = vsel %vm179, %v8224, 0
  %v8902 = vsel %vm179, %v8225, 0
  %v8905 = vsel %vm179, %v8226, 0
  %v8908 = vsel %vm179, %v8227, 0
  %v8911 = vsel %vm179, %v8228, 0
  %v8914 = vsel %vm179, %v8229, 0
  %v8917 = vsel %vm179, %v8230, 0
  %v8920 = vsel %vm179, %v8231, 0
  %v8923 = vsel %vm179, %v8232, 0
  %v8926 = vsel %vm179, %v8233, 0
  %v8929 = vsel %vm179, %v8234, 0
  %v8932 = vsel %vm179, %v8235, 0
  %v8935 = vsel %vm179, %v8236, 0
  %v8938 = vsel %vm179, %v8237, 0
  %v8941 = vsel %vm179, %v8238, 0
  %v8944 = vsel %vm179, %v8239, 0
  %v8947 = vsel %vm179, %v8240, 0
  %v8950 = vsel %vm179, %v8241, 0
  %v8953 = vsel %vm179, %v8242, 0
  %v8956 = vsel %vm179, %v8243, 0
  %v8959 = vsel %vm179, %v8244, 0
  %v8962 = vsel %vm179, %v8245, 0
  %v8965 = vsel %vm179, %v8246, 0
  %v8968 = vsel %vm179, %v8247, 0
  %v8971 = vsel %vm179, %v8248, 0
  %v8974 = vsel %vm179, %v8249, 0
  %v8977 = vsel %vm179, %v8250, 0
  %v8980 = vsel %vm179, %v8251, 0
  %v8983 = vsel %vm179, %v8252, 0
  %v8986 = vsel %vm179, %v8253, 0
  %v8989 = vsel %vm179, %v8254, 0
  %v8992 = vsel %vm179, %v8255, 0
  %v8995 = vsel %vm179, %v8256, 0
  %v8998 = vsel %vm179, %v8257, 0
  %v9001 = vsel %vm179, %v8258, 0
  %v9004 = vsel %vm179, %v8259, 0
  %v9007 = vsel %vm179, %v8260, 0
  %v9010 = vsel %vm179, %v8261, 0
  %v9013 = vsel %vm179, %v8262, 0
  %v9016 = vsel %vm179, %v8263, 0
  %v9019 = vsel %vm179, %v8264, 0
  %v9022 = vsel %vm179, %v8265, 0
  %v9025 = vsel %vm179, %v8266, 0
  %v9028 = vsel %vm179, %v8267, 0
  %v9031 = vsel %vm179, %v8268, 0
  %v9034 = vsel %vm179, %v8269, 0
  %v9037 = vsel %vm179, %v8270, 0
  %v9040 = vsel %vm179, %v8271, 0
  %v9043 = vsel %vm179, %v8272, 0
  %v9046 = vsel %vm179, %v8273, 0
  %v9049 = vsel %vm179, %v8274, 0
  %v9052 = vsel %vm179, %v8275, 0
  %v9055 = vsel %vm179, %v8276, 0
  %v9058 = vsel %vm179, %v8277, 0
  %v9061 = vsel %vm179, %v8278, 0
  %v9064 = vsel %vm179, %v8279, 0
  %v9067 = vsel %vm179, %v8280, 0
  %v9070 = vsel %vm179, %v8281, 0
  %v9073 = vsel %vm179, %v8282, 0
  %v9076 = vsel %vm179, %v8283, 0
  %v9079 = vsel %vm179, %v8284, 0
  %v9082 = vsel %vm179, %v8285, 0
  %v9085 = vsel %vm179, %v8286, 0
  %v9088 = vsel %vm179, %v8287, 0
  %v9091 = vsel %vm179, %v8288, 0
  %v9094 = vsel %vm179, %v8289, 0
  %v9097 = vsel %vm179, %v8290, 0
  %v9100 = vsel %vm179, %v8291, 0
  %v9103 = vsel %vm179, %v8292, 0
  %v9106 = vsel %vm179, %v8293, 0
  %v9109 = vsel %vm179, %v8294, 0
  %v9112 = vsel %vm179, %v8295, 0
  %v9115 = vsel %vm179, %v8296, 0
  %v9118 = vsel %vm179, %v8297, 0
  %v9121 = vsel %vm179, %v8298, 0
  %v9124 = vsel %vm179, %v8299, 0
  %v9127 = vsel %vm179, %v8300, 0
  %v9130 = vsel %vm179, %v8301, 0
  %v9133 = vsel %vm179, %v8302, 0
  %v9136 = vsel %vm179, %v8303, 0
  %v9139 = vsel %vm1600, %v8305, 0
  %9141 = vmatpush.msra.mxu0 0.0
  %9142 = vmatpush.msra.mxu0 0.0
  %9143 = vmatpush.msra.mxu0 0.0
  %9144 = vmatpush.msra.mxu0 0.0
  %9145 = vmatpush.msra.mxu0 0.0
  %9146 = vmatpush.msra.mxu0 0.0
  %9147 = vmatpush.msra.mxu0 0.0
  %9148 = vmatpush.msra.mxu0 0.0
  %9149 = vmatpush.msra.mxu0 0.0
  %9150 = vmatpush.msra.mxu0 0.0
  %9151 = vmatpush.msra.mxu0 0.0
  %9152 = vmatpush.msra.mxu0 0.0
  %9153 = vmatpush.msra.mxu0 0.0
  %9154 = vmatpush.msra.mxu0 0.0
  %9155 = vmatpush.msra.mxu0 0.0
  %9156 = vmatpush.msra.mxu0 %v9139
  %9157 = vmatmul.f32.gmra.mxu0 %v8896
  %v9158 = vpop.f32.mrf.mxu0
  %v9159 = vadd.f32 %v8653, %v9158
  %9160 = vmatmul.f32.gmra.mxu0 %v8899
  %v9161 = vpop.f32.mrf.mxu0
  %v9162 = vadd.f32 %v8656, %v9161
  %9163 = vmatmul.f32.gmra.mxu0 %v8902
  %v9164 = vpop.f32.mrf.mxu0
  %v9165 = vadd.f32 %v8659, %v9164
  %9166 = vmatmul.f32.gmra.mxu0 %v8905
  %v9167 = vpop.f32.mrf.mxu0
  %v9168 = vadd.f32 %v8662, %v9167
  %9169 = vmatmul.f32.gmra.mxu0 %v8908
  %v9170 = vpop.f32.mrf.mxu0
  %v9171 = vadd.f32 %v8665, %v9170
  %9172 = vmatmul.f32.gmra.mxu0 %v8911
  %v9173 = vpop.f32.mrf.mxu0
  %v9174 = vadd.f32 %v8668, %v9173
  %9175 = vmatmul.f32.gmra.mxu0 %v8914
  %v9176 = vpop.f32.mrf.mxu0
  %v9177 = vadd.f32 %v8671, %v9176
  %9178 = vmatmul.f32.gmra.mxu0 %v8917
  %v9179 = vpop.f32.mrf.mxu0
  %v9180 = vadd.f32 %v8674, %v9179
  %9181 = vmatmul.f32.gmra.mxu0 %v8920
  %v9182 = vpop.f32.mrf.mxu0
  %v9183 = vadd.f32 %v8677, %v9182
  %9184 = vmatmul.f32.gmra.mxu0 %v8923
  %v9185 = vpop.f32.mrf.mxu0
  %v9186 = vadd.f32 %v8680, %v9185
  %9187 = vmatmul.f32.gmra.mxu0 %v8926
  %v9188 = vpop.f32.mrf.mxu0
  %v9189 = vadd.f32 %v8683, %v9188
  %9190 = vmatmul.f32.gmra.mxu0 %v8929
  %v9191 = vpop.f32.mrf.mxu0
  %v9192 = vadd.f32 %v8686, %v9191
  %9193 = vmatmul.f32.gmra.mxu0 %v8932
  %v9194 = vpop.f32.mrf.mxu0
  %v9195 = vadd.f32 %v8689, %v9194
  %9196 = vmatmul.f32.gmra.mxu0 %v8935
  %v9197 = vpop.f32.mrf.mxu0
  %v9198 = vadd.f32 %v8692, %v9197
  %9199 = vmatmul.f32.gmra.mxu0 %v8938
  %v9200 = vpop.f32.mrf.mxu0
  %v9201 = vadd.f32 %v8695, %v9200
  %9202 = vmatmul.f32.gmra.mxu0 %v8941
  %v9203 = vpop.f32.mrf.mxu0
  %v9204 = vadd.f32 %v8698, %v9203
  %9205 = vmatmul.f32.gmra.mxu0 %v8944
  %v9206 = vpop.f32.mrf.mxu0
  %v9207 = vadd.f32 %v8701, %v9206
  %9208 = vmatmul.f32.gmra.mxu0 %v8947
  %v9209 = vpop.f32.mrf.mxu0
  %v9210 = vadd.f32 %v8704, %v9209
  %9211 = vmatmul.f32.gmra.mxu0 %v8950
  %v9212 = vpop.f32.mrf.mxu0
  %v9213 = vadd.f32 %v8707, %v9212
  %9214 = vmatmul.f32.gmra.mxu0 %v8953
  %v9215 = vpop.f32.mrf.mxu0
  %v9216 = vadd.f32 %v8710, %v9215
  %9217 = vmatmul.f32.gmra.mxu0 %v8956
  %v9218 = vpop.f32.mrf.mxu0
  %v9219 = vadd.f32 %v8713, %v9218
  %9220 = vmatmul.f32.gmra.mxu0 %v8959
  %v9221 = vpop.f32.mrf.mxu0
  %v9222 = vadd.f32 %v8716, %v9221
  %9223 = vmatmul.f32.gmra.mxu0 %v8962
  %v9224 = vpop.f32.mrf.mxu0
  %v9225 = vadd.f32 %v8719, %v9224
  %9226 = vmatmul.f32.gmra.mxu0 %v8965
  %v9227 = vpop.f32.mrf.mxu0
  %v9228 = vadd.f32 %v8722, %v9227
  %9229 = vmatmul.f32.gmra.mxu0 %v8968
  %v9230 = vpop.f32.mrf.mxu0
  %v9231 = vadd.f32 %v8725, %v9230
  %9232 = vmatmul.f32.gmra.mxu0 %v8971
  %v9233 = vpop.f32.mrf.mxu0
  %v9234 = vadd.f32 %v8728, %v9233
  %9235 = vmatmul.f32.gmra.mxu0 %v8974
  %v9236 = vpop.f32.mrf.mxu0
  %v9237 = vadd.f32 %v8731, %v9236
  %9238 = vmatmul.f32.gmra.mxu0 %v8977
  %v9239 = vpop.f32.mrf.mxu0
  %v9240 = vadd.f32 %v8734, %v9239
  %9241 = vmatmul.f32.gmra.mxu0 %v8980
  %v9242 = vpop.f32.mrf.mxu0
  %v9243 = vadd.f32 %v8737, %v9242
  %9244 = vmatmul.f32.gmra.mxu0 %v8983
  %v9245 = vpop.f32.mrf.mxu0
  %v9246 = vadd.f32 %v8740, %v9245
  %9247 = vmatmul.f32.gmra.mxu0 %v8986
  %v9248 = vpop.f32.mrf.mxu0
  %v9249 = vadd.f32 %v8743, %v9248
  %9250 = vmatmul.f32.gmra.mxu0 %v8989
  %v9251 = vpop.f32.mrf.mxu0
  %v9252 = vadd.f32 %v8746, %v9251
  %9253 = vmatmul.f32.gmra.mxu0 %v8992
  %v9254 = vpop.f32.mrf.mxu0
  %v9255 = vadd.f32 %v8749, %v9254
  %9256 = vmatmul.f32.gmra.mxu0 %v8995
  %v9257 = vpop.f32.mrf.mxu0
  %v9258 = vadd.f32 %v8752, %v9257
  %9259 = vmatmul.f32.gmra.mxu0 %v8998
  %v9260 = vpop.f32.mrf.mxu0
  %v9261 = vadd.f32 %v8755, %v9260
  %9262 = vmatmul.f32.gmra.mxu0 %v9001
  %v9263 = vpop.f32.mrf.mxu0
  %v9264 = vadd.f32 %v8758, %v9263
  %9265 = vmatmul.f32.gmra.mxu0 %v9004
  %v9266 = vpop.f32.mrf.mxu0
  %v9267 = vadd.f32 %v8761, %v9266
  %9268 = vmatmul.f32.gmra.mxu0 %v9007
  %v9269 = vpop.f32.mrf.mxu0
  %v9270 = vadd.f32 %v8764, %v9269
  %9271 = vmatmul.f32.gmra.mxu0 %v9010
  %v9272 = vpop.f32.mrf.mxu0
  %v9273 = vadd.f32 %v8767, %v9272
  %9274 = vmatmul.f32.gmra.mxu0 %v9013
  %v9275 = vpop.f32.mrf.mxu0
  %v9276 = vadd.f32 %v8770, %v9275
  %9277 = vmatmul.f32.gmra.mxu0 %v9016
  %v9278 = vpop.f32.mrf.mxu0
  %v9279 = vadd.f32 %v8773, %v9278
  %9280 = vmatmul.f32.gmra.mxu0 %v9019
  %v9281 = vpop.f32.mrf.mxu0
  %v9282 = vadd.f32 %v8776, %v9281
  %9283 = vmatmul.f32.gmra.mxu0 %v9022
  %v9284 = vpop.f32.mrf.mxu0
  %v9285 = vadd.f32 %v8779, %v9284
  %9286 = vmatmul.f32.gmra.mxu0 %v9025
  %v9287 = vpop.f32.mrf.mxu0
  %v9288 = vadd.f32 %v8782, %v9287
  %9289 = vmatmul.f32.gmra.mxu0 %v9028
  %v9290 = vpop.f32.mrf.mxu0
  %v9291 = vadd.f32 %v8785, %v9290
  %9292 = vmatmul.f32.gmra.mxu0 %v9031
  %v9293 = vpop.f32.mrf.mxu0
  %v9294 = vadd.f32 %v8788, %v9293
  %9295 = vmatmul.f32.gmra.mxu0 %v9034
  %v9296 = vpop.f32.mrf.mxu0
  %v9297 = vadd.f32 %v8791, %v9296
  %9298 = vmatmul.f32.gmra.mxu0 %v9037
  %v9299 = vpop.f32.mrf.mxu0
  %v9300 = vadd.f32 %v8794, %v9299
  %9301 = vmatmul.f32.gmra.mxu0 %v9040
  %v9302 = vpop.f32.mrf.mxu0
  %v9303 = vadd.f32 %v8797, %v9302
  %9304 = vmatmul.f32.gmra.mxu0 %v9043
  %v9305 = vpop.f32.mrf.mxu0
  %v9306 = vadd.f32 %v8800, %v9305
  %9307 = vmatmul.f32.gmra.mxu0 %v9046
  %v9308 = vpop.f32.mrf.mxu0
  %v9309 = vadd.f32 %v8803, %v9308
  %9310 = vmatmul.f32.gmra.mxu0 %v9049
  %v9311 = vpop.f32.mrf.mxu0
  %v9312 = vadd.f32 %v8806, %v9311
  %9313 = vmatmul.f32.gmra.mxu0 %v9052
  %v9314 = vpop.f32.mrf.mxu0
  %v9315 = vadd.f32 %v8809, %v9314
  %9316 = vmatmul.f32.gmra.mxu0 %v9055
  %v9317 = vpop.f32.mrf.mxu0
  %v9318 = vadd.f32 %v8812, %v9317
  %9319 = vmatmul.f32.gmra.mxu0 %v9058
  %v9320 = vpop.f32.mrf.mxu0
  %v9321 = vadd.f32 %v8815, %v9320
  %9322 = vmatmul.f32.gmra.mxu0 %v9061
  %v9323 = vpop.f32.mrf.mxu0
  %v9324 = vadd.f32 %v8818, %v9323
  %9325 = vmatmul.f32.gmra.mxu0 %v9064
  %v9326 = vpop.f32.mrf.mxu0
  %v9327 = vadd.f32 %v8821, %v9326
  %9328 = vmatmul.f32.gmra.mxu0 %v9067
  %v9329 = vpop.f32.mrf.mxu0
  %v9330 = vadd.f32 %v8824, %v9329
  %9331 = vmatmul.f32.gmra.mxu0 %v9070
  %v9332 = vpop.f32.mrf.mxu0
  %v9333 = vadd.f32 %v8827, %v9332
  %9334 = vmatmul.f32.gmra.mxu0 %v9073
  %v9335 = vpop.f32.mrf.mxu0
  %v9336 = vadd.f32 %v8830, %v9335
  %9337 = vmatmul.f32.gmra.mxu0 %v9076
  %v9338 = vpop.f32.mrf.mxu0
  %v9339 = vadd.f32 %v8833, %v9338
  %9340 = vmatmul.f32.gmra.mxu0 %v9079
  %v9341 = vpop.f32.mrf.mxu0
  %v9342 = vadd.f32 %v8836, %v9341
  %9343 = vmatmul.f32.gmra.mxu0 %v9082
  %v9344 = vpop.f32.mrf.mxu0
  %v9345 = vadd.f32 %v8839, %v9344
  %9346 = vmatmul.f32.gmra.mxu0 %v9085
  %v9347 = vpop.f32.mrf.mxu0
  %v9348 = vadd.f32 %v8842, %v9347
  %9349 = vmatmul.f32.gmra.mxu0 %v9088
  %v9350 = vpop.f32.mrf.mxu0
  %v9351 = vadd.f32 %v8845, %v9350
  %9352 = vmatmul.f32.gmra.mxu0 %v9091
  %v9353 = vpop.f32.mrf.mxu0
  %v9354 = vadd.f32 %v8848, %v9353
  %9355 = vmatmul.f32.gmra.mxu0 %v9094
  %v9356 = vpop.f32.mrf.mxu0
  %v9357 = vadd.f32 %v8851, %v9356
  %9358 = vmatmul.f32.gmra.mxu0 %v9097
  %v9359 = vpop.f32.mrf.mxu0
  %v9360 = vadd.f32 %v8854, %v9359
  %9361 = vmatmul.f32.gmra.mxu0 %v9100
  %v9362 = vpop.f32.mrf.mxu0
  %v9363 = vadd.f32 %v8857, %v9362
  %9364 = vmatmul.f32.gmra.mxu0 %v9103
  %v9365 = vpop.f32.mrf.mxu0
  %v9366 = vadd.f32 %v8860, %v9365
  %9367 = vmatmul.f32.gmra.mxu0 %v9106
  %v9368 = vpop.f32.mrf.mxu0
  %v9369 = vadd.f32 %v8863, %v9368
  %9370 = vmatmul.f32.gmra.mxu0 %v9109
  %v9371 = vpop.f32.mrf.mxu0
  %v9372 = vadd.f32 %v8866, %v9371
  %9373 = vmatmul.f32.gmra.mxu0 %v9112
  %v9374 = vpop.f32.mrf.mxu0
  %v9375 = vadd.f32 %v8869, %v9374
  %9376 = vmatmul.f32.gmra.mxu0 %v9115
  %v9377 = vpop.f32.mrf.mxu0
  %v9378 = vadd.f32 %v8872, %v9377
  %9379 = vmatmul.f32.gmra.mxu0 %v9118
  %v9380 = vpop.f32.mrf.mxu0
  %v9381 = vadd.f32 %v8875, %v9380
  %9382 = vmatmul.f32.gmra.mxu0 %v9121
  %v9383 = vpop.f32.mrf.mxu0
  %v9384 = vadd.f32 %v8878, %v9383
  %9385 = vmatmul.f32.gmra.mxu0 %v9124
  %v9386 = vpop.f32.mrf.mxu0
  %v9387 = vadd.f32 %v8881, %v9386
  %9388 = vmatmul.f32.gmra.mxu0 %v9127
  %v9389 = vpop.f32.mrf.mxu0
  %v9390 = vadd.f32 %v8884, %v9389
  %9391 = vmatmul.f32.gmra.mxu0 %v9130
  %v9392 = vpop.f32.mrf.mxu0
  %v9393 = vadd.f32 %v8887, %v9392
  %9394 = vmatmul.f32.gmra.mxu0 %v9133
  %v9395 = vpop.f32.mrf.mxu0
  %v9396 = vadd.f32 %v8890, %v9395
  %9397 = vmatmul.f32.gmra.mxu0 %v9136
  %v9398 = vpop.f32.mrf.mxu0
  %v9399 = vadd.f32 %v8893, %v9398
  %9400 = vdwg.mxu0
  %v9401 = vld [vmem:[#allocation2 + $0x7] sm:$0xff]
  %v9402 = vld [vmem:[#allocation2 + $0xf] sm:$0xff]
  %v9403 = vld [vmem:[#allocation2 + $0x17] sm:$0xff]
  %v9404 = vld [vmem:[#allocation2 + $0x1f] sm:$0xff]
  %v9405 = vld [vmem:[#allocation2 + $0x27] sm:$0xff]
  %v9406 = vld [vmem:[#allocation2 + $0x2f] sm:$0xff]
  %v9407 = vld [vmem:[#allocation2 + $0x37] sm:$0xff]
  %v9408 = vld [vmem:[#allocation2 + $0x3f] sm:$0xff]
  %v9409 = vld [vmem:[#allocation2 + $0x47] sm:$0xff]
  %v9410 = vld [vmem:[#allocation2 + $0x4f] sm:$0xff]
  %v9411 = vld [vmem:[#allocation2 + $0x57] sm:$0xff]
  %v9412 = vld [vmem:[#allocation2 + $0x5f] sm:$0xff]
  %v9413 = vld [vmem:[#allocation2 + $0x67] sm:$0xff]
  %v9414 = vld [vmem:[#allocation2 + $0x6f] sm:$0xff]
  %v9415 = vld [vmem:[#allocation2 + $0x77] sm:$0xff]
  %v9416 = vld [vmem:[#allocation2 + $0x7f] sm:$0xff]
  %v9417 = vld [vmem:[#allocation2 + $0x87] sm:$0xff]
  %v9418 = vld [vmem:[#allocation2 + $0x8f] sm:$0xff]
  %v9419 = vld [vmem:[#allocation2 + $0x97] sm:$0xff]
  %v9420 = vld [vmem:[#allocation2 + $0x9f] sm:$0xff]
  %v9421 = vld [vmem:[#allocation2 + $0xa7] sm:$0xff]
  %v9422 = vld [vmem:[#allocation2 + $0xaf] sm:$0xff]
  %v9423 = vld [vmem:[#allocation2 + $0xb7] sm:$0xff]
  %v9424 = vld [vmem:[#allocation2 + $0xbf] sm:$0xff]
  %v9425 = vld [vmem:[#allocation2 + $0xc7] sm:$0xff]
  %v9426 = vld [vmem:[#allocation2 + $0xcf] sm:$0xff]
  %v9427 = vld [vmem:[#allocation2 + $0xd7] sm:$0xff]
  %v9428 = vld [vmem:[#allocation2 + $0xdf] sm:$0xff]
  %v9429 = vld [vmem:[#allocation2 + $0xe7] sm:$0xff]
  %v9430 = vld [vmem:[#allocation2 + $0xef] sm:$0xff]
  %v9431 = vld [vmem:[#allocation2 + $0xf7] sm:$0xff]
  %v9432 = vld [vmem:[#allocation2 + $0xff] sm:$0xff]
  %v9433 = vld [vmem:[#allocation2 + $0x107] sm:$0xff]
  %v9434 = vld [vmem:[#allocation2 + $0x10f] sm:$0xff]
  %v9435 = vld [vmem:[#allocation2 + $0x117] sm:$0xff]
  %v9436 = vld [vmem:[#allocation2 + $0x11f] sm:$0xff]
  %v9437 = vld [vmem:[#allocation2 + $0x127] sm:$0xff]
  %v9438 = vld [vmem:[#allocation2 + $0x12f] sm:$0xff]
  %v9439 = vld [vmem:[#allocation2 + $0x137] sm:$0xff]
  %v9440 = vld [vmem:[#allocation2 + $0x13f] sm:$0xff]
  %v9441 = vld [vmem:[#allocation2 + $0x147] sm:$0xff]
  %v9442 = vld [vmem:[#allocation2 + $0x14f] sm:$0xff]
  %v9443 = vld [vmem:[#allocation2 + $0x157] sm:$0xff]
  %v9444 = vld [vmem:[#allocation2 + $0x15f] sm:$0xff]
  %v9445 = vld [vmem:[#allocation2 + $0x167] sm:$0xff]
  %v9446 = vld [vmem:[#allocation2 + $0x16f] sm:$0xff]
  %v9447 = vld [vmem:[#allocation2 + $0x177] sm:$0xff]
  %v9448 = vld [vmem:[#allocation2 + $0x17f] sm:$0xff]
  %v9449 = vld [vmem:[#allocation2 + $0x187] sm:$0xff]
  %v9450 = vld [vmem:[#allocation2 + $0x18f] sm:$0xff]
  %v9451 = vld [vmem:[#allocation2 + $0x197] sm:$0xff]
  %v9452 = vld [vmem:[#allocation2 + $0x19f] sm:$0xff]
  %v9453 = vld [vmem:[#allocation2 + $0x1a7] sm:$0xff]
  %v9454 = vld [vmem:[#allocation2 + $0x1af] sm:$0xff]
  %v9455 = vld [vmem:[#allocation2 + $0x1b7] sm:$0xff]
  %v9456 = vld [vmem:[#allocation2 + $0x1bf] sm:$0xff]
  %v9457 = vld [vmem:[#allocation2 + $0x1c7] sm:$0xff]
  %v9458 = vld [vmem:[#allocation2 + $0x1cf] sm:$0xff]
  %v9459 = vld [vmem:[#allocation2 + $0x1d7] sm:$0xff]
  %v9460 = vld [vmem:[#allocation2 + $0x1df] sm:$0xff]
  %v9461 = vld [vmem:[#allocation2 + $0x1e7] sm:$0xff]
  %v9462 = vld [vmem:[#allocation2 + $0x1ef] sm:$0xff]
  %v9463 = vld [vmem:[#allocation2 + $0x1f7] sm:$0xff]
  %v9464 = vld [vmem:[#allocation2 + $0x1ff] sm:$0xff]
  %v9465 = vld [vmem:[#allocation2 + $0x207] sm:$0xff]
  %v9466 = vld [vmem:[#allocation2 + $0x20f] sm:$0xff]
  %v9467 = vld [vmem:[#allocation2 + $0x217] sm:$0xff]
  %v9468 = vld [vmem:[#allocation2 + $0x21f] sm:$0xff]
  %v9469 = vld [vmem:[#allocation2 + $0x227] sm:$0xff]
  %v9470 = vld [vmem:[#allocation2 + $0x22f] sm:$0xff]
  %v9471 = vld [vmem:[#allocation2 + $0x237] sm:$0xff]
  %v9472 = vld [vmem:[#allocation2 + $0x23f] sm:$0xff]
  %v9473 = vld [vmem:[#allocation2 + $0x247] sm:$0xff]
  %v9474 = vld [vmem:[#allocation2 + $0x24f] sm:$0xff]
  %v9475 = vld [vmem:[#allocation2 + $0x257] sm:$0xff]
  %v9476 = vld [vmem:[#allocation2 + $0x25f] sm:$0xff]
  %v9477 = vld [vmem:[#allocation2 + $0x267] sm:$0xff]
  %v9478 = vld [vmem:[#allocation2 + $0x26f] sm:$0xff]
  %v9479 = vld [vmem:[#allocation2 + $0x277] sm:$0xff]
  %v9480 = vld [vmem:[#allocation2 + $0x27f] sm:$0xff]
  %v9481 = vld [vmem:[#allocation2 + $0x287] sm:$0xff]
  %s9482 = scalar_lea.vmem %s3, 44
  %v9483 = vld [vmem:[%s9482] sm:$0xf]
  %v9485 = vsel %vm179, %v9401, 0
  %v9488 = vsel %vm179, %v9402, 0
  %v9491 = vsel %vm179, %v9403, 0
  %v9494 = vsel %vm179, %v9404, 0
  %v9497 = vsel %vm179, %v9405, 0
  %v9500 = vsel %vm179, %v9406, 0
  %v9503 = vsel %vm179, %v9407, 0
  %v9506 = vsel %vm179, %v9408, 0
  %v9509 = vsel %vm179, %v9409, 0
  %v9512 = vsel %vm179, %v9410, 0
  %v9515 = vsel %vm179, %v9411, 0
  %v9518 = vsel %vm179, %v9412, 0
  %v9521 = vsel %vm179, %v9413, 0
  %v9524 = vsel %vm179, %v9414, 0
  %v9527 = vsel %vm179, %v9415, 0
  %v9530 = vsel %vm179, %v9416, 0
  %v9533 = vsel %vm179, %v9417, 0
  %v9536 = vsel %vm179, %v9418, 0
  %v9539 = vsel %vm179, %v9419, 0
  %v9542 = vsel %vm179, %v9420, 0
  %v9545 = vsel %vm179, %v9421, 0
  %v9548 = vsel %vm179, %v9422, 0
  %v9551 = vsel %vm179, %v9423, 0
  %v9554 = vsel %vm179, %v9424, 0
  %v9557 = vsel %vm179, %v9425, 0
  %v9560 = vsel %vm179, %v9426, 0
  %v9563 = vsel %vm179, %v9427, 0
  %v9566 = vsel %vm179, %v9428, 0
  %v9569 = vsel %vm179, %v9429, 0
  %v9572 = vsel %vm179, %v9430, 0
  %v9575 = vsel %vm179, %v9431, 0
  %v9578 = vsel %vm179, %v9432, 0
  %v9581 = vsel %vm179, %v9433, 0
  %v9584 = vsel %vm179, %v9434, 0
  %v9587 = vsel %vm179, %v9435, 0
  %v9590 = vsel %vm179, %v9436, 0
  %v9593 = vsel %vm179, %v9437, 0
  %v9596 = vsel %vm179, %v9438, 0
  %v9599 = vsel %vm179, %v9439, 0
  %v9602 = vsel %vm179, %v9440, 0
  %v9605 = vsel %vm179, %v9441, 0
  %v9608 = vsel %vm179, %v9442, 0
  %v9611 = vsel %vm179, %v9443, 0
  %v9614 = vsel %vm179, %v9444, 0
  %v9617 = vsel %vm179, %v9445, 0
  %v9620 = vsel %vm179, %v9446, 0
  %v9623 = vsel %vm179, %v9447, 0
  %v9626 = vsel %vm179, %v9448, 0
  %v9629 = vsel %vm179, %v9449, 0
  %v9632 = vsel %vm179, %v9450, 0
  %v9635 = vsel %vm179, %v9451, 0
  %v9638 = vsel %vm179, %v9452, 0
  %v9641 = vsel %vm179, %v9453, 0
  %v9644 = vsel %vm179, %v9454, 0
  %v9647 = vsel %vm179, %v9455, 0
  %v9650 = vsel %vm179, %v9456, 0
  %v9653 = vsel %vm179, %v9457, 0
  %v9656 = vsel %vm179, %v9458, 0
  %v9659 = vsel %vm179, %v9459, 0
  %v9662 = vsel %vm179, %v9460, 0
  %v9665 = vsel %vm179, %v9461, 0
  %v9668 = vsel %vm179, %v9462, 0
  %v9671 = vsel %vm179, %v9463, 0
  %v9674 = vsel %vm179, %v9464, 0
  %v9677 = vsel %vm179, %v9465, 0
  %v9680 = vsel %vm179, %v9466, 0
  %v9683 = vsel %vm179, %v9467, 0
  %v9686 = vsel %vm179, %v9468, 0
  %v9689 = vsel %vm179, %v9469, 0
  %v9692 = vsel %vm179, %v9470, 0
  %v9695 = vsel %vm179, %v9471, 0
  %v9698 = vsel %vm179, %v9472, 0
  %v9701 = vsel %vm179, %v9473, 0
  %v9704 = vsel %vm179, %v9474, 0
  %v9707 = vsel %vm179, %v9475, 0
  %v9710 = vsel %vm179, %v9476, 0
  %v9713 = vsel %vm179, %v9477, 0
  %v9716 = vsel %vm179, %v9478, 0
  %v9719 = vsel %vm179, %v9479, 0
  %v9722 = vsel %vm179, %v9480, 0
  %v9725 = vsel %vm179, %v9481, 0
  %v9728 = vsel %vm1600, %v9483, 0
  %9730 = vmatpush.msra.mxu0 0.0
  %9731 = vmatpush.msra.mxu0 0.0
  %9732 = vmatpush.msra.mxu0 0.0
  %9733 = vmatpush.msra.mxu0 0.0
  %9734 = vmatpush.msra.mxu0 0.0
  %9735 = vmatpush.msra.mxu0 0.0
  %9736 = vmatpush.msra.mxu0 0.0
  %9737 = vmatpush.msra.mxu0 0.0
  %9738 = vmatpush.msra.mxu0 0.0
  %9739 = vmatpush.msra.mxu0 0.0
  %9740 = vmatpush.msra.mxu0 0.0
  %9741 = vmatpush.msra.mxu0 0.0
  %9742 = vmatpush.msra.mxu0 0.0
  %9743 = vmatpush.msra.mxu0 0.0
  %9744 = vmatpush.msra.mxu0 0.0
  %9745 = vmatpush.msra.mxu0 %v9728
  %9746 = vmatmul.f32.gmra.mxu0 %v9485
  %v9747 = vpop.f32.mrf.mxu0
  %v9748 = vadd.f32 0.0, %v9747
  %9749 = vmatmul.f32.gmra.mxu0 %v9488
  %v9750 = vpop.f32.mrf.mxu0
  %v9751 = vadd.f32 0.0, %v9750
  %9752 = vmatmul.f32.gmra.mxu0 %v9491
  %v9753 = vpop.f32.mrf.mxu0
  %v9754 = vadd.f32 0.0, %v9753
  %9755 = vmatmul.f32.gmra.mxu0 %v9494
  %v9756 = vpop.f32.mrf.mxu0
  %v9757 = vadd.f32 0.0, %v9756
  %9758 = vmatmul.f32.gmra.mxu0 %v9497
  %v9759 = vpop.f32.mrf.mxu0
  %v9760 = vadd.f32 0.0, %v9759
  %9761 = vmatmul.f32.gmra.mxu0 %v9500
  %v9762 = vpop.f32.mrf.mxu0
  %v9763 = vadd.f32 0.0, %v9762
  %9764 = vmatmul.f32.gmra.mxu0 %v9503
  %v9765 = vpop.f32.mrf.mxu0
  %v9766 = vadd.f32 0.0, %v9765
  %9767 = vmatmul.f32.gmra.mxu0 %v9506
  %v9768 = vpop.f32.mrf.mxu0
  %v9769 = vadd.f32 0.0, %v9768
  %9770 = vmatmul.f32.gmra.mxu0 %v9509
  %v9771 = vpop.f32.mrf.mxu0
  %v9772 = vadd.f32 0.0, %v9771
  %9773 = vmatmul.f32.gmra.mxu0 %v9512
  %v9774 = vpop.f32.mrf.mxu0
  %v9775 = vadd.f32 0.0, %v9774
  %9776 = vmatmul.f32.gmra.mxu0 %v9515
  %v9777 = vpop.f32.mrf.mxu0
  %v9778 = vadd.f32 0.0, %v9777
  %9779 = vmatmul.f32.gmra.mxu0 %v9518
  %v9780 = vpop.f32.mrf.mxu0
  %v9781 = vadd.f32 0.0, %v9780
  %9782 = vmatmul.f32.gmra.mxu0 %v9521
  %v9783 = vpop.f32.mrf.mxu0
  %v9784 = vadd.f32 0.0, %v9783
  %9785 = vmatmul.f32.gmra.mxu0 %v9524
  %v9786 = vpop.f32.mrf.mxu0
  %v9787 = vadd.f32 0.0, %v9786
  %9788 = vmatmul.f32.gmra.mxu0 %v9527
  %v9789 = vpop.f32.mrf.mxu0
  %v9790 = vadd.f32 0.0, %v9789
  %9791 = vmatmul.f32.gmra.mxu0 %v9530
  %v9792 = vpop.f32.mrf.mxu0
  %v9793 = vadd.f32 0.0, %v9792
  %9794 = vmatmul.f32.gmra.mxu0 %v9533
  %v9795 = vpop.f32.mrf.mxu0
  %v9796 = vadd.f32 0.0, %v9795
  %9797 = vmatmul.f32.gmra.mxu0 %v9536
  %v9798 = vpop.f32.mrf.mxu0
  %v9799 = vadd.f32 0.0, %v9798
  %9800 = vmatmul.f32.gmra.mxu0 %v9539
  %v9801 = vpop.f32.mrf.mxu0
  %v9802 = vadd.f32 0.0, %v9801
  %9803 = vmatmul.f32.gmra.mxu0 %v9542
  %v9804 = vpop.f32.mrf.mxu0
  %v9805 = vadd.f32 0.0, %v9804
  %9806 = vmatmul.f32.gmra.mxu0 %v9545
  %v9807 = vpop.f32.mrf.mxu0
  %v9808 = vadd.f32 0.0, %v9807
  %9809 = vmatmul.f32.gmra.mxu0 %v9548
  %v9810 = vpop.f32.mrf.mxu0
  %v9811 = vadd.f32 0.0, %v9810
  %9812 = vmatmul.f32.gmra.mxu0 %v9551
  %v9813 = vpop.f32.mrf.mxu0
  %v9814 = vadd.f32 0.0, %v9813
  %9815 = vmatmul.f32.gmra.mxu0 %v9554
  %v9816 = vpop.f32.mrf.mxu0
  %v9817 = vadd.f32 0.0, %v9816
  %9818 = vmatmul.f32.gmra.mxu0 %v9557
  %v9819 = vpop.f32.mrf.mxu0
  %v9820 = vadd.f32 0.0, %v9819
  %9821 = vmatmul.f32.gmra.mxu0 %v9560
  %v9822 = vpop.f32.mrf.mxu0
  %v9823 = vadd.f32 0.0, %v9822
  %9824 = vmatmul.f32.gmra.mxu0 %v9563
  %v9825 = vpop.f32.mrf.mxu0
  %v9826 = vadd.f32 0.0, %v9825
  %9827 = vmatmul.f32.gmra.mxu0 %v9566
  %v9828 = vpop.f32.mrf.mxu0
  %v9829 = vadd.f32 0.0, %v9828
  %9830 = vmatmul.f32.gmra.mxu0 %v9569
  %v9831 = vpop.f32.mrf.mxu0
  %v9832 = vadd.f32 0.0, %v9831
  %9833 = vmatmul.f32.gmra.mxu0 %v9572
  %v9834 = vpop.f32.mrf.mxu0
  %v9835 = vadd.f32 0.0, %v9834
  %9836 = vmatmul.f32.gmra.mxu0 %v9575
  %v9837 = vpop.f32.mrf.mxu0
  %v9838 = vadd.f32 0.0, %v9837
  %9839 = vmatmul.f32.gmra.mxu0 %v9578
  %v9840 = vpop.f32.mrf.mxu0
  %v9841 = vadd.f32 0.0, %v9840
  %9842 = vmatmul.f32.gmra.mxu0 %v9581
  %v9843 = vpop.f32.mrf.mxu0
  %v9844 = vadd.f32 0.0, %v9843
  %9845 = vmatmul.f32.gmra.mxu0 %v9584
  %v9846 = vpop.f32.mrf.mxu0
  %v9847 = vadd.f32 0.0, %v9846
  %9848 = vmatmul.f32.gmra.mxu0 %v9587
  %v9849 = vpop.f32.mrf.mxu0
  %v9850 = vadd.f32 0.0, %v9849
  %9851 = vmatmul.f32.gmra.mxu0 %v9590
  %v9852 = vpop.f32.mrf.mxu0
  %v9853 = vadd.f32 0.0, %v9852
  %9854 = vmatmul.f32.gmra.mxu0 %v9593
  %v9855 = vpop.f32.mrf.mxu0
  %v9856 = vadd.f32 0.0, %v9855
  %9857 = vmatmul.f32.gmra.mxu0 %v9596
  %v9858 = vpop.f32.mrf.mxu0
  %v9859 = vadd.f32 0.0, %v9858
  %9860 = vmatmul.f32.gmra.mxu0 %v9599
  %v9861 = vpop.f32.mrf.mxu0
  %v9862 = vadd.f32 0.0, %v9861
  %9863 = vmatmul.f32.gmra.mxu0 %v9602
  %v9864 = vpop.f32.mrf.mxu0
  %v9865 = vadd.f32 0.0, %v9864
  %9866 = vmatmul.f32.gmra.mxu0 %v9605
  %v9867 = vpop.f32.mrf.mxu0
  %v9868 = vadd.f32 0.0, %v9867
  %9869 = vmatmul.f32.gmra.mxu0 %v9608
  %v9870 = vpop.f32.mrf.mxu0
  %v9871 = vadd.f32 0.0, %v9870
  %9872 = vmatmul.f32.gmra.mxu0 %v9611
  %v9873 = vpop.f32.mrf.mxu0
  %v9874 = vadd.f32 0.0, %v9873
  %9875 = vmatmul.f32.gmra.mxu0 %v9614
  %v9876 = vpop.f32.mrf.mxu0
  %v9877 = vadd.f32 0.0, %v9876
  %9878 = vmatmul.f32.gmra.mxu0 %v9617
  %v9879 = vpop.f32.mrf.mxu0
  %v9880 = vadd.f32 0.0, %v9879
  %9881 = vmatmul.f32.gmra.mxu0 %v9620
  %v9882 = vpop.f32.mrf.mxu0
  %v9883 = vadd.f32 0.0, %v9882
  %9884 = vmatmul.f32.gmra.mxu0 %v9623
  %v9885 = vpop.f32.mrf.mxu0
  %v9886 = vadd.f32 0.0, %v9885
  %9887 = vmatmul.f32.gmra.mxu0 %v9626
  %v9888 = vpop.f32.mrf.mxu0
  %v9889 = vadd.f32 0.0, %v9888
  %9890 = vmatmul.f32.gmra.mxu0 %v9629
  %v9891 = vpop.f32.mrf.mxu0
  %v9892 = vadd.f32 0.0, %v9891
  %9893 = vmatmul.f32.gmra.mxu0 %v9632
  %v9894 = vpop.f32.mrf.mxu0
  %v9895 = vadd.f32 0.0, %v9894
  %9896 = vmatmul.f32.gmra.mxu0 %v9635
  %v9897 = vpop.f32.mrf.mxu0
  %v9898 = vadd.f32 0.0, %v9897
  %9899 = vmatmul.f32.gmra.mxu0 %v9638
  %v9900 = vpop.f32.mrf.mxu0
  %v9901 = vadd.f32 0.0, %v9900
  %9902 = vmatmul.f32.gmra.mxu0 %v9641
  %v9903 = vpop.f32.mrf.mxu0
  %v9904 = vadd.f32 0.0, %v9903
  %9905 = vmatmul.f32.gmra.mxu0 %v9644
  %v9906 = vpop.f32.mrf.mxu0
  %v9907 = vadd.f32 0.0, %v9906
  %9908 = vmatmul.f32.gmra.mxu0 %v9647
  %v9909 = vpop.f32.mrf.mxu0
  %v9910 = vadd.f32 0.0, %v9909
  %9911 = vmatmul.f32.gmra.mxu0 %v9650
  %v9912 = vpop.f32.mrf.mxu0
  %v9913 = vadd.f32 0.0, %v9912
  %9914 = vmatmul.f32.gmra.mxu0 %v9653
  %v9915 = vpop.f32.mrf.mxu0
  %v9916 = vadd.f32 0.0, %v9915
  %9917 = vmatmul.f32.gmra.mxu0 %v9656
  %v9918 = vpop.f32.mrf.mxu0
  %v9919 = vadd.f32 0.0, %v9918
  %9920 = vmatmul.f32.gmra.mxu0 %v9659
  %v9921 = vpop.f32.mrf.mxu0
  %v9922 = vadd.f32 0.0, %v9921
  %9923 = vmatmul.f32.gmra.mxu0 %v9662
  %v9924 = vpop.f32.mrf.mxu0
  %v9925 = vadd.f32 0.0, %v9924
  %9926 = vmatmul.f32.gmra.mxu0 %v9665
  %v9927 = vpop.f32.mrf.mxu0
  %v9928 = vadd.f32 0.0, %v9927
  %9929 = vmatmul.f32.gmra.mxu0 %v9668
  %v9930 = vpop.f32.mrf.mxu0
  %v9931 = vadd.f32 0.0, %v9930
  %9932 = vmatmul.f32.gmra.mxu0 %v9671
  %v9933 = vpop.f32.mrf.mxu0
  %v9934 = vadd.f32 0.0, %v9933
  %9935 = vmatmul.f32.gmra.mxu0 %v9674
  %v9936 = vpop.f32.mrf.mxu0
  %v9937 = vadd.f32 0.0, %v9936
  %9938 = vmatmul.f32.gmra.mxu0 %v9677
  %v9939 = vpop.f32.mrf.mxu0
  %v9940 = vadd.f32 0.0, %v9939
  %9941 = vmatmul.f32.gmra.mxu0 %v9680
  %v9942 = vpop.f32.mrf.mxu0
  %v9943 = vadd.f32 0.0, %v9942
  %9944 = vmatmul.f32.gmra.mxu0 %v9683
  %v9945 = vpop.f32.mrf.mxu0
  %v9946 = vadd.f32 0.0, %v9945
  %9947 = vmatmul.f32.gmra.mxu0 %v9686
  %v9948 = vpop.f32.mrf.mxu0
  %v9949 = vadd.f32 0.0, %v9948
  %9950 = vmatmul.f32.gmra.mxu0 %v9689
  %v9951 = vpop.f32.mrf.mxu0
  %v9952 = vadd.f32 0.0, %v9951
  %9953 = vmatmul.f32.gmra.mxu0 %v9692
  %v9954 = vpop.f32.mrf.mxu0
  %v9955 = vadd.f32 0.0, %v9954
  %9956 = vmatmul.f32.gmra.mxu0 %v9695
  %v9957 = vpop.f32.mrf.mxu0
  %v9958 = vadd.f32 0.0, %v9957
  %9959 = vmatmul.f32.gmra.mxu0 %v9698
  %v9960 = vpop.f32.mrf.mxu0
  %v9961 = vadd.f32 0.0, %v9960
  %9962 = vmatmul.f32.gmra.mxu0 %v9701
  %v9963 = vpop.f32.mrf.mxu0
  %v9964 = vadd.f32 0.0, %v9963
  %9965 = vmatmul.f32.gmra.mxu0 %v9704
  %v9966 = vpop.f32.mrf.mxu0
  %v9967 = vadd.f32 0.0, %v9966
  %9968 = vmatmul.f32.gmra.mxu0 %v9707
  %v9969 = vpop.f32.mrf.mxu0
  %v9970 = vadd.f32 0.0, %v9969
  %9971 = vmatmul.f32.gmra.mxu0 %v9710
  %v9972 = vpop.f32.mrf.mxu0
  %v9973 = vadd.f32 0.0, %v9972
  %9974 = vmatmul.f32.gmra.mxu0 %v9713
  %v9975 = vpop.f32.mrf.mxu0
  %v9976 = vadd.f32 0.0, %v9975
  %9977 = vmatmul.f32.gmra.mxu0 %v9716
  %v9978 = vpop.f32.mrf.mxu0
  %v9979 = vadd.f32 0.0, %v9978
  %9980 = vmatmul.f32.gmra.mxu0 %v9719
  %v9981 = vpop.f32.mrf.mxu0
  %v9982 = vadd.f32 0.0, %v9981
  %9983 = vmatmul.f32.gmra.mxu0 %v9722
  %v9984 = vpop.f32.mrf.mxu0
  %v9985 = vadd.f32 0.0, %v9984
  %9986 = vmatmul.f32.gmra.mxu0 %v9725
  %v9987 = vpop.f32.mrf.mxu0
  %v9988 = vadd.f32 0.0, %v9987
  %9989 = vdwg.mxu0
  %v9990 = vadd.f32 %v9159, %v9748
  %v9991 = vadd.f32 %v9162, %v9751
  %v9992 = vadd.f32 %v9165, %v9754
  %v9993 = vadd.f32 %v9168, %v9757
  %v9994 = vadd.f32 %v9171, %v9760
  %v9995 = vadd.f32 %v9174, %v9763
  %v9996 = vadd.f32 %v9177, %v9766
  %v9997 = vadd.f32 %v9180, %v9769
  %v9998 = vadd.f32 %v9183, %v9772
  %v9999 = vadd.f32 %v9186, %v9775
  %v10000 = vadd.f32 %v9189, %v9778
  %v10001 = vadd.f32 %v9192, %v9781
  %v10002 = vadd.f32 %v9195, %v9784
  %v10003 = vadd.f32 %v9198, %v9787
  %v10004 = vadd.f32 %v9201, %v9790
  %v10005 = vadd.f32 %v9204, %v9793
  %v10006 = vadd.f32 %v9207, %v9796
  %v10007 = vadd.f32 %v9210, %v9799
  %v10008 = vadd.f32 %v9213, %v9802
  %v10009 = vadd.f32 %v9216, %v9805
  %v10010 = vadd.f32 %v9219, %v9808
  %v10011 = vadd.f32 %v9222, %v9811
  %v10012 = vadd.f32 %v9225, %v9814
  %v10013 = vadd.f32 %v9228, %v9817
  %v10014 = vadd.f32 %v9231, %v9820
  %v10015 = vadd.f32 %v9234, %v9823
  %v10016 = vadd.f32 %v9237, %v9826
  %v10017 = vadd.f32 %v9240, %v9829
  %v10018 = vadd.f32 %v9243, %v9832
  %v10019 = vadd.f32 %v9246, %v9835
  %v10020 = vadd.f32 %v9249, %v9838
  %v10021 = vadd.f32 %v9252, %v9841
  %v10022 = vadd.f32 %v9255, %v9844
  %v10023 = vadd.f32 %v9258, %v9847
  %v10024 = vadd.f32 %v9261, %v9850
  %v10025 = vadd.f32 %v9264, %v9853
  %v10026 = vadd.f32 %v9267, %v9856
  %v10027 = vadd.f32 %v9270, %v9859
  %v10028 = vadd.f32 %v9273, %v9862
  %v10029 = vadd.f32 %v9276, %v9865
  %v10030 = vadd.f32 %v9279, %v9868
  %v10031 = vadd.f32 %v9282, %v9871
  %v10032 = vadd.f32 %v9285, %v9874
  %v10033 = vadd.f32 %v9288, %v9877
  %v10034 = vadd.f32 %v9291, %v9880
  %v10035 = vadd.f32 %v9294, %v9883
  %v10036 = vadd.f32 %v9297, %v9886
  %v10037 = vadd.f32 %v9300, %v9889
  %v10038 = vadd.f32 %v9303, %v9892
  %v10039 = vadd.f32 %v9306, %v9895
  %v10040 = vadd.f32 %v9309, %v9898
  %v10041 = vadd.f32 %v9312, %v9901
  %v10042 = vadd.f32 %v9315, %v9904
  %v10043 = vadd.f32 %v9318, %v9907
  %v10044 = vadd.f32 %v9321, %v9910
  %v10045 = vadd.f32 %v9324, %v9913
  %v10046 = vadd.f32 %v9327, %v9916
  %v10047 = vadd.f32 %v9330, %v9919
  %v10048 = vadd.f32 %v9333, %v9922
  %v10049 = vadd.f32 %v9336, %v9925
  %v10050 = vadd.f32 %v9339, %v9928
  %v10051 = vadd.f32 %v9342, %v9931
  %v10052 = vadd.f32 %v9345, %v9934
  %v10053 = vadd.f32 %v9348, %v9937
  %v10054 = vadd.f32 %v9351, %v9940
  %v10055 = vadd.f32 %v9354, %v9943
  %v10056 = vadd.f32 %v9357, %v9946
  %v10057 = vadd.f32 %v9360, %v9949
  %v10058 = vadd.f32 %v9363, %v9952
  %v10059 = vadd.f32 %v9366, %v9955
  %v10060 = vadd.f32 %v9369, %v9958
  %v10061 = vadd.f32 %v9372, %v9961
  %v10062 = vadd.f32 %v9375, %v9964
  %v10063 = vadd.f32 %v9378, %v9967
  %v10064 = vadd.f32 %v9381, %v9970
  %v10065 = vadd.f32 %v9384, %v9973
  %v10066 = vadd.f32 %v9387, %v9976
  %v10067 = vadd.f32 %v9390, %v9979
  %v10068 = vadd.f32 %v9393, %v9982
  %v10069 = vadd.f32 %v9396, %v9985
  %v10070 = vadd.f32 %v9399, %v9988
  %v10071 = vld [vmem:[#allocation2 + $0x17] sm:$0xff]
  %v10072 = vld [vmem:[#allocation2 + $0x1f] sm:$0xff]
  %v10073 = vld [vmem:[#allocation2 + $0x27] sm:$0xff]
  %v10074 = vld [vmem:[#allocation2 + $0x2f] sm:$0xff]
  %v10075 = vld [vmem:[#allocation2 + $0x37] sm:$0xff]
  %v10076 = vld [vmem:[#allocation2 + $0x3f] sm:$0xff]
  %v10077 = vld [vmem:[#allocation2 + $0x47] sm:$0xff]
  %v10078 = vld [vmem:[#allocation2 + $0x4f] sm:$0xff]
  %v10079 = vld [vmem:[#allocation2 + $0x57] sm:$0xff]
  %v10080 = vld [vmem:[#allocation2 + $0x5f] sm:$0xff]
  %v10081 = vld [vmem:[#allocation2 + $0x67] sm:$0xff]
  %v10082 = vld [vmem:[#allocation2 + $0x6f] sm:$0xff]
  %v10083 = vld [vmem:[#allocation2 + $0x77] sm:$0xff]
  %v10084 = vld [vmem:[#allocation2 + $0x7f] sm:$0xff]
  %v10085 = vld [vmem:[#allocation2 + $0x87] sm:$0xff]
  %v10086 = vld [vmem:[#allocation2 + $0x8f] sm:$0xff]
  %v10087 = vld [vmem:[#allocation2 + $0x97] sm:$0xff]
  %v10088 = vld [vmem:[#allocation2 + $0x9f] sm:$0xff]
  %v10089 = vld [vmem:[#allocation2 + $0xa7] sm:$0xff]
  %v10090 = vld [vmem:[#allocation2 + $0xaf] sm:$0xff]
  %v10091 = vld [vmem:[#allocation2 + $0xb7] sm:$0xff]
  %v10092 = vld [vmem:[#allocation2 + $0xbf] sm:$0xff]
  %v10093 = vld [vmem:[#allocation2 + $0xc7] sm:$0xff]
  %v10094 = vld [vmem:[#allocation2 + $0xcf] sm:$0xff]
  %v10095 = vld [vmem:[#allocation2 + $0xd7] sm:$0xff]
  %v10096 = vld [vmem:[#allocation2 + $0xdf] sm:$0xff]
  %v10097 = vld [vmem:[#allocation2 + $0xe7] sm:$0xff]
  %v10098 = vld [vmem:[#allocation2 + $0xef] sm:$0xff]
  %v10099 = vld [vmem:[#allocation2 + $0xf7] sm:$0xff]
  %v10100 = vld [vmem:[#allocation2 + $0xff] sm:$0xff]
  %v10101 = vld [vmem:[#allocation2 + $0x107] sm:$0xff]
  %v10102 = vld [vmem:[#allocation2 + $0x10f] sm:$0xff]
  %v10103 = vld [vmem:[#allocation2 + $0x117] sm:$0xff]
  %v10104 = vld [vmem:[#allocation2 + $0x11f] sm:$0xff]
  %v10105 = vld [vmem:[#allocation2 + $0x127] sm:$0xff]
  %v10106 = vld [vmem:[#allocation2 + $0x12f] sm:$0xff]
  %v10107 = vld [vmem:[#allocation2 + $0x137] sm:$0xff]
  %v10108 = vld [vmem:[#allocation2 + $0x13f] sm:$0xff]
  %v10109 = vld [vmem:[#allocation2 + $0x147] sm:$0xff]
  %v10110 = vld [vmem:[#allocation2 + $0x14f] sm:$0xff]
  %v10111 = vld [vmem:[#allocation2 + $0x157] sm:$0xff]
  %v10112 = vld [vmem:[#allocation2 + $0x15f] sm:$0xff]
  %v10113 = vld [vmem:[#allocation2 + $0x167] sm:$0xff]
  %v10114 = vld [vmem:[#allocation2 + $0x16f] sm:$0xff]
  %v10115 = vld [vmem:[#allocation2 + $0x177] sm:$0xff]
  %v10116 = vld [vmem:[#allocation2 + $0x17f] sm:$0xff]
  %v10117 = vld [vmem:[#allocation2 + $0x187] sm:$0xff]
  %v10118 = vld [vmem:[#allocation2 + $0x18f] sm:$0xff]
  %v10119 = vld [vmem:[#allocation2 + $0x197] sm:$0xff]
  %v10120 = vld [vmem:[#allocation2 + $0x19f] sm:$0xff]
  %v10121 = vld [vmem:[#allocation2 + $0x1a7] sm:$0xff]
  %v10122 = vld [vmem:[#allocation2 + $0x1af] sm:$0xff]
  %v10123 = vld [vmem:[#allocation2 + $0x1b7] sm:$0xff]
  %v10124 = vld [vmem:[#allocation2 + $0x1bf] sm:$0xff]
  %v10125 = vld [vmem:[#allocation2 + $0x1c7] sm:$0xff]
  %v10126 = vld [vmem:[#allocation2 + $0x1cf] sm:$0xff]
  %v10127 = vld [vmem:[#allocation2 + $0x1d7] sm:$0xff]
  %v10128 = vld [vmem:[#allocation2 + $0x1df] sm:$0xff]
  %v10129 = vld [vmem:[#allocation2 + $0x1e7] sm:$0xff]
  %v10130 = vld [vmem:[#allocation2 + $0x1ef] sm:$0xff]
  %v10131 = vld [vmem:[#allocation2 + $0x1f7] sm:$0xff]
  %v10132 = vld [vmem:[#allocation2 + $0x1ff] sm:$0xff]
  %v10133 = vld [vmem:[#allocation2 + $0x207] sm:$0xff]
  %v10134 = vld [vmem:[#allocation2 + $0x20f] sm:$0xff]
  %v10135 = vld [vmem:[#allocation2 + $0x217] sm:$0xff]
  %v10136 = vld [vmem:[#allocation2 + $0x21f] sm:$0xff]
  %v10137 = vld [vmem:[#allocation2 + $0x227] sm:$0xff]
  %v10138 = vld [vmem:[#allocation2 + $0x22f] sm:$0xff]
  %v10139 = vld [vmem:[#allocation2 + $0x237] sm:$0xff]
  %v10140 = vld [vmem:[#allocation2 + $0x23f] sm:$0xff]
  %v10141 = vld [vmem:[#allocation2 + $0x247] sm:$0xff]
  %v10142 = vld [vmem:[#allocation2 + $0x24f] sm:$0xff]
  %v10143 = vld [vmem:[#allocation2 + $0x257] sm:$0xff]
  %v10144 = vld [vmem:[#allocation2 + $0x25f] sm:$0xff]
  %v10145 = vld [vmem:[#allocation2 + $0x267] sm:$0xff]
  %v10146 = vld [vmem:[#allocation2 + $0x26f] sm:$0xff]
  %v10147 = vld [vmem:[#allocation2 + $0x277] sm:$0xff]
  %v10148 = vld [vmem:[#allocation2 + $0x27f] sm:$0xff]
  %v10149 = vld [vmem:[#allocation2 + $0x287] sm:$0xff]
  %v10150 = vld [vmem:[#allocation2 + $0x28f] sm:$0xff]
  %v10151 = vld [vmem:[#allocation2 + $0x297] sm:$0xff]
  %s10152 = scalar_lea.vmem %s3, 48
  %v10153 = vld [vmem:[%s10152] sm:$0xf]
  %v10155 = vsel %vm179, %v10071, 0
  %v10158 = vsel %vm179, %v10072, 0
  %v10161 = vsel %vm179, %v10073, 0
  %v10164 = vsel %vm179, %v10074, 0
  %v10167 = vsel %vm179, %v10075, 0
  %v10170 = vsel %vm179, %v10076, 0
  %v10173 = vsel %vm179, %v10077, 0
  %v10176 = vsel %vm179, %v10078, 0
  %v10179 = vsel %vm179, %v10079, 0
  %v10182 = vsel %vm179, %v10080, 0
  %v10185 = vsel %vm179, %v10081, 0
  %v10188 = vsel %vm179, %v10082, 0
  %v10191 = vsel %vm179, %v10083, 0
  %v10194 = vsel %vm179, %v10084, 0
  %v10197 = vsel %vm179, %v10085, 0
  %v10200 = vsel %vm179, %v10086, 0
  %v10203 = vsel %vm179, %v10087, 0
  %v10206 = vsel %vm179, %v10088, 0
  %v10209 = vsel %vm179, %v10089, 0
  %v10212 = vsel %vm179, %v10090, 0
  %v10215 = vsel %vm179, %v10091, 0
  %v10218 = vsel %vm179, %v10092, 0
  %v10221 = vsel %vm179, %v10093, 0
  %v10224 = vsel %vm179, %v10094, 0
  %v10227 = vsel %vm179, %v10095, 0
  %v10230 = vsel %vm179, %v10096, 0
  %v10233 = vsel %vm179, %v10097, 0
  %v10236 = vsel %vm179, %v10098, 0
  %v10239 = vsel %vm179, %v10099, 0
  %v10242 = vsel %vm179, %v10100, 0
  %v10245 = vsel %vm179, %v10101, 0
  %v10248 = vsel %vm179, %v10102, 0
  %v10251 = vsel %vm179, %v10103, 0
  %v10254 = vsel %vm179, %v10104, 0
  %v10257 = vsel %vm179, %v10105, 0
  %v10260 = vsel %vm179, %v10106, 0
  %v10263 = vsel %vm179, %v10107, 0
  %v10266 = vsel %vm179, %v10108, 0
  %v10269 = vsel %vm179, %v10109, 0
  %v10272 = vsel %vm179, %v10110, 0
  %v10275 = vsel %vm179, %v10111, 0
  %v10278 = vsel %vm179, %v10112, 0
  %v10281 = vsel %vm179, %v10113, 0
  %v10284 = vsel %vm179, %v10114, 0
  %v10287 = vsel %vm179, %v10115, 0
  %v10290 = vsel %vm179, %v10116, 0
  %v10293 = vsel %vm179, %v10117, 0
  %v10296 = vsel %vm179, %v10118, 0
  %v10299 = vsel %vm179, %v10119, 0
  %v10302 = vsel %vm179, %v10120, 0
  %v10305 = vsel %vm179, %v10121, 0
  %v10308 = vsel %vm179, %v10122, 0
  %v10311 = vsel %vm179, %v10123, 0
  %v10314 = vsel %vm179, %v10124, 0
  %v10317 = vsel %vm179, %v10125, 0
  %v10320 = vsel %vm179, %v10126, 0
  %v10323 = vsel %vm179, %v10127, 0
  %v10326 = vsel %vm179, %v10128, 0
  %v10329 = vsel %vm179, %v10129, 0
  %v10332 = vsel %vm179, %v10130, 0
  %v10335 = vsel %vm179, %v10131, 0
  %v10338 = vsel %vm179, %v10132, 0
  %v10341 = vsel %vm179, %v10133, 0
  %v10344 = vsel %vm179, %v10134, 0
  %v10347 = vsel %vm179, %v10135, 0
  %v10350 = vsel %vm179, %v10136, 0
  %v10353 = vsel %vm179, %v10137, 0
  %v10356 = vsel %vm179, %v10138, 0
  %v10359 = vsel %vm179, %v10139, 0
  %v10362 = vsel %vm179, %v10140, 0
  %v10365 = vsel %vm179, %v10141, 0
  %v10368 = vsel %vm179, %v10142, 0
  %v10371 = vsel %vm179, %v10143, 0
  %v10374 = vsel %vm179, %v10144, 0
  %v10377 = vsel %vm179, %v10145, 0
  %v10380 = vsel %vm179, %v10146, 0
  %v10383 = vsel %vm179, %v10147, 0
  %v10386 = vsel %vm179, %v10148, 0
  %v10389 = vsel %vm179, %v10149, 0
  %v10392 = vsel %vm179, %v10150, 0
  %v10395 = vsel %vm179, %v10151, 0
  %v10398 = vsel %vm1600, %v10153, 0
  %10400 = vmatpush.msra.mxu0 0.0
  %10401 = vmatpush.msra.mxu0 0.0
  %10402 = vmatpush.msra.mxu0 0.0
  %10403 = vmatpush.msra.mxu0 0.0
  %10404 = vmatpush.msra.mxu0 0.0
  %10405 = vmatpush.msra.mxu0 0.0
  %10406 = vmatpush.msra.mxu0 0.0
  %10407 = vmatpush.msra.mxu0 0.0
  %10408 = vmatpush.msra.mxu0 0.0
  %10409 = vmatpush.msra.mxu0 0.0
  %10410 = vmatpush.msra.mxu0 0.0
  %10411 = vmatpush.msra.mxu0 0.0
  %10412 = vmatpush.msra.mxu0 0.0
  %10413 = vmatpush.msra.mxu0 0.0
  %10414 = vmatpush.msra.mxu0 0.0
  %10415 = vmatpush.msra.mxu0 %v10398
  %10416 = vmatmul.f32.gmra.mxu0 %v10155
  %v10417 = vpop.f32.mrf.mxu0
  %v10418 = vadd.f32 0.0, %v10417
  %10419 = vmatmul.f32.gmra.mxu0 %v10158
  %v10420 = vpop.f32.mrf.mxu0
  %v10421 = vadd.f32 0.0, %v10420
  %10422 = vmatmul.f32.gmra.mxu0 %v10161
  %v10423 = vpop.f32.mrf.mxu0
  %v10424 = vadd.f32 0.0, %v10423
  %10425 = vmatmul.f32.gmra.mxu0 %v10164
  %v10426 = vpop.f32.mrf.mxu0
  %v10427 = vadd.f32 0.0, %v10426
  %10428 = vmatmul.f32.gmra.mxu0 %v10167
  %v10429 = vpop.f32.mrf.mxu0
  %v10430 = vadd.f32 0.0, %v10429
  %10431 = vmatmul.f32.gmra.mxu0 %v10170
  %v10432 = vpop.f32.mrf.mxu0
  %v10433 = vadd.f32 0.0, %v10432
  %10434 = vmatmul.f32.gmra.mxu0 %v10173
  %v10435 = vpop.f32.mrf.mxu0
  %v10436 = vadd.f32 0.0, %v10435
  %10437 = vmatmul.f32.gmra.mxu0 %v10176
  %v10438 = vpop.f32.mrf.mxu0
  %v10439 = vadd.f32 0.0, %v10438
  %10440 = vmatmul.f32.gmra.mxu0 %v10179
  %v10441 = vpop.f32.mrf.mxu0
  %v10442 = vadd.f32 0.0, %v10441
  %10443 = vmatmul.f32.gmra.mxu0 %v10182
  %v10444 = vpop.f32.mrf.mxu0
  %v10445 = vadd.f32 0.0, %v10444
  %10446 = vmatmul.f32.gmra.mxu0 %v10185
  %v10447 = vpop.f32.mrf.mxu0
  %v10448 = vadd.f32 0.0, %v10447
  %10449 = vmatmul.f32.gmra.mxu0 %v10188
  %v10450 = vpop.f32.mrf.mxu0
  %v10451 = vadd.f32 0.0, %v10450
  %10452 = vmatmul.f32.gmra.mxu0 %v10191
  %v10453 = vpop.f32.mrf.mxu0
  %v10454 = vadd.f32 0.0, %v10453
  %10455 = vmatmul.f32.gmra.mxu0 %v10194
  %v10456 = vpop.f32.mrf.mxu0
  %v10457 = vadd.f32 0.0, %v10456
  %10458 = vmatmul.f32.gmra.mxu0 %v10197
  %v10459 = vpop.f32.mrf.mxu0
  %v10460 = vadd.f32 0.0, %v10459
  %10461 = vmatmul.f32.gmra.mxu0 %v10200
  %v10462 = vpop.f32.mrf.mxu0
  %v10463 = vadd.f32 0.0, %v10462
  %10464 = vmatmul.f32.gmra.mxu0 %v10203
  %v10465 = vpop.f32.mrf.mxu0
  %v10466 = vadd.f32 0.0, %v10465
  %10467 = vmatmul.f32.gmra.mxu0 %v10206
  %v10468 = vpop.f32.mrf.mxu0
  %v10469 = vadd.f32 0.0, %v10468
  %10470 = vmatmul.f32.gmra.mxu0 %v10209
  %v10471 = vpop.f32.mrf.mxu0
  %v10472 = vadd.f32 0.0, %v10471
  %10473 = vmatmul.f32.gmra.mxu0 %v10212
  %v10474 = vpop.f32.mrf.mxu0
  %v10475 = vadd.f32 0.0, %v10474
  %10476 = vmatmul.f32.gmra.mxu0 %v10215
  %v10477 = vpop.f32.mrf.mxu0
  %v10478 = vadd.f32 0.0, %v10477
  %10479 = vmatmul.f32.gmra.mxu0 %v10218
  %v10480 = vpop.f32.mrf.mxu0
  %v10481 = vadd.f32 0.0, %v10480
  %10482 = vmatmul.f32.gmra.mxu0 %v10221
  %v10483 = vpop.f32.mrf.mxu0
  %v10484 = vadd.f32 0.0, %v10483
  %10485 = vmatmul.f32.gmra.mxu0 %v10224
  %v10486 = vpop.f32.mrf.mxu0
  %v10487 = vadd.f32 0.0, %v10486
  %10488 = vmatmul.f32.gmra.mxu0 %v10227
  %v10489 = vpop.f32.mrf.mxu0
  %v10490 = vadd.f32 0.0, %v10489
  %10491 = vmatmul.f32.gmra.mxu0 %v10230
  %v10492 = vpop.f32.mrf.mxu0
  %v10493 = vadd.f32 0.0, %v10492
  %10494 = vmatmul.f32.gmra.mxu0 %v10233
  %v10495 = vpop.f32.mrf.mxu0
  %v10496 = vadd.f32 0.0, %v10495
  %10497 = vmatmul.f32.gmra.mxu0 %v10236
  %v10498 = vpop.f32.mrf.mxu0
  %v10499 = vadd.f32 0.0, %v10498
  %10500 = vmatmul.f32.gmra.mxu0 %v10239
  %v10501 = vpop.f32.mrf.mxu0
  %v10502 = vadd.f32 0.0, %v10501
  %10503 = vmatmul.f32.gmra.mxu0 %v10242
  %v10504 = vpop.f32.mrf.mxu0
  %v10505 = vadd.f32 0.0, %v10504
  %10506 = vmatmul.f32.gmra.mxu0 %v10245
  %v10507 = vpop.f32.mrf.mxu0
  %v10508 = vadd.f32 0.0, %v10507
  %10509 = vmatmul.f32.gmra.mxu0 %v10248
  %v10510 = vpop.f32.mrf.mxu0
  %v10511 = vadd.f32 0.0, %v10510
  %10512 = vmatmul.f32.gmra.mxu0 %v10251
  %v10513 = vpop.f32.mrf.mxu0
  %v10514 = vadd.f32 0.0, %v10513
  %10515 = vmatmul.f32.gmra.mxu0 %v10254
  %v10516 = vpop.f32.mrf.mxu0
  %v10517 = vadd.f32 0.0, %v10516
  %10518 = vmatmul.f32.gmra.mxu0 %v10257
  %v10519 = vpop.f32.mrf.mxu0
  %v10520 = vadd.f32 0.0, %v10519
  %10521 = vmatmul.f32.gmra.mxu0 %v10260
  %v10522 = vpop.f32.mrf.mxu0
  %v10523 = vadd.f32 0.0, %v10522
  %10524 = vmatmul.f32.gmra.mxu0 %v10263
  %v10525 = vpop.f32.mrf.mxu0
  %v10526 = vadd.f32 0.0, %v10525
  %10527 = vmatmul.f32.gmra.mxu0 %v10266
  %v10528 = vpop.f32.mrf.mxu0
  %v10529 = vadd.f32 0.0, %v10528
  %10530 = vmatmul.f32.gmra.mxu0 %v10269
  %v10531 = vpop.f32.mrf.mxu0
  %v10532 = vadd.f32 0.0, %v10531
  %10533 = vmatmul.f32.gmra.mxu0 %v10272
  %v10534 = vpop.f32.mrf.mxu0
  %v10535 = vadd.f32 0.0, %v10534
  %10536 = vmatmul.f32.gmra.mxu0 %v10275
  %v10537 = vpop.f32.mrf.mxu0
  %v10538 = vadd.f32 0.0, %v10537
  %10539 = vmatmul.f32.gmra.mxu0 %v10278
  %v10540 = vpop.f32.mrf.mxu0
  %v10541 = vadd.f32 0.0, %v10540
  %10542 = vmatmul.f32.gmra.mxu0 %v10281
  %v10543 = vpop.f32.mrf.mxu0
  %v10544 = vadd.f32 0.0, %v10543
  %10545 = vmatmul.f32.gmra.mxu0 %v10284
  %v10546 = vpop.f32.mrf.mxu0
  %v10547 = vadd.f32 0.0, %v10546
  %10548 = vmatmul.f32.gmra.mxu0 %v10287
  %v10549 = vpop.f32.mrf.mxu0
  %v10550 = vadd.f32 0.0, %v10549
  %10551 = vmatmul.f32.gmra.mxu0 %v10290
  %v10552 = vpop.f32.mrf.mxu0
  %v10553 = vadd.f32 0.0, %v10552
  %10554 = vmatmul.f32.gmra.mxu0 %v10293
  %v10555 = vpop.f32.mrf.mxu0
  %v10556 = vadd.f32 0.0, %v10555
  %10557 = vmatmul.f32.gmra.mxu0 %v10296
  %v10558 = vpop.f32.mrf.mxu0
  %v10559 = vadd.f32 0.0, %v10558
  %10560 = vmatmul.f32.gmra.mxu0 %v10299
  %v10561 = vpop.f32.mrf.mxu0
  %v10562 = vadd.f32 0.0, %v10561
  %10563 = vmatmul.f32.gmra.mxu0 %v10302
  %v10564 = vpop.f32.mrf.mxu0
  %v10565 = vadd.f32 0.0, %v10564
  %10566 = vmatmul.f32.gmra.mxu0 %v10305
  %v10567 = vpop.f32.mrf.mxu0
  %v10568 = vadd.f32 0.0, %v10567
  %10569 = vmatmul.f32.gmra.mxu0 %v10308
  %v10570 = vpop.f32.mrf.mxu0
  %v10571 = vadd.f32 0.0, %v10570
  %10572 = vmatmul.f32.gmra.mxu0 %v10311
  %v10573 = vpop.f32.mrf.mxu0
  %v10574 = vadd.f32 0.0, %v10573
  %10575 = vmatmul.f32.gmra.mxu0 %v10314
  %v10576 = vpop.f32.mrf.mxu0
  %v10577 = vadd.f32 0.0, %v10576
  %10578 = vmatmul.f32.gmra.mxu0 %v10317
  %v10579 = vpop.f32.mrf.mxu0
  %v10580 = vadd.f32 0.0, %v10579
  %10581 = vmatmul.f32.gmra.mxu0 %v10320
  %v10582 = vpop.f32.mrf.mxu0
  %v10583 = vadd.f32 0.0, %v10582
  %10584 = vmatmul.f32.gmra.mxu0 %v10323
  %v10585 = vpop.f32.mrf.mxu0
  %v10586 = vadd.f32 0.0, %v10585
  %10587 = vmatmul.f32.gmra.mxu0 %v10326
  %v10588 = vpop.f32.mrf.mxu0
  %v10589 = vadd.f32 0.0, %v10588
  %10590 = vmatmul.f32.gmra.mxu0 %v10329
  %v10591 = vpop.f32.mrf.mxu0
  %v10592 = vadd.f32 0.0, %v10591
  %10593 = vmatmul.f32.gmra.mxu0 %v10332
  %v10594 = vpop.f32.mrf.mxu0
  %v10595 = vadd.f32 0.0, %v10594
  %10596 = vmatmul.f32.gmra.mxu0 %v10335
  %v10597 = vpop.f32.mrf.mxu0
  %v10598 = vadd.f32 0.0, %v10597
  %10599 = vmatmul.f32.gmra.mxu0 %v10338
  %v10600 = vpop.f32.mrf.mxu0
  %v10601 = vadd.f32 0.0, %v10600
  %10602 = vmatmul.f32.gmra.mxu0 %v10341
  %v10603 = vpop.f32.mrf.mxu0
  %v10604 = vadd.f32 0.0, %v10603
  %10605 = vmatmul.f32.gmra.mxu0 %v10344
  %v10606 = vpop.f32.mrf.mxu0
  %v10607 = vadd.f32 0.0, %v10606
  %10608 = vmatmul.f32.gmra.mxu0 %v10347
  %v10609 = vpop.f32.mrf.mxu0
  %v10610 = vadd.f32 0.0, %v10609
  %10611 = vmatmul.f32.gmra.mxu0 %v10350
  %v10612 = vpop.f32.mrf.mxu0
  %v10613 = vadd.f32 0.0, %v10612
  %10614 = vmatmul.f32.gmra.mxu0 %v10353
  %v10615 = vpop.f32.mrf.mxu0
  %v10616 = vadd.f32 0.0, %v10615
  %10617 = vmatmul.f32.gmra.mxu0 %v10356
  %v10618 = vpop.f32.mrf.mxu0
  %v10619 = vadd.f32 0.0, %v10618
  %10620 = vmatmul.f32.gmra.mxu0 %v10359
  %v10621 = vpop.f32.mrf.mxu0
  %v10622 = vadd.f32 0.0, %v10621
  %10623 = vmatmul.f32.gmra.mxu0 %v10362
  %v10624 = vpop.f32.mrf.mxu0
  %v10625 = vadd.f32 0.0, %v10624
  %10626 = vmatmul.f32.gmra.mxu0 %v10365
  %v10627 = vpop.f32.mrf.mxu0
  %v10628 = vadd.f32 0.0, %v10627
  %10629 = vmatmul.f32.gmra.mxu0 %v10368
  %v10630 = vpop.f32.mrf.mxu0
  %v10631 = vadd.f32 0.0, %v10630
  %10632 = vmatmul.f32.gmra.mxu0 %v10371
  %v10633 = vpop.f32.mrf.mxu0
  %v10634 = vadd.f32 0.0, %v10633
  %10635 = vmatmul.f32.gmra.mxu0 %v10374
  %v10636 = vpop.f32.mrf.mxu0
  %v10637 = vadd.f32 0.0, %v10636
  %10638 = vmatmul.f32.gmra.mxu0 %v10377
  %v10639 = vpop.f32.mrf.mxu0
  %v10640 = vadd.f32 0.0, %v10639
  %10641 = vmatmul.f32.gmra.mxu0 %v10380
  %v10642 = vpop.f32.mrf.mxu0
  %v10643 = vadd.f32 0.0, %v10642
  %10644 = vmatmul.f32.gmra.mxu0 %v10383
  %v10645 = vpop.f32.mrf.mxu0
  %v10646 = vadd.f32 0.0, %v10645
  %10647 = vmatmul.f32.gmra.mxu0 %v10386
  %v10648 = vpop.f32.mrf.mxu0
  %v10649 = vadd.f32 0.0, %v10648
  %10650 = vmatmul.f32.gmra.mxu0 %v10389
  %v10651 = vpop.f32.mrf.mxu0
  %v10652 = vadd.f32 0.0, %v10651
  %10653 = vmatmul.f32.gmra.mxu0 %v10392
  %v10654 = vpop.f32.mrf.mxu0
  %v10655 = vadd.f32 0.0, %v10654
  %10656 = vmatmul.f32.gmra.mxu0 %v10395
  %v10657 = vpop.f32.mrf.mxu0
  %v10658 = vadd.f32 0.0, %v10657
  %10659 = vdwg.mxu0
  %v10660 = vadd.f32 %v9990, %v10418
  %v10661 = vadd.f32 %v9991, %v10421
  %v10662 = vadd.f32 %v9992, %v10424
  %v10663 = vadd.f32 %v9993, %v10427
  %v10664 = vadd.f32 %v9994, %v10430
  %v10665 = vadd.f32 %v9995, %v10433
  %v10666 = vadd.f32 %v9996, %v10436
  %v10667 = vadd.f32 %v9997, %v10439
  %v10668 = vadd.f32 %v9998, %v10442
  %v10669 = vadd.f32 %v9999, %v10445
  %v10670 = vadd.f32 %v10000, %v10448
  %v10671 = vadd.f32 %v10001, %v10451
  %v10672 = vadd.f32 %v10002, %v10454
  %v10673 = vadd.f32 %v10003, %v10457
  %v10674 = vadd.f32 %v10004, %v10460
  %v10675 = vadd.f32 %v10005, %v10463
  %v10676 = vadd.f32 %v10006, %v10466
  %v10677 = vadd.f32 %v10007, %v10469
  %v10678 = vadd.f32 %v10008, %v10472
  %v10679 = vadd.f32 %v10009, %v10475
  %v10680 = vadd.f32 %v10010, %v10478
  %v10681 = vadd.f32 %v10011, %v10481
  %v10682 = vadd.f32 %v10012, %v10484
  %v10683 = vadd.f32 %v10013, %v10487
  %v10684 = vadd.f32 %v10014, %v10490
  %v10685 = vadd.f32 %v10015, %v10493
  %v10686 = vadd.f32 %v10016, %v10496
  %v10687 = vadd.f32 %v10017, %v10499
  %v10688 = vadd.f32 %v10018, %v10502
  %v10689 = vadd.f32 %v10019, %v10505
  %v10690 = vadd.f32 %v10020, %v10508
  %v10691 = vadd.f32 %v10021, %v10511
  %v10692 = vadd.f32 %v10022, %v10514
  %v10693 = vadd.f32 %v10023, %v10517
  %v10694 = vadd.f32 %v10024, %v10520
  %v10695 = vadd.f32 %v10025, %v10523
  %v10696 = vadd.f32 %v10026, %v10526
  %v10697 = vadd.f32 %v10027, %v10529
  %v10698 = vadd.f32 %v10028, %v10532
  %v10699 = vadd.f32 %v10029, %v10535
  %v10700 = vadd.f32 %v10030, %v10538
  %v10701 = vadd.f32 %v10031, %v10541
  %v10702 = vadd.f32 %v10032, %v10544
  %v10703 = vadd.f32 %v10033, %v10547
  %v10704 = vadd.f32 %v10034, %v10550
  %v10705 = vadd.f32 %v10035, %v10553
  %v10706 = vadd.f32 %v10036, %v10556
  %v10707 = vadd.f32 %v10037, %v10559
  %v10708 = vadd.f32 %v10038, %v10562
  %v10709 = vadd.f32 %v10039, %v10565
  %v10710 = vadd.f32 %v10040, %v10568
  %v10711 = vadd.f32 %v10041, %v10571
  %v10712 = vadd.f32 %v10042, %v10574
  %v10713 = vadd.f32 %v10043, %v10577
  %v10714 = vadd.f32 %v10044, %v10580
  %v10715 = vadd.f32 %v10045, %v10583
  %v10716 = vadd.f32 %v10046, %v10586
  %v10717 = vadd.f32 %v10047, %v10589
  %v10718 = vadd.f32 %v10048, %v10592
  %v10719 = vadd.f32 %v10049, %v10595
  %v10720 = vadd.f32 %v10050, %v10598
  %v10721 = vadd.f32 %v10051, %v10601
  %v10722 = vadd.f32 %v10052, %v10604
  %v10723 = vadd.f32 %v10053, %v10607
  %v10724 = vadd.f32 %v10054, %v10610
  %v10725 = vadd.f32 %v10055, %v10613
  %v10726 = vadd.f32 %v10056, %v10616
  %v10727 = vadd.f32 %v10057, %v10619
  %v10728 = vadd.f32 %v10058, %v10622
  %v10729 = vadd.f32 %v10059, %v10625
  %v10730 = vadd.f32 %v10060, %v10628
  %v10731 = vadd.f32 %v10061, %v10631
  %v10732 = vadd.f32 %v10062, %v10634
  %v10733 = vadd.f32 %v10063, %v10637
  %v10734 = vadd.f32 %v10064, %v10640
  %v10735 = vadd.f32 %v10065, %v10643
  %v10736 = vadd.f32 %v10066, %v10646
  %v10737 = vadd.f32 %v10067, %v10649
  %v10738 = vadd.f32 %v10068, %v10652
  %v10739 = vadd.f32 %v10069, %v10655
  %v10740 = vadd.f32 %v10070, %v10658
  %v10741 = vld [vmem:[#allocation2 + $0x18] sm:$0xff]
  %v10742 = vld [vmem:[#allocation2 + $0x20] sm:$0xff]
  %v10743 = vld [vmem:[#allocation2 + $0x28] sm:$0xff]
  %v10744 = vld [vmem:[#allocation2 + $0x30] sm:$0xff]
  %v10745 = vld [vmem:[#allocation2 + $0x38] sm:$0xff]
  %v10746 = vld [vmem:[#allocation2 + $0x40] sm:$0xff]
  %v10747 = vld [vmem:[#allocation2 + $0x48] sm:$0xff]
  %v10748 = vld [vmem:[#allocation2 + $0x50] sm:$0xff]
  %v10749 = vld [vmem:[#allocation2 + $0x58] sm:$0xff]
  %v10750 = vld [vmem:[#allocation2 + $0x60] sm:$0xff]
  %v10751 = vld [vmem:[#allocation2 + $0x68] sm:$0xff]
  %v10752 = vld [vmem:[#allocation2 + $0x70] sm:$0xff]
  %v10753 = vld [vmem:[#allocation2 + $0x78] sm:$0xff]
  %v10754 = vld [vmem:[#allocation2 + $0x80] sm:$0xff]
  %v10755 = vld [vmem:[#allocation2 + $0x88] sm:$0xff]
  %v10756 = vld [vmem:[#allocation2 + $0x90] sm:$0xff]
  %v10757 = vld [vmem:[#allocation2 + $0x98] sm:$0xff]
  %v10758 = vld [vmem:[#allocation2 + $0xa0] sm:$0xff]
  %v10759 = vld [vmem:[#allocation2 + $0xa8] sm:$0xff]
  %v10760 = vld [vmem:[#allocation2 + $0xb0] sm:$0xff]
  %v10761 = vld [vmem:[#allocation2 + $0xb8] sm:$0xff]
  %v10762 = vld [vmem:[#allocation2 + $0xc0] sm:$0xff]
  %v10763 = vld [vmem:[#allocation2 + $0xc8] sm:$0xff]
  %v10764 = vld [vmem:[#allocation2 + $0xd0] sm:$0xff]
  %v10765 = vld [vmem:[#allocation2 + $0xd8] sm:$0xff]
  %v10766 = vld [vmem:[#allocation2 + $0xe0] sm:$0xff]
  %v10767 = vld [vmem:[#allocation2 + $0xe8] sm:$0xff]
  %v10768 = vld [vmem:[#allocation2 + $0xf0] sm:$0xff]
  %v10769 = vld [vmem:[#allocation2 + $0xf8] sm:$0xff]
  %v10770 = vld [vmem:[#allocation2 + $0x100] sm:$0xff]
  %v10771 = vld [vmem:[#allocation2 + $0x108] sm:$0xff]
  %v10772 = vld [vmem:[#allocation2 + $0x110] sm:$0xff]
  %v10773 = vld [vmem:[#allocation2 + $0x118] sm:$0xff]
  %v10774 = vld [vmem:[#allocation2 + $0x120] sm:$0xff]
  %v10775 = vld [vmem:[#allocation2 + $0x128] sm:$0xff]
  %v10776 = vld [vmem:[#allocation2 + $0x130] sm:$0xff]
  %v10777 = vld [vmem:[#allocation2 + $0x138] sm:$0xff]
  %v10778 = vld [vmem:[#allocation2 + $0x140] sm:$0xff]
  %v10779 = vld [vmem:[#allocation2 + $0x148] sm:$0xff]
  %v10780 = vld [vmem:[#allocation2 + $0x150] sm:$0xff]
  %v10781 = vld [vmem:[#allocation2 + $0x158] sm:$0xff]
  %v10782 = vld [vmem:[#allocation2 + $0x160] sm:$0xff]
  %v10783 = vld [vmem:[#allocation2 + $0x168] sm:$0xff]
  %v10784 = vld [vmem:[#allocation2 + $0x170] sm:$0xff]
  %v10785 = vld [vmem:[#allocation2 + $0x178] sm:$0xff]
  %v10786 = vld [vmem:[#allocation2 + $0x180] sm:$0xff]
  %v10787 = vld [vmem:[#allocation2 + $0x188] sm:$0xff]
  %v10788 = vld [vmem:[#allocation2 + $0x190] sm:$0xff]
  %v10789 = vld [vmem:[#allocation2 + $0x198] sm:$0xff]
  %v10790 = vld [vmem:[#allocation2 + $0x1a0] sm:$0xff]
  %v10791 = vld [vmem:[#allocation2 + $0x1a8] sm:$0xff]
  %v10792 = vld [vmem:[#allocation2 + $0x1b0] sm:$0xff]
  %v10793 = vld [vmem:[#allocation2 + $0x1b8] sm:$0xff]
  %v10794 = vld [vmem:[#allocation2 + $0x1c0] sm:$0xff]
  %v10795 = vld [vmem:[#allocation2 + $0x1c8] sm:$0xff]
  %v10796 = vld [vmem:[#allocation2 + $0x1d0] sm:$0xff]
  %v10797 = vld [vmem:[#allocation2 + $0x1d8] sm:$0xff]
  %v10798 = vld [vmem:[#allocation2 + $0x1e0] sm:$0xff]
  %v10799 = vld [vmem:[#allocation2 + $0x1e8] sm:$0xff]
  %v10800 = vld [vmem:[#allocation2 + $0x1f0] sm:$0xff]
  %v10801 = vld [vmem:[#allocation2 + $0x1f8] sm:$0xff]
  %v10802 = vld [vmem:[#allocation2 + $0x200] sm:$0xff]
  %v10803 = vld [vmem:[#allocation2 + $0x208] sm:$0xff]
  %v10804 = vld [vmem:[#allocation2 + $0x210] sm:$0xff]
  %v10805 = vld [vmem:[#allocation2 + $0x218] sm:$0xff]
  %v10806 = vld [vmem:[#allocation2 + $0x220] sm:$0xff]
  %v10807 = vld [vmem:[#allocation2 + $0x228] sm:$0xff]
  %v10808 = vld [vmem:[#allocation2 + $0x230] sm:$0xff]
  %v10809 = vld [vmem:[#allocation2 + $0x238] sm:$0xff]
  %v10810 = vld [vmem:[#allocation2 + $0x240] sm:$0xff]
  %v10811 = vld [vmem:[#allocation2 + $0x248] sm:$0xff]
  %v10812 = vld [vmem:[#allocation2 + $0x250] sm:$0xff]
  %v10813 = vld [vmem:[#allocation2 + $0x258] sm:$0xff]
  %v10814 = vld [vmem:[#allocation2 + $0x260] sm:$0xff]
  %v10815 = vld [vmem:[#allocation2 + $0x268] sm:$0xff]
  %v10816 = vld [vmem:[#allocation2 + $0x270] sm:$0xff]
  %v10817 = vld [vmem:[#allocation2 + $0x278] sm:$0xff]
  %v10818 = vld [vmem:[#allocation2 + $0x280] sm:$0xff]
  %v10819 = vld [vmem:[#allocation2 + $0x288] sm:$0xff]
  %v10820 = vld [vmem:[#allocation2 + $0x290] sm:$0xff]
  %v10821 = vld [vmem:[#allocation2 + $0x298] sm:$0xff]
  %s10822 = scalar_lea.vmem %s3, 52
  %v10823 = vld [vmem:[%s10822] sm:$0xf]
  %v10825 = vsel %vm179, %v10741, 0
  %v10828 = vsel %vm179, %v10742, 0
  %v10831 = vsel %vm179, %v10743, 0
  %v10834 = vsel %vm179, %v10744, 0
  %v10837 = vsel %vm179, %v10745, 0
  %v10840 = vsel %vm179, %v10746, 0
  %v10843 = vsel %vm179, %v10747, 0
  %v10846 = vsel %vm179, %v10748, 0
  %v10849 = vsel %vm179, %v10749, 0
  %v10852 = vsel %vm179, %v10750, 0
  %v10855 = vsel %vm179, %v10751, 0
  %v10858 = vsel %vm179, %v10752, 0
  %v10861 = vsel %vm179, %v10753, 0
  %v10864 = vsel %vm179, %v10754, 0
  %v10867 = vsel %vm179, %v10755, 0
  %v10870 = vsel %vm179, %v10756, 0
  %v10873 = vsel %vm179, %v10757, 0
  %v10876 = vsel %vm179, %v10758, 0
  %v10879 = vsel %vm179, %v10759, 0
  %v10882 = vsel %vm179, %v10760, 0
  %v10885 = vsel %vm179, %v10761, 0
  %v10888 = vsel %vm179, %v10762, 0
  %v10891 = vsel %vm179, %v10763, 0
  %v10894 = vsel %vm179, %v10764, 0
  %v10897 = vsel %vm179, %v10765, 0
  %v10900 = vsel %vm179, %v10766, 0
  %v10903 = vsel %vm179, %v10767, 0
  %v10906 = vsel %vm179, %v10768, 0
  %v10909 = vsel %vm179, %v10769, 0
  %v10912 = vsel %vm179, %v10770, 0
  %v10915 = vsel %vm179, %v10771, 0
  %v10918 = vsel %vm179, %v10772, 0
  %v10921 = vsel %vm179, %v10773, 0
  %v10924 = vsel %vm179, %v10774, 0
  %v10927 = vsel %vm179, %v10775, 0
  %v10930 = vsel %vm179, %v10776, 0
  %v10933 = vsel %vm179, %v10777, 0
  %v10936 = vsel %vm179, %v10778, 0
  %v10939 = vsel %vm179, %v10779, 0
  %v10942 = vsel %vm179, %v10780, 0
  %v10945 = vsel %vm179, %v10781, 0
  %v10948 = vsel %vm179, %v10782, 0
  %v10951 = vsel %vm179, %v10783, 0
  %v10954 = vsel %vm179, %v10784, 0
  %v10957 = vsel %vm179, %v10785, 0
  %v10960 = vsel %vm179, %v10786, 0
  %v10963 = vsel %vm179, %v10787, 0
  %v10966 = vsel %vm179, %v10788, 0
  %v10969 = vsel %vm179, %v10789, 0
  %v10972 = vsel %vm179, %v10790, 0
  %v10975 = vsel %vm179, %v10791, 0
  %v10978 = vsel %vm179, %v10792, 0
  %v10981 = vsel %vm179, %v10793, 0
  %v10984 = vsel %vm179, %v10794, 0
  %v10987 = vsel %vm179, %v10795, 0
  %v10990 = vsel %vm179, %v10796, 0
  %v10993 = vsel %vm179, %v10797, 0
  %v10996 = vsel %vm179, %v10798, 0
  %v10999 = vsel %vm179, %v10799, 0
  %v11002 = vsel %vm179, %v10800, 0
  %v11005 = vsel %vm179, %v10801, 0
  %v11008 = vsel %vm179, %v10802, 0
  %v11011 = vsel %vm179, %v10803, 0
  %v11014 = vsel %vm179, %v10804, 0
  %v11017 = vsel %vm179, %v10805, 0
  %v11020 = vsel %vm179, %v10806, 0
  %v11023 = vsel %vm179, %v10807, 0
  %v11026 = vsel %vm179, %v10808, 0
  %v11029 = vsel %vm179, %v10809, 0
  %v11032 = vsel %vm179, %v10810, 0
  %v11035 = vsel %vm179, %v10811, 0
  %v11038 = vsel %vm179, %v10812, 0
  %v11041 = vsel %vm179, %v10813, 0
  %v11044 = vsel %vm179, %v10814, 0
  %v11047 = vsel %vm179, %v10815, 0
  %v11050 = vsel %vm179, %v10816, 0
  %v11053 = vsel %vm179, %v10817, 0
  %v11056 = vsel %vm179, %v10818, 0
  %v11059 = vsel %vm179, %v10819, 0
  %v11062 = vsel %vm179, %v10820, 0
  %v11065 = vsel %vm179, %v10821, 0
  %v11068 = vsel %vm1600, %v10823, 0
  %11070 = vmatpush.msra.mxu0 0.0
  %11071 = vmatpush.msra.mxu0 0.0
  %11072 = vmatpush.msra.mxu0 0.0
  %11073 = vmatpush.msra.mxu0 0.0
  %11074 = vmatpush.msra.mxu0 0.0
  %11075 = vmatpush.msra.mxu0 0.0
  %11076 = vmatpush.msra.mxu0 0.0
  %11077 = vmatpush.msra.mxu0 0.0
  %11078 = vmatpush.msra.mxu0 0.0
  %11079 = vmatpush.msra.mxu0 0.0
  %11080 = vmatpush.msra.mxu0 0.0
  %11081 = vmatpush.msra.mxu0 0.0
  %11082 = vmatpush.msra.mxu0 0.0
  %11083 = vmatpush.msra.mxu0 0.0
  %11084 = vmatpush.msra.mxu0 0.0
  %11085 = vmatpush.msra.mxu0 %v11068
  %11086 = vmatmul.f32.gmra.mxu0 %v10825
  %v11087 = vpop.f32.mrf.mxu0
  %v11088 = vadd.f32 0.0, %v11087
  %11089 = vmatmul.f32.gmra.mxu0 %v10828
  %v11090 = vpop.f32.mrf.mxu0
  %v11091 = vadd.f32 0.0, %v11090
  %11092 = vmatmul.f32.gmra.mxu0 %v10831
  %v11093 = vpop.f32.mrf.mxu0
  %v11094 = vadd.f32 0.0, %v11093
  %11095 = vmatmul.f32.gmra.mxu0 %v10834
  %v11096 = vpop.f32.mrf.mxu0
  %v11097 = vadd.f32 0.0, %v11096
  %11098 = vmatmul.f32.gmra.mxu0 %v10837
  %v11099 = vpop.f32.mrf.mxu0
  %v11100 = vadd.f32 0.0, %v11099
  %11101 = vmatmul.f32.gmra.mxu0 %v10840
  %v11102 = vpop.f32.mrf.mxu0
  %v11103 = vadd.f32 0.0, %v11102
  %11104 = vmatmul.f32.gmra.mxu0 %v10843
  %v11105 = vpop.f32.mrf.mxu0
  %v11106 = vadd.f32 0.0, %v11105
  %11107 = vmatmul.f32.gmra.mxu0 %v10846
  %v11108 = vpop.f32.mrf.mxu0
  %v11109 = vadd.f32 0.0, %v11108
  %11110 = vmatmul.f32.gmra.mxu0 %v10849
  %v11111 = vpop.f32.mrf.mxu0
  %v11112 = vadd.f32 0.0, %v11111
  %11113 = vmatmul.f32.gmra.mxu0 %v10852
  %v11114 = vpop.f32.mrf.mxu0
  %v11115 = vadd.f32 0.0, %v11114
  %11116 = vmatmul.f32.gmra.mxu0 %v10855
  %v11117 = vpop.f32.mrf.mxu0
  %v11118 = vadd.f32 0.0, %v11117
  %11119 = vmatmul.f32.gmra.mxu0 %v10858
  %v11120 = vpop.f32.mrf.mxu0
  %v11121 = vadd.f32 0.0, %v11120
  %11122 = vmatmul.f32.gmra.mxu0 %v10861
  %v11123 = vpop.f32.mrf.mxu0
  %v11124 = vadd.f32 0.0, %v11123
  %11125 = vmatmul.f32.gmra.mxu0 %v10864
  %v11126 = vpop.f32.mrf.mxu0
  %v11127 = vadd.f32 0.0, %v11126
  %11128 = vmatmul.f32.gmra.mxu0 %v10867
  %v11129 = vpop.f32.mrf.mxu0
  %v11130 = vadd.f32 0.0, %v11129
  %11131 = vmatmul.f32.gmra.mxu0 %v10870
  %v11132 = vpop.f32.mrf.mxu0
  %v11133 = vadd.f32 0.0, %v11132
  %11134 = vmatmul.f32.gmra.mxu0 %v10873
  %v11135 = vpop.f32.mrf.mxu0
  %v11136 = vadd.f32 0.0, %v11135
  %11137 = vmatmul.f32.gmra.mxu0 %v10876
  %v11138 = vpop.f32.mrf.mxu0
  %v11139 = vadd.f32 0.0, %v11138
  %11140 = vmatmul.f32.gmra.mxu0 %v10879
  %v11141 = vpop.f32.mrf.mxu0
  %v11142 = vadd.f32 0.0, %v11141
  %11143 = vmatmul.f32.gmra.mxu0 %v10882
  %v11144 = vpop.f32.mrf.mxu0
  %v11145 = vadd.f32 0.0, %v11144
  %11146 = vmatmul.f32.gmra.mxu0 %v10885
  %v11147 = vpop.f32.mrf.mxu0
  %v11148 = vadd.f32 0.0, %v11147
  %11149 = vmatmul.f32.gmra.mxu0 %v10888
  %v11150 = vpop.f32.mrf.mxu0
  %v11151 = vadd.f32 0.0, %v11150
  %11152 = vmatmul.f32.gmra.mxu0 %v10891
  %v11153 = vpop.f32.mrf.mxu0
  %v11154 = vadd.f32 0.0, %v11153
  %11155 = vmatmul.f32.gmra.mxu0 %v10894
  %v11156 = vpop.f32.mrf.mxu0
  %v11157 = vadd.f32 0.0, %v11156
  %11158 = vmatmul.f32.gmra.mxu0 %v10897
  %v11159 = vpop.f32.mrf.mxu0
  %v11160 = vadd.f32 0.0, %v11159
  %11161 = vmatmul.f32.gmra.mxu0 %v10900
  %v11162 = vpop.f32.mrf.mxu0
  %v11163 = vadd.f32 0.0, %v11162
  %11164 = vmatmul.f32.gmra.mxu0 %v10903
  %v11165 = vpop.f32.mrf.mxu0
  %v11166 = vadd.f32 0.0, %v11165
  %11167 = vmatmul.f32.gmra.mxu0 %v10906
  %v11168 = vpop.f32.mrf.mxu0
  %v11169 = vadd.f32 0.0, %v11168
  %11170 = vmatmul.f32.gmra.mxu0 %v10909
  %v11171 = vpop.f32.mrf.mxu0
  %v11172 = vadd.f32 0.0, %v11171
  %11173 = vmatmul.f32.gmra.mxu0 %v10912
  %v11174 = vpop.f32.mrf.mxu0
  %v11175 = vadd.f32 0.0, %v11174
  %11176 = vmatmul.f32.gmra.mxu0 %v10915
  %v11177 = vpop.f32.mrf.mxu0
  %v11178 = vadd.f32 0.0, %v11177
  %11179 = vmatmul.f32.gmra.mxu0 %v10918
  %v11180 = vpop.f32.mrf.mxu0
  %v11181 = vadd.f32 0.0, %v11180
  %11182 = vmatmul.f32.gmra.mxu0 %v10921
  %v11183 = vpop.f32.mrf.mxu0
  %v11184 = vadd.f32 0.0, %v11183
  %11185 = vmatmul.f32.gmra.mxu0 %v10924
  %v11186 = vpop.f32.mrf.mxu0
  %v11187 = vadd.f32 0.0, %v11186
  %11188 = vmatmul.f32.gmra.mxu0 %v10927
  %v11189 = vpop.f32.mrf.mxu0
  %v11190 = vadd.f32 0.0, %v11189
  %11191 = vmatmul.f32.gmra.mxu0 %v10930
  %v11192 = vpop.f32.mrf.mxu0
  %v11193 = vadd.f32 0.0, %v11192
  %11194 = vmatmul.f32.gmra.mxu0 %v10933
  %v11195 = vpop.f32.mrf.mxu0
  %v11196 = vadd.f32 0.0, %v11195
  %11197 = vmatmul.f32.gmra.mxu0 %v10936
  %v11198 = vpop.f32.mrf.mxu0
  %v11199 = vadd.f32 0.0, %v11198
  %11200 = vmatmul.f32.gmra.mxu0 %v10939
  %v11201 = vpop.f32.mrf.mxu0
  %v11202 = vadd.f32 0.0, %v11201
  %11203 = vmatmul.f32.gmra.mxu0 %v10942
  %v11204 = vpop.f32.mrf.mxu0
  %v11205 = vadd.f32 0.0, %v11204
  %11206 = vmatmul.f32.gmra.mxu0 %v10945
  %v11207 = vpop.f32.mrf.mxu0
  %v11208 = vadd.f32 0.0, %v11207
  %11209 = vmatmul.f32.gmra.mxu0 %v10948
  %v11210 = vpop.f32.mrf.mxu0
  %v11211 = vadd.f32 0.0, %v11210
  %11212 = vmatmul.f32.gmra.mxu0 %v10951
  %v11213 = vpop.f32.mrf.mxu0
  %v11214 = vadd.f32 0.0, %v11213
  %11215 = vmatmul.f32.gmra.mxu0 %v10954
  %v11216 = vpop.f32.mrf.mxu0
  %v11217 = vadd.f32 0.0, %v11216
  %11218 = vmatmul.f32.gmra.mxu0 %v10957
  %v11219 = vpop.f32.mrf.mxu0
  %v11220 = vadd.f32 0.0, %v11219
  %11221 = vmatmul.f32.gmra.mxu0 %v10960
  %v11222 = vpop.f32.mrf.mxu0
  %v11223 = vadd.f32 0.0, %v11222
  %11224 = vmatmul.f32.gmra.mxu0 %v10963
  %v11225 = vpop.f32.mrf.mxu0
  %v11226 = vadd.f32 0.0, %v11225
  %11227 = vmatmul.f32.gmra.mxu0 %v10966
  %v11228 = vpop.f32.mrf.mxu0
  %v11229 = vadd.f32 0.0, %v11228
  %11230 = vmatmul.f32.gmra.mxu0 %v10969
  %v11231 = vpop.f32.mrf.mxu0
  %v11232 = vadd.f32 0.0, %v11231
  %11233 = vmatmul.f32.gmra.mxu0 %v10972
  %v11234 = vpop.f32.mrf.mxu0
  %v11235 = vadd.f32 0.0, %v11234
  %11236 = vmatmul.f32.gmra.mxu0 %v10975
  %v11237 = vpop.f32.mrf.mxu0
  %v11238 = vadd.f32 0.0, %v11237
  %11239 = vmatmul.f32.gmra.mxu0 %v10978
  %v11240 = vpop.f32.mrf.mxu0
  %v11241 = vadd.f32 0.0, %v11240
  %11242 = vmatmul.f32.gmra.mxu0 %v10981
  %v11243 = vpop.f32.mrf.mxu0
  %v11244 = vadd.f32 0.0, %v11243
  %11245 = vmatmul.f32.gmra.mxu0 %v10984
  %v11246 = vpop.f32.mrf.mxu0
  %v11247 = vadd.f32 0.0, %v11246
  %11248 = vmatmul.f32.gmra.mxu0 %v10987
  %v11249 = vpop.f32.mrf.mxu0
  %v11250 = vadd.f32 0.0, %v11249
  %11251 = vmatmul.f32.gmra.mxu0 %v10990
  %v11252 = vpop.f32.mrf.mxu0
  %v11253 = vadd.f32 0.0, %v11252
  %11254 = vmatmul.f32.gmra.mxu0 %v10993
  %v11255 = vpop.f32.mrf.mxu0
  %v11256 = vadd.f32 0.0, %v11255
  %11257 = vmatmul.f32.gmra.mxu0 %v10996
  %v11258 = vpop.f32.mrf.mxu0
  %v11259 = vadd.f32 0.0, %v11258
  %11260 = vmatmul.f32.gmra.mxu0 %v10999
  %v11261 = vpop.f32.mrf.mxu0
  %v11262 = vadd.f32 0.0, %v11261
  %11263 = vmatmul.f32.gmra.mxu0 %v11002
  %v11264 = vpop.f32.mrf.mxu0
  %v11265 = vadd.f32 0.0, %v11264
  %11266 = vmatmul.f32.gmra.mxu0 %v11005
  %v11267 = vpop.f32.mrf.mxu0
  %v11268 = vadd.f32 0.0, %v11267
  %11269 = vmatmul.f32.gmra.mxu0 %v11008
  %v11270 = vpop.f32.mrf.mxu0
  %v11271 = vadd.f32 0.0, %v11270
  %11272 = vmatmul.f32.gmra.mxu0 %v11011
  %v11273 = vpop.f32.mrf.mxu0
  %v11274 = vadd.f32 0.0, %v11273
  %11275 = vmatmul.f32.gmra.mxu0 %v11014
  %v11276 = vpop.f32.mrf.mxu0
  %v11277 = vadd.f32 0.0, %v11276
  %11278 = vmatmul.f32.gmra.mxu0 %v11017
  %v11279 = vpop.f32.mrf.mxu0
  %v11280 = vadd.f32 0.0, %v11279
  %11281 = vmatmul.f32.gmra.mxu0 %v11020
  %v11282 = vpop.f32.mrf.mxu0
  %v11283 = vadd.f32 0.0, %v11282
  %11284 = vmatmul.f32.gmra.mxu0 %v11023
  %v11285 = vpop.f32.mrf.mxu0
  %v11286 = vadd.f32 0.0, %v11285
  %11287 = vmatmul.f32.gmra.mxu0 %v11026
  %v11288 = vpop.f32.mrf.mxu0
  %v11289 = vadd.f32 0.0, %v11288
  %11290 = vmatmul.f32.gmra.mxu0 %v11029
  %v11291 = vpop.f32.mrf.mxu0
  %v11292 = vadd.f32 0.0, %v11291
  %11293 = vmatmul.f32.gmra.mxu0 %v11032
  %v11294 = vpop.f32.mrf.mxu0
  %v11295 = vadd.f32 0.0, %v11294
  %11296 = vmatmul.f32.gmra.mxu0 %v11035
  %v11297 = vpop.f32.mrf.mxu0
  %v11298 = vadd.f32 0.0, %v11297
  %11299 = vmatmul.f32.gmra.mxu0 %v11038
  %v11300 = vpop.f32.mrf.mxu0
  %v11301 = vadd.f32 0.0, %v11300
  %11302 = vmatmul.f32.gmra.mxu0 %v11041
  %v11303 = vpop.f32.mrf.mxu0
  %v11304 = vadd.f32 0.0, %v11303
  %11305 = vmatmul.f32.gmra.mxu0 %v11044
  %v11306 = vpop.f32.mrf.mxu0
  %v11307 = vadd.f32 0.0, %v11306
  %11308 = vmatmul.f32.gmra.mxu0 %v11047
  %v11309 = vpop.f32.mrf.mxu0
  %v11310 = vadd.f32 0.0, %v11309
  %11311 = vmatmul.f32.gmra.mxu0 %v11050
  %v11312 = vpop.f32.mrf.mxu0
  %v11313 = vadd.f32 0.0, %v11312
  %11314 = vmatmul.f32.gmra.mxu0 %v11053
  %v11315 = vpop.f32.mrf.mxu0
  %v11316 = vadd.f32 0.0, %v11315
  %11317 = vmatmul.f32.gmra.mxu0 %v11056
  %v11318 = vpop.f32.mrf.mxu0
  %v11319 = vadd.f32 0.0, %v11318
  %11320 = vmatmul.f32.gmra.mxu0 %v11059
  %v11321 = vpop.f32.mrf.mxu0
  %v11322 = vadd.f32 0.0, %v11321
  %11323 = vmatmul.f32.gmra.mxu0 %v11062
  %v11324 = vpop.f32.mrf.mxu0
  %v11325 = vadd.f32 0.0, %v11324
  %11326 = vmatmul.f32.gmra.mxu0 %v11065
  %v11327 = vpop.f32.mrf.mxu0
  %v11328 = vadd.f32 0.0, %v11327
  %11329 = vdwg.mxu0
  %v11330 = vadd.f32 %v10660, %v11088
  %v11331 = vadd.f32 %v10661, %v11091
  %v11332 = vadd.f32 %v10662, %v11094
  %v11333 = vadd.f32 %v10663, %v11097
  %v11334 = vadd.f32 %v10664, %v11100
  %v11335 = vadd.f32 %v10665, %v11103
  %v11336 = vadd.f32 %v10666, %v11106
  %v11337 = vadd.f32 %v10667, %v11109
  %v11338 = vadd.f32 %v10668, %v11112
  %v11339 = vadd.f32 %v10669, %v11115
  %v11340 = vadd.f32 %v10670, %v11118
  %v11341 = vadd.f32 %v10671, %v11121
  %v11342 = vadd.f32 %v10672, %v11124
  %v11343 = vadd.f32 %v10673, %v11127
  %v11344 = vadd.f32 %v10674, %v11130
  %v11345 = vadd.f32 %v10675, %v11133
  %v11346 = vadd.f32 %v10676, %v11136
  %v11347 = vadd.f32 %v10677, %v11139
  %v11348 = vadd.f32 %v10678, %v11142
  %v11349 = vadd.f32 %v10679, %v11145
  %v11350 = vadd.f32 %v10680, %v11148
  %v11351 = vadd.f32 %v10681, %v11151
  %v11352 = vadd.f32 %v10682, %v11154
  %v11353 = vadd.f32 %v10683, %v11157
  %v11354 = vadd.f32 %v10684, %v11160
  %v11355 = vadd.f32 %v10685, %v11163
  %v11356 = vadd.f32 %v10686, %v11166
  %v11357 = vadd.f32 %v10687, %v11169
  %v11358 = vadd.f32 %v10688, %v11172
  %v11359 = vadd.f32 %v10689, %v11175
  %v11360 = vadd.f32 %v10690, %v11178
  %v11361 = vadd.f32 %v10691, %v11181
  %v11362 = vadd.f32 %v10692, %v11184
  %v11363 = vadd.f32 %v10693, %v11187
  %v11364 = vadd.f32 %v10694, %v11190
  %v11365 = vadd.f32 %v10695, %v11193
  %v11366 = vadd.f32 %v10696, %v11196
  %v11367 = vadd.f32 %v10697, %v11199
  %v11368 = vadd.f32 %v10698, %v11202
  %v11369 = vadd.f32 %v10699, %v11205
  %v11370 = vadd.f32 %v10700, %v11208
  %v11371 = vadd.f32 %v10701, %v11211
  %v11372 = vadd.f32 %v10702, %v11214
  %v11373 = vadd.f32 %v10703, %v11217
  %v11374 = vadd.f32 %v10704, %v11220
  %v11375 = vadd.f32 %v10705, %v11223
  %v11376 = vadd.f32 %v10706, %v11226
  %v11377 = vadd.f32 %v10707, %v11229
  %v11378 = vadd.f32 %v10708, %v11232
  %v11379 = vadd.f32 %v10709, %v11235
  %v11380 = vadd.f32 %v10710, %v11238
  %v11381 = vadd.f32 %v10711, %v11241
  %v11382 = vadd.f32 %v10712, %v11244
  %v11383 = vadd.f32 %v10713, %v11247
  %v11384 = vadd.f32 %v10714, %v11250
  %v11385 = vadd.f32 %v10715, %v11253
  %v11386 = vadd.f32 %v10716, %v11256
  %v11387 = vadd.f32 %v10717, %v11259
  %v11388 = vadd.f32 %v10718, %v11262
  %v11389 = vadd.f32 %v10719, %v11265
  %v11390 = vadd.f32 %v10720, %v11268
  %v11391 = vadd.f32 %v10721, %v11271
  %v11392 = vadd.f32 %v10722, %v11274
  %v11393 = vadd.f32 %v10723, %v11277
  %v11394 = vadd.f32 %v10724, %v11280
  %v11395 = vadd.f32 %v10725, %v11283
  %v11396 = vadd.f32 %v10726, %v11286
  %v11397 = vadd.f32 %v10727, %v11289
  %v11398 = vadd.f32 %v10728, %v11292
  %v11399 = vadd.f32 %v10729, %v11295
  %v11400 = vadd.f32 %v10730, %v11298
  %v11401 = vadd.f32 %v10731, %v11301
  %v11402 = vadd.f32 %v10732, %v11304
  %v11403 = vadd.f32 %v10733, %v11307
  %v11404 = vadd.f32 %v10734, %v11310
  %v11405 = vadd.f32 %v10735, %v11313
  %v11406 = vadd.f32 %v10736, %v11316
  %v11407 = vadd.f32 %v10737, %v11319
  %v11408 = vadd.f32 %v10738, %v11322
  %v11409 = vadd.f32 %v10739, %v11325
  %v11410 = vadd.f32 %v10740, %v11328
  %v11411 = vld [vmem:[#allocation2 + $0x19] sm:$0xff]
  %v11412 = vld [vmem:[#allocation2 + $0x21] sm:$0xff]
  %v11413 = vld [vmem:[#allocation2 + $0x29] sm:$0xff]
  %v11414 = vld [vmem:[#allocation2 + $0x31] sm:$0xff]
  %v11415 = vld [vmem:[#allocation2 + $0x39] sm:$0xff]
  %v11416 = vld [vmem:[#allocation2 + $0x41] sm:$0xff]
  %v11417 = vld [vmem:[#allocation2 + $0x49] sm:$0xff]
  %v11418 = vld [vmem:[#allocation2 + $0x51] sm:$0xff]
  %v11419 = vld [vmem:[#allocation2 + $0x59] sm:$0xff]
  %v11420 = vld [vmem:[#allocation2 + $0x61] sm:$0xff]
  %v11421 = vld [vmem:[#allocation2 + $0x69] sm:$0xff]
  %v11422 = vld [vmem:[#allocation2 + $0x71] sm:$0xff]
  %v11423 = vld [vmem:[#allocation2 + $0x79] sm:$0xff]
  %v11424 = vld [vmem:[#allocation2 + $0x81] sm:$0xff]
  %v11425 = vld [vmem:[#allocation2 + $0x89] sm:$0xff]
  %v11426 = vld [vmem:[#allocation2 + $0x91] sm:$0xff]
  %v11427 = vld [vmem:[#allocation2 + $0x99] sm:$0xff]
  %v11428 = vld [vmem:[#allocation2 + $0xa1] sm:$0xff]
  %v11429 = vld [vmem:[#allocation2 + $0xa9] sm:$0xff]
  %v11430 = vld [vmem:[#allocation2 + $0xb1] sm:$0xff]
  %v11431 = vld [vmem:[#allocation2 + $0xb9] sm:$0xff]
  %v11432 = vld [vmem:[#allocation2 + $0xc1] sm:$0xff]
  %v11433 = vld [vmem:[#allocation2 + $0xc9] sm:$0xff]
  %v11434 = vld [vmem:[#allocation2 + $0xd1] sm:$0xff]
  %v11435 = vld [vmem:[#allocation2 + $0xd9] sm:$0xff]
  %v11436 = vld [vmem:[#allocation2 + $0xe1] sm:$0xff]
  %v11437 = vld [vmem:[#allocation2 + $0xe9] sm:$0xff]
  %v11438 = vld [vmem:[#allocation2 + $0xf1] sm:$0xff]
  %v11439 = vld [vmem:[#allocation2 + $0xf9] sm:$0xff]
  %v11440 = vld [vmem:[#allocation2 + $0x101] sm:$0xff]
  %v11441 = vld [vmem:[#allocation2 + $0x109] sm:$0xff]
  %v11442 = vld [vmem:[#allocation2 + $0x111] sm:$0xff]
  %v11443 = vld [vmem:[#allocation2 + $0x119] sm:$0xff]
  %v11444 = vld [vmem:[#allocation2 + $0x121] sm:$0xff]
  %v11445 = vld [vmem:[#allocation2 + $0x129] sm:$0xff]
  %v11446 = vld [vmem:[#allocation2 + $0x131] sm:$0xff]
  %v11447 = vld [vmem:[#allocation2 + $0x139] sm:$0xff]
  %v11448 = vld [vmem:[#allocation2 + $0x141] sm:$0xff]
  %v11449 = vld [vmem:[#allocation2 + $0x149] sm:$0xff]
  %v11450 = vld [vmem:[#allocation2 + $0x151] sm:$0xff]
  %v11451 = vld [vmem:[#allocation2 + $0x159] sm:$0xff]
  %v11452 = vld [vmem:[#allocation2 + $0x161] sm:$0xff]
  %v11453 = vld [vmem:[#allocation2 + $0x169] sm:$0xff]
  %v11454 = vld [vmem:[#allocation2 + $0x171] sm:$0xff]
  %v11455 = vld [vmem:[#allocation2 + $0x179] sm:$0xff]
  %v11456 = vld [vmem:[#allocation2 + $0x181] sm:$0xff]
  %v11457 = vld [vmem:[#allocation2 + $0x189] sm:$0xff]
  %v11458 = vld [vmem:[#allocation2 + $0x191] sm:$0xff]
  %v11459 = vld [vmem:[#allocation2 + $0x199] sm:$0xff]
  %v11460 = vld [vmem:[#allocation2 + $0x1a1] sm:$0xff]
  %v11461 = vld [vmem:[#allocation2 + $0x1a9] sm:$0xff]
  %v11462 = vld [vmem:[#allocation2 + $0x1b1] sm:$0xff]
  %v11463 = vld [vmem:[#allocation2 + $0x1b9] sm:$0xff]
  %v11464 = vld [vmem:[#allocation2 + $0x1c1] sm:$0xff]
  %v11465 = vld [vmem:[#allocation2 + $0x1c9] sm:$0xff]
  %v11466 = vld [vmem:[#allocation2 + $0x1d1] sm:$0xff]
  %v11467 = vld [vmem:[#allocation2 + $0x1d9] sm:$0xff]
  %v11468 = vld [vmem:[#allocation2 + $0x1e1] sm:$0xff]
  %v11469 = vld [vmem:[#allocation2 + $0x1e9] sm:$0xff]
  %v11470 = vld [vmem:[#allocation2 + $0x1f1] sm:$0xff]
  %v11471 = vld [vmem:[#allocation2 + $0x1f9] sm:$0xff]
  %v11472 = vld [vmem:[#allocation2 + $0x201] sm:$0xff]
  %v11473 = vld [vmem:[#allocation2 + $0x209] sm:$0xff]
  %v11474 = vld [vmem:[#allocation2 + $0x211] sm:$0xff]
  %v11475 = vld [vmem:[#allocation2 + $0x219] sm:$0xff]
  %v11476 = vld [vmem:[#allocation2 + $0x221] sm:$0xff]
  %v11477 = vld [vmem:[#allocation2 + $0x229] sm:$0xff]
  %v11478 = vld [vmem:[#allocation2 + $0x231] sm:$0xff]
  %v11479 = vld [vmem:[#allocation2 + $0x239] sm:$0xff]
  %v11480 = vld [vmem:[#allocation2 + $0x241] sm:$0xff]
  %v11481 = vld [vmem:[#allocation2 + $0x249] sm:$0xff]
  %v11482 = vld [vmem:[#allocation2 + $0x251] sm:$0xff]
  %v11483 = vld [vmem:[#allocation2 + $0x259] sm:$0xff]
  %v11484 = vld [vmem:[#allocation2 + $0x261] sm:$0xff]
  %v11485 = vld [vmem:[#allocation2 + $0x269] sm:$0xff]
  %v11486 = vld [vmem:[#allocation2 + $0x271] sm:$0xff]
  %v11487 = vld [vmem:[#allocation2 + $0x279] sm:$0xff]
  %v11488 = vld [vmem:[#allocation2 + $0x281] sm:$0xff]
  %v11489 = vld [vmem:[#allocation2 + $0x289] sm:$0xff]
  %v11490 = vld [vmem:[#allocation2 + $0x291] sm:$0xff]
  %v11491 = vld [vmem:[#allocation2 + $0x299] sm:$0xff]
  %s11492 = scalar_lea.vmem %s3, 56
  %v11493 = vld [vmem:[%s11492] sm:$0xf]
  %v11495 = vsel %vm179, %v11411, 0
  %v11498 = vsel %vm179, %v11412, 0
  %v11501 = vsel %vm179, %v11413, 0
  %v11504 = vsel %vm179, %v11414, 0
  %v11507 = vsel %vm179, %v11415, 0
  %v11510 = vsel %vm179, %v11416, 0
  %v11513 = vsel %vm179, %v11417, 0
  %v11516 = vsel %vm179, %v11418, 0
  %v11519 = vsel %vm179, %v11419, 0
  %v11522 = vsel %vm179, %v11420, 0
  %v11525 = vsel %vm179, %v11421, 0
  %v11528 = vsel %vm179, %v11422, 0
  %v11531 = vsel %vm179, %v11423, 0
  %v11534 = vsel %vm179, %v11424, 0
  %v11537 = vsel %vm179, %v11425, 0
  %v11540 = vsel %vm179, %v11426, 0
  %v11543 = vsel %vm179, %v11427, 0
  %v11546 = vsel %vm179, %v11428, 0
  %v11549 = vsel %vm179, %v11429, 0
  %v11552 = vsel %vm179, %v11430, 0
  %v11555 = vsel %vm179, %v11431, 0
  %v11558 = vsel %vm179, %v11432, 0
  %v11561 = vsel %vm179, %v11433, 0
  %v11564 = vsel %vm179, %v11434, 0
  %v11567 = vsel %vm179, %v11435, 0
  %v11570 = vsel %vm179, %v11436, 0
  %v11573 = vsel %vm179, %v11437, 0
  %v11576 = vsel %vm179, %v11438, 0
  %v11579 = vsel %vm179, %v11439, 0
  %v11582 = vsel %vm179, %v11440, 0
  %v11585 = vsel %vm179, %v11441, 0
  %v11588 = vsel %vm179, %v11442, 0
  %v11591 = vsel %vm179, %v11443, 0
  %v11594 = vsel %vm179, %v11444, 0
  %v11597 = vsel %vm179, %v11445, 0
  %v11600 = vsel %vm179, %v11446, 0
  %v11603 = vsel %vm179, %v11447, 0
  %v11606 = vsel %vm179, %v11448, 0
  %v11609 = vsel %vm179, %v11449, 0
  %v11612 = vsel %vm179, %v11450, 0
  %v11615 = vsel %vm179, %v11451, 0
  %v11618 = vsel %vm179, %v11452, 0
  %v11621 = vsel %vm179, %v11453, 0
  %v11624 = vsel %vm179, %v11454, 0
  %v11627 = vsel %vm179, %v11455, 0
  %v11630 = vsel %vm179, %v11456, 0
  %v11633 = vsel %vm179, %v11457, 0
  %v11636 = vsel %vm179, %v11458, 0
  %v11639 = vsel %vm179, %v11459, 0
  %v11642 = vsel %vm179, %v11460, 0
  %v11645 = vsel %vm179, %v11461, 0
  %v11648 = vsel %vm179, %v11462, 0
  %v11651 = vsel %vm179, %v11463, 0
  %v11654 = vsel %vm179, %v11464, 0
  %v11657 = vsel %vm179, %v11465, 0
  %v11660 = vsel %vm179, %v11466, 0
  %v11663 = vsel %vm179, %v11467, 0
  %v11666 = vsel %vm179, %v11468, 0
  %v11669 = vsel %vm179, %v11469, 0
  %v11672 = vsel %vm179, %v11470, 0
  %v11675 = vsel %vm179, %v11471, 0
  %v11678 = vsel %vm179, %v11472, 0
  %v11681 = vsel %vm179, %v11473, 0
  %v11684 = vsel %vm179, %v11474, 0
  %v11687 = vsel %vm179, %v11475, 0
  %v11690 = vsel %vm179, %v11476, 0
  %v11693 = vsel %vm179, %v11477, 0
  %v11696 = vsel %vm179, %v11478, 0
  %v11699 = vsel %vm179, %v11479, 0
  %v11702 = vsel %vm179, %v11480, 0
  %v11705 = vsel %vm179, %v11481, 0
  %v11708 = vsel %vm179, %v11482, 0
  %v11711 = vsel %vm179, %v11483, 0
  %v11714 = vsel %vm179, %v11484, 0
  %v11717 = vsel %vm179, %v11485, 0
  %v11720 = vsel %vm179, %v11486, 0
  %v11723 = vsel %vm179, %v11487, 0
  %v11726 = vsel %vm179, %v11488, 0
  %v11729 = vsel %vm179, %v11489, 0
  %v11732 = vsel %vm179, %v11490, 0
  %v11735 = vsel %vm179, %v11491, 0
  %v11738 = vsel %vm1600, %v11493, 0
  %11740 = vmatpush.msra.mxu0 0.0
  %11741 = vmatpush.msra.mxu0 0.0
  %11742 = vmatpush.msra.mxu0 0.0
  %11743 = vmatpush.msra.mxu0 0.0
  %11744 = vmatpush.msra.mxu0 0.0
  %11745 = vmatpush.msra.mxu0 0.0
  %11746 = vmatpush.msra.mxu0 0.0
  %11747 = vmatpush.msra.mxu0 0.0
  %11748 = vmatpush.msra.mxu0 0.0
  %11749 = vmatpush.msra.mxu0 0.0
  %11750 = vmatpush.msra.mxu0 0.0
  %11751 = vmatpush.msra.mxu0 0.0
  %11752 = vmatpush.msra.mxu0 0.0
  %11753 = vmatpush.msra.mxu0 0.0
  %11754 = vmatpush.msra.mxu0 0.0
  %11755 = vmatpush.msra.mxu0 %v11738
  %11756 = vmatmul.f32.gmra.mxu0 %v11495
  %v11757 = vpop.f32.mrf.mxu0
  %v11758 = vadd.f32 0.0, %v11757
  %11759 = vmatmul.f32.gmra.mxu0 %v11498
  %v11760 = vpop.f32.mrf.mxu0
  %v11761 = vadd.f32 0.0, %v11760
  %11762 = vmatmul.f32.gmra.mxu0 %v11501
  %v11763 = vpop.f32.mrf.mxu0
  %v11764 = vadd.f32 0.0, %v11763
  %11765 = vmatmul.f32.gmra.mxu0 %v11504
  %v11766 = vpop.f32.mrf.mxu0
  %v11767 = vadd.f32 0.0, %v11766
  %11768 = vmatmul.f32.gmra.mxu0 %v11507
  %v11769 = vpop.f32.mrf.mxu0
  %v11770 = vadd.f32 0.0, %v11769
  %11771 = vmatmul.f32.gmra.mxu0 %v11510
  %v11772 = vpop.f32.mrf.mxu0
  %v11773 = vadd.f32 0.0, %v11772
  %11774 = vmatmul.f32.gmra.mxu0 %v11513
  %v11775 = vpop.f32.mrf.mxu0
  %v11776 = vadd.f32 0.0, %v11775
  %11777 = vmatmul.f32.gmra.mxu0 %v11516
  %v11778 = vpop.f32.mrf.mxu0
  %v11779 = vadd.f32 0.0, %v11778
  %11780 = vmatmul.f32.gmra.mxu0 %v11519
  %v11781 = vpop.f32.mrf.mxu0
  %v11782 = vadd.f32 0.0, %v11781
  %11783 = vmatmul.f32.gmra.mxu0 %v11522
  %v11784 = vpop.f32.mrf.mxu0
  %v11785 = vadd.f32 0.0, %v11784
  %11786 = vmatmul.f32.gmra.mxu0 %v11525
  %v11787 = vpop.f32.mrf.mxu0
  %v11788 = vadd.f32 0.0, %v11787
  %11789 = vmatmul.f32.gmra.mxu0 %v11528
  %v11790 = vpop.f32.mrf.mxu0
  %v11791 = vadd.f32 0.0, %v11790
  %11792 = vmatmul.f32.gmra.mxu0 %v11531
  %v11793 = vpop.f32.mrf.mxu0
  %v11794 = vadd.f32 0.0, %v11793
  %11795 = vmatmul.f32.gmra.mxu0 %v11534
  %v11796 = vpop.f32.mrf.mxu0
  %v11797 = vadd.f32 0.0, %v11796
  %11798 = vmatmul.f32.gmra.mxu0 %v11537
  %v11799 = vpop.f32.mrf.mxu0
  %v11800 = vadd.f32 0.0, %v11799
  %11801 = vmatmul.f32.gmra.mxu0 %v11540
  %v11802 = vpop.f32.mrf.mxu0
  %v11803 = vadd.f32 0.0, %v11802
  %11804 = vmatmul.f32.gmra.mxu0 %v11543
  %v11805 = vpop.f32.mrf.mxu0
  %v11806 = vadd.f32 0.0, %v11805
  %11807 = vmatmul.f32.gmra.mxu0 %v11546
  %v11808 = vpop.f32.mrf.mxu0
  %v11809 = vadd.f32 0.0, %v11808
  %11810 = vmatmul.f32.gmra.mxu0 %v11549
  %v11811 = vpop.f32.mrf.mxu0
  %v11812 = vadd.f32 0.0, %v11811
  %11813 = vmatmul.f32.gmra.mxu0 %v11552
  %v11814 = vpop.f32.mrf.mxu0
  %v11815 = vadd.f32 0.0, %v11814
  %11816 = vmatmul.f32.gmra.mxu0 %v11555
  %v11817 = vpop.f32.mrf.mxu0
  %v11818 = vadd.f32 0.0, %v11817
  %11819 = vmatmul.f32.gmra.mxu0 %v11558
  %v11820 = vpop.f32.mrf.mxu0
  %v11821 = vadd.f32 0.0, %v11820
  %11822 = vmatmul.f32.gmra.mxu0 %v11561
  %v11823 = vpop.f32.mrf.mxu0
  %v11824 = vadd.f32 0.0, %v11823
  %11825 = vmatmul.f32.gmra.mxu0 %v11564
  %v11826 = vpop.f32.mrf.mxu0
  %v11827 = vadd.f32 0.0, %v11826
  %11828 = vmatmul.f32.gmra.mxu0 %v11567
  %v11829 = vpop.f32.mrf.mxu0
  %v11830 = vadd.f32 0.0, %v11829
  %11831 = vmatmul.f32.gmra.mxu0 %v11570
  %v11832 = vpop.f32.mrf.mxu0
  %v11833 = vadd.f32 0.0, %v11832
  %11834 = vmatmul.f32.gmra.mxu0 %v11573
  %v11835 = vpop.f32.mrf.mxu0
  %v11836 = vadd.f32 0.0, %v11835
  %11837 = vmatmul.f32.gmra.mxu0 %v11576
  %v11838 = vpop.f32.mrf.mxu0
  %v11839 = vadd.f32 0.0, %v11838
  %11840 = vmatmul.f32.gmra.mxu0 %v11579
  %v11841 = vpop.f32.mrf.mxu0
  %v11842 = vadd.f32 0.0, %v11841
  %11843 = vmatmul.f32.gmra.mxu0 %v11582
  %v11844 = vpop.f32.mrf.mxu0
  %v11845 = vadd.f32 0.0, %v11844
  %11846 = vmatmul.f32.gmra.mxu0 %v11585
  %v11847 = vpop.f32.mrf.mxu0
  %v11848 = vadd.f32 0.0, %v11847
  %11849 = vmatmul.f32.gmra.mxu0 %v11588
  %v11850 = vpop.f32.mrf.mxu0
  %v11851 = vadd.f32 0.0, %v11850
  %11852 = vmatmul.f32.gmra.mxu0 %v11591
  %v11853 = vpop.f32.mrf.mxu0
  %v11854 = vadd.f32 0.0, %v11853
  %11855 = vmatmul.f32.gmra.mxu0 %v11594
  %v11856 = vpop.f32.mrf.mxu0
  %v11857 = vadd.f32 0.0, %v11856
  %11858 = vmatmul.f32.gmra.mxu0 %v11597
  %v11859 = vpop.f32.mrf.mxu0
  %v11860 = vadd.f32 0.0, %v11859
  %11861 = vmatmul.f32.gmra.mxu0 %v11600
  %v11862 = vpop.f32.mrf.mxu0
  %v11863 = vadd.f32 0.0, %v11862
  %11864 = vmatmul.f32.gmra.mxu0 %v11603
  %v11865 = vpop.f32.mrf.mxu0
  %v11866 = vadd.f32 0.0, %v11865
  %11867 = vmatmul.f32.gmra.mxu0 %v11606
  %v11868 = vpop.f32.mrf.mxu0
  %v11869 = vadd.f32 0.0, %v11868
  %11870 = vmatmul.f32.gmra.mxu0 %v11609
  %v11871 = vpop.f32.mrf.mxu0
  %v11872 = vadd.f32 0.0, %v11871
  %11873 = vmatmul.f32.gmra.mxu0 %v11612
  %v11874 = vpop.f32.mrf.mxu0
  %v11875 = vadd.f32 0.0, %v11874
  %11876 = vmatmul.f32.gmra.mxu0 %v11615
  %v11877 = vpop.f32.mrf.mxu0
  %v11878 = vadd.f32 0.0, %v11877
  %11879 = vmatmul.f32.gmra.mxu0 %v11618
  %v11880 = vpop.f32.mrf.mxu0
  %v11881 = vadd.f32 0.0, %v11880
  %11882 = vmatmul.f32.gmra.mxu0 %v11621
  %v11883 = vpop.f32.mrf.mxu0
  %v11884 = vadd.f32 0.0, %v11883
  %11885 = vmatmul.f32.gmra.mxu0 %v11624
  %v11886 = vpop.f32.mrf.mxu0
  %v11887 = vadd.f32 0.0, %v11886
  %11888 = vmatmul.f32.gmra.mxu0 %v11627
  %v11889 = vpop.f32.mrf.mxu0
  %v11890 = vadd.f32 0.0, %v11889
  %11891 = vmatmul.f32.gmra.mxu0 %v11630
  %v11892 = vpop.f32.mrf.mxu0
  %v11893 = vadd.f32 0.0, %v11892
  %11894 = vmatmul.f32.gmra.mxu0 %v11633
  %v11895 = vpop.f32.mrf.mxu0
  %v11896 = vadd.f32 0.0, %v11895
  %11897 = vmatmul.f32.gmra.mxu0 %v11636
  %v11898 = vpop.f32.mrf.mxu0
  %v11899 = vadd.f32 0.0, %v11898
  %11900 = vmatmul.f32.gmra.mxu0 %v11639
  %v11901 = vpop.f32.mrf.mxu0
  %v11902 = vadd.f32 0.0, %v11901
  %11903 = vmatmul.f32.gmra.mxu0 %v11642
  %v11904 = vpop.f32.mrf.mxu0
  %v11905 = vadd.f32 0.0, %v11904
  %11906 = vmatmul.f32.gmra.mxu0 %v11645
  %v11907 = vpop.f32.mrf.mxu0
  %v11908 = vadd.f32 0.0, %v11907
  %11909 = vmatmul.f32.gmra.mxu0 %v11648
  %v11910 = vpop.f32.mrf.mxu0
  %v11911 = vadd.f32 0.0, %v11910
  %11912 = vmatmul.f32.gmra.mxu0 %v11651
  %v11913 = vpop.f32.mrf.mxu0
  %v11914 = vadd.f32 0.0, %v11913
  %11915 = vmatmul.f32.gmra.mxu0 %v11654
  %v11916 = vpop.f32.mrf.mxu0
  %v11917 = vadd.f32 0.0, %v11916
  %11918 = vmatmul.f32.gmra.mxu0 %v11657
  %v11919 = vpop.f32.mrf.mxu0
  %v11920 = vadd.f32 0.0, %v11919
  %11921 = vmatmul.f32.gmra.mxu0 %v11660
  %v11922 = vpop.f32.mrf.mxu0
  %v11923 = vadd.f32 0.0, %v11922
  %11924 = vmatmul.f32.gmra.mxu0 %v11663
  %v11925 = vpop.f32.mrf.mxu0
  %v11926 = vadd.f32 0.0, %v11925
  %11927 = vmatmul.f32.gmra.mxu0 %v11666
  %v11928 = vpop.f32.mrf.mxu0
  %v11929 = vadd.f32 0.0, %v11928
  %11930 = vmatmul.f32.gmra.mxu0 %v11669
  %v11931 = vpop.f32.mrf.mxu0
  %v11932 = vadd.f32 0.0, %v11931
  %11933 = vmatmul.f32.gmra.mxu0 %v11672
  %v11934 = vpop.f32.mrf.mxu0
  %v11935 = vadd.f32 0.0, %v11934
  %11936 = vmatmul.f32.gmra.mxu0 %v11675
  %v11937 = vpop.f32.mrf.mxu0
  %v11938 = vadd.f32 0.0, %v11937
  %11939 = vmatmul.f32.gmra.mxu0 %v11678
  %v11940 = vpop.f32.mrf.mxu0
  %v11941 = vadd.f32 0.0, %v11940
  %11942 = vmatmul.f32.gmra.mxu0 %v11681
  %v11943 = vpop.f32.mrf.mxu0
  %v11944 = vadd.f32 0.0, %v11943
  %11945 = vmatmul.f32.gmra.mxu0 %v11684
  %v11946 = vpop.f32.mrf.mxu0
  %v11947 = vadd.f32 0.0, %v11946
  %11948 = vmatmul.f32.gmra.mxu0 %v11687
  %v11949 = vpop.f32.mrf.mxu0
  %v11950 = vadd.f32 0.0, %v11949
  %11951 = vmatmul.f32.gmra.mxu0 %v11690
  %v11952 = vpop.f32.mrf.mxu0
  %v11953 = vadd.f32 0.0, %v11952
  %11954 = vmatmul.f32.gmra.mxu0 %v11693
  %v11955 = vpop.f32.mrf.mxu0
  %v11956 = vadd.f32 0.0, %v11955
  %11957 = vmatmul.f32.gmra.mxu0 %v11696
  %v11958 = vpop.f32.mrf.mxu0
  %v11959 = vadd.f32 0.0, %v11958
  %11960 = vmatmul.f32.gmra.mxu0 %v11699
  %v11961 = vpop.f32.mrf.mxu0
  %v11962 = vadd.f32 0.0, %v11961
  %11963 = vmatmul.f32.gmra.mxu0 %v11702
  %v11964 = vpop.f32.mrf.mxu0
  %v11965 = vadd.f32 0.0, %v11964
  %11966 = vmatmul.f32.gmra.mxu0 %v11705
  %v11967 = vpop.f32.mrf.mxu0
  %v11968 = vadd.f32 0.0, %v11967
  %11969 = vmatmul.f32.gmra.mxu0 %v11708
  %v11970 = vpop.f32.mrf.mxu0
  %v11971 = vadd.f32 0.0, %v11970
  %11972 = vmatmul.f32.gmra.mxu0 %v11711
  %v11973 = vpop.f32.mrf.mxu0
  %v11974 = vadd.f32 0.0, %v11973
  %11975 = vmatmul.f32.gmra.mxu0 %v11714
  %v11976 = vpop.f32.mrf.mxu0
  %v11977 = vadd.f32 0.0, %v11976
  %11978 = vmatmul.f32.gmra.mxu0 %v11717
  %v11979 = vpop.f32.mrf.mxu0
  %v11980 = vadd.f32 0.0, %v11979
  %11981 = vmatmul.f32.gmra.mxu0 %v11720
  %v11982 = vpop.f32.mrf.mxu0
  %v11983 = vadd.f32 0.0, %v11982
  %11984 = vmatmul.f32.gmra.mxu0 %v11723
  %v11985 = vpop.f32.mrf.mxu0
  %v11986 = vadd.f32 0.0, %v11985
  %11987 = vmatmul.f32.gmra.mxu0 %v11726
  %v11988 = vpop.f32.mrf.mxu0
  %v11989 = vadd.f32 0.0, %v11988
  %11990 = vmatmul.f32.gmra.mxu0 %v11729
  %v11991 = vpop.f32.mrf.mxu0
  %v11992 = vadd.f32 0.0, %v11991
  %11993 = vmatmul.f32.gmra.mxu0 %v11732
  %v11994 = vpop.f32.mrf.mxu0
  %v11995 = vadd.f32 0.0, %v11994
  %11996 = vmatmul.f32.gmra.mxu0 %v11735
  %v11997 = vpop.f32.mrf.mxu0
  %v11998 = vadd.f32 0.0, %v11997
  %11999 = vdwg.mxu0
  %v12000 = vadd.f32 %v11330, %v11758
  %v12001 = vadd.f32 %v11331, %v11761
  %v12002 = vadd.f32 %v11332, %v11764
  %v12003 = vadd.f32 %v11333, %v11767
  %v12004 = vadd.f32 %v11334, %v11770
  %v12005 = vadd.f32 %v11335, %v11773
  %v12006 = vadd.f32 %v11336, %v11776
  %v12007 = vadd.f32 %v11337, %v11779
  %v12008 = vadd.f32 %v11338, %v11782
  %v12009 = vadd.f32 %v11339, %v11785
  %v12010 = vadd.f32 %v11340, %v11788
  %v12011 = vadd.f32 %v11341, %v11791
  %v12012 = vadd.f32 %v11342, %v11794
  %v12013 = vadd.f32 %v11343, %v11797
  %v12014 = vadd.f32 %v11344, %v11800
  %v12015 = vadd.f32 %v11345, %v11803
  %v12016 = vadd.f32 %v11346, %v11806
  %v12017 = vadd.f32 %v11347, %v11809
  %v12018 = vadd.f32 %v11348, %v11812
  %v12019 = vadd.f32 %v11349, %v11815
  %v12020 = vadd.f32 %v11350, %v11818
  %v12021 = vadd.f32 %v11351, %v11821
  %v12022 = vadd.f32 %v11352, %v11824
  %v12023 = vadd.f32 %v11353, %v11827
  %v12024 = vadd.f32 %v11354, %v11830
  %v12025 = vadd.f32 %v11355, %v11833
  %v12026 = vadd.f32 %v11356, %v11836
  %v12027 = vadd.f32 %v11357, %v11839
  %v12028 = vadd.f32 %v11358, %v11842
  %v12029 = vadd.f32 %v11359, %v11845
  %v12030 = vadd.f32 %v11360, %v11848
  %v12031 = vadd.f32 %v11361, %v11851
  %v12032 = vadd.f32 %v11362, %v11854
  %v12033 = vadd.f32 %v11363, %v11857
  %v12034 = vadd.f32 %v11364, %v11860
  %v12035 = vadd.f32 %v11365, %v11863
  %v12036 = vadd.f32 %v11366, %v11866
  %v12037 = vadd.f32 %v11367, %v11869
  %v12038 = vadd.f32 %v11368, %v11872
  %v12039 = vadd.f32 %v11369, %v11875
  %v12040 = vadd.f32 %v11370, %v11878
  %v12041 = vadd.f32 %v11371, %v11881
  %v12042 = vadd.f32 %v11372, %v11884
  %v12043 = vadd.f32 %v11373, %v11887
  %v12044 = vadd.f32 %v11374, %v11890
  %v12045 = vadd.f32 %v11375, %v11893
  %v12046 = vadd.f32 %v11376, %v11896
  %v12047 = vadd.f32 %v11377, %v11899
  %v12048 = vadd.f32 %v11378, %v11902
  %v12049 = vadd.f32 %v11379, %v11905
  %v12050 = vadd.f32 %v11380, %v11908
  %v12051 = vadd.f32 %v11381, %v11911
  %v12052 = vadd.f32 %v11382, %v11914
  %v12053 = vadd.f32 %v11383, %v11917
  %v12054 = vadd.f32 %v11384, %v11920
  %v12055 = vadd.f32 %v11385, %v11923
  %v12056 = vadd.f32 %v11386, %v11926
  %v12057 = vadd.f32 %v11387, %v11929
  %v12058 = vadd.f32 %v11388, %v11932
  %v12059 = vadd.f32 %v11389, %v11935
  %v12060 = vadd.f32 %v11390, %v11938
  %v12061 = vadd.f32 %v11391, %v11941
  %v12062 = vadd.f32 %v11392, %v11944
  %v12063 = vadd.f32 %v11393, %v11947
  %v12064 = vadd.f32 %v11394, %v11950
  %v12065 = vadd.f32 %v11395, %v11953
  %v12066 = vadd.f32 %v11396, %v11956
  %v12067 = vadd.f32 %v11397, %v11959
  %v12068 = vadd.f32 %v11398, %v11962
  %v12069 = vadd.f32 %v11399, %v11965
  %v12070 = vadd.f32 %v11400, %v11968
  %v12071 = vadd.f32 %v11401, %v11971
  %v12072 = vadd.f32 %v11402, %v11974
  %v12073 = vadd.f32 %v11403, %v11977
  %v12074 = vadd.f32 %v11404, %v11980
  %v12075 = vadd.f32 %v11405, %v11983
  %v12076 = vadd.f32 %v11406, %v11986
  %v12077 = vadd.f32 %v11407, %v11989
  %v12078 = vadd.f32 %v11408, %v11992
  %v12079 = vadd.f32 %v11409, %v11995
  %v12080 = vadd.f32 %v11410, %v11998
  %v12081 = vld [vmem:[#allocation2 + $0x29] sm:$0xff]
  %v12082 = vld [vmem:[#allocation2 + $0x31] sm:$0xff]
  %v12083 = vld [vmem:[#allocation2 + $0x39] sm:$0xff]
  %v12084 = vld [vmem:[#allocation2 + $0x41] sm:$0xff]
  %v12085 = vld [vmem:[#allocation2 + $0x49] sm:$0xff]
  %v12086 = vld [vmem:[#allocation2 + $0x51] sm:$0xff]
  %v12087 = vld [vmem:[#allocation2 + $0x59] sm:$0xff]
  %v12088 = vld [vmem:[#allocation2 + $0x61] sm:$0xff]
  %v12089 = vld [vmem:[#allocation2 + $0x69] sm:$0xff]
  %v12090 = vld [vmem:[#allocation2 + $0x71] sm:$0xff]
  %v12091 = vld [vmem:[#allocation2 + $0x79] sm:$0xff]
  %v12092 = vld [vmem:[#allocation2 + $0x81] sm:$0xff]
  %v12093 = vld [vmem:[#allocation2 + $0x89] sm:$0xff]
  %v12094 = vld [vmem:[#allocation2 + $0x91] sm:$0xff]
  %v12095 = vld [vmem:[#allocation2 + $0x99] sm:$0xff]
  %v12096 = vld [vmem:[#allocation2 + $0xa1] sm:$0xff]
  %v12097 = vld [vmem:[#allocation2 + $0xa9] sm:$0xff]
  %v12098 = vld [vmem:[#allocation2 + $0xb1] sm:$0xff]
  %v12099 = vld [vmem:[#allocation2 + $0xb9] sm:$0xff]
  %v12100 = vld [vmem:[#allocation2 + $0xc1] sm:$0xff]
  %v12101 = vld [vmem:[#allocation2 + $0xc9] sm:$0xff]
  %v12102 = vld [vmem:[#allocation2 + $0xd1] sm:$0xff]
  %v12103 = vld [vmem:[#allocation2 + $0xd9] sm:$0xff]
  %v12104 = vld [vmem:[#allocation2 + $0xe1] sm:$0xff]
  %v12105 = vld [vmem:[#allocation2 + $0xe9] sm:$0xff]
  %v12106 = vld [vmem:[#allocation2 + $0xf1] sm:$0xff]
  %v12107 = vld [vmem:[#allocation2 + $0xf9] sm:$0xff]
  %v12108 = vld [vmem:[#allocation2 + $0x101] sm:$0xff]
  %v12109 = vld [vmem:[#allocation2 + $0x109] sm:$0xff]
  %v12110 = vld [vmem:[#allocation2 + $0x111] sm:$0xff]
  %v12111 = vld [vmem:[#allocation2 + $0x119] sm:$0xff]
  %v12112 = vld [vmem:[#allocation2 + $0x121] sm:$0xff]
  %v12113 = vld [vmem:[#allocation2 + $0x129] sm:$0xff]
  %v12114 = vld [vmem:[#allocation2 + $0x131] sm:$0xff]
  %v12115 = vld [vmem:[#allocation2 + $0x139] sm:$0xff]
  %v12116 = vld [vmem:[#allocation2 + $0x141] sm:$0xff]
  %v12117 = vld [vmem:[#allocation2 + $0x149] sm:$0xff]
  %v12118 = vld [vmem:[#allocation2 + $0x151] sm:$0xff]
  %v12119 = vld [vmem:[#allocation2 + $0x159] sm:$0xff]
  %v12120 = vld [vmem:[#allocation2 + $0x161] sm:$0xff]
  %v12121 = vld [vmem:[#allocation2 + $0x169] sm:$0xff]
  %v12122 = vld [vmem:[#allocation2 + $0x171] sm:$0xff]
  %v12123 = vld [vmem:[#allocation2 + $0x179] sm:$0xff]
  %v12124 = vld [vmem:[#allocation2 + $0x181] sm:$0xff]
  %v12125 = vld [vmem:[#allocation2 + $0x189] sm:$0xff]
  %v12126 = vld [vmem:[#allocation2 + $0x191] sm:$0xff]
  %v12127 = vld [vmem:[#allocation2 + $0x199] sm:$0xff]
  %v12128 = vld [vmem:[#allocation2 + $0x1a1] sm:$0xff]
  %v12129 = vld [vmem:[#allocation2 + $0x1a9] sm:$0xff]
  %v12130 = vld [vmem:[#allocation2 + $0x1b1] sm:$0xff]
  %v12131 = vld [vmem:[#allocation2 + $0x1b9] sm:$0xff]
  %v12132 = vld [vmem:[#allocation2 + $0x1c1] sm:$0xff]
  %v12133 = vld [vmem:[#allocation2 + $0x1c9] sm:$0xff]
  %v12134 = vld [vmem:[#allocation2 + $0x1d1] sm:$0xff]
  %v12135 = vld [vmem:[#allocation2 + $0x1d9] sm:$0xff]
  %v12136 = vld [vmem:[#allocation2 + $0x1e1] sm:$0xff]
  %v12137 = vld [vmem:[#allocation2 + $0x1e9] sm:$0xff]
  %v12138 = vld [vmem:[#allocation2 + $0x1f1] sm:$0xff]
  %v12139 = vld [vmem:[#allocation2 + $0x1f9] sm:$0xff]
  %v12140 = vld [vmem:[#allocation2 + $0x201] sm:$0xff]
  %v12141 = vld [vmem:[#allocation2 + $0x209] sm:$0xff]
  %v12142 = vld [vmem:[#allocation2 + $0x211] sm:$0xff]
  %v12143 = vld [vmem:[#allocation2 + $0x219] sm:$0xff]
  %v12144 = vld [vmem:[#allocation2 + $0x221] sm:$0xff]
  %v12145 = vld [vmem:[#allocation2 + $0x229] sm:$0xff]
  %v12146 = vld [vmem:[#allocation2 + $0x231] sm:$0xff]
  %v12147 = vld [vmem:[#allocation2 + $0x239] sm:$0xff]
  %v12148 = vld [vmem:[#allocation2 + $0x241] sm:$0xff]
  %v12149 = vld [vmem:[#allocation2 + $0x249] sm:$0xff]
  %v12150 = vld [vmem:[#allocation2 + $0x251] sm:$0xff]
  %v12151 = vld [vmem:[#allocation2 + $0x259] sm:$0xff]
  %v12152 = vld [vmem:[#allocation2 + $0x261] sm:$0xff]
  %v12153 = vld [vmem:[#allocation2 + $0x269] sm:$0xff]
  %v12154 = vld [vmem:[#allocation2 + $0x271] sm:$0xff]
  %v12155 = vld [vmem:[#allocation2 + $0x279] sm:$0xff]
  %v12156 = vld [vmem:[#allocation2 + $0x281] sm:$0xff]
  %v12157 = vld [vmem:[#allocation2 + $0x289] sm:$0xff]
  %v12158 = vld [vmem:[#allocation2 + $0x291] sm:$0xff]
  %v12159 = vld [vmem:[#allocation2 + $0x299] sm:$0xff]
  %v12160 = vld [vmem:[#allocation2 + $0x2a1] sm:$0xff]
  %v12161 = vld [vmem:[#allocation2 + $0x2a9] sm:$0xff]
  %s12162 = scalar_lea.vmem %s3, 60
  %v12163 = vld [vmem:[%s12162] sm:$0xf]
  %v12165 = vsel %vm179, %v12081, 0
  %v12168 = vsel %vm179, %v12082, 0
  %v12171 = vsel %vm179, %v12083, 0
  %v12174 = vsel %vm179, %v12084, 0
  %v12177 = vsel %vm179, %v12085, 0
  %v12180 = vsel %vm179, %v12086, 0
  %v12183 = vsel %vm179, %v12087, 0
  %v12186 = vsel %vm179, %v12088, 0
  %v12189 = vsel %vm179, %v12089, 0
  %v12192 = vsel %vm179, %v12090, 0
  %v12195 = vsel %vm179, %v12091, 0
  %v12198 = vsel %vm179, %v12092, 0
  %v12201 = vsel %vm179, %v12093, 0
  %v12204 = vsel %vm179, %v12094, 0
  %v12207 = vsel %vm179, %v12095, 0
  %v12210 = vsel %vm179, %v12096, 0
  %v12213 = vsel %vm179, %v12097, 0
  %v12216 = vsel %vm179, %v12098, 0
  %v12219 = vsel %vm179, %v12099, 0
  %v12222 = vsel %vm179, %v12100, 0
  %v12225 = vsel %vm179, %v12101, 0
  %v12228 = vsel %vm179, %v12102, 0
  %v12231 = vsel %vm179, %v12103, 0
  %v12234 = vsel %vm179, %v12104, 0
  %v12237 = vsel %vm179, %v12105, 0
  %v12240 = vsel %vm179, %v12106, 0
  %v12243 = vsel %vm179, %v12107, 0
  %v12246 = vsel %vm179, %v12108, 0
  %v12249 = vsel %vm179, %v12109, 0
  %v12252 = vsel %vm179, %v12110, 0
  %v12255 = vsel %vm179, %v12111, 0
  %v12258 = vsel %vm179, %v12112, 0
  %v12261 = vsel %vm179, %v12113, 0
  %v12264 = vsel %vm179, %v12114, 0
  %v12267 = vsel %vm179, %v12115, 0
  %v12270 = vsel %vm179, %v12116, 0
  %v12273 = vsel %vm179, %v12117, 0
  %v12276 = vsel %vm179, %v12118, 0
  %v12279 = vsel %vm179, %v12119, 0
  %v12282 = vsel %vm179, %v12120, 0
  %v12285 = vsel %vm179, %v12121, 0
  %v12288 = vsel %vm179, %v12122, 0
  %v12291 = vsel %vm179, %v12123, 0
  %v12294 = vsel %vm179, %v12124, 0
  %v12297 = vsel %vm179, %v12125, 0
  %v12300 = vsel %vm179, %v12126, 0
  %v12303 = vsel %vm179, %v12127, 0
  %v12306 = vsel %vm179, %v12128, 0
  %v12309 = vsel %vm179, %v12129, 0
  %v12312 = vsel %vm179, %v12130, 0
  %v12315 = vsel %vm179, %v12131, 0
  %v12318 = vsel %vm179, %v12132, 0
  %v12321 = vsel %vm179, %v12133, 0
  %v12324 = vsel %vm179, %v12134, 0
  %v12327 = vsel %vm179, %v12135, 0
  %v12330 = vsel %vm179, %v12136, 0
  %v12333 = vsel %vm179, %v12137, 0
  %v12336 = vsel %vm179, %v12138, 0
  %v12339 = vsel %vm179, %v12139, 0
  %v12342 = vsel %vm179, %v12140, 0
  %v12345 = vsel %vm179, %v12141, 0
  %v12348 = vsel %vm179, %v12142, 0
  %v12351 = vsel %vm179, %v12143, 0
  %v12354 = vsel %vm179, %v12144, 0
  %v12357 = vsel %vm179, %v12145, 0
  %v12360 = vsel %vm179, %v12146, 0
  %v12363 = vsel %vm179, %v12147, 0
  %v12366 = vsel %vm179, %v12148, 0
  %v12369 = vsel %vm179, %v12149, 0
  %v12372 = vsel %vm179, %v12150, 0
  %v12375 = vsel %vm179, %v12151, 0
  %v12378 = vsel %vm179, %v12152, 0
  %v12381 = vsel %vm179, %v12153, 0
  %v12384 = vsel %vm179, %v12154, 0
  %v12387 = vsel %vm179, %v12155, 0
  %v12390 = vsel %vm179, %v12156, 0
  %v12393 = vsel %vm179, %v12157, 0
  %v12396 = vsel %vm179, %v12158, 0
  %v12399 = vsel %vm179, %v12159, 0
  %v12402 = vsel %vm179, %v12160, 0
  %v12405 = vsel %vm179, %v12161, 0
  %v12408 = vsel %vm1600, %v12163, 0
  %12410 = vmatpush.msra.mxu0 0.0
  %12411 = vmatpush.msra.mxu0 0.0
  %12412 = vmatpush.msra.mxu0 0.0
  %12413 = vmatpush.msra.mxu0 0.0
  %12414 = vmatpush.msra.mxu0 0.0
  %12415 = vmatpush.msra.mxu0 0.0
  %12416 = vmatpush.msra.mxu0 0.0
  %12417 = vmatpush.msra.mxu0 0.0
  %12418 = vmatpush.msra.mxu0 0.0
  %12419 = vmatpush.msra.mxu0 0.0
  %12420 = vmatpush.msra.mxu0 0.0
  %12421 = vmatpush.msra.mxu0 0.0
  %12422 = vmatpush.msra.mxu0 0.0
  %12423 = vmatpush.msra.mxu0 0.0
  %12424 = vmatpush.msra.mxu0 0.0
  %12425 = vmatpush.msra.mxu0 %v12408
  %12426 = vmatmul.f32.gmra.mxu0 %v12165
  %v12427 = vpop.f32.mrf.mxu0
  %v12428 = vadd.f32 0.0, %v12427
  %12429 = vmatmul.f32.gmra.mxu0 %v12168
  %v12430 = vpop.f32.mrf.mxu0
  %v12431 = vadd.f32 0.0, %v12430
  %12432 = vmatmul.f32.gmra.mxu0 %v12171
  %v12433 = vpop.f32.mrf.mxu0
  %v12434 = vadd.f32 0.0, %v12433
  %12435 = vmatmul.f32.gmra.mxu0 %v12174
  %v12436 = vpop.f32.mrf.mxu0
  %v12437 = vadd.f32 0.0, %v12436
  %12438 = vmatmul.f32.gmra.mxu0 %v12177
  %v12439 = vpop.f32.mrf.mxu0
  %v12440 = vadd.f32 0.0, %v12439
  %12441 = vmatmul.f32.gmra.mxu0 %v12180
  %v12442 = vpop.f32.mrf.mxu0
  %v12443 = vadd.f32 0.0, %v12442
  %12444 = vmatmul.f32.gmra.mxu0 %v12183
  %v12445 = vpop.f32.mrf.mxu0
  %v12446 = vadd.f32 0.0, %v12445
  %12447 = vmatmul.f32.gmra.mxu0 %v12186
  %v12448 = vpop.f32.mrf.mxu0
  %v12449 = vadd.f32 0.0, %v12448
  %12450 = vmatmul.f32.gmra.mxu0 %v12189
  %v12451 = vpop.f32.mrf.mxu0
  %v12452 = vadd.f32 0.0, %v12451
  %12453 = vmatmul.f32.gmra.mxu0 %v12192
  %v12454 = vpop.f32.mrf.mxu0
  %v12455 = vadd.f32 0.0, %v12454
  %12456 = vmatmul.f32.gmra.mxu0 %v12195
  %v12457 = vpop.f32.mrf.mxu0
  %v12458 = vadd.f32 0.0, %v12457
  %12459 = vmatmul.f32.gmra.mxu0 %v12198
  %v12460 = vpop.f32.mrf.mxu0
  %v12461 = vadd.f32 0.0, %v12460
  %12462 = vmatmul.f32.gmra.mxu0 %v12201
  %v12463 = vpop.f32.mrf.mxu0
  %v12464 = vadd.f32 0.0, %v12463
  %12465 = vmatmul.f32.gmra.mxu0 %v12204
  %v12466 = vpop.f32.mrf.mxu0
  %v12467 = vadd.f32 0.0, %v12466
  %12468 = vmatmul.f32.gmra.mxu0 %v12207
  %v12469 = vpop.f32.mrf.mxu0
  %v12470 = vadd.f32 0.0, %v12469
  %12471 = vmatmul.f32.gmra.mxu0 %v12210
  %v12472 = vpop.f32.mrf.mxu0
  %v12473 = vadd.f32 0.0, %v12472
  %12474 = vmatmul.f32.gmra.mxu0 %v12213
  %v12475 = vpop.f32.mrf.mxu0
  %v12476 = vadd.f32 0.0, %v12475
  %12477 = vmatmul.f32.gmra.mxu0 %v12216
  %v12478 = vpop.f32.mrf.mxu0
  %v12479 = vadd.f32 0.0, %v12478
  %12480 = vmatmul.f32.gmra.mxu0 %v12219
  %v12481 = vpop.f32.mrf.mxu0
  %v12482 = vadd.f32 0.0, %v12481
  %12483 = vmatmul.f32.gmra.mxu0 %v12222
  %v12484 = vpop.f32.mrf.mxu0
  %v12485 = vadd.f32 0.0, %v12484
  %12486 = vmatmul.f32.gmra.mxu0 %v12225
  %v12487 = vpop.f32.mrf.mxu0
  %v12488 = vadd.f32 0.0, %v12487
  %12489 = vmatmul.f32.gmra.mxu0 %v12228
  %v12490 = vpop.f32.mrf.mxu0
  %v12491 = vadd.f32 0.0, %v12490
  %12492 = vmatmul.f32.gmra.mxu0 %v12231
  %v12493 = vpop.f32.mrf.mxu0
  %v12494 = vadd.f32 0.0, %v12493
  %12495 = vmatmul.f32.gmra.mxu0 %v12234
  %v12496 = vpop.f32.mrf.mxu0
  %v12497 = vadd.f32 0.0, %v12496
  %12498 = vmatmul.f32.gmra.mxu0 %v12237
  %v12499 = vpop.f32.mrf.mxu0
  %v12500 = vadd.f32 0.0, %v12499
  %12501 = vmatmul.f32.gmra.mxu0 %v12240
  %v12502 = vpop.f32.mrf.mxu0
  %v12503 = vadd.f32 0.0, %v12502
  %12504 = vmatmul.f32.gmra.mxu0 %v12243
  %v12505 = vpop.f32.mrf.mxu0
  %v12506 = vadd.f32 0.0, %v12505
  %12507 = vmatmul.f32.gmra.mxu0 %v12246
  %v12508 = vpop.f32.mrf.mxu0
  %v12509 = vadd.f32 0.0, %v12508
  %12510 = vmatmul.f32.gmra.mxu0 %v12249
  %v12511 = vpop.f32.mrf.mxu0
  %v12512 = vadd.f32 0.0, %v12511
  %12513 = vmatmul.f32.gmra.mxu0 %v12252
  %v12514 = vpop.f32.mrf.mxu0
  %v12515 = vadd.f32 0.0, %v12514
  %12516 = vmatmul.f32.gmra.mxu0 %v12255
  %v12517 = vpop.f32.mrf.mxu0
  %v12518 = vadd.f32 0.0, %v12517
  %12519 = vmatmul.f32.gmra.mxu0 %v12258
  %v12520 = vpop.f32.mrf.mxu0
  %v12521 = vadd.f32 0.0, %v12520
  %12522 = vmatmul.f32.gmra.mxu0 %v12261
  %v12523 = vpop.f32.mrf.mxu0
  %v12524 = vadd.f32 0.0, %v12523
  %12525 = vmatmul.f32.gmra.mxu0 %v12264
  %v12526 = vpop.f32.mrf.mxu0
  %v12527 = vadd.f32 0.0, %v12526
  %12528 = vmatmul.f32.gmra.mxu0 %v12267
  %v12529 = vpop.f32.mrf.mxu0
  %v12530 = vadd.f32 0.0, %v12529
  %12531 = vmatmul.f32.gmra.mxu0 %v12270
  %v12532 = vpop.f32.mrf.mxu0
  %v12533 = vadd.f32 0.0, %v12532
  %12534 = vmatmul.f32.gmra.mxu0 %v12273
  %v12535 = vpop.f32.mrf.mxu0
  %v12536 = vadd.f32 0.0, %v12535
  %12537 = vmatmul.f32.gmra.mxu0 %v12276
  %v12538 = vpop.f32.mrf.mxu0
  %v12539 = vadd.f32 0.0, %v12538
  %12540 = vmatmul.f32.gmra.mxu0 %v12279
  %v12541 = vpop.f32.mrf.mxu0
  %v12542 = vadd.f32 0.0, %v12541
  %12543 = vmatmul.f32.gmra.mxu0 %v12282
  %v12544 = vpop.f32.mrf.mxu0
  %v12545 = vadd.f32 0.0, %v12544
  %12546 = vmatmul.f32.gmra.mxu0 %v12285
  %v12547 = vpop.f32.mrf.mxu0
  %v12548 = vadd.f32 0.0, %v12547
  %12549 = vmatmul.f32.gmra.mxu0 %v12288
  %v12550 = vpop.f32.mrf.mxu0
  %v12551 = vadd.f32 0.0, %v12550
  %12552 = vmatmul.f32.gmra.mxu0 %v12291
  %v12553 = vpop.f32.mrf.mxu0
  %v12554 = vadd.f32 0.0, %v12553
  %12555 = vmatmul.f32.gmra.mxu0 %v12294
  %v12556 = vpop.f32.mrf.mxu0
  %v12557 = vadd.f32 0.0, %v12556
  %12558 = vmatmul.f32.gmra.mxu0 %v12297
  %v12559 = vpop.f32.mrf.mxu0
  %v12560 = vadd.f32 0.0, %v12559
  %12561 = vmatmul.f32.gmra.mxu0 %v12300
  %v12562 = vpop.f32.mrf.mxu0
  %v12563 = vadd.f32 0.0, %v12562
  %12564 = vmatmul.f32.gmra.mxu0 %v12303
  %v12565 = vpop.f32.mrf.mxu0
  %v12566 = vadd.f32 0.0, %v12565
  %12567 = vmatmul.f32.gmra.mxu0 %v12306
  %v12568 = vpop.f32.mrf.mxu0
  %v12569 = vadd.f32 0.0, %v12568
  %12570 = vmatmul.f32.gmra.mxu0 %v12309
  %v12571 = vpop.f32.mrf.mxu0
  %v12572 = vadd.f32 0.0, %v12571
  %12573 = vmatmul.f32.gmra.mxu0 %v12312
  %v12574 = vpop.f32.mrf.mxu0
  %v12575 = vadd.f32 0.0, %v12574
  %12576 = vmatmul.f32.gmra.mxu0 %v12315
  %v12577 = vpop.f32.mrf.mxu0
  %v12578 = vadd.f32 0.0, %v12577
  %12579 = vmatmul.f32.gmra.mxu0 %v12318
  %v12580 = vpop.f32.mrf.mxu0
  %v12581 = vadd.f32 0.0, %v12580
  %12582 = vmatmul.f32.gmra.mxu0 %v12321
  %v12583 = vpop.f32.mrf.mxu0
  %v12584 = vadd.f32 0.0, %v12583
  %12585 = vmatmul.f32.gmra.mxu0 %v12324
  %v12586 = vpop.f32.mrf.mxu0
  %v12587 = vadd.f32 0.0, %v12586
  %12588 = vmatmul.f32.gmra.mxu0 %v12327
  %v12589 = vpop.f32.mrf.mxu0
  %v12590 = vadd.f32 0.0, %v12589
  %12591 = vmatmul.f32.gmra.mxu0 %v12330
  %v12592 = vpop.f32.mrf.mxu0
  %v12593 = vadd.f32 0.0, %v12592
  %12594 = vmatmul.f32.gmra.mxu0 %v12333
  %v12595 = vpop.f32.mrf.mxu0
  %v12596 = vadd.f32 0.0, %v12595
  %12597 = vmatmul.f32.gmra.mxu0 %v12336
  %v12598 = vpop.f32.mrf.mxu0
  %v12599 = vadd.f32 0.0, %v12598
  %12600 = vmatmul.f32.gmra.mxu0 %v12339
  %v12601 = vpop.f32.mrf.mxu0
  %v12602 = vadd.f32 0.0, %v12601
  %12603 = vmatmul.f32.gmra.mxu0 %v12342
  %v12604 = vpop.f32.mrf.mxu0
  %v12605 = vadd.f32 0.0, %v12604
  %12606 = vmatmul.f32.gmra.mxu0 %v12345
  %v12607 = vpop.f32.mrf.mxu0
  %v12608 = vadd.f32 0.0, %v12607
  %12609 = vmatmul.f32.gmra.mxu0 %v12348
  %v12610 = vpop.f32.mrf.mxu0
  %v12611 = vadd.f32 0.0, %v12610
  %12612 = vmatmul.f32.gmra.mxu0 %v12351
  %v12613 = vpop.f32.mrf.mxu0
  %v12614 = vadd.f32 0.0, %v12613
  %12615 = vmatmul.f32.gmra.mxu0 %v12354
  %v12616 = vpop.f32.mrf.mxu0
  %v12617 = vadd.f32 0.0, %v12616
  %12618 = vmatmul.f32.gmra.mxu0 %v12357
  %v12619 = vpop.f32.mrf.mxu0
  %v12620 = vadd.f32 0.0, %v12619
  %12621 = vmatmul.f32.gmra.mxu0 %v12360
  %v12622 = vpop.f32.mrf.mxu0
  %v12623 = vadd.f32 0.0, %v12622
  %12624 = vmatmul.f32.gmra.mxu0 %v12363
  %v12625 = vpop.f32.mrf.mxu0
  %v12626 = vadd.f32 0.0, %v12625
  %12627 = vmatmul.f32.gmra.mxu0 %v12366
  %v12628 = vpop.f32.mrf.mxu0
  %v12629 = vadd.f32 0.0, %v12628
  %12630 = vmatmul.f32.gmra.mxu0 %v12369
  %v12631 = vpop.f32.mrf.mxu0
  %v12632 = vadd.f32 0.0, %v12631
  %12633 = vmatmul.f32.gmra.mxu0 %v12372
  %v12634 = vpop.f32.mrf.mxu0
  %v12635 = vadd.f32 0.0, %v12634
  %12636 = vmatmul.f32.gmra.mxu0 %v12375
  %v12637 = vpop.f32.mrf.mxu0
  %v12638 = vadd.f32 0.0, %v12637
  %12639 = vmatmul.f32.gmra.mxu0 %v12378
  %v12640 = vpop.f32.mrf.mxu0
  %v12641 = vadd.f32 0.0, %v12640
  %12642 = vmatmul.f32.gmra.mxu0 %v12381
  %v12643 = vpop.f32.mrf.mxu0
  %v12644 = vadd.f32 0.0, %v12643
  %12645 = vmatmul.f32.gmra.mxu0 %v12384
  %v12646 = vpop.f32.mrf.mxu0
  %v12647 = vadd.f32 0.0, %v12646
  %12648 = vmatmul.f32.gmra.mxu0 %v12387
  %v12649 = vpop.f32.mrf.mxu0
  %v12650 = vadd.f32 0.0, %v12649
  %12651 = vmatmul.f32.gmra.mxu0 %v12390
  %v12652 = vpop.f32.mrf.mxu0
  %v12653 = vadd.f32 0.0, %v12652
  %12654 = vmatmul.f32.gmra.mxu0 %v12393
  %v12655 = vpop.f32.mrf.mxu0
  %v12656 = vadd.f32 0.0, %v12655
  %12657 = vmatmul.f32.gmra.mxu0 %v12396
  %v12658 = vpop.f32.mrf.mxu0
  %v12659 = vadd.f32 0.0, %v12658
  %12660 = vmatmul.f32.gmra.mxu0 %v12399
  %v12661 = vpop.f32.mrf.mxu0
  %v12662 = vadd.f32 0.0, %v12661
  %12663 = vmatmul.f32.gmra.mxu0 %v12402
  %v12664 = vpop.f32.mrf.mxu0
  %v12665 = vadd.f32 0.0, %v12664
  %12666 = vmatmul.f32.gmra.mxu0 %v12405
  %v12667 = vpop.f32.mrf.mxu0
  %v12668 = vadd.f32 0.0, %v12667
  %12669 = vdwg.mxu0
  %v12670 = vadd.f32 %v12000, %v12428
  %v12671 = vadd.f32 %v12001, %v12431
  %v12672 = vadd.f32 %v12002, %v12434
  %v12673 = vadd.f32 %v12003, %v12437
  %v12674 = vadd.f32 %v12004, %v12440
  %v12675 = vadd.f32 %v12005, %v12443
  %v12676 = vadd.f32 %v12006, %v12446
  %v12677 = vadd.f32 %v12007, %v12449
  %v12678 = vadd.f32 %v12008, %v12452
  %v12679 = vadd.f32 %v12009, %v12455
  %v12680 = vadd.f32 %v12010, %v12458
  %v12681 = vadd.f32 %v12011, %v12461
  %v12682 = vadd.f32 %v12012, %v12464
  %v12683 = vadd.f32 %v12013, %v12467
  %v12684 = vadd.f32 %v12014, %v12470
  %v12685 = vadd.f32 %v12015, %v12473
  %v12686 = vadd.f32 %v12016, %v12476
  %v12687 = vadd.f32 %v12017, %v12479
  %v12688 = vadd.f32 %v12018, %v12482
  %v12689 = vadd.f32 %v12019, %v12485
  %v12690 = vadd.f32 %v12020, %v12488
  %v12691 = vadd.f32 %v12021, %v12491
  %v12692 = vadd.f32 %v12022, %v12494
  %v12693 = vadd.f32 %v12023, %v12497
  %v12694 = vadd.f32 %v12024, %v12500
  %v12695 = vadd.f32 %v12025, %v12503
  %v12696 = vadd.f32 %v12026, %v12506
  %v12697 = vadd.f32 %v12027, %v12509
  %v12698 = vadd.f32 %v12028, %v12512
  %v12699 = vadd.f32 %v12029, %v12515
  %v12700 = vadd.f32 %v12030, %v12518
  %v12701 = vadd.f32 %v12031, %v12521
  %v12702 = vadd.f32 %v12032, %v12524
  %v12703 = vadd.f32 %v12033, %v12527
  %v12704 = vadd.f32 %v12034, %v12530
  %v12705 = vadd.f32 %v12035, %v12533
  %v12706 = vadd.f32 %v12036, %v12536
  %v12707 = vadd.f32 %v12037, %v12539
  %v12708 = vadd.f32 %v12038, %v12542
  %v12709 = vadd.f32 %v12039, %v12545
  %v12710 = vadd.f32 %v12040, %v12548
  %v12711 = vadd.f32 %v12041, %v12551
  %v12712 = vadd.f32 %v12042, %v12554
  %v12713 = vadd.f32 %v12043, %v12557
  %v12714 = vadd.f32 %v12044, %v12560
  %v12715 = vadd.f32 %v12045, %v12563
  %v12716 = vadd.f32 %v12046, %v12566
  %v12717 = vadd.f32 %v12047, %v12569
  %v12718 = vadd.f32 %v12048, %v12572
  %v12719 = vadd.f32 %v12049, %v12575
  %v12720 = vadd.f32 %v12050, %v12578
  %v12721 = vadd.f32 %v12051, %v12581
  %v12722 = vadd.f32 %v12052, %v12584
  %v12723 = vadd.f32 %v12053, %v12587
  %v12724 = vadd.f32 %v12054, %v12590
  %v12725 = vadd.f32 %v12055, %v12593
  %v12726 = vadd.f32 %v12056, %v12596
  %v12727 = vadd.f32 %v12057, %v12599
  %v12728 = vadd.f32 %v12058, %v12602
  %v12729 = vadd.f32 %v12059, %v12605
  %v12730 = vadd.f32 %v12060, %v12608
  %v12731 = vadd.f32 %v12061, %v12611
  %v12732 = vadd.f32 %v12062, %v12614
  %v12733 = vadd.f32 %v12063, %v12617
  %v12734 = vadd.f32 %v12064, %v12620
  %v12735 = vadd.f32 %v12065, %v12623
  %v12736 = vadd.f32 %v12066, %v12626
  %v12737 = vadd.f32 %v12067, %v12629
  %v12738 = vadd.f32 %v12068, %v12632
  %v12739 = vadd.f32 %v12069, %v12635
  %v12740 = vadd.f32 %v12070, %v12638
  %v12741 = vadd.f32 %v12071, %v12641
  %v12742 = vadd.f32 %v12072, %v12644
  %v12743 = vadd.f32 %v12073, %v12647
  %v12744 = vadd.f32 %v12074, %v12650
  %v12745 = vadd.f32 %v12075, %v12653
  %v12746 = vadd.f32 %v12076, %v12656
  %v12747 = vadd.f32 %v12077, %v12659
  %v12748 = vadd.f32 %v12078, %v12662
  %v12749 = vadd.f32 %v12079, %v12665
  %v12750 = vadd.f32 %v12080, %v12668
  %v12751 = vld [vmem:[#allocation2 + $0x2a] sm:$0xff]
  %v12752 = vld [vmem:[#allocation2 + $0x32] sm:$0xff]
  %v12753 = vld [vmem:[#allocation2 + $0x3a] sm:$0xff]
  %v12754 = vld [vmem:[#allocation2 + $0x42] sm:$0xff]
  %v12755 = vld [vmem:[#allocation2 + $0x4a] sm:$0xff]
  %v12756 = vld [vmem:[#allocation2 + $0x52] sm:$0xff]
  %v12757 = vld [vmem:[#allocation2 + $0x5a] sm:$0xff]
  %v12758 = vld [vmem:[#allocation2 + $0x62] sm:$0xff]
  %v12759 = vld [vmem:[#allocation2 + $0x6a] sm:$0xff]
  %v12760 = vld [vmem:[#allocation2 + $0x72] sm:$0xff]
  %v12761 = vld [vmem:[#allocation2 + $0x7a] sm:$0xff]
  %v12762 = vld [vmem:[#allocation2 + $0x82] sm:$0xff]
  %v12763 = vld [vmem:[#allocation2 + $0x8a] sm:$0xff]
  %v12764 = vld [vmem:[#allocation2 + $0x92] sm:$0xff]
  %v12765 = vld [vmem:[#allocation2 + $0x9a] sm:$0xff]
  %v12766 = vld [vmem:[#allocation2 + $0xa2] sm:$0xff]
  %v12767 = vld [vmem:[#allocation2 + $0xaa] sm:$0xff]
  %v12768 = vld [vmem:[#allocation2 + $0xb2] sm:$0xff]
  %v12769 = vld [vmem:[#allocation2 + $0xba] sm:$0xff]
  %v12770 = vld [vmem:[#allocation2 + $0xc2] sm:$0xff]
  %v12771 = vld [vmem:[#allocation2 + $0xca] sm:$0xff]
  %v12772 = vld [vmem:[#allocation2 + $0xd2] sm:$0xff]
  %v12773 = vld [vmem:[#allocation2 + $0xda] sm:$0xff]
  %v12774 = vld [vmem:[#allocation2 + $0xe2] sm:$0xff]
  %v12775 = vld [vmem:[#allocation2 + $0xea] sm:$0xff]
  %v12776 = vld [vmem:[#allocation2 + $0xf2] sm:$0xff]
  %v12777 = vld [vmem:[#allocation2 + $0xfa] sm:$0xff]
  %v12778 = vld [vmem:[#allocation2 + $0x102] sm:$0xff]
  %v12779 = vld [vmem:[#allocation2 + $0x10a] sm:$0xff]
  %v12780 = vld [vmem:[#allocation2 + $0x112] sm:$0xff]
  %v12781 = vld [vmem:[#allocation2 + $0x11a] sm:$0xff]
  %v12782 = vld [vmem:[#allocation2 + $0x122] sm:$0xff]
  %v12783 = vld [vmem:[#allocation2 + $0x12a] sm:$0xff]
  %v12784 = vld [vmem:[#allocation2 + $0x132] sm:$0xff]
  %v12785 = vld [vmem:[#allocation2 + $0x13a] sm:$0xff]
  %v12786 = vld [vmem:[#allocation2 + $0x142] sm:$0xff]
  %v12787 = vld [vmem:[#allocation2 + $0x14a] sm:$0xff]
  %v12788 = vld [vmem:[#allocation2 + $0x152] sm:$0xff]
  %v12789 = vld [vmem:[#allocation2 + $0x15a] sm:$0xff]
  %v12790 = vld [vmem:[#allocation2 + $0x162] sm:$0xff]
  %v12791 = vld [vmem:[#allocation2 + $0x16a] sm:$0xff]
  %v12792 = vld [vmem:[#allocation2 + $0x172] sm:$0xff]
  %v12793 = vld [vmem:[#allocation2 + $0x17a] sm:$0xff]
  %v12794 = vld [vmem:[#allocation2 + $0x182] sm:$0xff]
  %v12795 = vld [vmem:[#allocation2 + $0x18a] sm:$0xff]
  %v12796 = vld [vmem:[#allocation2 + $0x192] sm:$0xff]
  %v12797 = vld [vmem:[#allocation2 + $0x19a] sm:$0xff]
  %v12798 = vld [vmem:[#allocation2 + $0x1a2] sm:$0xff]
  %v12799 = vld [vmem:[#allocation2 + $0x1aa] sm:$0xff]
  %v12800 = vld [vmem:[#allocation2 + $0x1b2] sm:$0xff]
  %v12801 = vld [vmem:[#allocation2 + $0x1ba] sm:$0xff]
  %v12802 = vld [vmem:[#allocation2 + $0x1c2] sm:$0xff]
  %v12803 = vld [vmem:[#allocation2 + $0x1ca] sm:$0xff]
  %v12804 = vld [vmem:[#allocation2 + $0x1d2] sm:$0xff]
  %v12805 = vld [vmem:[#allocation2 + $0x1da] sm:$0xff]
  %v12806 = vld [vmem:[#allocation2 + $0x1e2] sm:$0xff]
  %v12807 = vld [vmem:[#allocation2 + $0x1ea] sm:$0xff]
  %v12808 = vld [vmem:[#allocation2 + $0x1f2] sm:$0xff]
  %v12809 = vld [vmem:[#allocation2 + $0x1fa] sm:$0xff]
  %v12810 = vld [vmem:[#allocation2 + $0x202] sm:$0xff]
  %v12811 = vld [vmem:[#allocation2 + $0x20a] sm:$0xff]
  %v12812 = vld [vmem:[#allocation2 + $0x212] sm:$0xff]
  %v12813 = vld [vmem:[#allocation2 + $0x21a] sm:$0xff]
  %v12814 = vld [vmem:[#allocation2 + $0x222] sm:$0xff]
  %v12815 = vld [vmem:[#allocation2 + $0x22a] sm:$0xff]
  %v12816 = vld [vmem:[#allocation2 + $0x232] sm:$0xff]
  %v12817 = vld [vmem:[#allocation2 + $0x23a] sm:$0xff]
  %v12818 = vld [vmem:[#allocation2 + $0x242] sm:$0xff]
  %v12819 = vld [vmem:[#allocation2 + $0x24a] sm:$0xff]
  %v12820 = vld [vmem:[#allocation2 + $0x252] sm:$0xff]
  %v12821 = vld [vmem:[#allocation2 + $0x25a] sm:$0xff]
  %v12822 = vld [vmem:[#allocation2 + $0x262] sm:$0xff]
  %v12823 = vld [vmem:[#allocation2 + $0x26a] sm:$0xff]
  %v12824 = vld [vmem:[#allocation2 + $0x272] sm:$0xff]
  %v12825 = vld [vmem:[#allocation2 + $0x27a] sm:$0xff]
  %v12826 = vld [vmem:[#allocation2 + $0x282] sm:$0xff]
  %v12827 = vld [vmem:[#allocation2 + $0x28a] sm:$0xff]
  %v12828 = vld [vmem:[#allocation2 + $0x292] sm:$0xff]
  %v12829 = vld [vmem:[#allocation2 + $0x29a] sm:$0xff]
  %v12830 = vld [vmem:[#allocation2 + $0x2a2] sm:$0xff]
  %v12831 = vld [vmem:[#allocation2 + $0x2aa] sm:$0xff]
  %s12832 = scalar_lea.vmem %s3, 64
  %v12833 = vld [vmem:[%s12832] sm:$0xf]
  %v12835 = vsel %vm179, %v12751, 0
  %v12838 = vsel %vm179, %v12752, 0
  %v12841 = vsel %vm179, %v12753, 0
  %v12844 = vsel %vm179, %v12754, 0
  %v12847 = vsel %vm179, %v12755, 0
  %v12850 = vsel %vm179, %v12756, 0
  %v12853 = vsel %vm179, %v12757, 0
  %v12856 = vsel %vm179, %v12758, 0
  %v12859 = vsel %vm179, %v12759, 0
  %v12862 = vsel %vm179, %v12760, 0
  %v12865 = vsel %vm179, %v12761, 0
  %v12868 = vsel %vm179, %v12762, 0
  %v12871 = vsel %vm179, %v12763, 0
  %v12874 = vsel %vm179, %v12764, 0
  %v12877 = vsel %vm179, %v12765, 0
  %v12880 = vsel %vm179, %v12766, 0
  %v12883 = vsel %vm179, %v12767, 0
  %v12886 = vsel %vm179, %v12768, 0
  %v12889 = vsel %vm179, %v12769, 0
  %v12892 = vsel %vm179, %v12770, 0
  %v12895 = vsel %vm179, %v12771, 0
  %v12898 = vsel %vm179, %v12772, 0
  %v12901 = vsel %vm179, %v12773, 0
  %v12904 = vsel %vm179, %v12774, 0
  %v12907 = vsel %vm179, %v12775, 0
  %v12910 = vsel %vm179, %v12776, 0
  %v12913 = vsel %vm179, %v12777, 0
  %v12916 = vsel %vm179, %v12778, 0
  %v12919 = vsel %vm179, %v12779, 0
  %v12922 = vsel %vm179, %v12780, 0
  %v12925 = vsel %vm179, %v12781, 0
  %v12928 = vsel %vm179, %v12782, 0
  %v12931 = vsel %vm179, %v12783, 0
  %v12934 = vsel %vm179, %v12784, 0
  %v12937 = vsel %vm179, %v12785, 0
  %v12940 = vsel %vm179, %v12786, 0
  %v12943 = vsel %vm179, %v12787, 0
  %v12946 = vsel %vm179, %v12788, 0
  %v12949 = vsel %vm179, %v12789, 0
  %v12952 = vsel %vm179, %v12790, 0
  %v12955 = vsel %vm179, %v12791, 0
  %v12958 = vsel %vm179, %v12792, 0
  %v12961 = vsel %vm179, %v12793, 0
  %v12964 = vsel %vm179, %v12794, 0
  %v12967 = vsel %vm179, %v12795, 0
  %v12970 = vsel %vm179, %v12796, 0
  %v12973 = vsel %vm179, %v12797, 0
  %v12976 = vsel %vm179, %v12798, 0
  %v12979 = vsel %vm179, %v12799, 0
  %v12982 = vsel %vm179, %v12800, 0
  %v12985 = vsel %vm179, %v12801, 0
  %v12988 = vsel %vm179, %v12802, 0
  %v12991 = vsel %vm179, %v12803, 0
  %v12994 = vsel %vm179, %v12804, 0
  %v12997 = vsel %vm179, %v12805, 0
  %v13000 = vsel %vm179, %v12806, 0
  %v13003 = vsel %vm179, %v12807, 0
  %v13006 = vsel %vm179, %v12808, 0
  %v13009 = vsel %vm179, %v12809, 0
  %v13012 = vsel %vm179, %v12810, 0
  %v13015 = vsel %vm179, %v12811, 0
  %v13018 = vsel %vm179, %v12812, 0
  %v13021 = vsel %vm179, %v12813, 0
  %v13024 = vsel %vm179, %v12814, 0
  %v13027 = vsel %vm179, %v12815, 0
  %v13030 = vsel %vm179, %v12816, 0
  %v13033 = vsel %vm179, %v12817, 0
  %v13036 = vsel %vm179, %v12818, 0
  %v13039 = vsel %vm179, %v12819, 0
  %v13042 = vsel %vm179, %v12820, 0
  %v13045 = vsel %vm179, %v12821, 0
  %v13048 = vsel %vm179, %v12822, 0
  %v13051 = vsel %vm179, %v12823, 0
  %v13054 = vsel %vm179, %v12824, 0
  %v13057 = vsel %vm179, %v12825, 0
  %v13060 = vsel %vm179, %v12826, 0
  %v13063 = vsel %vm179, %v12827, 0
  %v13066 = vsel %vm179, %v12828, 0
  %v13069 = vsel %vm179, %v12829, 0
  %v13072 = vsel %vm179, %v12830, 0
  %v13075 = vsel %vm179, %v12831, 0
  %v13078 = vsel %vm1600, %v12833, 0
  %13080 = vmatpush.msra.mxu0 0.0
  %13081 = vmatpush.msra.mxu0 0.0
  %13082 = vmatpush.msra.mxu0 0.0
  %13083 = vmatpush.msra.mxu0 0.0
  %13084 = vmatpush.msra.mxu0 0.0
  %13085 = vmatpush.msra.mxu0 0.0
  %13086 = vmatpush.msra.mxu0 0.0
  %13087 = vmatpush.msra.mxu0 0.0
  %13088 = vmatpush.msra.mxu0 0.0
  %13089 = vmatpush.msra.mxu0 0.0
  %13090 = vmatpush.msra.mxu0 0.0
  %13091 = vmatpush.msra.mxu0 0.0
  %13092 = vmatpush.msra.mxu0 0.0
  %13093 = vmatpush.msra.mxu0 0.0
  %13094 = vmatpush.msra.mxu0 0.0
  %13095 = vmatpush.msra.mxu0 %v13078
  %13096 = vmatmul.f32.gmra.mxu0 %v12835
  %v13097 = vpop.f32.mrf.mxu0
  %v13098 = vadd.f32 0.0, %v13097
  %13099 = vmatmul.f32.gmra.mxu0 %v12838
  %v13100 = vpop.f32.mrf.mxu0
  %v13101 = vadd.f32 0.0, %v13100
  %13102 = vmatmul.f32.gmra.mxu0 %v12841
  %v13103 = vpop.f32.mrf.mxu0
  %v13104 = vadd.f32 0.0, %v13103
  %13105 = vmatmul.f32.gmra.mxu0 %v12844
  %v13106 = vpop.f32.mrf.mxu0
  %v13107 = vadd.f32 0.0, %v13106
  %13108 = vmatmul.f32.gmra.mxu0 %v12847
  %v13109 = vpop.f32.mrf.mxu0
  %v13110 = vadd.f32 0.0, %v13109
  %13111 = vmatmul.f32.gmra.mxu0 %v12850
  %v13112 = vpop.f32.mrf.mxu0
  %v13113 = vadd.f32 0.0, %v13112
  %13114 = vmatmul.f32.gmra.mxu0 %v12853
  %v13115 = vpop.f32.mrf.mxu0
  %v13116 = vadd.f32 0.0, %v13115
  %13117 = vmatmul.f32.gmra.mxu0 %v12856
  %v13118 = vpop.f32.mrf.mxu0
  %v13119 = vadd.f32 0.0, %v13118
  %13120 = vmatmul.f32.gmra.mxu0 %v12859
  %v13121 = vpop.f32.mrf.mxu0
  %v13122 = vadd.f32 0.0, %v13121
  %13123 = vmatmul.f32.gmra.mxu0 %v12862
  %v13124 = vpop.f32.mrf.mxu0
  %v13125 = vadd.f32 0.0, %v13124
  %13126 = vmatmul.f32.gmra.mxu0 %v12865
  %v13127 = vpop.f32.mrf.mxu0
  %v13128 = vadd.f32 0.0, %v13127
  %13129 = vmatmul.f32.gmra.mxu0 %v12868
  %v13130 = vpop.f32.mrf.mxu0
  %v13131 = vadd.f32 0.0, %v13130
  %13132 = vmatmul.f32.gmra.mxu0 %v12871
  %v13133 = vpop.f32.mrf.mxu0
  %v13134 = vadd.f32 0.0, %v13133
  %13135 = vmatmul.f32.gmra.mxu0 %v12874
  %v13136 = vpop.f32.mrf.mxu0
  %v13137 = vadd.f32 0.0, %v13136
  %13138 = vmatmul.f32.gmra.mxu0 %v12877
  %v13139 = vpop.f32.mrf.mxu0
  %v13140 = vadd.f32 0.0, %v13139
  %13141 = vmatmul.f32.gmra.mxu0 %v12880
  %v13142 = vpop.f32.mrf.mxu0
  %v13143 = vadd.f32 0.0, %v13142
  %13144 = vmatmul.f32.gmra.mxu0 %v12883
  %v13145 = vpop.f32.mrf.mxu0
  %v13146 = vadd.f32 0.0, %v13145
  %13147 = vmatmul.f32.gmra.mxu0 %v12886
  %v13148 = vpop.f32.mrf.mxu0
  %v13149 = vadd.f32 0.0, %v13148
  %13150 = vmatmul.f32.gmra.mxu0 %v12889
  %v13151 = vpop.f32.mrf.mxu0
  %v13152 = vadd.f32 0.0, %v13151
  %13153 = vmatmul.f32.gmra.mxu0 %v12892
  %v13154 = vpop.f32.mrf.mxu0
  %v13155 = vadd.f32 0.0, %v13154
  %13156 = vmatmul.f32.gmra.mxu0 %v12895
  %v13157 = vpop.f32.mrf.mxu0
  %v13158 = vadd.f32 0.0, %v13157
  %13159 = vmatmul.f32.gmra.mxu0 %v12898
  %v13160 = vpop.f32.mrf.mxu0
  %v13161 = vadd.f32 0.0, %v13160
  %13162 = vmatmul.f32.gmra.mxu0 %v12901
  %v13163 = vpop.f32.mrf.mxu0
  %v13164 = vadd.f32 0.0, %v13163
  %13165 = vmatmul.f32.gmra.mxu0 %v12904
  %v13166 = vpop.f32.mrf.mxu0
  %v13167 = vadd.f32 0.0, %v13166
  %13168 = vmatmul.f32.gmra.mxu0 %v12907
  %v13169 = vpop.f32.mrf.mxu0
  %v13170 = vadd.f32 0.0, %v13169
  %13171 = vmatmul.f32.gmra.mxu0 %v12910
  %v13172 = vpop.f32.mrf.mxu0
  %v13173 = vadd.f32 0.0, %v13172
  %13174 = vmatmul.f32.gmra.mxu0 %v12913
  %v13175 = vpop.f32.mrf.mxu0
  %v13176 = vadd.f32 0.0, %v13175
  %13177 = vmatmul.f32.gmra.mxu0 %v12916
  %v13178 = vpop.f32.mrf.mxu0
  %v13179 = vadd.f32 0.0, %v13178
  %13180 = vmatmul.f32.gmra.mxu0 %v12919
  %v13181 = vpop.f32.mrf.mxu0
  %v13182 = vadd.f32 0.0, %v13181
  %13183 = vmatmul.f32.gmra.mxu0 %v12922
  %v13184 = vpop.f32.mrf.mxu0
  %v13185 = vadd.f32 0.0, %v13184
  %13186 = vmatmul.f32.gmra.mxu0 %v12925
  %v13187 = vpop.f32.mrf.mxu0
  %v13188 = vadd.f32 0.0, %v13187
  %13189 = vmatmul.f32.gmra.mxu0 %v12928
  %v13190 = vpop.f32.mrf.mxu0
  %v13191 = vadd.f32 0.0, %v13190
  %13192 = vmatmul.f32.gmra.mxu0 %v12931
  %v13193 = vpop.f32.mrf.mxu0
  %v13194 = vadd.f32 0.0, %v13193
  %13195 = vmatmul.f32.gmra.mxu0 %v12934
  %v13196 = vpop.f32.mrf.mxu0
  %v13197 = vadd.f32 0.0, %v13196
  %13198 = vmatmul.f32.gmra.mxu0 %v12937
  %v13199 = vpop.f32.mrf.mxu0
  %v13200 = vadd.f32 0.0, %v13199
  %13201 = vmatmul.f32.gmra.mxu0 %v12940
  %v13202 = vpop.f32.mrf.mxu0
  %v13203 = vadd.f32 0.0, %v13202
  %13204 = vmatmul.f32.gmra.mxu0 %v12943
  %v13205 = vpop.f32.mrf.mxu0
  %v13206 = vadd.f32 0.0, %v13205
  %13207 = vmatmul.f32.gmra.mxu0 %v12946
  %v13208 = vpop.f32.mrf.mxu0
  %v13209 = vadd.f32 0.0, %v13208
  %13210 = vmatmul.f32.gmra.mxu0 %v12949
  %v13211 = vpop.f32.mrf.mxu0
  %v13212 = vadd.f32 0.0, %v13211
  %13213 = vmatmul.f32.gmra.mxu0 %v12952
  %v13214 = vpop.f32.mrf.mxu0
  %v13215 = vadd.f32 0.0, %v13214
  %13216 = vmatmul.f32.gmra.mxu0 %v12955
  %v13217 = vpop.f32.mrf.mxu0
  %v13218 = vadd.f32 0.0, %v13217
  %13219 = vmatmul.f32.gmra.mxu0 %v12958
  %v13220 = vpop.f32.mrf.mxu0
  %v13221 = vadd.f32 0.0, %v13220
  %13222 = vmatmul.f32.gmra.mxu0 %v12961
  %v13223 = vpop.f32.mrf.mxu0
  %v13224 = vadd.f32 0.0, %v13223
  %13225 = vmatmul.f32.gmra.mxu0 %v12964
  %v13226 = vpop.f32.mrf.mxu0
  %v13227 = vadd.f32 0.0, %v13226
  %13228 = vmatmul.f32.gmra.mxu0 %v12967
  %v13229 = vpop.f32.mrf.mxu0
  %v13230 = vadd.f32 0.0, %v13229
  %13231 = vmatmul.f32.gmra.mxu0 %v12970
  %v13232 = vpop.f32.mrf.mxu0
  %v13233 = vadd.f32 0.0, %v13232
  %13234 = vmatmul.f32.gmra.mxu0 %v12973
  %v13235 = vpop.f32.mrf.mxu0
  %v13236 = vadd.f32 0.0, %v13235
  %13237 = vmatmul.f32.gmra.mxu0 %v12976
  %v13238 = vpop.f32.mrf.mxu0
  %v13239 = vadd.f32 0.0, %v13238
  %13240 = vmatmul.f32.gmra.mxu0 %v12979
  %v13241 = vpop.f32.mrf.mxu0
  %v13242 = vadd.f32 0.0, %v13241
  %13243 = vmatmul.f32.gmra.mxu0 %v12982
  %v13244 = vpop.f32.mrf.mxu0
  %v13245 = vadd.f32 0.0, %v13244
  %13246 = vmatmul.f32.gmra.mxu0 %v12985
  %v13247 = vpop.f32.mrf.mxu0
  %v13248 = vadd.f32 0.0, %v13247
  %13249 = vmatmul.f32.gmra.mxu0 %v12988
  %v13250 = vpop.f32.mrf.mxu0
  %v13251 = vadd.f32 0.0, %v13250
  %13252 = vmatmul.f32.gmra.mxu0 %v12991
  %v13253 = vpop.f32.mrf.mxu0
  %v13254 = vadd.f32 0.0, %v13253
  %13255 = vmatmul.f32.gmra.mxu0 %v12994
  %v13256 = vpop.f32.mrf.mxu0
  %v13257 = vadd.f32 0.0, %v13256
  %13258 = vmatmul.f32.gmra.mxu0 %v12997
  %v13259 = vpop.f32.mrf.mxu0
  %v13260 = vadd.f32 0.0, %v13259
  %13261 = vmatmul.f32.gmra.mxu0 %v13000
  %v13262 = vpop.f32.mrf.mxu0
  %v13263 = vadd.f32 0.0, %v13262
  %13264 = vmatmul.f32.gmra.mxu0 %v13003
  %v13265 = vpop.f32.mrf.mxu0
  %v13266 = vadd.f32 0.0, %v13265
  %13267 = vmatmul.f32.gmra.mxu0 %v13006
  %v13268 = vpop.f32.mrf.mxu0
  %v13269 = vadd.f32 0.0, %v13268
  %13270 = vmatmul.f32.gmra.mxu0 %v13009
  %v13271 = vpop.f32.mrf.mxu0
  %v13272 = vadd.f32 0.0, %v13271
  %13273 = vmatmul.f32.gmra.mxu0 %v13012
  %v13274 = vpop.f32.mrf.mxu0
  %v13275 = vadd.f32 0.0, %v13274
  %13276 = vmatmul.f32.gmra.mxu0 %v13015
  %v13277 = vpop.f32.mrf.mxu0
  %v13278 = vadd.f32 0.0, %v13277
  %13279 = vmatmul.f32.gmra.mxu0 %v13018
  %v13280 = vpop.f32.mrf.mxu0
  %v13281 = vadd.f32 0.0, %v13280
  %13282 = vmatmul.f32.gmra.mxu0 %v13021
  %v13283 = vpop.f32.mrf.mxu0
  %v13284 = vadd.f32 0.0, %v13283
  %13285 = vmatmul.f32.gmra.mxu0 %v13024
  %v13286 = vpop.f32.mrf.mxu0
  %v13287 = vadd.f32 0.0, %v13286
  %13288 = vmatmul.f32.gmra.mxu0 %v13027
  %v13289 = vpop.f32.mrf.mxu0
  %v13290 = vadd.f32 0.0, %v13289
  %13291 = vmatmul.f32.gmra.mxu0 %v13030
  %v13292 = vpop.f32.mrf.mxu0
  %v13293 = vadd.f32 0.0, %v13292
  %13294 = vmatmul.f32.gmra.mxu0 %v13033
  %v13295 = vpop.f32.mrf.mxu0
  %v13296 = vadd.f32 0.0, %v13295
  %13297 = vmatmul.f32.gmra.mxu0 %v13036
  %v13298 = vpop.f32.mrf.mxu0
  %v13299 = vadd.f32 0.0, %v13298
  %13300 = vmatmul.f32.gmra.mxu0 %v13039
  %v13301 = vpop.f32.mrf.mxu0
  %v13302 = vadd.f32 0.0, %v13301
  %13303 = vmatmul.f32.gmra.mxu0 %v13042
  %v13304 = vpop.f32.mrf.mxu0
  %v13305 = vadd.f32 0.0, %v13304
  %13306 = vmatmul.f32.gmra.mxu0 %v13045
  %v13307 = vpop.f32.mrf.mxu0
  %v13308 = vadd.f32 0.0, %v13307
  %13309 = vmatmul.f32.gmra.mxu0 %v13048
  %v13310 = vpop.f32.mrf.mxu0
  %v13311 = vadd.f32 0.0, %v13310
  %13312 = vmatmul.f32.gmra.mxu0 %v13051
  %v13313 = vpop.f32.mrf.mxu0
  %v13314 = vadd.f32 0.0, %v13313
  %13315 = vmatmul.f32.gmra.mxu0 %v13054
  %v13316 = vpop.f32.mrf.mxu0
  %v13317 = vadd.f32 0.0, %v13316
  %13318 = vmatmul.f32.gmra.mxu0 %v13057
  %v13319 = vpop.f32.mrf.mxu0
  %v13320 = vadd.f32 0.0, %v13319
  %13321 = vmatmul.f32.gmra.mxu0 %v13060
  %v13322 = vpop.f32.mrf.mxu0
  %v13323 = vadd.f32 0.0, %v13322
  %13324 = vmatmul.f32.gmra.mxu0 %v13063
  %v13325 = vpop.f32.mrf.mxu0
  %v13326 = vadd.f32 0.0, %v13325
  %13327 = vmatmul.f32.gmra.mxu0 %v13066
  %v13328 = vpop.f32.mrf.mxu0
  %v13329 = vadd.f32 0.0, %v13328
  %13330 = vmatmul.f32.gmra.mxu0 %v13069
  %v13331 = vpop.f32.mrf.mxu0
  %v13332 = vadd.f32 0.0, %v13331
  %13333 = vmatmul.f32.gmra.mxu0 %v13072
  %v13334 = vpop.f32.mrf.mxu0
  %v13335 = vadd.f32 0.0, %v13334
  %13336 = vmatmul.f32.gmra.mxu0 %v13075
  %v13337 = vpop.f32.mrf.mxu0
  %v13338 = vadd.f32 0.0, %v13337
  %13339 = vdwg.mxu0
  %v13340 = vadd.f32 %v12670, %v13098
  %v13341 = vadd.f32 %v12671, %v13101
  %v13342 = vadd.f32 %v12672, %v13104
  %v13343 = vadd.f32 %v12673, %v13107
  %v13344 = vadd.f32 %v12674, %v13110
  %v13345 = vadd.f32 %v12675, %v13113
  %v13346 = vadd.f32 %v12676, %v13116
  %v13347 = vadd.f32 %v12677, %v13119
  %v13348 = vadd.f32 %v12678, %v13122
  %v13349 = vadd.f32 %v12679, %v13125
  %v13350 = vadd.f32 %v12680, %v13128
  %v13351 = vadd.f32 %v12681, %v13131
  %v13352 = vadd.f32 %v12682, %v13134
  %v13353 = vadd.f32 %v12683, %v13137
  %v13354 = vadd.f32 %v12684, %v13140
  %v13355 = vadd.f32 %v12685, %v13143
  %v13356 = vadd.f32 %v12686, %v13146
  %v13357 = vadd.f32 %v12687, %v13149
  %v13358 = vadd.f32 %v12688, %v13152
  %v13359 = vadd.f32 %v12689, %v13155
  %v13360 = vadd.f32 %v12690, %v13158
  %v13361 = vadd.f32 %v12691, %v13161
  %v13362 = vadd.f32 %v12692, %v13164
  %v13363 = vadd.f32 %v12693, %v13167
  %v13364 = vadd.f32 %v12694, %v13170
  %v13365 = vadd.f32 %v12695, %v13173
  %v13366 = vadd.f32 %v12696, %v13176
  %v13367 = vadd.f32 %v12697, %v13179
  %v13368 = vadd.f32 %v12698, %v13182
  %v13369 = vadd.f32 %v12699, %v13185
  %v13370 = vadd.f32 %v12700, %v13188
  %v13371 = vadd.f32 %v12701, %v13191
  %v13372 = vadd.f32 %v12702, %v13194
  %v13373 = vadd.f32 %v12703, %v13197
  %v13374 = vadd.f32 %v12704, %v13200
  %v13375 = vadd.f32 %v12705, %v13203
  %v13376 = vadd.f32 %v12706, %v13206
  %v13377 = vadd.f32 %v12707, %v13209
  %v13378 = vadd.f32 %v12708, %v13212
  %v13379 = vadd.f32 %v12709, %v13215
  %v13380 = vadd.f32 %v12710, %v13218
  %v13381 = vadd.f32 %v12711, %v13221
  %v13382 = vadd.f32 %v12712, %v13224
  %v13383 = vadd.f32 %v12713, %v13227
  %v13384 = vadd.f32 %v12714, %v13230
  %v13385 = vadd.f32 %v12715, %v13233
  %v13386 = vadd.f32 %v12716, %v13236
  %v13387 = vadd.f32 %v12717, %v13239
  %v13388 = vadd.f32 %v12718, %v13242
  %v13389 = vadd.f32 %v12719, %v13245
  %v13390 = vadd.f32 %v12720, %v13248
  %v13391 = vadd.f32 %v12721, %v13251
  %v13392 = vadd.f32 %v12722, %v13254
  %v13393 = vadd.f32 %v12723, %v13257
  %v13394 = vadd.f32 %v12724, %v13260
  %v13395 = vadd.f32 %v12725, %v13263
  %v13396 = vadd.f32 %v12726, %v13266
  %v13397 = vadd.f32 %v12727, %v13269
  %v13398 = vadd.f32 %v12728, %v13272
  %v13399 = vadd.f32 %v12729, %v13275
  %v13400 = vadd.f32 %v12730, %v13278
  %v13401 = vadd.f32 %v12731, %v13281
  %v13402 = vadd.f32 %v12732, %v13284
  %v13403 = vadd.f32 %v12733, %v13287
  %v13404 = vadd.f32 %v12734, %v13290
  %v13405 = vadd.f32 %v12735, %v13293
  %v13406 = vadd.f32 %v12736, %v13296
  %v13407 = vadd.f32 %v12737, %v13299
  %v13408 = vadd.f32 %v12738, %v13302
  %v13409 = vadd.f32 %v12739, %v13305
  %v13410 = vadd.f32 %v12740, %v13308
  %v13411 = vadd.f32 %v12741, %v13311
  %v13412 = vadd.f32 %v12742, %v13314
  %v13413 = vadd.f32 %v12743, %v13317
  %v13414 = vadd.f32 %v12744, %v13320
  %v13415 = vadd.f32 %v12745, %v13323
  %v13416 = vadd.f32 %v12746, %v13326
  %v13417 = vadd.f32 %v12747, %v13329
  %v13418 = vadd.f32 %v12748, %v13332
  %v13419 = vadd.f32 %v12749, %v13335
  %v13420 = vadd.f32 %v12750, %v13338
  %v13421 = vld [vmem:[#allocation2 + $0x2b] sm:$0xff]
  %v13422 = vld [vmem:[#allocation2 + $0x33] sm:$0xff]
  %v13423 = vld [vmem:[#allocation2 + $0x3b] sm:$0xff]
  %v13424 = vld [vmem:[#allocation2 + $0x43] sm:$0xff]
  %v13425 = vld [vmem:[#allocation2 + $0x4b] sm:$0xff]
  %v13426 = vld [vmem:[#allocation2 + $0x53] sm:$0xff]
  %v13427 = vld [vmem:[#allocation2 + $0x5b] sm:$0xff]
  %v13428 = vld [vmem:[#allocation2 + $0x63] sm:$0xff]
  %v13429 = vld [vmem:[#allocation2 + $0x6b] sm:$0xff]
  %v13430 = vld [vmem:[#allocation2 + $0x73] sm:$0xff]
  %v13431 = vld [vmem:[#allocation2 + $0x7b] sm:$0xff]
  %v13432 = vld [vmem:[#allocation2 + $0x83] sm:$0xff]
  %v13433 = vld [vmem:[#allocation2 + $0x8b] sm:$0xff]
  %v13434 = vld [vmem:[#allocation2 + $0x93] sm:$0xff]
  %v13435 = vld [vmem:[#allocation2 + $0x9b] sm:$0xff]
  %v13436 = vld [vmem:[#allocation2 + $0xa3] sm:$0xff]
  %v13437 = vld [vmem:[#allocation2 + $0xab] sm:$0xff]
  %v13438 = vld [vmem:[#allocation2 + $0xb3] sm:$0xff]
  %v13439 = vld [vmem:[#allocation2 + $0xbb] sm:$0xff]
  %v13440 = vld [vmem:[#allocation2 + $0xc3] sm:$0xff]
  %v13441 = vld [vmem:[#allocation2 + $0xcb] sm:$0xff]
  %v13442 = vld [vmem:[#allocation2 + $0xd3] sm:$0xff]
  %v13443 = vld [vmem:[#allocation2 + $0xdb] sm:$0xff]
  %v13444 = vld [vmem:[#allocation2 + $0xe3] sm:$0xff]
  %v13445 = vld [vmem:[#allocation2 + $0xeb] sm:$0xff]
  %v13446 = vld [vmem:[#allocation2 + $0xf3] sm:$0xff]
  %v13447 = vld [vmem:[#allocation2 + $0xfb] sm:$0xff]
  %v13448 = vld [vmem:[#allocation2 + $0x103] sm:$0xff]
  %v13449 = vld [vmem:[#allocation2 + $0x10b] sm:$0xff]
  %v13450 = vld [vmem:[#allocation2 + $0x113] sm:$0xff]
  %v13451 = vld [vmem:[#allocation2 + $0x11b] sm:$0xff]
  %v13452 = vld [vmem:[#allocation2 + $0x123] sm:$0xff]
  %v13453 = vld [vmem:[#allocation2 + $0x12b] sm:$0xff]
  %v13454 = vld [vmem:[#allocation2 + $0x133] sm:$0xff]
  %v13455 = vld [vmem:[#allocation2 + $0x13b] sm:$0xff]
  %v13456 = vld [vmem:[#allocation2 + $0x143] sm:$0xff]
  %v13457 = vld [vmem:[#allocation2 + $0x14b] sm:$0xff]
  %v13458 = vld [vmem:[#allocation2 + $0x153] sm:$0xff]
  %v13459 = vld [vmem:[#allocation2 + $0x15b] sm:$0xff]
  %v13460 = vld [vmem:[#allocation2 + $0x163] sm:$0xff]
  %v13461 = vld [vmem:[#allocation2 + $0x16b] sm:$0xff]
  %v13462 = vld [vmem:[#allocation2 + $0x173] sm:$0xff]
  %v13463 = vld [vmem:[#allocation2 + $0x17b] sm:$0xff]
  %v13464 = vld [vmem:[#allocation2 + $0x183] sm:$0xff]
  %v13465 = vld [vmem:[#allocation2 + $0x18b] sm:$0xff]
  %v13466 = vld [vmem:[#allocation2 + $0x193] sm:$0xff]
  %v13467 = vld [vmem:[#allocation2 + $0x19b] sm:$0xff]
  %v13468 = vld [vmem:[#allocation2 + $0x1a3] sm:$0xff]
  %v13469 = vld [vmem:[#allocation2 + $0x1ab] sm:$0xff]
  %v13470 = vld [vmem:[#allocation2 + $0x1b3] sm:$0xff]
  %v13471 = vld [vmem:[#allocation2 + $0x1bb] sm:$0xff]
  %v13472 = vld [vmem:[#allocation2 + $0x1c3] sm:$0xff]
  %v13473 = vld [vmem:[#allocation2 + $0x1cb] sm:$0xff]
  %v13474 = vld [vmem:[#allocation2 + $0x1d3] sm:$0xff]
  %v13475 = vld [vmem:[#allocation2 + $0x1db] sm:$0xff]
  %v13476 = vld [vmem:[#allocation2 + $0x1e3] sm:$0xff]
  %v13477 = vld [vmem:[#allocation2 + $0x1eb] sm:$0xff]
  %v13478 = vld [vmem:[#allocation2 + $0x1f3] sm:$0xff]
  %v13479 = vld [vmem:[#allocation2 + $0x1fb] sm:$0xff]
  %v13480 = vld [vmem:[#allocation2 + $0x203] sm:$0xff]
  %v13481 = vld [vmem:[#allocation2 + $0x20b] sm:$0xff]
  %v13482 = vld [vmem:[#allocation2 + $0x213] sm:$0xff]
  %v13483 = vld [vmem:[#allocation2 + $0x21b] sm:$0xff]
  %v13484 = vld [vmem:[#allocation2 + $0x223] sm:$0xff]
  %v13485 = vld [vmem:[#allocation2 + $0x22b] sm:$0xff]
  %v13486 = vld [vmem:[#allocation2 + $0x233] sm:$0xff]
  %v13487 = vld [vmem:[#allocation2 + $0x23b] sm:$0xff]
  %v13488 = vld [vmem:[#allocation2 + $0x243] sm:$0xff]
  %v13489 = vld [vmem:[#allocation2 + $0x24b] sm:$0xff]
  %v13490 = vld [vmem:[#allocation2 + $0x253] sm:$0xff]
  %v13491 = vld [vmem:[#allocation2 + $0x25b] sm:$0xff]
  %v13492 = vld [vmem:[#allocation2 + $0x263] sm:$0xff]
  %v13493 = vld [vmem:[#allocation2 + $0x26b] sm:$0xff]
  %v13494 = vld [vmem:[#allocation2 + $0x273] sm:$0xff]
  %v13495 = vld [vmem:[#allocation2 + $0x27b] sm:$0xff]
  %v13496 = vld [vmem:[#allocation2 + $0x283] sm:$0xff]
  %v13497 = vld [vmem:[#allocation2 + $0x28b] sm:$0xff]
  %v13498 = vld [vmem:[#allocation2 + $0x293] sm:$0xff]
  %v13499 = vld [vmem:[#allocation2 + $0x29b] sm:$0xff]
  %v13500 = vld [vmem:[#allocation2 + $0x2a3] sm:$0xff]
  %v13501 = vld [vmem:[#allocation2 + $0x2ab] sm:$0xff]
  %s13502 = scalar_lea.vmem %s3, 68
  %v13503 = vld [vmem:[%s13502] sm:$0xf]
  %v13505 = vsel %vm179, %v13421, 0
  %v13508 = vsel %vm179, %v13422, 0
  %v13511 = vsel %vm179, %v13423, 0
  %v13514 = vsel %vm179, %v13424, 0
  %v13517 = vsel %vm179, %v13425, 0
  %v13520 = vsel %vm179, %v13426, 0
  %v13523 = vsel %vm179, %v13427, 0
  %v13526 = vsel %vm179, %v13428, 0
  %v13529 = vsel %vm179, %v13429, 0
  %v13532 = vsel %vm179, %v13430, 0
  %v13535 = vsel %vm179, %v13431, 0
  %v13538 = vsel %vm179, %v13432, 0
  %v13541 = vsel %vm179, %v13433, 0
  %v13544 = vsel %vm179, %v13434, 0
  %v13547 = vsel %vm179, %v13435, 0
  %v13550 = vsel %vm179, %v13436, 0
  %v13553 = vsel %vm179, %v13437, 0
  %v13556 = vsel %vm179, %v13438, 0
  %v13559 = vsel %vm179, %v13439, 0
  %v13562 = vsel %vm179, %v13440, 0
  %v13565 = vsel %vm179, %v13441, 0
  %v13568 = vsel %vm179, %v13442, 0
  %v13571 = vsel %vm179, %v13443, 0
  %v13574 = vsel %vm179, %v13444, 0
  %v13577 = vsel %vm179, %v13445, 0
  %v13580 = vsel %vm179, %v13446, 0
  %v13583 = vsel %vm179, %v13447, 0
  %v13586 = vsel %vm179, %v13448, 0
  %v13589 = vsel %vm179, %v13449, 0
  %v13592 = vsel %vm179, %v13450, 0
  %v13595 = vsel %vm179, %v13451, 0
  %v13598 = vsel %vm179, %v13452, 0
  %v13601 = vsel %vm179, %v13453, 0
  %v13604 = vsel %vm179, %v13454, 0
  %v13607 = vsel %vm179, %v13455, 0
  %v13610 = vsel %vm179, %v13456, 0
  %v13613 = vsel %vm179, %v13457, 0
  %v13616 = vsel %vm179, %v13458, 0
  %v13619 = vsel %vm179, %v13459, 0
  %v13622 = vsel %vm179, %v13460, 0
  %v13625 = vsel %vm179, %v13461, 0
  %v13628 = vsel %vm179, %v13462, 0
  %v13631 = vsel %vm179, %v13463, 0
  %v13634 = vsel %vm179, %v13464, 0
  %v13637 = vsel %vm179, %v13465, 0
  %v13640 = vsel %vm179, %v13466, 0
  %v13643 = vsel %vm179, %v13467, 0
  %v13646 = vsel %vm179, %v13468, 0
  %v13649 = vsel %vm179, %v13469, 0
  %v13652 = vsel %vm179, %v13470, 0
  %v13655 = vsel %vm179, %v13471, 0
  %v13658 = vsel %vm179, %v13472, 0
  %v13661 = vsel %vm179, %v13473, 0
  %v13664 = vsel %vm179, %v13474, 0
  %v13667 = vsel %vm179, %v13475, 0
  %v13670 = vsel %vm179, %v13476, 0
  %v13673 = vsel %vm179, %v13477, 0
  %v13676 = vsel %vm179, %v13478, 0
  %v13679 = vsel %vm179, %v13479, 0
  %v13682 = vsel %vm179, %v13480, 0
  %v13685 = vsel %vm179, %v13481, 0
  %v13688 = vsel %vm179, %v13482, 0
  %v13691 = vsel %vm179, %v13483, 0
  %v13694 = vsel %vm179, %v13484, 0
  %v13697 = vsel %vm179, %v13485, 0
  %v13700 = vsel %vm179, %v13486, 0
  %v13703 = vsel %vm179, %v13487, 0
  %v13706 = vsel %vm179, %v13488, 0
  %v13709 = vsel %vm179, %v13489, 0
  %v13712 = vsel %vm179, %v13490, 0
  %v13715 = vsel %vm179, %v13491, 0
  %v13718 = vsel %vm179, %v13492, 0
  %v13721 = vsel %vm179, %v13493, 0
  %v13724 = vsel %vm179, %v13494, 0
  %v13727 = vsel %vm179, %v13495, 0
  %v13730 = vsel %vm179, %v13496, 0
  %v13733 = vsel %vm179, %v13497, 0
  %v13736 = vsel %vm179, %v13498, 0
  %v13739 = vsel %vm179, %v13499, 0
  %v13742 = vsel %vm179, %v13500, 0
  %v13745 = vsel %vm179, %v13501, 0
  %v13748 = vsel %vm1600, %v13503, 0
  %13750 = vmatpush.msra.mxu0 0.0
  %13751 = vmatpush.msra.mxu0 0.0
  %13752 = vmatpush.msra.mxu0 0.0
  %13753 = vmatpush.msra.mxu0 0.0
  %13754 = vmatpush.msra.mxu0 0.0
  %13755 = vmatpush.msra.mxu0 0.0
  %13756 = vmatpush.msra.mxu0 0.0
  %13757 = vmatpush.msra.mxu0 0.0
  %13758 = vmatpush.msra.mxu0 0.0
  %13759 = vmatpush.msra.mxu0 0.0
  %13760 = vmatpush.msra.mxu0 0.0
  %13761 = vmatpush.msra.mxu0 0.0
  %13762 = vmatpush.msra.mxu0 0.0
  %13763 = vmatpush.msra.mxu0 0.0
  %13764 = vmatpush.msra.mxu0 0.0
  %13765 = vmatpush.msra.mxu0 %v13748
  %13766 = vmatmul.f32.gmra.mxu0 %v13505
  %v13767 = vpop.f32.mrf.mxu0
  %v13768 = vadd.f32 0.0, %v13767
  %13769 = vmatmul.f32.gmra.mxu0 %v13508
  %v13770 = vpop.f32.mrf.mxu0
  %v13771 = vadd.f32 0.0, %v13770
  %13772 = vmatmul.f32.gmra.mxu0 %v13511
  %v13773 = vpop.f32.mrf.mxu0
  %v13774 = vadd.f32 0.0, %v13773
  %13775 = vmatmul.f32.gmra.mxu0 %v13514
  %v13776 = vpop.f32.mrf.mxu0
  %v13777 = vadd.f32 0.0, %v13776
  %13778 = vmatmul.f32.gmra.mxu0 %v13517
  %v13779 = vpop.f32.mrf.mxu0
  %v13780 = vadd.f32 0.0, %v13779
  %13781 = vmatmul.f32.gmra.mxu0 %v13520
  %v13782 = vpop.f32.mrf.mxu0
  %v13783 = vadd.f32 0.0, %v13782
  %13784 = vmatmul.f32.gmra.mxu0 %v13523
  %v13785 = vpop.f32.mrf.mxu0
  %v13786 = vadd.f32 0.0, %v13785
  %13787 = vmatmul.f32.gmra.mxu0 %v13526
  %v13788 = vpop.f32.mrf.mxu0
  %v13789 = vadd.f32 0.0, %v13788
  %13790 = vmatmul.f32.gmra.mxu0 %v13529
  %v13791 = vpop.f32.mrf.mxu0
  %v13792 = vadd.f32 0.0, %v13791
  %13793 = vmatmul.f32.gmra.mxu0 %v13532
  %v13794 = vpop.f32.mrf.mxu0
  %v13795 = vadd.f32 0.0, %v13794
  %13796 = vmatmul.f32.gmra.mxu0 %v13535
  %v13797 = vpop.f32.mrf.mxu0
  %v13798 = vadd.f32 0.0, %v13797
  %13799 = vmatmul.f32.gmra.mxu0 %v13538
  %v13800 = vpop.f32.mrf.mxu0
  %v13801 = vadd.f32 0.0, %v13800
  %13802 = vmatmul.f32.gmra.mxu0 %v13541
  %v13803 = vpop.f32.mrf.mxu0
  %v13804 = vadd.f32 0.0, %v13803
  %13805 = vmatmul.f32.gmra.mxu0 %v13544
  %v13806 = vpop.f32.mrf.mxu0
  %v13807 = vadd.f32 0.0, %v13806
  %13808 = vmatmul.f32.gmra.mxu0 %v13547
  %v13809 = vpop.f32.mrf.mxu0
  %v13810 = vadd.f32 0.0, %v13809
  %13811 = vmatmul.f32.gmra.mxu0 %v13550
  %v13812 = vpop.f32.mrf.mxu0
  %v13813 = vadd.f32 0.0, %v13812
  %13814 = vmatmul.f32.gmra.mxu0 %v13553
  %v13815 = vpop.f32.mrf.mxu0
  %v13816 = vadd.f32 0.0, %v13815
  %13817 = vmatmul.f32.gmra.mxu0 %v13556
  %v13818 = vpop.f32.mrf.mxu0
  %v13819 = vadd.f32 0.0, %v13818
  %13820 = vmatmul.f32.gmra.mxu0 %v13559
  %v13821 = vpop.f32.mrf.mxu0
  %v13822 = vadd.f32 0.0, %v13821
  %13823 = vmatmul.f32.gmra.mxu0 %v13562
  %v13824 = vpop.f32.mrf.mxu0
  %v13825 = vadd.f32 0.0, %v13824
  %13826 = vmatmul.f32.gmra.mxu0 %v13565
  %v13827 = vpop.f32.mrf.mxu0
  %v13828 = vadd.f32 0.0, %v13827
  %13829 = vmatmul.f32.gmra.mxu0 %v13568
  %v13830 = vpop.f32.mrf.mxu0
  %v13831 = vadd.f32 0.0, %v13830
  %13832 = vmatmul.f32.gmra.mxu0 %v13571
  %v13833 = vpop.f32.mrf.mxu0
  %v13834 = vadd.f32 0.0, %v13833
  %13835 = vmatmul.f32.gmra.mxu0 %v13574
  %v13836 = vpop.f32.mrf.mxu0
  %v13837 = vadd.f32 0.0, %v13836
  %13838 = vmatmul.f32.gmra.mxu0 %v13577
  %v13839 = vpop.f32.mrf.mxu0
  %v13840 = vadd.f32 0.0, %v13839
  %13841 = vmatmul.f32.gmra.mxu0 %v13580
  %v13842 = vpop.f32.mrf.mxu0
  %v13843 = vadd.f32 0.0, %v13842
  %13844 = vmatmul.f32.gmra.mxu0 %v13583
  %v13845 = vpop.f32.mrf.mxu0
  %v13846 = vadd.f32 0.0, %v13845
  %13847 = vmatmul.f32.gmra.mxu0 %v13586
  %v13848 = vpop.f32.mrf.mxu0
  %v13849 = vadd.f32 0.0, %v13848
  %13850 = vmatmul.f32.gmra.mxu0 %v13589
  %v13851 = vpop.f32.mrf.mxu0
  %v13852 = vadd.f32 0.0, %v13851
  %13853 = vmatmul.f32.gmra.mxu0 %v13592
  %v13854 = vpop.f32.mrf.mxu0
  %v13855 = vadd.f32 0.0, %v13854
  %13856 = vmatmul.f32.gmra.mxu0 %v13595
  %v13857 = vpop.f32.mrf.mxu0
  %v13858 = vadd.f32 0.0, %v13857
  %13859 = vmatmul.f32.gmra.mxu0 %v13598
  %v13860 = vpop.f32.mrf.mxu0
  %v13861 = vadd.f32 0.0, %v13860
  %13862 = vmatmul.f32.gmra.mxu0 %v13601
  %v13863 = vpop.f32.mrf.mxu0
  %v13864 = vadd.f32 0.0, %v13863
  %13865 = vmatmul.f32.gmra.mxu0 %v13604
  %v13866 = vpop.f32.mrf.mxu0
  %v13867 = vadd.f32 0.0, %v13866
  %13868 = vmatmul.f32.gmra.mxu0 %v13607
  %v13869 = vpop.f32.mrf.mxu0
  %v13870 = vadd.f32 0.0, %v13869
  %13871 = vmatmul.f32.gmra.mxu0 %v13610
  %v13872 = vpop.f32.mrf.mxu0
  %v13873 = vadd.f32 0.0, %v13872
  %13874 = vmatmul.f32.gmra.mxu0 %v13613
  %v13875 = vpop.f32.mrf.mxu0
  %v13876 = vadd.f32 0.0, %v13875
  %13877 = vmatmul.f32.gmra.mxu0 %v13616
  %v13878 = vpop.f32.mrf.mxu0
  %v13879 = vadd.f32 0.0, %v13878
  %13880 = vmatmul.f32.gmra.mxu0 %v13619
  %v13881 = vpop.f32.mrf.mxu0
  %v13882 = vadd.f32 0.0, %v13881
  %13883 = vmatmul.f32.gmra.mxu0 %v13622
  %v13884 = vpop.f32.mrf.mxu0
  %v13885 = vadd.f32 0.0, %v13884
  %13886 = vmatmul.f32.gmra.mxu0 %v13625
  %v13887 = vpop.f32.mrf.mxu0
  %v13888 = vadd.f32 0.0, %v13887
  %13889 = vmatmul.f32.gmra.mxu0 %v13628
  %v13890 = vpop.f32.mrf.mxu0
  %v13891 = vadd.f32 0.0, %v13890
  %13892 = vmatmul.f32.gmra.mxu0 %v13631
  %v13893 = vpop.f32.mrf.mxu0
  %v13894 = vadd.f32 0.0, %v13893
  %13895 = vmatmul.f32.gmra.mxu0 %v13634
  %v13896 = vpop.f32.mrf.mxu0
  %v13897 = vadd.f32 0.0, %v13896
  %13898 = vmatmul.f32.gmra.mxu0 %v13637
  %v13899 = vpop.f32.mrf.mxu0
  %v13900 = vadd.f32 0.0, %v13899
  %13901 = vmatmul.f32.gmra.mxu0 %v13640
  %v13902 = vpop.f32.mrf.mxu0
  %v13903 = vadd.f32 0.0, %v13902
  %13904 = vmatmul.f32.gmra.mxu0 %v13643
  %v13905 = vpop.f32.mrf.mxu0
  %v13906 = vadd.f32 0.0, %v13905
  %13907 = vmatmul.f32.gmra.mxu0 %v13646
  %v13908 = vpop.f32.mrf.mxu0
  %v13909 = vadd.f32 0.0, %v13908
  %13910 = vmatmul.f32.gmra.mxu0 %v13649
  %v13911 = vpop.f32.mrf.mxu0
  %v13912 = vadd.f32 0.0, %v13911
  %13913 = vmatmul.f32.gmra.mxu0 %v13652
  %v13914 = vpop.f32.mrf.mxu0
  %v13915 = vadd.f32 0.0, %v13914
  %13916 = vmatmul.f32.gmra.mxu0 %v13655
  %v13917 = vpop.f32.mrf.mxu0
  %v13918 = vadd.f32 0.0, %v13917
  %13919 = vmatmul.f32.gmra.mxu0 %v13658
  %v13920 = vpop.f32.mrf.mxu0
  %v13921 = vadd.f32 0.0, %v13920
  %13922 = vmatmul.f32.gmra.mxu0 %v13661
  %v13923 = vpop.f32.mrf.mxu0
  %v13924 = vadd.f32 0.0, %v13923
  %13925 = vmatmul.f32.gmra.mxu0 %v13664
  %v13926 = vpop.f32.mrf.mxu0
  %v13927 = vadd.f32 0.0, %v13926
  %13928 = vmatmul.f32.gmra.mxu0 %v13667
  %v13929 = vpop.f32.mrf.mxu0
  %v13930 = vadd.f32 0.0, %v13929
  %13931 = vmatmul.f32.gmra.mxu0 %v13670
  %v13932 = vpop.f32.mrf.mxu0
  %v13933 = vadd.f32 0.0, %v13932
  %13934 = vmatmul.f32.gmra.mxu0 %v13673
  %v13935 = vpop.f32.mrf.mxu0
  %v13936 = vadd.f32 0.0, %v13935
  %13937 = vmatmul.f32.gmra.mxu0 %v13676
  %v13938 = vpop.f32.mrf.mxu0
  %v13939 = vadd.f32 0.0, %v13938
  %13940 = vmatmul.f32.gmra.mxu0 %v13679
  %v13941 = vpop.f32.mrf.mxu0
  %v13942 = vadd.f32 0.0, %v13941
  %13943 = vmatmul.f32.gmra.mxu0 %v13682
  %v13944 = vpop.f32.mrf.mxu0
  %v13945 = vadd.f32 0.0, %v13944
  %13946 = vmatmul.f32.gmra.mxu0 %v13685
  %v13947 = vpop.f32.mrf.mxu0
  %v13948 = vadd.f32 0.0, %v13947
  %13949 = vmatmul.f32.gmra.mxu0 %v13688
  %v13950 = vpop.f32.mrf.mxu0
  %v13951 = vadd.f32 0.0, %v13950
  %13952 = vmatmul.f32.gmra.mxu0 %v13691
  %v13953 = vpop.f32.mrf.mxu0
  %v13954 = vadd.f32 0.0, %v13953
  %13955 = vmatmul.f32.gmra.mxu0 %v13694
  %v13956 = vpop.f32.mrf.mxu0
  %v13957 = vadd.f32 0.0, %v13956
  %13958 = vmatmul.f32.gmra.mxu0 %v13697
  %v13959 = vpop.f32.mrf.mxu0
  %v13960 = vadd.f32 0.0, %v13959
  %13961 = vmatmul.f32.gmra.mxu0 %v13700
  %v13962 = vpop.f32.mrf.mxu0
  %v13963 = vadd.f32 0.0, %v13962
  %13964 = vmatmul.f32.gmra.mxu0 %v13703
  %v13965 = vpop.f32.mrf.mxu0
  %v13966 = vadd.f32 0.0, %v13965
  %13967 = vmatmul.f32.gmra.mxu0 %v13706
  %v13968 = vpop.f32.mrf.mxu0
  %v13969 = vadd.f32 0.0, %v13968
  %13970 = vmatmul.f32.gmra.mxu0 %v13709
  %v13971 = vpop.f32.mrf.mxu0
  %v13972 = vadd.f32 0.0, %v13971
  %13973 = vmatmul.f32.gmra.mxu0 %v13712
  %v13974 = vpop.f32.mrf.mxu0
  %v13975 = vadd.f32 0.0, %v13974
  %13976 = vmatmul.f32.gmra.mxu0 %v13715
  %v13977 = vpop.f32.mrf.mxu0
  %v13978 = vadd.f32 0.0, %v13977
  %13979 = vmatmul.f32.gmra.mxu0 %v13718
  %v13980 = vpop.f32.mrf.mxu0
  %v13981 = vadd.f32 0.0, %v13980
  %13982 = vmatmul.f32.gmra.mxu0 %v13721
  %v13983 = vpop.f32.mrf.mxu0
  %v13984 = vadd.f32 0.0, %v13983
  %13985 = vmatmul.f32.gmra.mxu0 %v13724
  %v13986 = vpop.f32.mrf.mxu0
  %v13987 = vadd.f32 0.0, %v13986
  %13988 = vmatmul.f32.gmra.mxu0 %v13727
  %v13989 = vpop.f32.mrf.mxu0
  %v13990 = vadd.f32 0.0, %v13989
  %13991 = vmatmul.f32.gmra.mxu0 %v13730
  %v13992 = vpop.f32.mrf.mxu0
  %v13993 = vadd.f32 0.0, %v13992
  %13994 = vmatmul.f32.gmra.mxu0 %v13733
  %v13995 = vpop.f32.mrf.mxu0
  %v13996 = vadd.f32 0.0, %v13995
  %13997 = vmatmul.f32.gmra.mxu0 %v13736
  %v13998 = vpop.f32.mrf.mxu0
  %v13999 = vadd.f32 0.0, %v13998
  %14000 = vmatmul.f32.gmra.mxu0 %v13739
  %v14001 = vpop.f32.mrf.mxu0
  %v14002 = vadd.f32 0.0, %v14001
  %14003 = vmatmul.f32.gmra.mxu0 %v13742
  %v14004 = vpop.f32.mrf.mxu0
  %v14005 = vadd.f32 0.0, %v14004
  %14006 = vmatmul.f32.gmra.mxu0 %v13745
  %v14007 = vpop.f32.mrf.mxu0
  %v14008 = vadd.f32 0.0, %v14007
  %14009 = vdwg.mxu0
  %v14010 = vadd.f32 %v13340, %v13768
  %v14011 = vadd.f32 %v13341, %v13771
  %v14012 = vadd.f32 %v13342, %v13774
  %v14013 = vadd.f32 %v13343, %v13777
  %v14014 = vadd.f32 %v13344, %v13780
  %v14015 = vadd.f32 %v13345, %v13783
  %v14016 = vadd.f32 %v13346, %v13786
  %v14017 = vadd.f32 %v13347, %v13789
  %v14018 = vadd.f32 %v13348, %v13792
  %v14019 = vadd.f32 %v13349, %v13795
  %v14020 = vadd.f32 %v13350, %v13798
  %v14021 = vadd.f32 %v13351, %v13801
  %v14022 = vadd.f32 %v13352, %v13804
  %v14023 = vadd.f32 %v13353, %v13807
  %v14024 = vadd.f32 %v13354, %v13810
  %v14025 = vadd.f32 %v13355, %v13813
  %v14026 = vadd.f32 %v13356, %v13816
  %v14027 = vadd.f32 %v13357, %v13819
  %v14028 = vadd.f32 %v13358, %v13822
  %v14029 = vadd.f32 %v13359, %v13825
  %v14030 = vadd.f32 %v13360, %v13828
  %v14031 = vadd.f32 %v13361, %v13831
  %v14032 = vadd.f32 %v13362, %v13834
  %v14033 = vadd.f32 %v13363, %v13837
  %v14034 = vadd.f32 %v13364, %v13840
  %v14035 = vadd.f32 %v13365, %v13843
  %v14036 = vadd.f32 %v13366, %v13846
  %v14037 = vadd.f32 %v13367, %v13849
  %v14038 = vadd.f32 %v13368, %v13852
  %v14039 = vadd.f32 %v13369, %v13855
  %v14040 = vadd.f32 %v13370, %v13858
  %v14041 = vadd.f32 %v13371, %v13861
  %v14042 = vadd.f32 %v13372, %v13864
  %v14043 = vadd.f32 %v13373, %v13867
  %v14044 = vadd.f32 %v13374, %v13870
  %v14045 = vadd.f32 %v13375, %v13873
  %v14046 = vadd.f32 %v13376, %v13876
  %v14047 = vadd.f32 %v13377, %v13879
  %v14048 = vadd.f32 %v13378, %v13882
  %v14049 = vadd.f32 %v13379, %v13885
  %v14050 = vadd.f32 %v13380, %v13888
  %v14051 = vadd.f32 %v13381, %v13891
  %v14052 = vadd.f32 %v13382, %v13894
  %v14053 = vadd.f32 %v13383, %v13897
  %v14054 = vadd.f32 %v13384, %v13900
  %v14055 = vadd.f32 %v13385, %v13903
  %v14056 = vadd.f32 %v13386, %v13906
  %v14057 = vadd.f32 %v13387, %v13909
  %v14058 = vadd.f32 %v13388, %v13912
  %v14059 = vadd.f32 %v13389, %v13915
  %v14060 = vadd.f32 %v13390, %v13918
  %v14061 = vadd.f32 %v13391, %v13921
  %v14062 = vadd.f32 %v13392, %v13924
  %v14063 = vadd.f32 %v13393, %v13927
  %v14064 = vadd.f32 %v13394, %v13930
  %v14065 = vadd.f32 %v13395, %v13933
  %v14066 = vadd.f32 %v13396, %v13936
  %v14067 = vadd.f32 %v13397, %v13939
  %v14068 = vadd.f32 %v13398, %v13942
  %v14069 = vadd.f32 %v13399, %v13945
  %v14070 = vadd.f32 %v13400, %v13948
  %v14071 = vadd.f32 %v13401, %v13951
  %v14072 = vadd.f32 %v13402, %v13954
  %v14073 = vadd.f32 %v13403, %v13957
  %v14074 = vadd.f32 %v13404, %v13960
  %v14075 = vadd.f32 %v13405, %v13963
  %v14076 = vadd.f32 %v13406, %v13966
  %v14077 = vadd.f32 %v13407, %v13969
  %v14078 = vadd.f32 %v13408, %v13972
  %v14079 = vadd.f32 %v13409, %v13975
  %v14080 = vadd.f32 %v13410, %v13978
  %v14081 = vadd.f32 %v13411, %v13981
  %v14082 = vadd.f32 %v13412, %v13984
  %v14083 = vadd.f32 %v13413, %v13987
  %v14084 = vadd.f32 %v13414, %v13990
  %v14085 = vadd.f32 %v13415, %v13993
  %v14086 = vadd.f32 %v13416, %v13996
  %v14087 = vadd.f32 %v13417, %v13999
  %v14088 = vadd.f32 %v13418, %v14002
  %v14089 = vadd.f32 %v13419, %v14005
  %v14090 = vadd.f32 %v13420, %v14008
  %v14091 = vperm.slane %v191, 0
  %v14092 = vadd.f32 %v14010, %v14091
  %v14093 = vadd.f32 %v14011, %v14091
  %v14094 = vadd.f32 %v14012, %v14091
  %v14095 = vadd.f32 %v14013, %v14091
  %v14096 = vadd.f32 %v14014, %v14091
  %v14097 = vadd.f32 %v14015, %v14091
  %v14098 = vadd.f32 %v14016, %v14091
  %v14099 = vadd.f32 %v14017, %v14091
  %v14100 = vadd.f32 %v14018, %v14091
  %v14101 = vadd.f32 %v14019, %v14091
  %v14102 = vadd.f32 %v14020, %v14091
  %v14103 = vadd.f32 %v14021, %v14091
  %v14104 = vadd.f32 %v14022, %v14091
  %v14105 = vadd.f32 %v14023, %v14091
  %v14106 = vadd.f32 %v14024, %v14091
  %v14107 = vadd.f32 %v14025, %v14091
  %v14108 = vadd.f32 %v14026, %v14091
  %v14109 = vadd.f32 %v14027, %v14091
  %v14110 = vadd.f32 %v14028, %v14091
  %v14111 = vadd.f32 %v14029, %v14091
  %v14112 = vadd.f32 %v14030, %v14091
  %v14113 = vadd.f32 %v14031, %v14091
  %v14114 = vadd.f32 %v14032, %v14091
  %v14115 = vadd.f32 %v14033, %v14091
  %v14116 = vadd.f32 %v14034, %v14091
  %v14117 = vadd.f32 %v14035, %v14091
  %v14118 = vadd.f32 %v14036, %v14091
  %v14119 = vadd.f32 %v14037, %v14091
  %v14120 = vadd.f32 %v14038, %v14091
  %v14121 = vadd.f32 %v14039, %v14091
  %v14122 = vadd.f32 %v14040, %v14091
  %v14123 = vadd.f32 %v14041, %v14091
  %v14124 = vadd.f32 %v14042, %v14091
  %v14125 = vadd.f32 %v14043, %v14091
  %v14126 = vadd.f32 %v14044, %v14091
  %v14127 = vadd.f32 %v14045, %v14091
  %v14128 = vadd.f32 %v14046, %v14091
  %v14129 = vadd.f32 %v14047, %v14091
  %v14130 = vadd.f32 %v14048, %v14091
  %v14131 = vadd.f32 %v14049, %v14091
  %v14132 = vadd.f32 %v14050, %v14091
  %v14133 = vadd.f32 %v14051, %v14091
  %v14134 = vadd.f32 %v14052, %v14091
  %v14135 = vadd.f32 %v14053, %v14091
  %v14136 = vadd.f32 %v14054, %v14091
  %v14137 = vadd.f32 %v14055, %v14091
  %v14138 = vadd.f32 %v14056, %v14091
  %v14139 = vadd.f32 %v14057, %v14091
  %v14140 = vadd.f32 %v14058, %v14091
  %v14141 = vadd.f32 %v14059, %v14091
  %v14142 = vadd.f32 %v14060, %v14091
  %v14143 = vadd.f32 %v14061, %v14091
  %v14144 = vadd.f32 %v14062, %v14091
  %v14145 = vadd.f32 %v14063, %v14091
  %v14146 = vadd.f32 %v14064, %v14091
  %v14147 = vadd.f32 %v14065, %v14091
  %v14148 = vadd.f32 %v14066, %v14091
  %v14149 = vadd.f32 %v14067, %v14091
  %v14150 = vadd.f32 %v14068, %v14091
  %v14151 = vadd.f32 %v14069, %v14091
  %v14152 = vadd.f32 %v14070, %v14091
  %v14153 = vadd.f32 %v14071, %v14091
  %v14154 = vadd.f32 %v14072, %v14091
  %v14155 = vadd.f32 %v14073, %v14091
  %v14156 = vadd.f32 %v14074, %v14091
  %v14157 = vadd.f32 %v14075, %v14091
  %v14158 = vadd.f32 %v14076, %v14091
  %v14159 = vadd.f32 %v14077, %v14091
  %v14160 = vadd.f32 %v14078, %v14091
  %v14161 = vadd.f32 %v14079, %v14091
  %v14162 = vadd.f32 %v14080, %v14091
  %v14163 = vadd.f32 %v14081, %v14091
  %v14164 = vadd.f32 %v14082, %v14091
  %v14165 = vadd.f32 %v14083, %v14091
  %v14166 = vadd.f32 %v14084, %v14091
  %v14167 = vadd.f32 %v14085, %v14091
  %v14168 = vadd.f32 %v14086, %v14091
  %v14169 = vadd.f32 %v14087, %v14091
  %v14170 = vadd.f32 %v14088, %v14091
  %v14171 = vadd.f32 %v14089, %v14091
  %v14172 = vadd.f32 %v14090, %v14091
  %v14173 = vadd.f32 %v14092, %v17
  %v14174 = vadd.f32 %v14093, %v18
  %v14175 = vadd.f32 %v14094, %v19
  %v14176 = vadd.f32 %v14095, %v20
  %v14177 = vadd.f32 %v14096, %v21
  %v14178 = vadd.f32 %v14097, %v22
  %v14179 = vadd.f32 %v14098, %v23
  %v14180 = vadd.f32 %v14099, %v24
  %v14181 = vadd.f32 %v14100, %v25
  %v14182 = vadd.f32 %v14101, %v26
  %v14183 = vadd.f32 %v14102, %v27
  %v14184 = vadd.f32 %v14103, %v28
  %v14185 = vadd.f32 %v14104, %v29
  %v14186 = vadd.f32 %v14105, %v30
  %v14187 = vadd.f32 %v14106, %v31
  %v14188 = vadd.f32 %v14107, %v32
  %v14189 = vadd.f32 %v14108, %v33
  %v14190 = vadd.f32 %v14109, %v34
  %v14191 = vadd.f32 %v14110, %v35
  %v14192 = vadd.f32 %v14111, %v36
  %v14193 = vadd.f32 %v14112, %v37
  %v14194 = vadd.f32 %v14113, %v38
  %v14195 = vadd.f32 %v14114, %v39
  %v14196 = vadd.f32 %v14115, %v40
  %v14197 = vadd.f32 %v14116, %v41
  %v14198 = vadd.f32 %v14117, %v42
  %v14199 = vadd.f32 %v14118, %v43
  %v14200 = vadd.f32 %v14119, %v44
  %v14201 = vadd.f32 %v14120, %v45
  %v14202 = vadd.f32 %v14121, %v46
  %v14203 = vadd.f32 %v14122, %v47
  %v14204 = vadd.f32 %v14123, %v48
  %v14205 = vadd.f32 %v14124, %v49
  %v14206 = vadd.f32 %v14125, %v50
  %v14207 = vadd.f32 %v14126, %v51
  %v14208 = vadd.f32 %v14127, %v52
  %v14209 = vadd.f32 %v14128, %v53
  %v14210 = vadd.f32 %v14129, %v54
  %v14211 = vadd.f32 %v14130, %v55
  %v14212 = vadd.f32 %v14131, %v56
  %v14213 = vadd.f32 %v14132, %v57
  %v14214 = vadd.f32 %v14133, %v58
  %v14215 = vadd.f32 %v14134, %v59
  %v14216 = vadd.f32 %v14135, %v60
  %v14217 = vadd.f32 %v14136, %v61
  %v14218 = vadd.f32 %v14137, %v62
  %v14219 = vadd.f32 %v14138, %v63
  %v14220 = vadd.f32 %v14139, %v64
  %v14221 = vadd.f32 %v14140, %v65
  %v14222 = vadd.f32 %v14141, %v66
  %v14223 = vadd.f32 %v14142, %v67
  %v14224 = vadd.f32 %v14143, %v68
  %v14225 = vadd.f32 %v14144, %v69
  %v14226 = vadd.f32 %v14145, %v70
  %v14227 = vadd.f32 %v14146, %v71
  %v14228 = vadd.f32 %v14147, %v72
  %v14229 = vadd.f32 %v14148, %v73
  %v14230 = vadd.f32 %v14149, %v74
  %v14231 = vadd.f32 %v14150, %v75
  %v14232 = vadd.f32 %v14151, %v76
  %v14233 = vadd.f32 %v14152, %v77
  %v14234 = vadd.f32 %v14153, %v78
  %v14235 = vadd.f32 %v14154, %v79
  %v14236 = vadd.f32 %v14155, %v80
  %v14237 = vadd.f32 %v14156, %v81
  %v14238 = vadd.f32 %v14157, %v82
  %v14239 = vadd.f32 %v14158, %v83
  %v14240 = vadd.f32 %v14159, %v84
  %v14241 = vadd.f32 %v14160, %v85
  %v14242 = vadd.f32 %v14161, %v86
  %v14243 = vadd.f32 %v14162, %v87
  %v14244 = vadd.f32 %v14163, %v88
  %v14245 = vadd.f32 %v14164, %v89
  %v14246 = vadd.f32 %v14165, %v90
  %v14247 = vadd.f32 %v14166, %v91
  %v14248 = vadd.f32 %v14167, %v92
  %v14249 = vadd.f32 %v14168, %v93
  %v14250 = vadd.f32 %v14169, %v94
  %v14251 = vadd.f32 %v14170, %v95
  %v14252 = vadd.f32 %v14171, %v96
  %v14253 = vadd.f32 %v14172, %v97
  %14254 = vst.msk [vmem:[%s4] sm:$0xff] %vm179, %v14173
  %14255 = vst.msk [vmem:[%s4 + $0x8] sm:$0xff] %vm179, %v14174
  %14256 = vst.msk [vmem:[%s4 + $0x10] sm:$0xff] %vm179, %v14175
  %14257 = vst.msk [vmem:[%s4 + $0x18] sm:$0xff] %vm179, %v14176
  %14258 = vst.msk [vmem:[%s4 + $0x20] sm:$0xff] %vm179, %v14177
  %14259 = vst.msk [vmem:[%s4 + $0x28] sm:$0xff] %vm179, %v14178
  %14260 = vst.msk [vmem:[%s4 + $0x30] sm:$0xff] %vm179, %v14179
  %14261 = vst.msk [vmem:[%s4 + $0x38] sm:$0xff] %vm179, %v14180
  %14262 = vst.msk [vmem:[%s4 + $0x40] sm:$0xff] %vm179, %v14181
  %14263 = vst.msk [vmem:[%s4 + $0x48] sm:$0xff] %vm179, %v14182
  %14264 = vst.msk [vmem:[%s4 + $0x50] sm:$0xff] %vm179, %v14183
  %14265 = vst.msk [vmem:[%s4 + $0x58] sm:$0xff] %vm179, %v14184
  %14266 = vst.msk [vmem:[%s4 + $0x60] sm:$0xff] %vm179, %v14185
  %14267 = vst.msk [vmem:[%s4 + $0x68] sm:$0xff] %vm179, %v14186
  %14268 = vst.msk [vmem:[%s4 + $0x70] sm:$0xff] %vm179, %v14187
  %14269 = vst.msk [vmem:[%s4 + $0x78] sm:$0xff] %vm179, %v14188
  %14270 = vst.msk [vmem:[%s4 + $0x80] sm:$0xff] %vm179, %v14189
  %14271 = vst.msk [vmem:[%s4 + $0x88] sm:$0xff] %vm179, %v14190
  %14272 = vst.msk [vmem:[%s4 + $0x90] sm:$0xff] %vm179, %v14191
  %14273 = vst.msk [vmem:[%s4 + $0x98] sm:$0xff] %vm179, %v14192
  %14274 = vst.msk [vmem:[%s4 + $0xa0] sm:$0xff] %vm179, %v14193
  %14275 = vst.msk [vmem:[%s4 + $0xa8] sm:$0xff] %vm179, %v14194
  %14276 = vst.msk [vmem:[%s4 + $0xb0] sm:$0xff] %vm179, %v14195
  %14277 = vst.msk [vmem:[%s4 + $0xb8] sm:$0xff] %vm179, %v14196
  %14278 = vst.msk [vmem:[%s4 + $0xc0] sm:$0xff] %vm179, %v14197
  %14279 = vst.msk [vmem:[%s4 + $0xc8] sm:$0xff] %vm179, %v14198
  %14280 = vst.msk [vmem:[%s4 + $0xd0] sm:$0xff] %vm179, %v14199
  %14281 = vst.msk [vmem:[%s4 + $0xd8] sm:$0xff] %vm179, %v14200
  %14282 = vst.msk [vmem:[%s4 + $0xe0] sm:$0xff] %vm179, %v14201
  %14283 = vst.msk [vmem:[%s4 + $0xe8] sm:$0xff] %vm179, %v14202
  %14284 = vst.msk [vmem:[%s4 + $0xf0] sm:$0xff] %vm179, %v14203
  %14285 = vst.msk [vmem:[%s4 + $0xf8] sm:$0xff] %vm179, %v14204
  %14286 = vst.msk [vmem:[%s4 + $0x100] sm:$0xff] %vm179, %v14205
  %14287 = vst.msk [vmem:[%s4 + $0x108] sm:$0xff] %vm179, %v14206
  %14288 = vst.msk [vmem:[%s4 + $0x110] sm:$0xff] %vm179, %v14207
  %14289 = vst.msk [vmem:[%s4 + $0x118] sm:$0xff] %vm179, %v14208
  %14290 = vst.msk [vmem:[%s4 + $0x120] sm:$0xff] %vm179, %v14209
  %14291 = vst.msk [vmem:[%s4 + $0x128] sm:$0xff] %vm179, %v14210
  %14292 = vst.msk [vmem:[%s4 + $0x130] sm:$0xff] %vm179, %v14211
  %14293 = vst.msk [vmem:[%s4 + $0x138] sm:$0xff] %vm179, %v14212
  %14294 = vst.msk [vmem:[%s4 + $0x140] sm:$0xff] %vm179, %v14213
  %14295 = vst.msk [vmem:[%s4 + $0x148] sm:$0xff] %vm179, %v14214
  %14296 = vst.msk [vmem:[%s4 + $0x150] sm:$0xff] %vm179, %v14215
  %14297 = vst.msk [vmem:[%s4 + $0x158] sm:$0xff] %vm179, %v14216
  %14298 = vst.msk [vmem:[%s4 + $0x160] sm:$0xff] %vm179, %v14217
  %14299 = vst.msk [vmem:[%s4 + $0x168] sm:$0xff] %vm179, %v14218
  %14300 = vst.msk [vmem:[%s4 + $0x170] sm:$0xff] %vm179, %v14219
  %14301 = vst.msk [vmem:[%s4 + $0x178] sm:$0xff] %vm179, %v14220
  %14302 = vst.msk [vmem:[%s4 + $0x180] sm:$0xff] %vm179, %v14221
  %14303 = vst.msk [vmem:[%s4 + $0x188] sm:$0xff] %vm179, %v14222
  %14304 = vst.msk [vmem:[%s4 + $0x190] sm:$0xff] %vm179, %v14223
  %14305 = vst.msk [vmem:[%s4 + $0x198] sm:$0xff] %vm179, %v14224
  %14306 = vst.msk [vmem:[%s4 + $0x1a0] sm:$0xff] %vm179, %v14225
  %14307 = vst.msk [vmem:[%s4 + $0x1a8] sm:$0xff] %vm179, %v14226
  %14308 = vst.msk [vmem:[%s4 + $0x1b0] sm:$0xff] %vm179, %v14227
  %14309 = vst.msk [vmem:[%s4 + $0x1b8] sm:$0xff] %vm179, %v14228
  %14310 = vst.msk [vmem:[%s4 + $0x1c0] sm:$0xff] %vm179, %v14229
  %14311 = vst.msk [vmem:[%s4 + $0x1c8] sm:$0xff] %vm179, %v14230
  %14312 = vst.msk [vmem:[%s4 + $0x1d0] sm:$0xff] %vm179, %v14231
  %14313 = vst.msk [vmem:[%s4 + $0x1d8] sm:$0xff] %vm179, %v14232
  %14314 = vst.msk [vmem:[%s4 + $0x1e0] sm:$0xff] %vm179, %v14233
  %14315 = vst.msk [vmem:[%s4 + $0x1e8] sm:$0xff] %vm179, %v14234
  %14316 = vst.msk [vmem:[%s4 + $0x1f0] sm:$0xff] %vm179, %v14235
  %14317 = vst.msk [vmem:[%s4 + $0x1f8] sm:$0xff] %vm179, %v14236
  %14318 = vst.msk [vmem:[%s4 + $0x200] sm:$0xff] %vm179, %v14237
  %14319 = vst.msk [vmem:[%s4 + $0x208] sm:$0xff] %vm179, %v14238
  %14320 = vst.msk [vmem:[%s4 + $0x210] sm:$0xff] %vm179, %v14239
  %14321 = vst.msk [vmem:[%s4 + $0x218] sm:$0xff] %vm179, %v14240
  %14322 = vst.msk [vmem:[%s4 + $0x220] sm:$0xff] %vm179, %v14241
  %14323 = vst.msk [vmem:[%s4 + $0x228] sm:$0xff] %vm179, %v14242
  %14324 = vst.msk [vmem:[%s4 + $0x230] sm:$0xff] %vm179, %v14243
  %14325 = vst.msk [vmem:[%s4 + $0x238] sm:$0xff] %vm179, %v14244
  %14326 = vst.msk [vmem:[%s4 + $0x240] sm:$0xff] %vm179, %v14245
  %14327 = vst.msk [vmem:[%s4 + $0x248] sm:$0xff] %vm179, %v14246
  %14328 = vst.msk [vmem:[%s4 + $0x250] sm:$0xff] %vm179, %v14247
  %14329 = vst.msk [vmem:[%s4 + $0x258] sm:$0xff] %vm179, %v14248
  %14330 = vst.msk [vmem:[%s4 + $0x260] sm:$0xff] %vm179, %v14249
  %14331 = vst.msk [vmem:[%s4 + $0x268] sm:$0xff] %vm179, %v14250
  %14332 = vst.msk [vmem:[%s4 + $0x270] sm:$0xff] %vm179, %v14251
  %14333 = vst.msk [vmem:[%s4 + $0x278] sm:$0xff] %vm179, %v14252
  %14334 = vst.msk [vmem:[%s4 + $0x280] sm:$0xff] %vm179, %v14253
  // Predicated region
  $region18: #{tpu_custom_call.1} parent=0 // pred_check
    _
  $region19: #{tpu_custom_call.1} parent=0 // pred_check_branch
    %14336 = sbr.rel (0) target = $region21
  $region20: #{tpu_custom_call.1} parent=0 // pred_region
    _
  $region21: #{tpu_custom_call.1} parent=0 // pred_fallthru
    _
  // Predicated region
  $region22: #{tpu_custom_call.1} parent=0 // pred_check
    _
  $region23: #{tpu_custom_call.1} parent=0 // pred_check_branch
    %14338 = sbr.rel (0) target = $region25
  $region24: #{tpu_custom_call.1} parent=0 // pred_region
    _
  $region25: #{tpu_custom_call.1} parent=0 // pred_fallthru
    _

</llo_original>
